<compile_context>
chip_gen: v5e
topology: v5e:2x2
jax: 0.10.0
libtpu: 0.0.40
codegen_flags: <defaults>
</compile_context>

<pallas_src>
import functools
import math

import jax
import jax.numpy as jnp
from jax.experimental import pallas as pl
from jax.experimental.pallas import tpu as pltpu

# ----------------------------- synthetic CLIP-ViT config (small) -----------------------------
CHANNELS = 3          # CLIP expects RGB
PATCH_SIZE = 4
BASE_IMAGE_SIZE = 16  # analogue of 336
HIDDEN = 32
NUM_HEADS = 4
INTERMEDIATE = 64
NUM_LAYERS = 2
SELECT_LAYER = -2     # args.mm_vision_select_layer
SELECT_FEATURE = "patch"

S2_SCALES = [16, 32]              # analogue of [336, 672]
S2_SPLIT_SIZE = S2_SCALES[0]
S2_IMAGE_SIZE = S2_SCALES[-1]

NUM_PATCHES_PER_SIDE = BASE_IMAGE_SIZE // PATCH_SIZE
NUM_PATCHES = NUM_PATCHES_PER_SIDE ** 2


# ----------------------------------- tiling helpers -----------------------------------
def _row_tile(m):
    # 128 rows (multiple of 8 sublanes) when the array is big enough, else the full (ragged) dim.
    return 128 if m >= 128 else m


def _col_tile(n):
    # Lane-dense 128-wide output tiles when possible, else the full dim (toy D=32 / 3D=96 / I=64).
    return 128 if n >= 128 else n


def _mosaic(*sems):
    return pltpu.CompilerParams(
        dimension_semantics=sems,
        vmem_limit_bytes=48 * 1024 * 1024,   # fits v7x's 64 MiB/TC VMEM with headroom
    )


# ----------------------------------- Pallas kernels -----------------------------------
def _matmul_kernel(x_ref, w_ref, o_ref):
    # bf16 MXU operands, f32 accumulation (no bias path: patch embedding has no bias).
    o_ref[...] = jnp.dot(
        x_ref[...].astype(jnp.bfloat16), w_ref[...].astype(jnp.bfloat16),
        preferred_element_type=jnp.float32).astype(o_ref.dtype)


def pallas_matmul(x, w):
    m, k = x.shape
    n = w.shape[1]
    tm, tn = _row_tile(m), _col_tile(n)
    return pl.pallas_call(
        _matmul_kernel,
        out_shape=jax.ShapeDtypeStruct((m, n), x.dtype),
        grid=(pl.cdiv(m, tm), pl.cdiv(n, tn)),
        in_specs=[pl.BlockSpec((tm, k), lambda i, j: (i, 0)),
                  pl.BlockSpec((k, tn), lambda i, j: (0, j))],
        out_specs=pl.BlockSpec((tm, tn), lambda i, j: (i, j)),
        compiler_params=_mosaic("parallel", "parallel"),
    )(x, w)


def _ln_linear_kernel(x_ref, g_ref, b_ref, w_ref, bias_ref, o_ref, *, activation):
    # Fused LayerNorm (f32) -> GEMM (bf16 operands, f32 acc) -> bias -> optional quick_gelu (f32).
    x = x_ref[...].astype(jnp.float32)
    mu = jnp.mean(x, axis=-1, keepdims=True)
    var = jnp.mean(jnp.square(x - mu), axis=-1, keepdims=True)
    xn = (x - mu) * jax.lax.rsqrt(var + 1e-5)
    xn = xn * g_ref[...].astype(jnp.float32) + b_ref[...].astype(jnp.float32)
    y = jnp.dot(xn.astype(jnp.bfloat16), w_ref[...].astype(jnp.bfloat16),
                preferred_element_type=jnp.float32)
    y = y + bias_ref[...].astype(jnp.float32)
    if activation == "quick_gelu":          # CLIP quick_gelu: x * sigmoid(1.702 x)
        y = y * jax.nn.sigmoid(1.702 * y)
    o_ref[...] = y.astype(o_ref.dtype)


def pallas_ln_linear(x, gamma, beta, w, bias, activation="none"):
    m, k = x.shape
    n = w.shape[1]
    tm, tn = _row_tile(m), _col_tile(n)
    return pl.pallas_call(
        functools.partial(_ln_linear_kernel, activation=activation),
        out_shape=jax.ShapeDtypeStruct((m, n), x.dtype),
        grid=(pl.cdiv(m, tm), pl.cdiv(n, tn)),
        in_specs=[pl.BlockSpec((tm, k), lambda i, j: (i, 0)),
                  pl.BlockSpec((1, k), lambda i, j: (0, 0)),
                  pl.BlockSpec((1, k), lambda i, j: (0, 0)),
                  pl.BlockSpec((k, tn), lambda i, j: (0, j)),
                  pl.BlockSpec((1, tn), lambda i, j: (0, j))],
        out_specs=pl.BlockSpec((tm, tn), lambda i, j: (i, j)),
        compiler_params=_mosaic("parallel", "parallel"),
    )(x, gamma.reshape(1, k), beta.reshape(1, k), w, bias.reshape(1, n))


def _linear_residual_kernel(x_ref, w_ref, bias_ref, res_ref, o_ref):
    # GEMM (bf16 operands, f32 acc) with bias + residual add fused into the epilogue.
    y = jnp.dot(x_ref[...].astype(jnp.bfloat16), w_ref[...].astype(jnp.bfloat16),
                preferred_element_type=jnp.float32)
    y = y + bias_ref[...].astype(jnp.float32) + res_ref[...].astype(jnp.float32)
    o_ref[...] = y.astype(o_ref.dtype)


def pallas_linear_residual(x, w, bias, residual):
    m, k = x.shape
    n = w.shape[1]
    tm, tn = _row_tile(m), _col_tile(n)
    return pl.pallas_call(
        _linear_residual_kernel,
        out_shape=jax.ShapeDtypeStruct((m, n), residual.dtype),
        grid=(pl.cdiv(m, tm), pl.cdiv(n, tn)),
        in_specs=[pl.BlockSpec((tm, k), lambda i, j: (i, 0)),
                  pl.BlockSpec((k, tn), lambda i, j: (0, j)),
                  pl.BlockSpec((1, tn), lambda i, j: (0, j)),
                  pl.BlockSpec((tm, tn), lambda i, j: (i, j))],
        out_specs=pl.BlockSpec((tm, tn), lambda i, j: (i, j)),
        compiler_params=_mosaic("parallel", "parallel"),
    )(x, w, bias.reshape(1, n), residual)


def _layernorm_kernel(x_ref, g_ref, b_ref, o_ref):
    x = x_ref[...].astype(jnp.float32)
    mu = jnp.mean(x, axis=-1, keepdims=True)
    var = jnp.mean(jnp.square(x - mu), axis=-1, keepdims=True)
    y = (x - mu) * jax.lax.rsqrt(var + 1e-5)
    o_ref[...] = (y * g_ref[...].astype(jnp.float32) + b_ref[...].astype(jnp.float32)).astype(o_ref.dtype)


def pallas_layernorm(x, gamma, beta):
    # Only used for the pre-LN (its output is hidden_states[0] and the residual, so it must exist).
    m, d = x.shape
    tm = _row_tile(m)
    return pl.pallas_call(
        _layernorm_kernel,
        out_shape=jax.ShapeDtypeStruct((m, d), x.dtype),
        grid=(pl.cdiv(m, tm),),
        in_specs=[pl.BlockSpec((tm, d), lambda i: (i, 0)),
                  pl.BlockSpec((1, d), lambda i: (0, 0)),
                  pl.BlockSpec((1, d), lambda i: (0, 0))],
        out_specs=pl.BlockSpec((tm, d), lambda i: (i, 0)),
        compiler_params=_mosaic("parallel"),
    )(x, gamma.reshape(1, d), beta.reshape(1, d))


def _attention_kernel(qkv_ref, o_ref, *, num_heads, scale):
    # qkv_ref: [1, S, 3D] packed (q|k|v).  Heads are split with static lane slices in-kernel, so no
    # head split/merge transposes hit HBM.  Score/PV matmuls kept in f32 (tiny S x dh tiles).
    S = qkv_ref.shape[1]
    D = qkv_ref.shape[2] // 3
    dh = D // num_heads
    qkv = qkv_ref[0].astype(jnp.float32)                       # [S, 3D]
    head_outs = []
    for h in range(num_heads):                                 # static head loop (nh=4)
        q = qkv[:, h * dh:(h + 1) * dh]
        k = qkv[:, D + h * dh:D + (h + 1) * dh]
        v = qkv[:, 2 * D + h * dh:2 * D + (h + 1) * dh]
        # q @ k^T without an explicit transpose: contract the last dim of both operands.
        s = jax.lax.dot_general(q, k, (((1,), (1,)), ((), ())),
                                preferred_element_type=jnp.float32) * scale    # [S, S]
        m = jnp.max(s, axis=-1, keepdims=True)
        p = jnp.exp(s - m)
        p = p * pl.reciprocal(jnp.sum(p, axis=-1, keepdims=True), approx=True)
        head_outs.append(jnp.dot(p, v, preferred_element_type=jnp.float32))    # [S, dh]
    # Single lane-dense store with all heads packed back into [S, D].
    o_ref[0, :, :] = jnp.concatenate(head_outs, axis=-1).astype(o_ref.dtype)


def pallas_attention(qkv, num_heads):
    B, S, d3 = qkv.shape
    D = d3 // 3
    dh = D // num_heads
    return pl.pallas_call(
        functools.partial(_attention_kernel, num_heads=num_heads, scale=dh ** -0.5),
        out_shape=jax.ShapeDtypeStruct((B, S, D), qkv.dtype),
        grid=(B,),
        in_specs=[pl.BlockSpec((1, S, d3), lambda b: (b, 0, 0))],
        out_specs=pl.BlockSpec((1, S, D), lambda b: (b, 0, 0)),
        compiler_params=_mosaic("parallel"),
    )(qkv)


# ----------------------------------- CLIP vision model -----------------------------------
def _encoder_layer(h, lp, B, S):
    """h: [B*S, D] flattened activations (kept 2-D between kernels; no HBM transposes)."""
    M, D = h.shape
    # attention block: LN1 fused into the fused-QKV GEMM; o_proj fused with bias + residual add
    qkv = pallas_ln_linear(h, lp["ln1_g"], lp["ln1_b"], lp["qkv_w"], lp["qkv_b"])      # [M, 3D]
    attn = pallas_attention(qkv.reshape(B, S, 3 * D), NUM_HEADS)                       # [B, S, D]
    h = pallas_linear_residual(attn.reshape(M, D), lp["o_w"], lp["o_b"], h)            # [M, D]
    # MLP block: LN2 fused into fc1 (+quick_gelu); fc2 fused with bias + residual add
    f = pallas_ln_linear(h, lp["ln2_g"], lp["ln2_b"], lp["fc1_w"], lp["fc1_b"],
                         activation="quick_gelu")                                      # [M, I]
    h = pallas_linear_residual(f, lp["fc2_w"], lp["fc2_b"], h)                         # [M, D]
    return h


def clip_vision_selected_hidden(pixel_values, params):
    """HF CLIPVisionModel(output_hidden_states=True).hidden_states[SELECT_LAYER]."""
    B, C, H, W = pixel_values.shape
    P = PATCH_SIZE
    nh_s, nw_s = H // P, W // P
    N, D = nh_s * nw_s, HIDDEN

    # patch-embedding conv (stride=patch, no bias) == unfold + matmul; flatten order (c, ph, pw)
    patches = pixel_values.reshape(B, C, nh_s, P, nw_s, P).transpose(0, 2, 4, 1, 3, 5)
    patches = patches.reshape(B * N, C * P * P)
    x = pallas_matmul(patches, params["patch_w"]).reshape(B, N, D)

    cls = jnp.broadcast_to(params["class_embedding"].reshape(1, 1, D), (B, 1, D))
    x = jnp.concatenate([cls, x], axis=1) + params["pos_embedding"][None]   # [B, 1+N, D]
    S = N + 1

    h = pallas_layernorm(x.reshape(B * S, D), params["pre_ln_g"], params["pre_ln_b"])  # [B*S, D]
    hidden_states = [h]
    for lp in params["layers"]:
        h = _encoder_layer(h, lp, B, S)
        hidden_states.append(h)
    return hidden_states[SELECT_LAYER].reshape(B, S, D)


def forward_feature(images, params):
    """CLIPVisionTowerS2.forward_feature: run tower, select 'patch' features (drop CLS)."""
    hs = clip_vision_selected_hidden(images.astype(jnp.float32), params)
    if SELECT_FEATURE == "patch":
        hs = hs[:, 1:]
    return hs.astype(images.dtype)


# ----------------------------------- S2 multiscale wrapper -----------------------------------
def s2_forward(images, params):
    """s2wrapper.forward(model, images, img_sizes=S2_SCALES, max_split_size=S2_SPLIT_SIZE)."""
    B, C, _, _ = images.shape
    num_splits = [math.ceil(s / S2_SPLIT_SIZE) for s in S2_SCALES]

    # All scales produce split-size sub-images -> batch them through the tower in ONE call.
    split_batches = []
    for size, ns in zip(S2_SCALES, num_splits):
        # TODO(synk): jax 'bicubic' uses the Keys(a=-0.5) cubic kernel vs PyTorch bicubic a=-0.75.
        x = jax.image.resize(images.astype(jnp.float32), (B, C, size, size), method="bicubic")
        x = x.astype(images.dtype)
        h = size // ns
        # split_chessboard: new batch index = (i*ns + j)*B + b
        xs = x.reshape(B, C, ns, h, ns, h).transpose(2, 4, 0, 1, 3, 5).reshape(ns * ns * B, C, h, h)
        split_batches.append(xs)
    all_images = jnp.concatenate(split_batches, axis=0)            # [(sum ns^2)*B, C, split, split]
    all_feats = forward_feature(all_images, params)                # [(sum ns^2)*B, n, D]

    n_tok, D = all_feats.shape[1], all_feats.shape[2]
    side = int(round(n_tok ** 0.5))
    outs = []
    offset = 0
    for ns in num_splits:
        cnt = ns * ns * B
        feats = all_feats[offset:offset + cnt]
        offset += cnt
        f = feats.reshape(cnt, side, side, D).transpose(0, 3, 1, 2)         # b (h w) c -> b c h w
        # merge_chessboard
        f = f.reshape(ns, ns, B, D, side, side).transpose(2, 3, 0, 4, 1, 5)
        f = f.reshape(B, D, ns * side, ns * side)
        outs.append(f)

    out_size = outs[0].shape[-1]
    merged = []
    for f in outs:
        r = f.shape[-1] // out_size
        # F.interpolate(mode='area') with integer factor == exact average pooling
        f = f.reshape(B, f.shape[1], out_size, r, out_size, r).mean(axis=(3, 5))
        merged.append(f)
    out = jnp.concatenate(merged, axis=1)                            # [B, D*len(scales), hs, hs]
    return out.transpose(0, 2, 3, 1).reshape(B, out_size * out_size, -1)   # b c h w -> b (h w) c


# ----------------------------------- deterministic params -----------------------------------
def init_params(key):
    D, I = HIDDEN, INTERMEDIATE
    ks = iter(jax.random.split(key, 8 + NUM_LAYERS * 16))

    def nrm(shape, scale=0.02):
        return (scale * jax.random.normal(next(ks), shape)).astype(jnp.float32)

    params = {
        "patch_w": nrm((CHANNELS * PATCH_SIZE * PATCH_SIZE, D)),
        "class_embedding": nrm((D,)),
        "pos_embedding": nrm((NUM_PATCHES + 1, D)),
        "pre_ln_g": jnp.ones((D,), jnp.float32),
        "pre_ln_b": jnp.zeros((D,), jnp.float32),
        "layers": [],
    }
    for _ in range(NUM_LAYERS):
        q_w, k_w, v_w = nrm((D, D)), nrm((D, D)), nrm((D, D))
        q_b, k_b, v_b = nrm((D,)), nrm((D,)), nrm((D,))
        params["layers"].append({
            "ln1_g": jnp.ones((D,), jnp.float32), "ln1_b": jnp.zeros((D,), jnp.float32),
            # fused QKV projection: x @ [Wq | Wk | Wv]  (equivalent to 3 separate projections)
            "qkv_w": jnp.concatenate([q_w, k_w, v_w], axis=1),
            "qkv_b": jnp.concatenate([q_b, k_b, v_b], axis=0),
            "o_w": nrm((D, D)), "o_b": nrm((D,)),
            "ln2_g": jnp.ones((D,), jnp.float32), "ln2_b": jnp.zeros((D,), jnp.float32),
            "fc1_w": nrm((D, I)), "fc1_b": nrm((I,)),
            "fc2_w": nrm((I, D)), "fc2_b": nrm((D,)),
        })
    return params


# ----------------------------------- main -----------------------------------
if __name__ == "__main__":
    key = jax.random.PRNGKey(0)
    pkey, xkey = jax.random.split(key)
    params = init_params(pkey)

    # images preprocessed to the S2 image size (image_processor crop_size = s2_image_size)
    images = jax.random.normal(xkey, (2, CHANNELS, S2_IMAGE_SIZE, S2_IMAGE_SIZE), jnp.float32)

    features = jax.block_until_ready(jax.jit(s2_forward)(images, params))

    expected = (2, NUM_PATCHES, HIDDEN * len(S2_SCALES))   # hidden_size = config.hidden_size * n_scales
    assert features.shape == expected, (features.shape, expected)
    assert features.dtype == images.dtype
    print("KERNEL_OK")
</pallas_src>

<mosaic_0001>
module attributes {stable_mosaic.version = 11 : i64} {
  func.func @_matmul_kernel(%arg0: i32, %arg1: i32, %arg2: memref<128x48xf32, #tpu.memory_space<vmem>>, %arg3: memref<48x32xf32, #tpu.memory_space<vmem>>, %arg4: memref<128x32xf32, #tpu.memory_space<vmem>>) attributes {dimension_semantics = [#tpu.dimension_semantics<parallel>, #tpu.dimension_semantics<parallel>], iteration_bounds = array<i64: 2, 1>, scalar_prefetch = 0 : i64, scratch_operands = 0 : i64, tpu.core_type = #tpu.core_type<tc>, window_params = [{transform_indices = @transform_0, window_bounds = array<i64: 128, 48>}, {transform_indices = @transform_1, window_bounds = array<i64: 48, 32>}, {transform_indices = @transform_2, window_bounds = array<i64: 128, 32>}]} {
    %c0 = arith.constant 0 : index
    %c0_0 = arith.constant 0 : index
    %0 = vector.load %arg2[%c0, %c0_0] : memref<128x48xf32, #tpu.memory_space<vmem>>, vector<128x48xf32>
    %1 = arith.truncf %0 : vector<128x48xf32> to vector<128x48xbf16>
    %c0_1 = arith.constant 0 : index
    %c0_2 = arith.constant 0 : index
    %2 = vector.load %arg3[%c0_1, %c0_2] : memref<48x32xf32, #tpu.memory_space<vmem>>, vector<48x32xf32>
    %3 = arith.truncf %2 : vector<48x32xf32> to vector<48x32xbf16>
    %cst = arith.constant dense<0.000000e+00> : vector<128x32xf32>
    %4 = tpu.matmul %1, %3, %cst {dimension_numbers = #tpu.dot_dimension_numbers<[1], [0], [0], [1], [0, 0, 1, 1], [], []>} : vector<128x48xbf16>, vector<48x32xbf16>, vector<128x32xf32> -> vector<128x32xf32>
    %c0_3 = arith.constant 0 : index
    %c0_4 = arith.constant 0 : index
    %5 = vector.load %arg4[%c0_3, %c0_4] : memref<128x32xf32, #tpu.memory_space<vmem>>, vector<128x32xf32>
    tpu.vector_store %arg4[%c0_3, %c0_4], %4 {strides = array<i32>} : memref<128x32xf32, #tpu.memory_space<vmem>>, vector<128x32xf32>,
    return
  }
  func.func @transform_0(%arg0: i32, %arg1: i32) -> (i32, i32) {
    %c0_i32 = arith.constant 0 : i32
    %c0_i32_0 = arith.constant 0 : i32
    return %arg0, %c0_i32 : i32, i32
  }
  func.func @transform_1(%arg0: i32, %arg1: i32) -> (i32, i32) {
    %c0_i32 = arith.constant 0 : i32
    %c0_i32_0 = arith.constant 0 : i32
    return %c0_i32, %arg1 : i32, i32
  }
  func.func @transform_2(%arg0: i32, %arg1: i32) -> (i32, i32) {
    %c0_i32 = arith.constant 0 : i32
    return %arg0, %arg1 : i32, i32
  }
}

module attributes {stable_mosaic.version = 11 : i64} {
  func.func @_layernorm_kernel(%arg0: i32, %arg1: memref<128x32xf32, #tpu.memory_space<vmem>>, %arg2: memref<1x32xf32, #tpu.memory_space<vmem>>, %arg3: memref<1x32xf32, #tpu.memory_space<vmem>>, %arg4: memref<128x32xf32, #tpu.memory_space<vmem>>) attributes {dimension_semantics = [#tpu.dimension_semantics<parallel>], iteration_bounds = array<i64: 2>, scalar_prefetch = 0 : i64, scratch_operands = 0 : i64, tpu.core_type = #tpu.core_type<tc>, window_params = [{transform_indices = @transform_0, window_bounds = array<i64: 128, 32>}, {pipeline_mode = #tpu.pipeline_mode<synchronous>, transform_indices = @transform_1, window_bounds = array<i64: 1, 32>}, {pipeline_mode = #tpu.pipeline_mode<synchronous>, transform_indices = @transform_2, window_bounds = array<i64: 1, 32>}, {transform_indices = @transform_3, window_bounds = array<i64: 128, 32>}]} {
    %c0 = arith.constant 0 : index
    %c0_0 = arith.constant 0 : index
    %0 = vector.load %arg1[%c0, %c0_0] : memref<128x32xf32, #tpu.memory_space<vmem>>, vector<128x32xf32>
    %cst = arith.constant dense<0.000000e+00> : vector<128xf32>
    %1 = vector.multi_reduction <add>, %0, %cst [1] : vector<128x32xf32> to vector<128xf32>
    %2 = vector.shape_cast %1 : vector<128xf32> to vector<128x1xf32>
    %cst_1 = arith.constant 3.200000e+01 : f32
    %3 = vector.broadcast %cst_1 : f32 to vector<128x1xf32>
    %4 = arith.divf %2, %3 : vector<128x1xf32>
    %5 = vector.broadcast %4 : vector<128x1xf32> to vector<128x32xf32>
    %6 = arith.subf %0, %5 : vector<128x32xf32>
    %7 = arith.mulf %6, %6 : vector<128x32xf32>
    %cst_2 = arith.constant dense<0.000000e+00> : vector<128xf32>
    %8 = vector.multi_reduction <add>, %7, %cst_2 [1] : vector<128x32xf32> to vector<128xf32>
    %9 = vector.shape_cast %8 : vector<128xf32> to vector<128x1xf32>
    %cst_3 = arith.constant 3.200000e+01 : f32
    %10 = vector.broadcast %cst_3 : f32 to vector<128x1xf32>
    %11 = arith.divf %9, %10 : vector<128x1xf32>
    %12 = vector.broadcast %4 : vector<128x1xf32> to vector<128x32xf32>
    %13 = arith.subf %0, %12 : vector<128x32xf32>
    %cst_4 = arith.constant 9.99999974E-6 : f32
    %14 = vector.broadcast %cst_4 : f32 to vector<128x1xf32>
    %15 = arith.addf %11, %14 : vector<128x1xf32>
    %16 = math.rsqrt %15 : vector<128x1xf32>
    %17 = vector.broadcast %16 : vector<128x1xf32> to vector<128x32xf32>
    %18 = arith.mulf %13, %17 : vector<128x32xf32>
    %c0_5 = arith.constant 0 : index
    %c0_6 = arith.constant 0 : index
    %19 = vector.load %arg2[%c0_5, %c0_6] : memref<1x32xf32, #tpu.memory_space<vmem>>, vector<1x32xf32>
    %20 = vector.broadcast %19 : vector<1x32xf32> to vector<128x32xf32>
    %21 = arith.mulf %18, %20 : vector<128x32xf32>
    %c0_7 = arith.constant 0 : index
    %c0_8 = arith.constant 0 : index
    %22 = vector.load %arg3[%c0_7, %c0_8] : memref<1x32xf32, #tpu.memory_space<vmem>>, vector<1x32xf32>
    %23 = vector.broadcast %22 : vector<1x32xf32> to vector<128x32xf32>
    %24 = arith.addf %21, %23 : vector<128x32xf32>
    %c0_9 = arith.constant 0 : index
    %c0_10 = arith.constant 0 : index
    %25 = vector.load %arg4[%c0_9, %c0_10] : memref<128x32xf32, #tpu.memory_space<vmem>>, vector<128x32xf32>
    tpu.vector_store %arg4[%c0_9, %c0_10], %24 {strides = array<i32>} : memref<128x32xf32, #tpu.memory_space<vmem>>, vector<128x32xf32>,
    return
  }
  func.func @transform_0(%arg0: i32) -> (i32, i32) {
    %c0_i32 = arith.constant 0 : i32
    %c0_i32_0 = arith.constant 0 : i32
    return %arg0, %c0_i32 : i32, i32
  }
  func.func @transform_1(%arg0: i32) -> (i32, i32) {
    %c0_i32 = arith.constant 0 : i32
    %c0_i32_0 = arith.constant 0 : i32
    %c0_i32_1 = arith.constant 0 : i32
    return %c0_i32, %c0_i32_0 : i32, i32
  }
  func.func @transform_2(%arg0: i32) -> (i32, i32) {
    %c0_i32 = arith.constant 0 : i32
    %c0_i32_0 = arith.constant 0 : i32
    %c0_i32_1 = arith.constant 0 : i32
    return %c0_i32, %c0_i32_0 : i32, i32
  }
  func.func @transform_3(%arg0: i32) -> (i32, i32) {
    %c0_i32 = arith.constant 0 : i32
    %c0_i32_0 = arith.constant 0 : i32
    return %arg0, %c0_i32 : i32, i32
  }
}

module attributes {stable_mosaic.version = 11 : i64} {
  func.func @_attention_kernel(%arg0: i32, %arg1: memref<1x17x96xf32, #tpu.memory_space<vmem>>, %arg2: memref<1x17x32xf32, #tpu.memory_space<vmem>>) attributes {dimension_semantics = [#tpu.dimension_semantics<parallel>], iteration_bounds = array<i64: 10>, scalar_prefetch = 0 : i64, scratch_operands = 0 : i64, tpu.core_type = #tpu.core_type<tc>, window_params = [{transform_indices = @transform_0, window_bounds = array<i64: 1, 17, 96>}, {transform_indices = @transform_1, window_bounds = array<i64: 1, 17, 32>}]} {
    %c0 = arith.constant 0 : index
    %c0_0 = arith.constant 0 : index
    %c0_1 = arith.constant 0 : index
    %0 = vector.load %arg1[%c0, %c0_0, %c0_1] : memref<1x17x96xf32, #tpu.memory_space<vmem>>, vector<1x17x96xf32>
    %1 = vector.shape_cast %0 : vector<1x17x96xf32> to vector<17x96xf32>
    %2 = vector.extract_strided_slice %1 {offsets = [0, 0], sizes = [17, 8], strides = [1, 1]} : vector<17x96xf32> to vector<17x8xf32>
    %3 = vector.extract_strided_slice %1 {offsets = [0, 32], sizes = [17, 8], strides = [1, 1]} : vector<17x96xf32> to vector<17x8xf32>
    %4 = vector.extract_strided_slice %1 {offsets = [0, 64], sizes = [17, 8], strides = [1, 1]} : vector<17x96xf32> to vector<17x8xf32>
    %cst = arith.constant dense<0.000000e+00> : vector<17x17xf32>
    %5 = tpu.matmul %2, %3, %cst {dimension_numbers = #tpu.dot_dimension_numbers<[1], [1], [0], [0], [0, 0, 1, 0], [], []>} : vector<17x8xf32>, vector<17x8xf32>, vector<17x17xf32> -> vector<17x17xf32>
    %cst_2 = arith.constant 0.353553385 : f32
    %6 = vector.broadcast %cst_2 : f32 to vector<17x17xf32>
    %7 = arith.mulf %5, %6 : vector<17x17xf32>
    %cst_3 = arith.constant dense<0xFF800000> : vector<17xf32>
    %8 = vector.multi_reduction <maximumf>, %7, %cst_3 [1] : vector<17x17xf32> to vector<17xf32>
    %9 = vector.shape_cast %8 : vector<17xf32> to vector<17x1xf32>
    %10 = vector.broadcast %9 : vector<17x1xf32> to vector<17x17xf32>
    %11 = arith.subf %7, %10 : vector<17x17xf32>
    %12 = math.exp %11 : vector<17x17xf32>
    %cst_4 = arith.constant dense<0.000000e+00> : vector<17xf32>
    %13 = vector.multi_reduction <add>, %12, %cst_4 [1] : vector<17x17xf32> to vector<17xf32>
    %14 = vector.shape_cast %13 : vector<17xf32> to vector<17x1xf32>
    %15 = tpu.reciprocal %14 {approx = true} : vector<17x1xf32> -> vector<17x1xf32>
    %16 = vector.broadcast %15 : vector<17x1xf32> to vector<17x17xf32>
    %17 = arith.mulf %12, %16 : vector<17x17xf32>
    %cst_5 = arith.constant dense<0.000000e+00> : vector<17x8xf32>
    %18 = tpu.matmul %17, %4, %cst_5 {dimension_numbers = #tpu.dot_dimension_numbers<[1], [0], [0], [1], [0, 0, 1, 1], [], []>} : vector<17x17xf32>, vector<17x8xf32>, vector<17x8xf32> -> vector<17x8xf32>
    %19 = vector.extract_strided_slice %1 {offsets = [0, 8], sizes = [17, 8], strides = [1, 1]} : vector<17x96xf32> to vector<17x8xf32>
    %20 = vector.extract_strided_slice %1 {offsets = [0, 40], sizes = [17, 8], strides = [1, 1]} : vector<17x96xf32> to vector<17x8xf32>
    %21 = vector.extract_strided_slice %1 {offsets = [0, 72], sizes = [17, 8], strides = [1, 1]} : vector<17x96xf32> to vector<17x8xf32>
    %cst_6 = arith.constant dense<0.000000e+00> : vector<17x17xf32>
    %22 = tpu.matmul %19, %20, %cst_6 {dimension_numbers = #tpu.dot_dimension_numbers<[1], [1], [0], [0], [0, 0, 1, 0], [], []>} : vector<17x8xf32>, vector<17x8xf32>, vector<17x17xf32> -> vector<17x17xf32>
    %cst_7 = arith.constant 0.353553385 : f32
    %23 = vector.broadcast %cst_7 : f32 to vector<17x17xf32>
    %24 = arith.mulf %22, %23 : vector<17x17xf32>
    %cst_8 = arith.constant dense<0xFF800000> : vector<17xf32>
    %25 = vector.multi_reduction <maximumf>, %24, %cst_8 [1] : vector<17x17xf32> to vector<17xf32>
    %26 = vector.shape_cast %25 : vector<17xf32> to vector<17x1xf32>
    %27 = vector.broadcast %26 : vector<17x1xf32> to vector<17x17xf32>
    %28 = arith.subf %24, %27 : vector<17x17xf32>
    %29 = math.exp %28 : vector<17x17xf32>
    %cst_9 = arith.constant dense<0.000000e+00> : vector<17xf32>
    %30 = vector.multi_reduction <add>, %29, %cst_9 [1] : vector<17x17xf32> to vector<17xf32>
    %31 = vector.shape_cast %30 : vector<17xf32> to vector<17x1xf32>
    %32 = tpu.reciprocal %31 {approx = true} : vector<17x1xf32> -> vector<17x1xf32>
    %33 = vector.broadcast %32 : vector<17x1xf32> to vector<17x17xf32>
    %34 = arith.mulf %29, %33 : vector<17x17xf32>
    %cst_10 = arith.constant dense<0.000000e+00> : vector<17x8xf32>
    %35 = tpu.matmul %34, %21, %cst_10 {dimension_numbers = #tpu.dot_dimension_numbers<[1], [0], [0], [1], [0, 0, 1, 1], [], []>} : vector<17x17xf32>, vector<17x8xf32>, vector<17x8xf32> -> vector<17x8xf32>
    %36 = vector.extract_strided_slice %1 {offsets = [0, 16], sizes = [17, 8], strides = [1, 1]} : vector<17x96xf32> to vector<17x8xf32>
    %37 = vector.extract_strided_slice %1 {offsets = [0, 48], sizes = [17, 8], strides = [1, 1]} : vector<17x96xf32> to vector<17x8xf32>
    %38 = vector.extract_strided_slice %1 {offsets = [0, 80], sizes = [17, 8], strides = [1, 1]} : vector<17x96xf32> to vector<17x8xf32>
    %cst_11 = arith.constant dense<0.000000e+00> : vector<17x17xf32>
    %39 = tpu.matmul %36, %37, %cst_11 {dimension_numbers = #tpu.dot_dimension_numbers<[1], [1], [0], [0], [0, 0, 1, 0], [], []>} : vector<17x8xf32>, vector<17x8xf32>, vector<17x17xf32> -> vector<17x17xf32>
    %cst_12 = arith.constant 0.353553385 : f32
    %40 = vector.broadcast %cst_12 : f32 to vector<17x17xf32>
    %41 = arith.mulf %39, %40 : vector<17x17xf32>
    %cst_13 = arith.constant dense<0xFF800000> : vector<17xf32>
    %42 = vector.multi_reduction <maximumf>, %41, %cst_13 [1] : vector<17x17xf32> to vector<17xf32>
    %43 = vector.shape_cast %42 : vector<17xf32> to vector<17x1xf32>
    %44 = vector.broadcast %43 : vector<17x1xf32> to vector<17x17xf32>
    %45 = arith.subf %41, %44 : vector<17x17xf32>
    %46 = math.exp %45 : vector<17x17xf32>
    %cst_14 = arith.constant dense<0.000000e+00> : vector<17xf32>
    %47 = vector.multi_reduction <add>, %46, %cst_14 [1] : vector<17x17xf32> to vector<17xf32>
    %48 = vector.shape_cast %47 : vector<17xf32> to vector<17x1xf32>
    %49 = tpu.reciprocal %48 {approx = true} : vector<17x1xf32> -> vector<17x1xf32>
    %50 = vector.broadcast %49 : vector<17x1xf32> to vector<17x17xf32>
    %51 = arith.mulf %46, %50 : vector<17x17xf32>
    %cst_15 = arith.constant dense<0.000000e+00> : vector<17x8xf32>
    %52 = tpu.matmul %51, %38, %cst_15 {dimension_numbers = #tpu.dot_dimension_numbers<[1], [0], [0], [1], [0, 0, 1, 1], [], []>} : vector<17x17xf32>, vector<17x8xf32>, vector<17x8xf32> -> vector<17x8xf32>
    %53 = vector.extract_strided_slice %1 {offsets = [0, 24], sizes = [17, 8], strides = [1, 1]} : vector<17x96xf32> to vector<17x8xf32>
    %54 = vector.extract_strided_slice %1 {offsets = [0, 56], sizes = [17, 8], strides = [1, 1]} : vector<17x96xf32> to vector<17x8xf32>
    %55 = vector.extract_strided_slice %1 {offsets = [0, 88], sizes = [17, 8], strides = [1, 1]} : vector<17x96xf32> to vector<17x8xf32>
    %cst_16 = arith.constant dense<0.000000e+00> : vector<17x17xf32>
    %56 = tpu.matmul %53, %54, %cst_16 {dimension_numbers = #tpu.dot_dimension_numbers<[1], [1], [0], [0], [0, 0, 1, 0], [], []>} : vector<17x8xf32>, vector<17x8xf32>, vector<17x17xf32> -> vector<17x17xf32>
    %cst_17 = arith.constant 0.353553385 : f32
    %57 = vector.broadcast %cst_17 : f32 to vector<17x17xf32>
    %58 = arith.mulf %56, %57 : vector<17x17xf32>
    %cst_18 = arith.constant dense<0xFF800000> : vector<17xf32>
    %59 = vector.multi_reduction <maximumf>, %58, %cst_18 [1] : vector<17x17xf32> to vector<17xf32>
    %60 = vector.shape_cast %59 : vector<17xf32> to vector<17x1xf32>
    %61 = vector.broadcast %60 : vector<17x1xf32> to vector<17x17xf32>
    %62 = arith.subf %58, %61 : vector<17x17xf32>
    %63 = math.exp %62 : vector<17x17xf32>
    %cst_19 = arith.constant dense<0.000000e+00> : vector<17xf32>
    %64 = vector.multi_reduction <add>, %63, %cst_19 [1] : vector<17x17xf32> to vector<17xf32>
    %65 = vector.shape_cast %64 : vector<17xf32> to vector<17x1xf32>
    %66 = tpu.reciprocal %65 {approx = true} : vector<17x1xf32> -> vector<17x1xf32>
    %67 = vector.broadcast %66 : vector<17x1xf32> to vector<17x17xf32>
    %68 = arith.mulf %63, %67 : vector<17x17xf32>
    %cst_20 = arith.constant dense<0.000000e+00> : vector<17x8xf32>
    %69 = tpu.matmul %68, %55, %cst_20 {dimension_numbers = #tpu.dot_dimension_numbers<[1], [0], [0], [1], [0, 0, 1, 1], [], []>} : vector<17x17xf32>, vector<17x8xf32>, vector<17x8xf32> -> vector<17x8xf32>
    %70 = tpu.concatenate %18, %35, %52, %69 in 1 : vector<17x8xf32>, vector<17x8xf32>, vector<17x8xf32>, vector<17x8xf32> -> vector<17x32xf32>
    %c0_21 = arith.constant 0 : index
    %c0_22 = arith.constant 0 : index
    %c0_23 = arith.constant 0 : index
    %71 = vector.load %arg2[%c0_21, %c0_22, %c0_23] : memref<1x17x32xf32, #tpu.memory_space<vmem>>, vector<1x17x32xf32>
    %72 = vector.shape_cast %71 : vector<1x17x32xf32> to vector<17x32xf32>
    %73 = vector.shape_cast %70 : vector<17x32xf32> to vector<1x17x32xf32>
    tpu.vector_store %arg2[%c0_21, %c0_22, %c0_23], %73 {strides = array<i32>} : memref<1x17x32xf32, #tpu.memory_space<vmem>>, vector<1x17x32xf32>,
    return
  }
  func.func @transform_0(%arg0: i32) -> (i32, i32, i32) {
    %c0_i32 = arith.constant 0 : i32
    %c0_i32_0 = arith.constant 0 : i32
    %c0_i32_1 = arith.constant 0 : i32
    return %arg0, %c0_i32, %c0_i32_0 : i32, i32, i32
  }
  func.func @transform_1(%arg0: i32) -> (i32, i32, i32) {
    %c0_i32 = arith.constant 0 : i32
    %c0_i32_0 = arith.constant 0 : i32
    %c0_i32_1 = arith.constant 0 : i32
    return %arg0, %c0_i32, %c0_i32_0 : i32, i32, i32
  }
}

module attributes {stable_mosaic.version = 11 : i64} {
  func.func @_ln_linear_kernel(%arg0: i32, %arg1: i32, %arg2: memref<128x32xf32, #tpu.memory_space<vmem>>, %arg3: memref<1x32xf32, #tpu.memory_space<vmem>>, %arg4: memref<1x32xf32, #tpu.memory_space<vmem>>, %arg5: memref<32x96xf32, #tpu.memory_space<vmem>>, %arg6: memref<1x96xf32, #tpu.memory_space<vmem>>, %arg7: memref<128x96xf32, #tpu.memory_space<vmem>>) attributes {dimension_semantics = [#tpu.dimension_semantics<parallel>, #tpu.dimension_semantics<parallel>], iteration_bounds = array<i64: 2, 1>, scalar_prefetch = 0 : i64, scratch_operands = 0 : i64, tpu.core_type = #tpu.core_type<tc>, window_params = [{transform_indices = @transform_0, window_bounds = array<i64: 128, 32>}, {pipeline_mode = #tpu.pipeline_mode<synchronous>, transform_indices = @transform_1, window_bounds = array<i64: 1, 32>}, {pipeline_mode = #tpu.pipeline_mode<synchronous>, transform_indices = @transform_2, window_bounds = array<i64: 1, 32>}, {transform_indices = @transform_3, window_bounds = array<i64: 32, 96>}, {transform_indices = @transform_4, window_bounds = array<i64: 1, 96>}, {transform_indices = @transform_5, window_bounds = array<i64: 128, 96>}]} {
    %c0 = arith.constant 0 : index
    %c0_0 = arith.constant 0 : index
    %0 = vector.load %arg2[%c0, %c0_0] : memref<128x32xf32, #tpu.memory_space<vmem>>, vector<128x32xf32>
    %cst = arith.constant dense<0.000000e+00> : vector<128xf32>
    %1 = vector.multi_reduction <add>, %0, %cst [1] : vector<128x32xf32> to vector<128xf32>
    %2 = vector.shape_cast %1 : vector<128xf32> to vector<128x1xf32>
    %cst_1 = arith.constant 3.200000e+01 : f32
    %3 = vector.broadcast %cst_1 : f32 to vector<128x1xf32>
    %4 = arith.divf %2, %3 : vector<128x1xf32>
    %5 = vector.broadcast %4 : vector<128x1xf32> to vector<128x32xf32>
    %6 = arith.subf %0, %5 : vector<128x32xf32>
    %7 = arith.mulf %6, %6 : vector<128x32xf32>
    %cst_2 = arith.constant dense<0.000000e+00> : vector<128xf32>
    %8 = vector.multi_reduction <add>, %7, %cst_2 [1] : vector<128x32xf32> to vector<128xf32>
    %9 = vector.shape_cast %8 : vector<128xf32> to vector<128x1xf32>
    %cst_3 = arith.constant 3.200000e+01 : f32
    %10 = vector.broadcast %cst_3 : f32 to vector<128x1xf32>
    %11 = arith.divf %9, %10 : vector<128x1xf32>
    %12 = vector.broadcast %4 : vector<128x1xf32> to vector<128x32xf32>
    %13 = arith.subf %0, %12 : vector<128x32xf32>
    %cst_4 = arith.constant 9.99999974E-6 : f32
    %14 = vector.broadcast %cst_4 : f32 to vector<128x1xf32>
    %15 = arith.addf %11, %14 : vector<128x1xf32>
    %16 = math.rsqrt %15 : vector<128x1xf32>
    %17 = vector.broadcast %16 : vector<128x1xf32> to vector<128x32xf32>
    %18 = arith.mulf %13, %17 : vector<128x32xf32>
    %c0_5 = arith.constant 0 : index
    %c0_6 = arith.constant 0 : index
    %19 = vector.load %arg3[%c0_5, %c0_6] : memref<1x32xf32, #tpu.memory_space<vmem>>, vector<1x32xf32>
    %20 = vector.broadcast %19 : vector<1x32xf32> to vector<128x32xf32>
    %21 = arith.mulf %18, %20 : vector<128x32xf32>
    %c0_7 = arith.constant 0 : index
    %c0_8 = arith.constant 0 : index
    %22 = vector.load %arg4[%c0_7, %c0_8] : memref<1x32xf32, #tpu.memory_space<vmem>>, vector<1x32xf32>
    %23 = vector.broadcast %22 : vector<1x32xf32> to vector<128x32xf32>
    %24 = arith.addf %21, %23 : vector<128x32xf32>
    %25 = arith.truncf %24 : vector<128x32xf32> to vector<128x32xbf16>
    %c0_9 = arith.constant 0 : index
    %c0_10 = arith.constant 0 : index
    %26 = vector.load %arg5[%c0_9, %c0_10] : memref<32x96xf32, #tpu.memory_space<vmem>>, vector<32x96xf32>
    %27 = arith.truncf %26 : vector<32x96xf32> to vector<32x96xbf16>
    %cst_11 = arith.constant dense<0.000000e+00> : vector<128x96xf32>
    %28 = tpu.matmul %25, %27, %cst_11 {dimension_numbers = #tpu.dot_dimension_numbers<[1], [0], [0], [1], [0, 0, 1, 1], [], []>} : vector<128x32xbf16>, vector<32x96xbf16>, vector<128x96xf32> -> vector<128x96xf32>
    %c0_12 = arith.constant 0 : index
    %c0_13 = arith.constant 0 : index
    %29 = vector.load %arg6[%c0_12, %c0_13] : memref<1x96xf32, #tpu.memory_space<vmem>>, vector<1x96xf32>
    %30 = vector.broadcast %29 : vector<1x96xf32> to vector<128x96xf32>
    %31 = arith.addf %28, %30 : vector<128x96xf32>
    %c0_14 = arith.constant 0 : index
    %c0_15 = arith.constant 0 : index
    %32 = vector.load %arg7[%c0_14, %c0_15] : memref<128x96xf32, #tpu.memory_space<vmem>>, vector<128x96xf32>
    tpu.vector_store %arg7[%c0_14, %c0_15], %31 {strides = array<i32>} : memref<128x96xf32, #tpu.memory_space<vmem>>, vector<128x96xf32>,
    return
  }
  func.func @transform_0(%arg0: i32, %arg1: i32) -> (i32, i32) {
    %c0_i32 = arith.constant 0 : i32
    %c0_i32_0 = arith.constant 0 : i32
    return %arg0, %c0_i32 : i32, i32
  }
  func.func @transform_1(%arg0: i32, %arg1: i32) -> (i32, i32) {
    %c0_i32 = arith.constant 0 : i32
    %c0_i32_0 = arith.constant 0 : i32
    %c0_i32_1 = arith.constant 0 : i32
    return %c0_i32, %c0_i32_0 : i32, i32
  }
  func.func @transform_2(%arg0: i32, %arg1: i32) -> (i32, i32) {
    %c0_i32 = arith.constant 0 : i32
    %c0_i32_0 = arith.constant 0 : i32
    %c0_i32_1 = arith.constant 0 : i32
    return %c0_i32, %c0_i32_0 : i32, i32
  }
  func.func @transform_3(%arg0: i32, %arg1: i32) -> (i32, i32) {
    %c0_i32 = arith.constant 0 : i32
    %c0_i32_0 = arith.constant 0 : i32
    return %c0_i32, %arg1 : i32, i32
  }
  func.func @transform_4(%arg0: i32, %arg1: i32) -> (i32, i32) {
    %c0_i32 = arith.constant 0 : i32
    %c0_i32_0 = arith.constant 0 : i32
    return %c0_i32, %arg1 : i32, i32
  }
  func.func @transform_5(%arg0: i32, %arg1: i32) -> (i32, i32) {
    %c0_i32 = arith.constant 0 : i32
    return %arg0, %arg1 : i32, i32
  }
}

module attributes {stable_mosaic.version = 11 : i64} {
  func.func @_linear_residual_kernel(%arg0: i32, %arg1: i32, %arg2: memref<128x32xf32, #tpu.memory_space<vmem>>, %arg3: memref<32x32xf32, #tpu.memory_space<vmem>>, %arg4: memref<1x32xf32, #tpu.memory_space<vmem>>, %arg5: memref<128x32xf32, #tpu.memory_space<vmem>>, %arg6: memref<128x32xf32, #tpu.memory_space<vmem>>) attributes {dimension_semantics = [#tpu.dimension_semantics<parallel>, #tpu.dimension_semantics<parallel>], iteration_bounds = array<i64: 2, 1>, scalar_prefetch = 0 : i64, scratch_operands = 0 : i64, tpu.core_type = #tpu.core_type<tc>, window_params = [{transform_indices = @transform_0, window_bounds = array<i64: 128, 32>}, {transform_indices = @transform_1, window_bounds = array<i64: 32, 32>}, {transform_indices = @transform_2, window_bounds = array<i64: 1, 32>}, {transform_indices = @transform_3, window_bounds = array<i64: 128, 32>}, {transform_indices = @transform_4, window_bounds = array<i64: 128, 32>}]} {
    %c0 = arith.constant 0 : index
    %c0_0 = arith.constant 0 : index
    %0 = vector.load %arg2[%c0, %c0_0] : memref<128x32xf32, #tpu.memory_space<vmem>>, vector<128x32xf32>
    %1 = arith.truncf %0 : vector<128x32xf32> to vector<128x32xbf16>
    %c0_1 = arith.constant 0 : index
    %c0_2 = arith.constant 0 : index
    %2 = vector.load %arg3[%c0_1, %c0_2] : memref<32x32xf32, #tpu.memory_space<vmem>>, vector<32x32xf32>
    %3 = arith.truncf %2 : vector<32x32xf32> to vector<32x32xbf16>
    %cst = arith.constant dense<0.000000e+00> : vector<128x32xf32>
    %4 = tpu.matmul %1, %3, %cst {dimension_numbers = #tpu.dot_dimension_numbers<[1], [0], [0], [1], [0, 0, 1, 1], [], []>} : vector<128x32xbf16>, vector<32x32xbf16>, vector<128x32xf32> -> vector<128x32xf32>
    %c0_3 = arith.constant 0 : index
    %c0_4 = arith.constant 0 : index
    %5 = vector.load %arg4[%c0_3, %c0_4] : memref<1x32xf32, #tpu.memory_space<vmem>>, vector<1x32xf32>
    %6 = vector.broadcast %5 : vector<1x32xf32> to vector<128x32xf32>
    %7 = arith.addf %4, %6 : vector<128x32xf32>
    %c0_5 = arith.constant 0 : index
    %c0_6 = arith.constant 0 : index
    %8 = vector.load %arg5[%c0_5, %c0_6] : memref<128x32xf32, #tpu.memory_space<vmem>>, vector<128x32xf32>
    %9 = arith.addf %7, %8 : vector<128x32xf32>
    %c0_7 = arith.constant 0 : index
    %c0_8 = arith.constant 0 : index
    %10 = vector.load %arg6[%c0_7, %c0_8] : memref<128x32xf32, #tpu.memory_space<vmem>>, vector<128x32xf32>
    tpu.vector_store %arg6[%c0_7, %c0_8], %9 {strides = array<i32>} : memref<128x32xf32, #tpu.memory_space<vmem>>, vector<128x32xf32>,
    return
  }
  func.func @transform_0(%arg0: i32, %arg1: i32) -> (i32, i32) {
    %c0_i32 = arith.constant 0 : i32
    %c0_i32_0 = arith.constant 0 : i32
    return %arg0, %c0_i32 : i32, i32
  }
  func.func @transform_1(%arg0: i32, %arg1: i32) -> (i32, i32) {
    %c0_i32 = arith.constant 0 : i32
    %c0_i32_0 = arith.constant 0 : i32
    return %c0_i32, %arg1 : i32, i32
  }
  func.func @transform_2(%arg0: i32, %arg1: i32) -> (i32, i32) {
    %c0_i32 = arith.constant 0 : i32
    %c0_i32_0 = arith.constant 0 : i32
    return %c0_i32, %arg1 : i32, i32
  }
  func.func @transform_3(%arg0: i32, %arg1: i32) -> (i32, i32) {
    %c0_i32 = arith.constant 0 : i32
    return %arg0, %arg1 : i32, i32
  }
  func.func @transform_4(%arg0: i32, %arg1: i32) -> (i32, i32) {
    %c0_i32 = arith.constant 0 : i32
    return %arg0, %arg1 : i32, i32
  }
}

module attributes {stable_mosaic.version = 11 : i64} {
  func.func @_ln_linear_kernel(%arg0: i32, %arg1: i32, %arg2: memref<128x32xf32, #tpu.memory_space<vmem>>, %arg3: memref<1x32xf32, #tpu.memory_space<vmem>>, %arg4: memref<1x32xf32, #tpu.memory_space<vmem>>, %arg5: memref<32x64xf32, #tpu.memory_space<vmem>>, %arg6: memref<1x64xf32, #tpu.memory_space<vmem>>, %arg7: memref<128x64xf32, #tpu.memory_space<vmem>>) attributes {dimension_semantics = [#tpu.dimension_semantics<parallel>, #tpu.dimension_semantics<parallel>], iteration_bounds = array<i64: 2, 1>, scalar_prefetch = 0 : i64, scratch_operands = 0 : i64, tpu.core_type = #tpu.core_type<tc>, window_params = [{transform_indices = @transform_0, window_bounds = array<i64: 128, 32>}, {pipeline_mode = #tpu.pipeline_mode<synchronous>, transform_indices = @transform_1, window_bounds = array<i64: 1, 32>}, {pipeline_mode = #tpu.pipeline_mode<synchronous>, transform_indices = @transform_2, window_bounds = array<i64: 1, 32>}, {transform_indices = @transform_3, window_bounds = array<i64: 32, 64>}, {transform_indices = @transform_4, window_bounds = array<i64: 1, 64>}, {transform_indices = @transform_5, window_bounds = array<i64: 128, 64>}]} {
    %c0 = arith.constant 0 : index
    %c0_0 = arith.constant 0 : index
    %0 = vector.load %arg2[%c0, %c0_0] : memref<128x32xf32, #tpu.memory_space<vmem>>, vector<128x32xf32>
    %cst = arith.constant dense<0.000000e+00> : vector<128xf32>
    %1 = vector.multi_reduction <add>, %0, %cst [1] : vector<128x32xf32> to vector<128xf32>
    %2 = vector.shape_cast %1 : vector<128xf32> to vector<128x1xf32>
    %cst_1 = arith.constant 3.200000e+01 : f32
    %3 = vector.broadcast %cst_1 : f32 to vector<128x1xf32>
    %4 = arith.divf %2, %3 : vector<128x1xf32>
    %5 = vector.broadcast %4 : vector<128x1xf32> to vector<128x32xf32>
    %6 = arith.subf %0, %5 : vector<128x32xf32>
    %7 = arith.mulf %6, %6 : vector<128x32xf32>
    %cst_2 = arith.constant dense<0.000000e+00> : vector<128xf32>
    %8 = vector.multi_reduction <add>, %7, %cst_2 [1] : vector<128x32xf32> to vector<128xf32>
    %9 = vector.shape_cast %8 : vector<128xf32> to vector<128x1xf32>
    %cst_3 = arith.constant 3.200000e+01 : f32
    %10 = vector.broadcast %cst_3 : f32 to vector<128x1xf32>
    %11 = arith.divf %9, %10 : vector<128x1xf32>
    %12 = vector.broadcast %4 : vector<128x1xf32> to vector<128x32xf32>
    %13 = arith.subf %0, %12 : vector<128x32xf32>
    %cst_4 = arith.constant 9.99999974E-6 : f32
    %14 = vector.broadcast %cst_4 : f32 to vector<128x1xf32>
    %15 = arith.addf %11, %14 : vector<128x1xf32>
    %16 = math.rsqrt %15 : vector<128x1xf32>
    %17 = vector.broadcast %16 : vector<128x1xf32> to vector<128x32xf32>
    %18 = arith.mulf %13, %17 : vector<128x32xf32>
    %c0_5 = arith.constant 0 : index
    %c0_6 = arith.constant 0 : index
    %19 = vector.load %arg3[%c0_5, %c0_6] : memref<1x32xf32, #tpu.memory_space<vmem>>, vector<1x32xf32>
    %20 = vector.broadcast %19 : vector<1x32xf32> to vector<128x32xf32>
    %21 = arith.mulf %18, %20 : vector<128x32xf32>
    %c0_7 = arith.constant 0 : index
    %c0_8 = arith.constant 0 : index
    %22 = vector.load %arg4[%c0_7, %c0_8] : memref<1x32xf32, #tpu.memory_space<vmem>>, vector<1x32xf32>
    %23 = vector.broadcast %22 : vector<1x32xf32> to vector<128x32xf32>
    %24 = arith.addf %21, %23 : vector<128x32xf32>
    %25 = arith.truncf %24 : vector<128x32xf32> to vector<128x32xbf16>
    %c0_9 = arith.constant 0 : index
    %c0_10 = arith.constant 0 : index
    %26 = vector.load %arg5[%c0_9, %c0_10] : memref<32x64xf32, #tpu.memory_space<vmem>>, vector<32x64xf32>
    %27 = arith.truncf %26 : vector<32x64xf32> to vector<32x64xbf16>
    %cst_11 = arith.constant dense<0.000000e+00> : vector<128x64xf32>
    %28 = tpu.matmul %25, %27, %cst_11 {dimension_numbers = #tpu.dot_dimension_numbers<[1], [0], [0], [1], [0, 0, 1, 1], [], []>} : vector<128x32xbf16>, vector<32x64xbf16>, vector<128x64xf32> -> vector<128x64xf32>
    %c0_12 = arith.constant 0 : index
    %c0_13 = arith.constant 0 : index
    %29 = vector.load %arg6[%c0_12, %c0_13] : memref<1x64xf32, #tpu.memory_space<vmem>>, vector<1x64xf32>
    %30 = vector.broadcast %29 : vector<1x64xf32> to vector<128x64xf32>
    %31 = arith.addf %28, %30 : vector<128x64xf32>
    %cst_14 = arith.constant 1.702000e+00 : f32
    %32 = vector.broadcast %cst_14 : f32 to vector<128x64xf32>
    %33 = arith.mulf %32, %31 : vector<128x64xf32>
    %34 = arith.negf %33 : vector<128x64xf32>
    %35 = math.exp %34 : vector<128x64xf32>
    %cst_15 = arith.constant 1.000000e+00 : f32
    %36 = vector.broadcast %cst_15 : f32 to vector<128x64xf32>
    %37 = arith.addf %36, %35 : vector<128x64xf32>
    %38 = arith.divf %36, %37 : vector<128x64xf32>
    %39 = arith.mulf %31, %38 : vector<128x64xf32>
    %c0_16 = arith.constant 0 : index
    %c0_17 = arith.constant 0 : index
    %40 = vector.load %arg7[%c0_16, %c0_17] : memref<128x64xf32, #tpu.memory_space<vmem>>, vector<128x64xf32>
    tpu.vector_store %arg7[%c0_16, %c0_17], %39 {strides = array<i32>} : memref<128x64xf32, #tpu.memory_space<vmem>>, vector<128x64xf32>,
    return
  }
  func.func @transform_0(%arg0: i32, %arg1: i32) -> (i32, i32) {
    %c0_i32 = arith.constant 0 : i32
    %c0_i32_0 = arith.constant 0 : i32
    return %arg0, %c0_i32 : i32, i32
  }
  func.func @transform_1(%arg0: i32, %arg1: i32) -> (i32, i32) {
    %c0_i32 = arith.constant 0 : i32
    %c0_i32_0 = arith.constant 0 : i32
    %c0_i32_1 = arith.constant 0 : i32
    return %c0_i32, %c0_i32_0 : i32, i32
  }
  func.func @transform_2(%arg0: i32, %arg1: i32) -> (i32, i32) {
    %c0_i32 = arith.constant 0 : i32
    %c0_i32_0 = arith.constant 0 : i32
    %c0_i32_1 = arith.constant 0 : i32
    return %c0_i32, %c0_i32_0 : i32, i32
  }
  func.func @transform_3(%arg0: i32, %arg1: i32) -> (i32, i32) {
    %c0_i32 = arith.constant 0 : i32
    %c0_i32_0 = arith.constant 0 : i32
    return %c0_i32, %arg1 : i32, i32
  }
  func.func @transform_4(%arg0: i32, %arg1: i32) -> (i32, i32) {
    %c0_i32 = arith.constant 0 : i32
    %c0_i32_0 = arith.constant 0 : i32
    return %c0_i32, %arg1 : i32, i32
  }
  func.func @transform_5(%arg0: i32, %arg1: i32) -> (i32, i32) {
    %c0_i32 = arith.constant 0 : i32
    return %arg0, %arg1 : i32, i32
  }
}

module attributes {stable_mosaic.version = 11 : i64} {
  func.func @_linear_residual_kernel(%arg0: i32, %arg1: i32, %arg2: memref<128x64xf32, #tpu.memory_space<vmem>>, %arg3: memref<64x32xf32, #tpu.memory_space<vmem>>, %arg4: memref<1x32xf32, #tpu.memory_space<vmem>>, %arg5: memref<128x32xf32, #tpu.memory_space<vmem>>, %arg6: memref<128x32xf32, #tpu.memory_space<vmem>>) attributes {dimension_semantics = [#tpu.dimension_semantics<parallel>, #tpu.dimension_semantics<parallel>], iteration_bounds = array<i64: 2, 1>, scalar_prefetch = 0 : i64, scratch_operands = 0 : i64, tpu.core_type = #tpu.core_type<tc>, window_params = [{transform_indices = @transform_0, window_bounds = array<i64: 128, 64>}, {transform_indices = @transform_1, window_bounds = array<i64: 64, 32>}, {transform_indices = @transform_2, window_bounds = array<i64: 1, 32>}, {transform_indices = @transform_3, window_bounds = array<i64: 128, 32>}, {transform_indices = @transform_4, window_bounds = array<i64: 128, 32>}]} {
    %c0 = arith.constant 0 : index
    %c0_0 = arith.constant 0 : index
    %0 = vector.load %arg2[%c0, %c0_0] : memref<128x64xf32, #tpu.memory_space<vmem>>, vector<128x64xf32>
    %1 = arith.truncf %0 : vector<128x64xf32> to vector<128x64xbf16>
    %c0_1 = arith.constant 0 : index
    %c0_2 = arith.constant 0 : index
    %2 = vector.load %arg3[%c0_1, %c0_2] : memref<64x32xf32, #tpu.memory_space<vmem>>, vector<64x32xf32>
    %3 = arith.truncf %2 : vector<64x32xf32> to vector<64x32xbf16>
    %cst = arith.constant dense<0.000000e+00> : vector<128x32xf32>
    %4 = tpu.matmul %1, %3, %cst {dimension_numbers = #tpu.dot_dimension_numbers<[1], [0], [0], [1], [0, 0, 1, 1], [], []>} : vector<128x64xbf16>, vector<64x32xbf16>, vector<128x32xf32> -> vector<128x32xf32>
    %c0_3 = arith.constant 0 : index
    %c0_4 = arith.constant 0 : index
    %5 = vector.load %arg4[%c0_3, %c0_4] : memref<1x32xf32, #tpu.memory_space<vmem>>, vector<1x32xf32>
    %6 = vector.broadcast %5 : vector<1x32xf32> to vector<128x32xf32>
    %7 = arith.addf %4, %6 : vector<128x32xf32>
    %c0_5 = arith.constant 0 : index
    %c0_6 = arith.constant 0 : index
    %8 = vector.load %arg5[%c0_5, %c0_6] : memref<128x32xf32, #tpu.memory_space<vmem>>, vector<128x32xf32>
    %9 = arith.addf %7, %8 : vector<128x32xf32>
    %c0_7 = arith.constant 0 : index
    %c0_8 = arith.constant 0 : index
    %10 = vector.load %arg6[%c0_7, %c0_8] : memref<128x32xf32, #tpu.memory_space<vmem>>, vector<128x32xf32>
    tpu.vector_store %arg6[%c0_7, %c0_8], %9 {strides = array<i32>} : memref<128x32xf32, #tpu.memory_space<vmem>>, vector<128x32xf32>,
    return
  }
  func.func @transform_0(%arg0: i32, %arg1: i32) -> (i32, i32) {
    %c0_i32 = arith.constant 0 : i32
    %c0_i32_0 = arith.constant 0 : i32
    return %arg0, %c0_i32 : i32, i32
  }
  func.func @transform_1(%arg0: i32, %arg1: i32) -> (i32, i32) {
    %c0_i32 = arith.constant 0 : i32
    %c0_i32_0 = arith.constant 0 : i32
    return %c0_i32, %arg1 : i32, i32
  }
  func.func @transform_2(%arg0: i32, %arg1: i32) -> (i32, i32) {
    %c0_i32 = arith.constant 0 : i32
    %c0_i32_0 = arith.constant 0 : i32
    return %c0_i32, %arg1 : i32, i32
  }
  func.func @transform_3(%arg0: i32, %arg1: i32) -> (i32, i32) {
    %c0_i32 = arith.constant 0 : i32
    return %arg0, %arg1 : i32, i32
  }
  func.func @transform_4(%arg0: i32, %arg1: i32) -> (i32, i32) {
    %c0_i32 = arith.constant 0 : i32
    return %arg0, %arg1 : i32, i32
  }
}

</mosaic_0001>

<llo_original>
// kernel: s2_forward.7
$region0: #{s2_forward.7}
  #allocation0 [shape = 'u32[]', space=smem, size = 0x4, offset = 0x4, fixed_abs, tag = 'smem constant byte address 0x4 - core index']
  #allocation1 [shape = 'u32[72,128]{1,0:T(1,128)}', space=vmem, size = 0x9000, scoped, tag = 'internal scratch']
  %s0 = inlined_call_operand.vmem [shape: f32[160,48], index: 0, kind: input, shape index: {}]
  %s1 = inlined_call_operand.vmem [shape: f32[48,32], index: 1, kind: input, shape index: {}]
  %s2 = inlined_call_operand.vmem [shape: f32[160,32], index: 2, kind: output, shape index: {}]
  %s3 = sld [smem:[#allocation0]]
  $region89: #{s2_forward.7} parent=0
    _
  %s5 = ssub.s32 1, %s3
  %s6 = scalar_select 0, %s5, %s3
  $region1: #{s2_forward.7} parent=0
    #allocation2 [shape = 'u8[131072]{0}', space=vmem, size = 0x20000, scoped, tag = 'output window, operand 0']
    loop: start=0, step=1, limit=4
    $region2: #{s2_forward.7} parent=1 // loop_pre_header
      _
    $region3: #{s2_forward.7} parent=1 // loop_header
      %s8 = sphi 0, %s12
      %p9 = scmp.ge.s32.totalorder %s8, 4
      %s15 = sphi 0, %s27
      %s16 = sphi 0, %s23
      %s17 = sphi 0, %s15
      %s18 = sphi 0, %s16
      %s19 = sphi 0, %s17
      %s20 = sphi 0, %s18
      %s30 = sphi 0, %s32
      %s33 = sphi 0, %s30
      %s34 = sphi 0, %s33
      %s50 = sphi 0, %s34
      %s56 = sphi 0, %s58
      %s59 = sphi 0, %s56
      %s60 = sphi 0, %s59
      %s76 = sphi 0, %s60
      %s84 = sphi 0, %s86
      %s87 = sphi 0, %s84
      %s88 = sphi 0, %s87
      %s104 = sphi 0, %s88
    $region4: #{s2_forward.7} parent=1 // loop_header_branch
      %11 = sbr.rel (%p9) target = $region8
    $region5: #{s2_forward.7} parent=1 // loop_body
      %s13 = ssub.s32 %s8, 1
      %s14 = ssub.s32 %s8, 2
      %s21 = sadd.s32 1, %s16
      %p22 = scmp.ge.s32.totalorder %s21, 1
      %s23 = scalar_select %p22, 0, %s21
      %s24 = sadd.s32 1, %s15
      %s25 = scalar_select %p22, %s24, %s15
      %p26 = scmp.ge.s32.totalorder %s25, 2
      %s27 = scalar_select %p26, 0, %s25
      %s28 = ssub.s32 %s15, %s27
      %p29 = scmp.eq.s32.totalorder %s28, 0
      %s31 = sadd.s32 %s30, 1
      %s32 = scalar_select %p29, %s30, %s31
      %p35 = pneg %p29
      %p36 = scmp.eq.s32.totalorder %s8, 1
      %p37 = por %p35, %p36
      %p38 = scmp.ne.s32.totalorder %s30, %s33
      %p39 = scmp.eq.s32.totalorder %s8, 0
      %p40 = por %p38, %p39
      %p41 = scmp.ne.s32.totalorder %s30, %s33
      %p42 = scmp.eq.s32.totalorder %s13, 1
      %p43 = por %p41, %p42
      %p44 = scmp.ne.s32.totalorder %s33, %s34
      %p45 = scmp.eq.s32.totalorder %s13, 0
      %p46 = por %p44, %p45
      %p47 = scmp.ne.s32.totalorder %s33, %s34
      %p48 = scmp.eq.s32.totalorder %s14, 1
      %p49 = por %p47, %p48
      %p51 = scmp.ne.s32.totalorder %s34, %s50
      %p52 = scmp.eq.s32.totalorder %s14, 0
      %p53 = por %p51, %p52
      %s54 = ssub.s32 %s16, %s23
      %p55 = scmp.eq.s32.totalorder %s54, 0
      %s57 = sadd.s32 %s56, 1
      %s58 = scalar_select %p55, %s56, %s57
      %p61 = pneg %p55
      %p62 = scmp.eq.s32.totalorder %s8, 1
      %p63 = por %p61, %p62
      %p64 = scmp.ne.s32.totalorder %s56, %s59
      %p65 = scmp.eq.s32.totalorder %s8, 0
      %p66 = por %p64, %p65
      %p67 = scmp.ne.s32.totalorder %s56, %s59
      %p68 = scmp.eq.s32.totalorder %s13, 1
      %p69 = por %p67, %p68
      %p70 = scmp.ne.s32.totalorder %s59, %s60
      %p71 = scmp.eq.s32.totalorder %s13, 0
      %p72 = por %p70, %p71
      %p73 = scmp.ne.s32.totalorder %s59, %s60
      %p74 = scmp.eq.s32.totalorder %s14, 1
      %p75 = por %p73, %p74
      %p77 = scmp.ne.s32.totalorder %s60, %s76
      %p78 = scmp.eq.s32.totalorder %s14, 0
      %p79 = por %p77, %p78
      %s80 = ssub.s32 %s15, %s27
      %s81 = ssub.s32 %s16, %s23
      %s82 = sor.u32 %s80, %s81
      %p83 = scmp.eq.s32.totalorder %s82, 0
      %s85 = sadd.s32 %s84, 1
      %s86 = scalar_select %p83, %s84, %s85
      %p89 = pneg %p83
      %p90 = scmp.eq.s32.totalorder %s8, 1
      %p91 = por %p89, %p90
      %p92 = scmp.ne.s32.totalorder %s84, %s87
      %p93 = scmp.eq.s32.totalorder %s8, 0
      %p94 = por %p92, %p93
      %p95 = scmp.ne.s32.totalorder %s84, %s87
      %p96 = scmp.eq.s32.totalorder %s13, 1
      %p97 = por %p95, %p96
      %p98 = scmp.ne.s32.totalorder %s87, %s88
      %p99 = scmp.eq.s32.totalorder %s13, 0
      %p100 = por %p98, %p99
      %p101 = scmp.ne.s32.totalorder %s87, %s88
      %p102 = scmp.eq.s32.totalorder %s14, 1
      %p103 = por %p101, %p102
      %p105 = scmp.ne.s32.totalorder %s88, %s104
      %p106 = scmp.eq.s32.totalorder %s14, 0
      %p107 = por %p105, %p106
      %p108 = scmp.le.s32.totalorder 1, %s8
      %p109 = scmp.lt.s32.totalorder %s8, 3
      %p110 = pnand %p108, %p109
      %p111 = pneg %p110
      // Predicated region
      $region9: #{s2_forward.7} parent=5 // pred_check
        _
      $region10: #{s2_forward.7} parent=5 // pred_check_branch
        %113 = sbr.rel (%p110) target = $region12
      $region11: #{s2_forward.7} parent=5 // pred_region
        %s114 = ssub.s32 %s8, 1
        // Predicated region
        $region13: #{s2_forward.7} parent=11 // pred_check
          %p115 = pneg %p72
        $region14: #{s2_forward.7} parent=11 // pred_check_branch
          %117 = sbr.rel (%p115) target = $region16
        $region15: #{s2_forward.7} parent=11 // pred_region
          %p118 = scmp.lt.s32.totalorder %s18, 0
          %s119 = scalar_select %p118, %s18, 0
          %s120 = smul.addr %s119, 8
          %s121 = scalar_lea.vmem %s1, %s120
        $region16: #{s2_forward.7} parent=11 // pred_fallthru
          _
      $region12: #{s2_forward.7} parent=5 // pred_fallthru
        _
      %p122 = scmp.lt.s32.totalorder %s8, 2
      // Predicated region
      $region17: #{s2_forward.7} parent=5 // pred_check
        %p123 = pneg %p122
      $region18: #{s2_forward.7} parent=5 // pred_check_branch
        %125 = sbr.rel (%p123) target = $region20
      $region19: #{s2_forward.7} parent=5 // pred_region
        // Predicated region
        $region21: #{s2_forward.7} parent=19 // pred_check
          %p126 = pneg %p40
        $region22: #{s2_forward.7} parent=19 // pred_check_branch
          %128 = sbr.rel (%p126) target = $region24
        $region23: #{s2_forward.7} parent=19 // pred_region
          %s129 = smul.u32 16, %s15
          %s130 = ssub.s32 20, %s129
          %p131 = scmp.lt.s32.totalorder %s130, 16
          %s132 = scalar_select %p131, %s130, 16
          %s133 = smul.u32 8, %s132
          %p134 = scmp.lt.s32.totalorder %s129, 19
          %s135 = scalar_select %p134, %s129, 19
          %s136 = smul.addr %s135, 8
          %s137 = scalar_lea.vmem %s0, %s136
          %s138 = smul.u32 16, %s15
          %s139 = ssub.s32 20, %s138
          %p140 = scmp.lt.s32.totalorder %s139, 16
          %s141 = scalar_select %p140, %s139, 16
          %s142 = smul.u32 8, %s141
        $region24: #{s2_forward.7} parent=19 // pred_fallthru
          _
      $region20: #{s2_forward.7} parent=5 // pred_fallthru
        _
      %p143 = scmp.le.s32.totalorder 1, %s8
      %p144 = scmp.lt.s32.totalorder %s8, 3
      %p145 = pnand %p143, %p144
      %p146 = pneg %p145
      // Predicated region
      $region25: #{s2_forward.7} parent=5 // pred_check
        _
      $region26: #{s2_forward.7} parent=5 // pred_check_branch
        %148 = sbr.rel (%p145) target = $region28
      $region27: #{s2_forward.7} parent=5 // pred_region
        %s149 = ssub.s32 %s8, 1
        %s150 = smul.u32 16, %s17
        %s151 = ssub.s32 20, %s150
        %p152 = scmp.lt.s32.totalorder %s151, 16
        %s153 = scalar_select %p152, %s151, 16
        %s154 = smul.u32 8, %s153
        %p155 = scmp.lt.s32.totalorder %s150, 19
        %s156 = scalar_select %p155, %s150, 19
        %s157 = smul.addr %s156, 8
        %s158 = scalar_lea.vmem %s0, %s157
        %p159 = pneg %p46
        %p160 = pneg %p43
        %p161 = scmp.lt.s32.totalorder %s18, 0
        %s162 = scalar_select %p161, %s18, 0
        %s163 = smul.addr %s162, 8
        %s164 = scalar_lea.vmem %s1, %s163
        %p165 = pneg %p72
        %p166 = pneg %p69
        %p167 = pneg %p100
        %p168 = pneg %p97
        %s169 = sand.u32 %s87, 1
        %s170 = sand.u32 %s87, 1
        %s171 = smul.addr %s170, 128
        %s172 = scalar_lea.vmem [#allocation2], %s171
        %s173 = smul.u32 16, %s17
        %s174 = ssub.s32 20, %s173
        %p175 = scmp.lt.s32.totalorder %s174, 16
        %s176 = scalar_select %p175, %s174, 16
        %s177 = smul.u32 8, %s176
        %p178 = scmp.lt.s32.totalorder %s173, 19
        %s179 = scalar_select %p178, %s173, 19
        %s180 = smul.addr %s179, 8
        %s181 = scalar_lea.vmem %s0, %s180
        %s182 = smul.u32 16, %s17
        %s183 = ssub.s32 20, %s182
        %p184 = scmp.lt.s32.totalorder %s183, 16
        %s185 = scalar_select %p184, %s183, 16
        %s186 = smul.u32 8, %s185
        %p187 = scmp.lt.s32.totalorder %s18, 0
        %s188 = scalar_select %p187, %s18, 0
        %s189 = smul.addr %s188, 8
        %s190 = scalar_lea.vmem %s1, %s189
        %s191 = smul.u32 16, %s17
        %s192 = ssub.s32 20, %s191
        %p193 = scmp.lt.s32.totalorder %s192, 16
        %s194 = scalar_select %p193, %s192, 16
        %s195 = smul.u32 8, %s194
        %v197 = vld [vmem:[%s181] sm:$0xff]
        %v198 = vld [vmem:[%s181 + $0x8] sm:$0xff]
        %v199 = vld [vmem:[%s181 + $0x10] sm:$0xff]
        %v200 = vld [vmem:[%s181 + $0x18] sm:$0xff]
        %v201 = vld [vmem:[%s181 + $0x20] sm:$0xff]
        %v202 = vld [vmem:[%s181 + $0x28] sm:$0xff]
        %v203 = vld [vmem:[%s181 + $0x30] sm:$0xff]
        %v204 = vld [vmem:[%s181 + $0x38] sm:$0xff]
        %v205 = vld [vmem:[%s181 + $0x40] sm:$0xff]
        %v206 = vld [vmem:[%s181 + $0x48] sm:$0xff]
        %v207 = vld [vmem:[%s181 + $0x50] sm:$0xff]
        %v208 = vld [vmem:[%s181 + $0x58] sm:$0xff]
        %v209 = vld [vmem:[%s181 + $0x60] sm:$0xff]
        %v210 = vld [vmem:[%s181 + $0x68] sm:$0xff]
        %v211 = vld [vmem:[%s181 + $0x70] sm:$0xff]
        %v212 = vld [vmem:[%s181 + $0x78] sm:$0xff]
        %v213 = vpack.c.bf16 %v198, %v197
        %v214 = vpack.c.bf16 %v200, %v199
        %v215 = vpack.c.bf16 %v202, %v201
        %v216 = vpack.c.bf16 %v204, %v203
        %v217 = vpack.c.bf16 %v206, %v205
        %v218 = vpack.c.bf16 %v208, %v207
        %v219 = vpack.c.bf16 %v210, %v209
        %v220 = vpack.c.bf16 %v212, %v211
        %v221 = vld [vmem:[%s190] sm:$0xff]
        %v222 = vld [vmem:[%s190 + $0x8] sm:$0xff]
        %v223 = vld [vmem:[%s190 + $0x10] sm:$0xff]
        %v224 = vld [vmem:[%s190 + $0x18] sm:$0xff]
        %v225 = vld [vmem:[%s190 + $0x20] sm:$0xff]
        %v226 = vld [vmem:[%s190 + $0x28] sm:$0xff]
        %v227 = vpack.c.bf16 %v222, %v221
        %v228 = vpack.c.bf16 %v224, %v223
        %v229 = vpack.c.bf16 %v226, %v225
        %vm230 = vcmask 392192
        %v232 = vsel %vm230, %v213, 0
        %v235 = vsel %vm230, %v214, 0
        %v238 = vsel %vm230, %v215, 0
        %v241 = vsel %vm230, %v216, 0
        %v244 = vsel %vm230, %v217, 0
        %v247 = vsel %vm230, %v218, 0
        %v250 = vsel %vm230, %v219, 0
        %v253 = vsel %vm230, %v220, 0
        %255 = vmatpush.bf16.msra.mxu0 0
        %256 = vmatpush.bf16.msra.mxu0 0
        %257 = vmatpush.bf16.msra.mxu0 0
        %258 = vmatpush.bf16.msra.mxu0 0
        %259 = vmatpush.bf16.msra.mxu0 0
        %260 = vmatpush.bf16.msra.mxu0 %v229
        %261 = vmatpush.bf16.msra.mxu0 %v228
        %262 = vmatpush.bf16.msra.mxu0 %v227
        %263 = vmatmul.bf16.gmra.mxu0 %v232
        %v264 = vpop.f32.mrf.mxu0
        %v265 = vadd.f32 0.0, %v264
        %v266 = vpop.f32.mrf.mxu0
        %v267 = vadd.f32 0.0, %v266
        %268 = vmatmul.bf16.gmra.mxu0 %v235
        %v269 = vpop.f32.mrf.mxu0
        %v270 = vadd.f32 0.0, %v269
        %v271 = vpop.f32.mrf.mxu0
        %v272 = vadd.f32 0.0, %v271
        %273 = vmatmul.bf16.gmra.mxu0 %v238
        %v274 = vpop.f32.mrf.mxu0
        %v275 = vadd.f32 0.0, %v274
        %v276 = vpop.f32.mrf.mxu0
        %v277 = vadd.f32 0.0, %v276
        %278 = vmatmul.bf16.gmra.mxu0 %v241
        %v279 = vpop.f32.mrf.mxu0
        %v280 = vadd.f32 0.0, %v279
        %v281 = vpop.f32.mrf.mxu0
        %v282 = vadd.f32 0.0, %v281
        %283 = vmatmul.bf16.gmra.mxu0 %v244
        %v284 = vpop.f32.mrf.mxu0
        %v285 = vadd.f32 0.0, %v284
        %v286 = vpop.f32.mrf.mxu0
        %v287 = vadd.f32 0.0, %v286
        %288 = vmatmul.bf16.gmra.mxu0 %v247
        %v289 = vpop.f32.mrf.mxu0
        %v290 = vadd.f32 0.0, %v289
        %v291 = vpop.f32.mrf.mxu0
        %v292 = vadd.f32 0.0, %v291
        %293 = vmatmul.bf16.gmra.mxu0 %v250
        %v294 = vpop.f32.mrf.mxu0
        %v295 = vadd.f32 0.0, %v294
        %v296 = vpop.f32.mrf.mxu0
        %v297 = vadd.f32 0.0, %v296
        %298 = vmatmul.bf16.gmra.mxu0 %v253
        %v299 = vpop.f32.mrf.mxu0
        %v300 = vadd.f32 0.0, %v299
        %v301 = vpop.f32.mrf.mxu0
        %v302 = vadd.f32 0.0, %v301
        %303 = vdwg.mxu0
        %vm304 = vcmask 261120
        %305 = vst.msk [vmem:[%s172] sm:$0xff] %vm304, %v265
        %306 = vst.msk [vmem:[%s172 + $0x8] sm:$0xff] %vm304, %v267
        %307 = vst.msk [vmem:[%s172 + $0x10] sm:$0xff] %vm304, %v270
        %308 = vst.msk [vmem:[%s172 + $0x18] sm:$0xff] %vm304, %v272
        %309 = vst.msk [vmem:[%s172 + $0x20] sm:$0xff] %vm304, %v275
        %310 = vst.msk [vmem:[%s172 + $0x28] sm:$0xff] %vm304, %v277
        %311 = vst.msk [vmem:[%s172 + $0x30] sm:$0xff] %vm304, %v280
        %312 = vst.msk [vmem:[%s172 + $0x38] sm:$0xff] %vm304, %v282
        %313 = vst.msk [vmem:[%s172 + $0x40] sm:$0xff] %vm304, %v285
        %314 = vst.msk [vmem:[%s172 + $0x48] sm:$0xff] %vm304, %v287
        %315 = vst.msk [vmem:[%s172 + $0x50] sm:$0xff] %vm304, %v290
        %316 = vst.msk [vmem:[%s172 + $0x58] sm:$0xff] %vm304, %v292
        %317 = vst.msk [vmem:[%s172 + $0x60] sm:$0xff] %vm304, %v295
        %318 = vst.msk [vmem:[%s172 + $0x68] sm:$0xff] %vm304, %v297
        %319 = vst.msk [vmem:[%s172 + $0x70] sm:$0xff] %vm304, %v300
        %320 = vst.msk [vmem:[%s172 + $0x78] sm:$0xff] %vm304, %v302
        %s321 = sand.u32 %s87, 1
        %s322 = sand.u32 %s87, 1
        %s323 = smul.addr %s322, 128
        %s324 = scalar_lea.vmem [#allocation2], %s323
        // Predicated region
        $region29: #{s2_forward.7} parent=27 // pred_check
          %p325 = pneg %p97
        $region30: #{s2_forward.7} parent=27 // pred_check_branch
          %327 = sbr.rel (%p325) target = $region32
        $region31: #{s2_forward.7} parent=27 // pred_region
          %s328 = smul.u32 16, %s17
          %s329 = ssub.s32 20, %s328
          %p330 = scmp.lt.s32.totalorder %s329, 16
          %s331 = scalar_select %p330, %s329, 16
          %s332 = smul.u32 8, %s331
          %p333 = scmp.ne.s32.totalorder 0, %s332
          %s334 = sadd.s32 %s18, %s328
          %s335 = smul.addr %s334, 8
          %s336 = scalar_lea.vmem %s2, %s335
          // Predicated region
          $region33: #{s2_forward.7} parent=31 // pred_check
            %p337 = pneg %p333
          $region34: #{s2_forward.7} parent=31 // pred_check_branch
            %339 = sbr.rel (%p337) target = $region36
          $region35: #{s2_forward.7} parent=31 // pred_region
            // Predicated region
            $region37: #{s2_forward.7} parent=35 // pred_check
              _
            $region38: #{s2_forward.7} parent=35 // pred_check_branch
              %341 = sbr.rel (0) target = $region40
            $region39: #{s2_forward.7} parent=35 // pred_region
              // Predicated region
              $region59: #{s2_forward.7} parent=39 // pred_check
                _
              $region60: #{s2_forward.7} parent=39 // pred_check_branch
                %421 = sbr.rel (0) target = $region62
              $region61: #{s2_forward.7} parent=39 // pred_region
                %s422 = sshrl.u32 %s331, 4
                // While loop
                $region63: #{s2_forward.7} parent=61 // loop_pre_header
                  _
                $region64: #{s2_forward.7} parent=61 // loop_header
                  %s424 = sphi 0, %s426
                  %p425 = scmp.ge.s32.totalorder %s424, %s422
                  %s429 = sphi 0, %s466
                  %s430 = sphi %s324, %s469
                  %s431 = sphi %s336, %s470
                $region65: #{s2_forward.7} parent=61 // loop_header_branch
                  %428 = sbr.rel (%p425) target = $region69
                $region66: #{s2_forward.7} parent=61 // loop_body
                  %v432 = vld [vmem:[%s430] sm:$0xff]
                  %433 = vst [vmem:[%s431] sm:$0xff] %v432
                  %v434 = vld [vmem:[%s430 + $0x8] sm:$0xff]
                  %435 = vst [vmem:[%s431 + $0x8] sm:$0xff] %v434
                  %v436 = vld [vmem:[%s430 + $0x10] sm:$0xff]
                  %437 = vst [vmem:[%s431 + $0x10] sm:$0xff] %v436
                  %v438 = vld [vmem:[%s430 + $0x18] sm:$0xff]
                  %439 = vst [vmem:[%s431 + $0x18] sm:$0xff] %v438
                  %v440 = vld [vmem:[%s430 + $0x20] sm:$0xff]
                  %441 = vst [vmem:[%s431 + $0x20] sm:$0xff] %v440
                  %v442 = vld [vmem:[%s430 + $0x28] sm:$0xff]
                  %443 = vst [vmem:[%s431 + $0x28] sm:$0xff] %v442
                  %v444 = vld [vmem:[%s430 + $0x30] sm:$0xff]
                  %445 = vst [vmem:[%s431 + $0x30] sm:$0xff] %v444
                  %v446 = vld [vmem:[%s430 + $0x38] sm:$0xff]
                  %447 = vst [vmem:[%s431 + $0x38] sm:$0xff] %v446
                  %v448 = vld [vmem:[%s430 + $0x40] sm:$0xff]
                  %449 = vst [vmem:[%s431 + $0x40] sm:$0xff] %v448
                  %v450 = vld [vmem:[%s430 + $0x48] sm:$0xff]
                  %451 = vst [vmem:[%s431 + $0x48] sm:$0xff] %v450
                  %v452 = vld [vmem:[%s430 + $0x50] sm:$0xff]
                  %453 = vst [vmem:[%s431 + $0x50] sm:$0xff] %v452
                  %v454 = vld [vmem:[%s430 + $0x58] sm:$0xff]
                  %455 = vst [vmem:[%s431 + $0x58] sm:$0xff] %v454
                  %v456 = vld [vmem:[%s430 + $0x60] sm:$0xff]
                  %457 = vst [vmem:[%s431 + $0x60] sm:$0xff] %v456
                  %v458 = vld [vmem:[%s430 + $0x68] sm:$0xff]
                  %459 = vst [vmem:[%s431 + $0x68] sm:$0xff] %v458
                  %v460 = vld [vmem:[%s430 + $0x70] sm:$0xff]
                  %461 = vst [vmem:[%s431 + $0x70] sm:$0xff] %v460
                  %v462 = vld [vmem:[%s430 + $0x78] sm:$0xff]
                  %463 = vst [vmem:[%s431 + $0x78] sm:$0xff] %v462
                  %s464 = sadd.s32 1, %s429
                  %p465 = scmp.ge.s32.totalorder %s464, %s422
                  %s466 = scalar_select %p465, 0, %s464
                  %s467 = smul.u32 %s466, 128
                  %s468 = smul.u32 %s466, 128
                  %s469 = scalar_lea.vmem %s324, %s467 [#allocation2]
                  %s470 = scalar_lea.vmem %s336, %s468
                $region67: #{s2_forward.7} parent=61 // loop_footer
                  %s426 = sadd.s32 %s424, 1
                $region68: #{s2_forward.7} parent=61 // loop_footer_branch
                  %423 = sbr.rel target = $region64
                $region69: #{s2_forward.7} parent=61 // loop_exit
                  _
                %s471 = sshrl.u32 %s331, 4
                %s472 = sand.u32 %s331, 15
                %s473 = smul.u32 %s471, 16
                %s474 = smul.u32 8, %s473
                %s475 = scalar_lea.vmem %s324, %s474 [#allocation2]
                %s476 = smul.u32 8, %s473
                %s477 = scalar_lea.vmem %s336, %s476
                // While loop
                $region70: #{s2_forward.7} parent=61 // loop_pre_header
                  _
                $region71: #{s2_forward.7} parent=61 // loop_header
                  %s479 = sphi 0, %s481
                  %p480 = scmp.ge.s32.totalorder %s479, %s472
                  %s484 = sphi 0, %s491
                  %s485 = sphi %s475, %s494
                  %s486 = sphi %s477, %s495
                $region72: #{s2_forward.7} parent=61 // loop_header_branch
                  %483 = sbr.rel (%p480) target = $region76
                $region73: #{s2_forward.7} parent=61 // loop_body
                  %v487 = vld [vmem:[%s485] sm:$0xff]
                  %488 = vst [vmem:[%s486] sm:$0xff] %v487
                  %s489 = sadd.s32 1, %s484
                  %p490 = scmp.ge.s32.totalorder %s489, %s472
                  %s491 = scalar_select %p490, 0, %s489
                  %s492 = smul.u32 %s491, 8
                  %s493 = smul.u32 %s491, 8
                  %s494 = scalar_lea.vmem %s475, %s492 [#allocation2]
                  %s495 = scalar_lea.vmem %s477, %s493
                $region74: #{s2_forward.7} parent=61 // loop_footer
                  %s481 = sadd.s32 %s479, 1
                $region75: #{s2_forward.7} parent=61 // loop_footer_branch
                  %478 = sbr.rel target = $region71
                $region76: #{s2_forward.7} parent=61 // loop_exit
                  _
              $region62: #{s2_forward.7} parent=39 // pred_fallthru
                _
              // Predicated region
              $region77: #{s2_forward.7} parent=39 // pred_check
                _
              $region78: #{s2_forward.7} parent=39 // pred_check_branch
                %497 = sbr.rel target = $region80
              $region79: #{s2_forward.7} parent=39 // pred_region
                _
              $region80: #{s2_forward.7} parent=39 // pred_fallthru
                _
            $region40: #{s2_forward.7} parent=35 // pred_fallthru
              _
            // Predicated region
            $region41: #{s2_forward.7} parent=35 // pred_check
              _
            $region42: #{s2_forward.7} parent=35 // pred_check_branch
              %343 = sbr.rel target = $region44
            $region43: #{s2_forward.7} parent=35 // pred_region
              %s345 = ssub.s32 256, 1
              %s346 = sshrl.u32 %s331, 4
              // While loop
              $region45: #{s2_forward.7} parent=43 // loop_pre_header
                _
              $region46: #{s2_forward.7} parent=43 // loop_header
                %s348 = sphi 0, %s350
                %p349 = scmp.ge.s32.totalorder %s348, %s346
                %s353 = sphi 0, %s390
                %s354 = sphi %s324, %s393
                %s355 = sphi %s336, %s394
              $region47: #{s2_forward.7} parent=43 // loop_header_branch
                %352 = sbr.rel (%p349) target = $region51
              $region48: #{s2_forward.7} parent=43 // loop_body
                %v356 = vld [vmem:[%s354] sm:%s345]
                %357 = vst [vmem:[%s355] sm:%s345] %v356
                %v358 = vld [vmem:[%s354 + $0x8] sm:%s345]
                %359 = vst [vmem:[%s355 + $0x8] sm:%s345] %v358
                %v360 = vld [vmem:[%s354 + $0x10] sm:%s345]
                %361 = vst [vmem:[%s355 + $0x10] sm:%s345] %v360
                %v362 = vld [vmem:[%s354 + $0x18] sm:%s345]
                %363 = vst [vmem:[%s355 + $0x18] sm:%s345] %v362
                %v364 = vld [vmem:[%s354 + $0x20] sm:%s345]
                %365 = vst [vmem:[%s355 + $0x20] sm:%s345] %v364
                %v366 = vld [vmem:[%s354 + $0x28] sm:%s345]
                %367 = vst [vmem:[%s355 + $0x28] sm:%s345] %v366
                %v368 = vld [vmem:[%s354 + $0x30] sm:%s345]
                %369 = vst [vmem:[%s355 + $0x30] sm:%s345] %v368
                %v370 = vld [vmem:[%s354 + $0x38] sm:%s345]
                %371 = vst [vmem:[%s355 + $0x38] sm:%s345] %v370
                %v372 = vld [vmem:[%s354 + $0x40] sm:%s345]
                %373 = vst [vmem:[%s355 + $0x40] sm:%s345] %v372
                %v374 = vld [vmem:[%s354 + $0x48] sm:%s345]
                %375 = vst [vmem:[%s355 + $0x48] sm:%s345] %v374
                %v376 = vld [vmem:[%s354 + $0x50] sm:%s345]
                %377 = vst [vmem:[%s355 + $0x50] sm:%s345] %v376
                %v378 = vld [vmem:[%s354 + $0x58] sm:%s345]
                %379 = vst [vmem:[%s355 + $0x58] sm:%s345] %v378
                %v380 = vld [vmem:[%s354 + $0x60] sm:%s345]
                %381 = vst [vmem:[%s355 + $0x60] sm:%s345] %v380
                %v382 = vld [vmem:[%s354 + $0x68] sm:%s345]
                %383 = vst [vmem:[%s355 + $0x68] sm:%s345] %v382
                %v384 = vld [vmem:[%s354 + $0x70] sm:%s345]
                %385 = vst [vmem:[%s355 + $0x70] sm:%s345] %v384
                %v386 = vld [vmem:[%s354 + $0x78] sm:%s345]
                %387 = vst [vmem:[%s355 + $0x78] sm:%s345] %v386
                %s388 = sadd.s32 1, %s353
                %p389 = scmp.ge.s32.totalorder %s388, %s346
                %s390 = scalar_select %p389, 0, %s388
                %s391 = smul.u32 %s390, 128
                %s392 = smul.u32 %s390, 128
                %s393 = scalar_lea.vmem %s324, %s391 [#allocation2]
                %s394 = scalar_lea.vmem %s336, %s392
              $region49: #{s2_forward.7} parent=43 // loop_footer
                %s350 = sadd.s32 %s348, 1
              $region50: #{s2_forward.7} parent=43 // loop_footer_branch
                %347 = sbr.rel target = $region46
              $region51: #{s2_forward.7} parent=43 // loop_exit
                _
              %s395 = sshrl.u32 %s331, 4
              %s396 = sand.u32 %s331, 15
              %s397 = smul.u32 %s395, 16
              %s398 = smul.u32 8, %s397
              %s399 = scalar_lea.vmem %s324, %s398 [#allocation2]
              %s400 = smul.u32 8, %s397
              %s401 = scalar_lea.vmem %s336, %s400
              // While loop
              $region52: #{s2_forward.7} parent=43 // loop_pre_header
                _
              $region53: #{s2_forward.7} parent=43 // loop_header
                %s403 = sphi 0, %s405
                %p404 = scmp.ge.s32.totalorder %s403, %s396
                %s408 = sphi 0, %s415
                %s409 = sphi %s399, %s418
                %s410 = sphi %s401, %s419
              $region54: #{s2_forward.7} parent=43 // loop_header_branch
                %407 = sbr.rel (%p404) target = $region58
              $region55: #{s2_forward.7} parent=43 // loop_body
                %v411 = vld [vmem:[%s409] sm:%s345]
                %412 = vst [vmem:[%s410] sm:%s345] %v411
                %s413 = sadd.s32 1, %s408
                %p414 = scmp.ge.s32.totalorder %s413, %s396
                %s415 = scalar_select %p414, 0, %s413
                %s416 = smul.u32 %s415, 8
                %s417 = smul.u32 %s415, 8
                %s418 = scalar_lea.vmem %s399, %s416 [#allocation2]
                %s419 = scalar_lea.vmem %s401, %s417
              $region56: #{s2_forward.7} parent=43 // loop_footer
                %s405 = sadd.s32 %s403, 1
              $region57: #{s2_forward.7} parent=43 // loop_footer_branch
                %402 = sbr.rel target = $region53
              $region58: #{s2_forward.7} parent=43 // loop_exit
                _
            $region44: #{s2_forward.7} parent=35 // pred_fallthru
              _
          $region36: #{s2_forward.7} parent=31 // pred_fallthru
            _
          %498 = vnop
        $region32: #{s2_forward.7} parent=27 // pred_fallthru
          _
      $region28: #{s2_forward.7} parent=5 // pred_fallthru
        _
      %p499 = scmp.le.s32.totalorder 2, %s8
      // Predicated region
      $region81: #{s2_forward.7} parent=5 // pred_check
        %p500 = pneg %p499
      $region82: #{s2_forward.7} parent=5 // pred_check_branch
        %502 = sbr.rel (%p500) target = $region84
      $region83: #{s2_forward.7} parent=5 // pred_region
        %s503 = ssub.s32 %s8, 2
        // Predicated region
        $region85: #{s2_forward.7} parent=83 // pred_check
          %p504 = pneg %p103
        $region86: #{s2_forward.7} parent=83 // pred_check_branch
          %506 = sbr.rel (%p504) target = $region88
        $region87: #{s2_forward.7} parent=83 // pred_region
          %s507 = sand.u32 %s88, 1
          %s508 = sand.u32 %s88, 1
          %s509 = smul.addr %s508, 128
          %s510 = scalar_lea.vmem [#allocation2], %s509
        $region88: #{s2_forward.7} parent=83 // pred_fallthru
          _
      $region84: #{s2_forward.7} parent=5 // pred_fallthru
        _
    $region6: #{s2_forward.7} parent=1 // loop_footer
      %s12 = sadd.s32 1, %s8
    $region7: #{s2_forward.7} parent=1 // loop_footer_branch
      %7 = sbr.rel target = $region3
    $region8: #{s2_forward.7} parent=1 // loop_exit
      _

// kernel: s2_forward.8
$region0: #{s2_forward.8}
  #allocation0 [shape = 'u32[]', space=smem, size = 0x4, offset = 0x4, fixed_abs, tag = 'smem constant byte address 0x4 - core index']
  #allocation1 [shape = 'u32[72,128]{1,0:T(1,128)}', space=vmem, size = 0x9000, scoped, tag = 'internal scratch']
  %s0 = inlined_call_operand.vmem [shape: f32[170,32], index: 0, kind: input, shape index: {}]
  %s1 = inlined_call_operand.vmem [shape: f32[1,32], index: 1, kind: input, shape index: {}]
  %s2 = inlined_call_operand.vmem [shape: f32[1,32], index: 2, kind: input, shape index: {}]
  %s3 = inlined_call_operand.vmem [shape: f32[170,32], index: 3, kind: output, shape index: {}]
  %s4 = sld [smem:[#allocation0]]
  $region93: #{s2_forward.8} parent=0
    _
  %s6 = ssub.s32 1, %s4
  %s7 = scalar_select 0, %s6, %s4
  $region1: #{s2_forward.8} parent=0
    #allocation2 [shape = 'u8[131072]{0}', space=vmem, size = 0x20000, scoped, tag = 'output window, operand 0']
    loop: start=0, step=1, limit=4
    $region2: #{s2_forward.8} parent=1 // loop_pre_header
      _
    $region3: #{s2_forward.8} parent=1 // loop_header
      %s9 = sphi 0, %s13
      %p10 = scmp.ge.s32.totalorder %s9, 4
      %s19 = sphi 0, %s21
      %s22 = sphi 0, %s19
      %s23 = sphi 0, %s22
      %s39 = sphi 0, %s23
      %s43 = sphi 0, %s43
      %s45 = sphi 0, %s43
      %s46 = sphi 0, %s45
      %s60 = sphi 0, %s46
      %s64 = sphi 0, %s64
      %s66 = sphi 0, %s64
      %s67 = sphi 0, %s66
      %s81 = sphi 0, %s67
      %s87 = sphi 0, %s89
      %s90 = sphi 0, %s87
      %s91 = sphi 0, %s90
      %s107 = sphi 0, %s91
    $region4: #{s2_forward.8} parent=1 // loop_header_branch
      %12 = sbr.rel (%p10) target = $region8
    $region5: #{s2_forward.8} parent=1 // loop_body
      %s14 = ssub.s32 %s9, 1
      %s15 = ssub.s32 %s9, 2
      %s16 = sadd.s32 %s9, 1
      %s17 = ssub.s32 %s9, %s16
      %p18 = scmp.eq.s32.totalorder %s17, 0
      %s20 = sadd.s32 %s19, 1
      %s21 = scalar_select %p18, %s19, %s20
      %p24 = pneg %p18
      %p25 = scmp.eq.s32.totalorder %s9, 1
      %p26 = por %p24, %p25
      %p27 = scmp.ne.s32.totalorder %s19, %s22
      %p28 = scmp.eq.s32.totalorder %s9, 0
      %p29 = por %p27, %p28
      %p30 = scmp.ne.s32.totalorder %s19, %s22
      %p31 = scmp.eq.s32.totalorder %s14, 1
      %p32 = por %p30, %p31
      %p33 = scmp.ne.s32.totalorder %s22, %s23
      %p34 = scmp.eq.s32.totalorder %s14, 0
      %p35 = por %p33, %p34
      %p36 = scmp.ne.s32.totalorder %s22, %s23
      %p37 = scmp.eq.s32.totalorder %s15, 1
      %p38 = por %p36, %p37
      %p40 = scmp.ne.s32.totalorder %s23, %s39
      %p41 = scmp.eq.s32.totalorder %s15, 0
      %p42 = por %p40, %p41
      %s44 = sadd.s32 %s43, 1
      %p47 = scmp.eq.s32.totalorder %s9, 1
      %p48 = scmp.ne.s32.totalorder %s43, %s45
      %p49 = scmp.eq.s32.totalorder %s9, 0
      %p50 = por %p48, %p49
      %p51 = scmp.ne.s32.totalorder %s43, %s45
      %p52 = scmp.eq.s32.totalorder %s14, 1
      %p53 = por %p51, %p52
      %p54 = scmp.ne.s32.totalorder %s45, %s46
      %p55 = scmp.eq.s32.totalorder %s14, 0
      %p56 = por %p54, %p55
      %p57 = scmp.ne.s32.totalorder %s45, %s46
      %p58 = scmp.eq.s32.totalorder %s15, 1
      %p59 = por %p57, %p58
      %p61 = scmp.ne.s32.totalorder %s46, %s60
      %p62 = scmp.eq.s32.totalorder %s15, 0
      %p63 = por %p61, %p62
      %s65 = sadd.s32 %s64, 1
      %p68 = scmp.eq.s32.totalorder %s9, 1
      %p69 = scmp.ne.s32.totalorder %s64, %s66
      %p70 = scmp.eq.s32.totalorder %s9, 0
      %p71 = por %p69, %p70
      %p72 = scmp.ne.s32.totalorder %s64, %s66
      %p73 = scmp.eq.s32.totalorder %s14, 1
      %p74 = por %p72, %p73
      %p75 = scmp.ne.s32.totalorder %s66, %s67
      %p76 = scmp.eq.s32.totalorder %s14, 0
      %p77 = por %p75, %p76
      %p78 = scmp.ne.s32.totalorder %s66, %s67
      %p79 = scmp.eq.s32.totalorder %s15, 1
      %p80 = por %p78, %p79
      %p82 = scmp.ne.s32.totalorder %s67, %s81
      %p83 = scmp.eq.s32.totalorder %s15, 0
      %p84 = por %p82, %p83
      %s85 = ssub.s32 %s9, %s16
      %p86 = scmp.eq.s32.totalorder %s85, 0
      %s88 = sadd.s32 %s87, 1
      %s89 = scalar_select %p86, %s87, %s88
      %p92 = pneg %p86
      %p93 = scmp.eq.s32.totalorder %s9, 1
      %p94 = por %p92, %p93
      %p95 = scmp.ne.s32.totalorder %s87, %s90
      %p96 = scmp.eq.s32.totalorder %s9, 0
      %p97 = por %p95, %p96
      %p98 = scmp.ne.s32.totalorder %s87, %s90
      %p99 = scmp.eq.s32.totalorder %s14, 1
      %p100 = por %p98, %p99
      %p101 = scmp.ne.s32.totalorder %s90, %s91
      %p102 = scmp.eq.s32.totalorder %s14, 0
      %p103 = por %p101, %p102
      %p104 = scmp.ne.s32.totalorder %s90, %s91
      %p105 = scmp.eq.s32.totalorder %s15, 1
      %p106 = por %p104, %p105
      %p108 = scmp.ne.s32.totalorder %s91, %s107
      %p109 = scmp.eq.s32.totalorder %s15, 0
      %p110 = por %p108, %p109
      %p111 = scmp.le.s32.totalorder 1, %s9
      %p112 = scmp.lt.s32.totalorder %s9, 3
      %p113 = pnand %p111, %p112
      %p114 = pneg %p113
      // Predicated region
      $region9: #{s2_forward.8} parent=5 // pred_check
        _
      $region10: #{s2_forward.8} parent=5 // pred_check_branch
        %116 = sbr.rel (%p113) target = $region12
      $region11: #{s2_forward.8} parent=5 // pred_region
        %s117 = ssub.s32 %s9, 1
        // Predicated region
        $region13: #{s2_forward.8} parent=11 // pred_check
          %p118 = pneg %p56
        $region14: #{s2_forward.8} parent=11 // pred_check_branch
          %120 = sbr.rel (%p118) target = $region16
        $region15: #{s2_forward.8} parent=11 // pred_region
          _
        $region16: #{s2_forward.8} parent=11 // pred_fallthru
          _
        // Predicated region
        $region17: #{s2_forward.8} parent=11 // pred_check
          %p121 = pneg %p77
        $region18: #{s2_forward.8} parent=11 // pred_check_branch
          %123 = sbr.rel (%p121) target = $region20
        $region19: #{s2_forward.8} parent=11 // pred_region
          _
        $region20: #{s2_forward.8} parent=11 // pred_fallthru
          _
      $region12: #{s2_forward.8} parent=5 // pred_fallthru
        _
      %p124 = scmp.lt.s32.totalorder %s9, 2
      // Predicated region
      $region21: #{s2_forward.8} parent=5 // pred_check
        %p125 = pneg %p124
      $region22: #{s2_forward.8} parent=5 // pred_check_branch
        %127 = sbr.rel (%p125) target = $region24
      $region23: #{s2_forward.8} parent=5 // pred_region
        // Predicated region
        $region25: #{s2_forward.8} parent=23 // pred_check
          %p128 = pneg %p29
        $region26: #{s2_forward.8} parent=23 // pred_check_branch
          %130 = sbr.rel (%p128) target = $region28
        $region27: #{s2_forward.8} parent=23 // pred_region
          %s131 = smul.u32 16, %s9
          %s132 = ssub.s32 22, %s131
          %p133 = scmp.lt.s32.totalorder %s132, 16
          %s134 = scalar_select %p133, %s132, 16
          %s135 = smul.u32 8, %s134
          %p136 = scmp.lt.s32.totalorder %s131, 21
          %s137 = scalar_select %p136, %s131, 21
          %s138 = smul.addr %s137, 8
          %s139 = scalar_lea.vmem %s0, %s138
          %s140 = smul.u32 16, %s9
          %s141 = ssub.s32 22, %s140
          %p142 = scmp.lt.s32.totalorder %s141, 16
          %s143 = scalar_select %p142, %s141, 16
          %s144 = smul.u32 8, %s143
        $region28: #{s2_forward.8} parent=23 // pred_fallthru
          _
      $region24: #{s2_forward.8} parent=5 // pred_fallthru
        _
      %p145 = scmp.le.s32.totalorder 1, %s9
      %p146 = scmp.lt.s32.totalorder %s9, 3
      %p147 = pnand %p145, %p146
      %p148 = pneg %p147
      // Predicated region
      $region29: #{s2_forward.8} parent=5 // pred_check
        _
      $region30: #{s2_forward.8} parent=5 // pred_check_branch
        %150 = sbr.rel (%p147) target = $region32
      $region31: #{s2_forward.8} parent=5 // pred_region
        %s151 = ssub.s32 %s9, 1
        %s152 = smul.u32 16, %s14
        %s153 = ssub.s32 22, %s152
        %p154 = scmp.lt.s32.totalorder %s153, 16
        %s155 = scalar_select %p154, %s153, 16
        %s156 = smul.u32 8, %s155
        %p157 = scmp.lt.s32.totalorder %s152, 21
        %s158 = scalar_select %p157, %s152, 21
        %s159 = smul.addr %s158, 8
        %s160 = scalar_lea.vmem %s0, %s159
        %p161 = pneg %p35
        %p162 = pneg %p32
        %p163 = pneg %p56
        %p164 = pneg %p53
        %p165 = pneg %p77
        %p166 = pneg %p74
        %p167 = pneg %p103
        %p168 = pneg %p100
        %s169 = sand.u32 %s90, 1
        %s170 = sand.u32 %s90, 1
        %s171 = smul.addr %s170, 128
        %s172 = scalar_lea.vmem [#allocation2], %s171
        %s173 = smul.u32 16, %s14
        %s174 = ssub.s32 22, %s173
        %p175 = scmp.lt.s32.totalorder %s174, 16
        %s176 = scalar_select %p175, %s174, 16
        %s177 = smul.u32 8, %s176
        %p178 = scmp.lt.s32.totalorder %s173, 21
        %s179 = scalar_select %p178, %s173, 21
        %s180 = smul.addr %s179, 8
        %s181 = scalar_lea.vmem %s0, %s180
        %s182 = smul.u32 16, %s14
        %s183 = ssub.s32 22, %s182
        %p184 = scmp.lt.s32.totalorder %s183, 16
        %s185 = scalar_select %p184, %s183, 16
        %s186 = smul.u32 8, %s185
        %s187 = smul.u32 16, %s14
        %s188 = ssub.s32 22, %s187
        %p189 = scmp.lt.s32.totalorder %s188, 16
        %s190 = scalar_select %p189, %s188, 16
        %s191 = smul.u32 8, %s190
        %v192 = vld [vmem:[%s181] sm:$0xff]
        %v193 = vld [vmem:[%s181 + $0x8] sm:$0xff]
        %v194 = vld [vmem:[%s181 + $0x10] sm:$0xff]
        %v195 = vld [vmem:[%s181 + $0x18] sm:$0xff]
        %v196 = vld [vmem:[%s181 + $0x20] sm:$0xff]
        %v197 = vld [vmem:[%s181 + $0x28] sm:$0xff]
        %v198 = vld [vmem:[%s181 + $0x30] sm:$0xff]
        %v199 = vld [vmem:[%s181 + $0x38] sm:$0xff]
        %v200 = vld [vmem:[%s181 + $0x40] sm:$0xff]
        %v201 = vld [vmem:[%s181 + $0x48] sm:$0xff]
        %v202 = vld [vmem:[%s181 + $0x50] sm:$0xff]
        %v203 = vld [vmem:[%s181 + $0x58] sm:$0xff]
        %v204 = vld [vmem:[%s181 + $0x60] sm:$0xff]
        %v205 = vld [vmem:[%s181 + $0x68] sm:$0xff]
        %v206 = vld [vmem:[%s181 + $0x70] sm:$0xff]
        %v207 = vld [vmem:[%s181 + $0x78] sm:$0xff]
        %vm208 = vcmask 261120
        %v209 = vsel %vm208, %v192, 0.0
        %210 = vadd.xlane.f32.xlu0 %v209
        %v211 = vpop.xlane.xlu0 %210
        %v212 = vsel %vm208, %v193, 0.0
        %213 = vadd.xlane.f32.xlu0 %v212
        %v214 = vpop.xlane.xlu0 %213
        %v215 = vsel %vm208, %v194, 0.0
        %216 = vadd.xlane.f32.xlu0 %v215
        %v217 = vpop.xlane.xlu0 %216
        %v218 = vsel %vm208, %v195, 0.0
        %219 = vadd.xlane.f32.xlu0 %v218
        %v220 = vpop.xlane.xlu0 %219
        %v221 = vsel %vm208, %v196, 0.0
        %222 = vadd.xlane.f32.xlu0 %v221
        %v223 = vpop.xlane.xlu0 %222
        %v224 = vsel %vm208, %v197, 0.0
        %225 = vadd.xlane.f32.xlu0 %v224
        %v226 = vpop.xlane.xlu0 %225
        %v227 = vsel %vm208, %v198, 0.0
        %228 = vadd.xlane.f32.xlu0 %v227
        %v229 = vpop.xlane.xlu0 %228
        %v230 = vsel %vm208, %v199, 0.0
        %231 = vadd.xlane.f32.xlu0 %v230
        %v232 = vpop.xlane.xlu0 %231
        %v233 = vsel %vm208, %v200, 0.0
        %234 = vadd.xlane.f32.xlu0 %v233
        %v235 = vpop.xlane.xlu0 %234
        %v236 = vsel %vm208, %v201, 0.0
        %237 = vadd.xlane.f32.xlu0 %v236
        %v238 = vpop.xlane.xlu0 %237
        %v239 = vsel %vm208, %v202, 0.0
        %240 = vadd.xlane.f32.xlu0 %v239
        %v241 = vpop.xlane.xlu0 %240
        %v242 = vsel %vm208, %v203, 0.0
        %243 = vadd.xlane.f32.xlu0 %v242
        %v244 = vpop.xlane.xlu0 %243
        %v245 = vsel %vm208, %v204, 0.0
        %246 = vadd.xlane.f32.xlu0 %v245
        %v247 = vpop.xlane.xlu0 %246
        %v248 = vsel %vm208, %v205, 0.0
        %249 = vadd.xlane.f32.xlu0 %v248
        %v250 = vpop.xlane.xlu0 %249
        %v251 = vsel %vm208, %v206, 0.0
        %252 = vadd.xlane.f32.xlu0 %v251
        %v253 = vpop.xlane.xlu0 %252
        %v254 = vsel %vm208, %v207, 0.0
        %255 = vadd.xlane.f32.xlu0 %v254
        %v256 = vpop.xlane.xlu0 %255
        %v257 = vrcp.pop 32.0
        %v258 = vmul.f32 32.0, %v257
        %v259 = vsub.f32 1.0, %v258
        %v260 = vmul.f32 %v257, %v259
        %v261 = vadd.f32 %v257, %v260
        %vm262 = vweird.f32 %v257
        %v263 = vsel %vm262, %v257, %v261
        %v264 = vmul.f32 %v211, %v263
        %v265 = vmul.f32 %v214, %v263
        %v266 = vmul.f32 %v217, %v263
        %v267 = vmul.f32 %v220, %v263
        %v268 = vmul.f32 %v223, %v263
        %v269 = vmul.f32 %v226, %v263
        %v270 = vmul.f32 %v229, %v263
        %v271 = vmul.f32 %v232, %v263
        %v272 = vmul.f32 %v235, %v263
        %v273 = vmul.f32 %v238, %v263
        %v274 = vmul.f32 %v241, %v263
        %v275 = vmul.f32 %v244, %v263
        %v276 = vmul.f32 %v247, %v263
        %v277 = vmul.f32 %v250, %v263
        %v278 = vmul.f32 %v253, %v263
        %v279 = vmul.f32 %v256, %v263
        %v280 = vsub.f32 %v192, %v264
        %v281 = vsub.f32 %v193, %v265
        %v282 = vsub.f32 %v194, %v266
        %v283 = vsub.f32 %v195, %v267
        %v284 = vsub.f32 %v196, %v268
        %v285 = vsub.f32 %v197, %v269
        %v286 = vsub.f32 %v198, %v270
        %v287 = vsub.f32 %v199, %v271
        %v288 = vsub.f32 %v200, %v272
        %v289 = vsub.f32 %v201, %v273
        %v290 = vsub.f32 %v202, %v274
        %v291 = vsub.f32 %v203, %v275
        %v292 = vsub.f32 %v204, %v276
        %v293 = vsub.f32 %v205, %v277
        %v294 = vsub.f32 %v206, %v278
        %v295 = vsub.f32 %v207, %v279
        %v296 = vmul.f32 %v280, %v280
        %v297 = vmul.f32 %v281, %v281
        %v298 = vmul.f32 %v282, %v282
        %v299 = vmul.f32 %v283, %v283
        %v300 = vmul.f32 %v284, %v284
        %v301 = vmul.f32 %v285, %v285
        %v302 = vmul.f32 %v286, %v286
        %v303 = vmul.f32 %v287, %v287
        %v304 = vmul.f32 %v288, %v288
        %v305 = vmul.f32 %v289, %v289
        %v306 = vmul.f32 %v290, %v290
        %v307 = vmul.f32 %v291, %v291
        %v308 = vmul.f32 %v292, %v292
        %v309 = vmul.f32 %v293, %v293
        %v310 = vmul.f32 %v294, %v294
        %v311 = vmul.f32 %v295, %v295
        %v312 = vsel %vm208, %v296, 0.0
        %313 = vadd.xlane.f32.xlu0 %v312
        %v314 = vpop.xlane.xlu0 %313
        %v315 = vsel %vm208, %v297, 0.0
        %316 = vadd.xlane.f32.xlu0 %v315
        %v317 = vpop.xlane.xlu0 %316
        %v318 = vsel %vm208, %v298, 0.0
        %319 = vadd.xlane.f32.xlu0 %v318
        %v320 = vpop.xlane.xlu0 %319
        %v321 = vsel %vm208, %v299, 0.0
        %322 = vadd.xlane.f32.xlu0 %v321
        %v323 = vpop.xlane.xlu0 %322
        %v324 = vsel %vm208, %v300, 0.0
        %325 = vadd.xlane.f32.xlu0 %v324
        %v326 = vpop.xlane.xlu0 %325
        %v327 = vsel %vm208, %v301, 0.0
        %328 = vadd.xlane.f32.xlu0 %v327
        %v329 = vpop.xlane.xlu0 %328
        %v330 = vsel %vm208, %v302, 0.0
        %331 = vadd.xlane.f32.xlu0 %v330
        %v332 = vpop.xlane.xlu0 %331
        %v333 = vsel %vm208, %v303, 0.0
        %334 = vadd.xlane.f32.xlu0 %v333
        %v335 = vpop.xlane.xlu0 %334
        %v336 = vsel %vm208, %v304, 0.0
        %337 = vadd.xlane.f32.xlu0 %v336
        %v338 = vpop.xlane.xlu0 %337
        %v339 = vsel %vm208, %v305, 0.0
        %340 = vadd.xlane.f32.xlu0 %v339
        %v341 = vpop.xlane.xlu0 %340
        %v342 = vsel %vm208, %v306, 0.0
        %343 = vadd.xlane.f32.xlu0 %v342
        %v344 = vpop.xlane.xlu0 %343
        %v345 = vsel %vm208, %v307, 0.0
        %346 = vadd.xlane.f32.xlu0 %v345
        %v347 = vpop.xlane.xlu0 %346
        %v348 = vsel %vm208, %v308, 0.0
        %349 = vadd.xlane.f32.xlu0 %v348
        %v350 = vpop.xlane.xlu0 %349
        %v351 = vsel %vm208, %v309, 0.0
        %352 = vadd.xlane.f32.xlu0 %v351
        %v353 = vpop.xlane.xlu0 %352
        %v354 = vsel %vm208, %v310, 0.0
        %355 = vadd.xlane.f32.xlu0 %v354
        %v356 = vpop.xlane.xlu0 %355
        %v357 = vsel %vm208, %v311, 0.0
        %358 = vadd.xlane.f32.xlu0 %v357
        %v359 = vpop.xlane.xlu0 %358
        %v360 = vmul.f32 %v314, %v263
        %v361 = vmul.f32 %v317, %v263
        %v362 = vmul.f32 %v320, %v263
        %v363 = vmul.f32 %v323, %v263
        %v364 = vmul.f32 %v326, %v263
        %v365 = vmul.f32 %v329, %v263
        %v366 = vmul.f32 %v332, %v263
        %v367 = vmul.f32 %v335, %v263
        %v368 = vmul.f32 %v338, %v263
        %v369 = vmul.f32 %v341, %v263
        %v370 = vmul.f32 %v344, %v263
        %v371 = vmul.f32 %v347, %v263
        %v372 = vmul.f32 %v350, %v263
        %v373 = vmul.f32 %v353, %v263
        %v374 = vmul.f32 %v356, %v263
        %v375 = vmul.f32 %v359, %v263
        %v376 = vadd.f32 %v360, 1e-05
        %v377 = vadd.f32 %v361, 1e-05
        %v378 = vadd.f32 %v362, 1e-05
        %v379 = vadd.f32 %v363, 1e-05
        %v380 = vadd.f32 %v364, 1e-05
        %v381 = vadd.f32 %v365, 1e-05
        %v382 = vadd.f32 %v366, 1e-05
        %v383 = vadd.f32 %v367, 1e-05
        %v384 = vadd.f32 %v368, 1e-05
        %v385 = vadd.f32 %v369, 1e-05
        %v386 = vadd.f32 %v370, 1e-05
        %v387 = vadd.f32 %v371, 1e-05
        %v388 = vadd.f32 %v372, 1e-05
        %v389 = vadd.f32 %v373, 1e-05
        %v390 = vadd.f32 %v374, 1e-05
        %v391 = vadd.f32 %v375, 1e-05
        %v392 = vrsqrt.pop %v376
        %v393 = vmul.f32 %v392, %v376
        %v394 = vmul.f32 %v393, %v392
        %v395 = vmul.f32 0.5, %v394
        %v396 = vsub.f32 1.5, %v395
        %v397 = vmul.f32 %v392, %v396
        %vm398 = vweird.f32 %v376
        %vm399 = vweird.f32 %v392
        %vm400 = vmor %vm398, %vm399
        %v401 = vsel %vm400, %v392, %v397
        %v402 = vrsqrt.pop %v377
        %v403 = vmul.f32 %v402, %v377
        %v404 = vmul.f32 %v403, %v402
        %v405 = vmul.f32 0.5, %v404
        %v406 = vsub.f32 1.5, %v405
        %v407 = vmul.f32 %v402, %v406
        %vm408 = vweird.f32 %v377
        %vm409 = vweird.f32 %v402
        %vm410 = vmor %vm408, %vm409
        %v411 = vsel %vm410, %v402, %v407
        %v412 = vrsqrt.pop %v378
        %v413 = vmul.f32 %v412, %v378
        %v414 = vmul.f32 %v413, %v412
        %v415 = vmul.f32 0.5, %v414
        %v416 = vsub.f32 1.5, %v415
        %v417 = vmul.f32 %v412, %v416
        %vm418 = vweird.f32 %v378
        %vm419 = vweird.f32 %v412
        %vm420 = vmor %vm418, %vm419
        %v421 = vsel %vm420, %v412, %v417
        %v422 = vrsqrt.pop %v379
        %v423 = vmul.f32 %v422, %v379
        %v424 = vmul.f32 %v423, %v422
        %v425 = vmul.f32 0.5, %v424
        %v426 = vsub.f32 1.5, %v425
        %v427 = vmul.f32 %v422, %v426
        %vm428 = vweird.f32 %v379
        %vm429 = vweird.f32 %v422
        %vm430 = vmor %vm428, %vm429
        %v431 = vsel %vm430, %v422, %v427
        %v432 = vrsqrt.pop %v380
        %v433 = vmul.f32 %v432, %v380
        %v434 = vmul.f32 %v433, %v432
        %v435 = vmul.f32 0.5, %v434
        %v436 = vsub.f32 1.5, %v435
        %v437 = vmul.f32 %v432, %v436
        %vm438 = vweird.f32 %v380
        %vm439 = vweird.f32 %v432
        %vm440 = vmor %vm438, %vm439
        %v441 = vsel %vm440, %v432, %v437
        %v442 = vrsqrt.pop %v381
        %v443 = vmul.f32 %v442, %v381
        %v444 = vmul.f32 %v443, %v442
        %v445 = vmul.f32 0.5, %v444
        %v446 = vsub.f32 1.5, %v445
        %v447 = vmul.f32 %v442, %v446
        %vm448 = vweird.f32 %v381
        %vm449 = vweird.f32 %v442
        %vm450 = vmor %vm448, %vm449
        %v451 = vsel %vm450, %v442, %v447
        %v452 = vrsqrt.pop %v382
        %v453 = vmul.f32 %v452, %v382
        %v454 = vmul.f32 %v453, %v452
        %v455 = vmul.f32 0.5, %v454
        %v456 = vsub.f32 1.5, %v455
        %v457 = vmul.f32 %v452, %v456
        %vm458 = vweird.f32 %v382
        %vm459 = vweird.f32 %v452
        %vm460 = vmor %vm458, %vm459
        %v461 = vsel %vm460, %v452, %v457
        %v462 = vrsqrt.pop %v383
        %v463 = vmul.f32 %v462, %v383
        %v464 = vmul.f32 %v463, %v462
        %v465 = vmul.f32 0.5, %v464
        %v466 = vsub.f32 1.5, %v465
        %v467 = vmul.f32 %v462, %v466
        %vm468 = vweird.f32 %v383
        %vm469 = vweird.f32 %v462
        %vm470 = vmor %vm468, %vm469
        %v471 = vsel %vm470, %v462, %v467
        %v472 = vrsqrt.pop %v384
        %v473 = vmul.f32 %v472, %v384
        %v474 = vmul.f32 %v473, %v472
        %v475 = vmul.f32 0.5, %v474
        %v476 = vsub.f32 1.5, %v475
        %v477 = vmul.f32 %v472, %v476
        %vm478 = vweird.f32 %v384
        %vm479 = vweird.f32 %v472
        %vm480 = vmor %vm478, %vm479
        %v481 = vsel %vm480, %v472, %v477
        %v482 = vrsqrt.pop %v385
        %v483 = vmul.f32 %v482, %v385
        %v484 = vmul.f32 %v483, %v482
        %v485 = vmul.f32 0.5, %v484
        %v486 = vsub.f32 1.5, %v485
        %v487 = vmul.f32 %v482, %v486
        %vm488 = vweird.f32 %v385
        %vm489 = vweird.f32 %v482
        %vm490 = vmor %vm488, %vm489
        %v491 = vsel %vm490, %v482, %v487
        %v492 = vrsqrt.pop %v386
        %v493 = vmul.f32 %v492, %v386
        %v494 = vmul.f32 %v493, %v492
        %v495 = vmul.f32 0.5, %v494
        %v496 = vsub.f32 1.5, %v495
        %v497 = vmul.f32 %v492, %v496
        %vm498 = vweird.f32 %v386
        %vm499 = vweird.f32 %v492
        %vm500 = vmor %vm498, %vm499
        %v501 = vsel %vm500, %v492, %v497
        %v502 = vrsqrt.pop %v387
        %v503 = vmul.f32 %v502, %v387
        %v504 = vmul.f32 %v503, %v502
        %v505 = vmul.f32 0.5, %v504
        %v506 = vsub.f32 1.5, %v505
        %v507 = vmul.f32 %v502, %v506
        %vm508 = vweird.f32 %v387
        %vm509 = vweird.f32 %v502
        %vm510 = vmor %vm508, %vm509
        %v511 = vsel %vm510, %v502, %v507
        %v512 = vrsqrt.pop %v388
        %v513 = vmul.f32 %v512, %v388
        %v514 = vmul.f32 %v513, %v512
        %v515 = vmul.f32 0.5, %v514
        %v516 = vsub.f32 1.5, %v515
        %v517 = vmul.f32 %v512, %v516
        %vm518 = vweird.f32 %v388
        %vm519 = vweird.f32 %v512
        %vm520 = vmor %vm518, %vm519
        %v521 = vsel %vm520, %v512, %v517
        %v522 = vrsqrt.pop %v389
        %v523 = vmul.f32 %v522, %v389
        %v524 = vmul.f32 %v523, %v522
        %v525 = vmul.f32 0.5, %v524
        %v526 = vsub.f32 1.5, %v525
        %v527 = vmul.f32 %v522, %v526
        %vm528 = vweird.f32 %v389
        %vm529 = vweird.f32 %v522
        %vm530 = vmor %vm528, %vm529
        %v531 = vsel %vm530, %v522, %v527
        %v532 = vrsqrt.pop %v390
        %v533 = vmul.f32 %v532, %v390
        %v534 = vmul.f32 %v533, %v532
        %v535 = vmul.f32 0.5, %v534
        %v536 = vsub.f32 1.5, %v535
        %v537 = vmul.f32 %v532, %v536
        %vm538 = vweird.f32 %v390
        %vm539 = vweird.f32 %v532
        %vm540 = vmor %vm538, %vm539
        %v541 = vsel %vm540, %v532, %v537
        %v542 = vrsqrt.pop %v391
        %v543 = vmul.f32 %v542, %v391
        %v544 = vmul.f32 %v543, %v542
        %v545 = vmul.f32 0.5, %v544
        %v546 = vsub.f32 1.5, %v545
        %v547 = vmul.f32 %v542, %v546
        %vm548 = vweird.f32 %v391
        %vm549 = vweird.f32 %v542
        %vm550 = vmor %vm548, %vm549
        %v551 = vsel %vm550, %v542, %v547
        %v552 = vmul.f32 %v280, %v401
        %v553 = vmul.f32 %v281, %v411
        %v554 = vmul.f32 %v282, %v421
        %v555 = vmul.f32 %v283, %v431
        %v556 = vmul.f32 %v284, %v441
        %v557 = vmul.f32 %v285, %v451
        %v558 = vmul.f32 %v286, %v461
        %v559 = vmul.f32 %v287, %v471
        %v560 = vmul.f32 %v288, %v481
        %v561 = vmul.f32 %v289, %v491
        %v562 = vmul.f32 %v290, %v501
        %v563 = vmul.f32 %v291, %v511
        %v564 = vmul.f32 %v292, %v521
        %v565 = vmul.f32 %v293, %v531
        %v566 = vmul.f32 %v294, %v541
        %v567 = vmul.f32 %v295, %v551
        %v568 = vld [vmem:[%s1] sm:$0x1]
        %v570 = vperm.slane %v568, 0
        %v572 = vmul.f32 %v552, %v570
        %v573 = vmul.f32 %v553, %v570
        %v574 = vmul.f32 %v554, %v570
        %v575 = vmul.f32 %v555, %v570
        %v576 = vmul.f32 %v556, %v570
        %v577 = vmul.f32 %v557, %v570
        %v578 = vmul.f32 %v558, %v570
        %v579 = vmul.f32 %v559, %v570
        %v580 = vmul.f32 %v560, %v570
        %v581 = vmul.f32 %v561, %v570
        %v582 = vmul.f32 %v562, %v570
        %v583 = vmul.f32 %v563, %v570
        %v584 = vmul.f32 %v564, %v570
        %v585 = vmul.f32 %v565, %v570
        %v586 = vmul.f32 %v566, %v570
        %v587 = vmul.f32 %v567, %v570
        %v588 = vld [vmem:[%s2] sm:$0x1]
        %v590 = vperm.slane %v588, 0
        %v592 = vadd.f32 %v572, %v590
        %v593 = vadd.f32 %v573, %v590
        %v594 = vadd.f32 %v574, %v590
        %v595 = vadd.f32 %v575, %v590
        %v596 = vadd.f32 %v576, %v590
        %v597 = vadd.f32 %v577, %v590
        %v598 = vadd.f32 %v578, %v590
        %v599 = vadd.f32 %v579, %v590
        %v600 = vadd.f32 %v580, %v590
        %v601 = vadd.f32 %v581, %v590
        %v602 = vadd.f32 %v582, %v590
        %v603 = vadd.f32 %v583, %v590
        %v604 = vadd.f32 %v584, %v590
        %v605 = vadd.f32 %v585, %v590
        %v606 = vadd.f32 %v586, %v590
        %v607 = vadd.f32 %v587, %v590
        %608 = vst.msk [vmem:[%s172] sm:$0xff] %vm208, %v592
        %609 = vst.msk [vmem:[%s172 + $0x8] sm:$0xff] %vm208, %v593
        %610 = vst.msk [vmem:[%s172 + $0x10] sm:$0xff] %vm208, %v594
        %611 = vst.msk [vmem:[%s172 + $0x18] sm:$0xff] %vm208, %v595
        %612 = vst.msk [vmem:[%s172 + $0x20] sm:$0xff] %vm208, %v596
        %613 = vst.msk [vmem:[%s172 + $0x28] sm:$0xff] %vm208, %v597
        %614 = vst.msk [vmem:[%s172 + $0x30] sm:$0xff] %vm208, %v598
        %615 = vst.msk [vmem:[%s172 + $0x38] sm:$0xff] %vm208, %v599
        %616 = vst.msk [vmem:[%s172 + $0x40] sm:$0xff] %vm208, %v600
        %617 = vst.msk [vmem:[%s172 + $0x48] sm:$0xff] %vm208, %v601
        %618 = vst.msk [vmem:[%s172 + $0x50] sm:$0xff] %vm208, %v602
        %619 = vst.msk [vmem:[%s172 + $0x58] sm:$0xff] %vm208, %v603
        %620 = vst.msk [vmem:[%s172 + $0x60] sm:$0xff] %vm208, %v604
        %621 = vst.msk [vmem:[%s172 + $0x68] sm:$0xff] %vm208, %v605
        %622 = vst.msk [vmem:[%s172 + $0x70] sm:$0xff] %vm208, %v606
        %623 = vst.msk [vmem:[%s172 + $0x78] sm:$0xff] %vm208, %v607
        %s624 = sand.u32 %s90, 1
        %s625 = sand.u32 %s90, 1
        %s626 = smul.addr %s625, 128
        %s627 = scalar_lea.vmem [#allocation2], %s626
        // Predicated region
        $region33: #{s2_forward.8} parent=31 // pred_check
          %p628 = pneg %p100
        $region34: #{s2_forward.8} parent=31 // pred_check_branch
          %630 = sbr.rel (%p628) target = $region36
        $region35: #{s2_forward.8} parent=31 // pred_region
          %s631 = smul.u32 16, %s14
          %s632 = ssub.s32 22, %s631
          %p633 = scmp.lt.s32.totalorder %s632, 16
          %s634 = scalar_select %p633, %s632, 16
          %s635 = smul.u32 8, %s634
          %p636 = scmp.ne.s32.totalorder 0, %s635
          %s637 = smul.addr %s631, 8
          %s638 = scalar_lea.vmem %s3, %s637
          // Predicated region
          $region37: #{s2_forward.8} parent=35 // pred_check
            %p639 = pneg %p636
          $region38: #{s2_forward.8} parent=35 // pred_check_branch
            %641 = sbr.rel (%p639) target = $region40
          $region39: #{s2_forward.8} parent=35 // pred_region
            // Predicated region
            $region41: #{s2_forward.8} parent=39 // pred_check
              _
            $region42: #{s2_forward.8} parent=39 // pred_check_branch
              %643 = sbr.rel (0) target = $region44
            $region43: #{s2_forward.8} parent=39 // pred_region
              // Predicated region
              $region63: #{s2_forward.8} parent=43 // pred_check
                _
              $region64: #{s2_forward.8} parent=43 // pred_check_branch
                %723 = sbr.rel (0) target = $region66
              $region65: #{s2_forward.8} parent=43 // pred_region
                %s724 = sshrl.u32 %s634, 4
                // While loop
                $region67: #{s2_forward.8} parent=65 // loop_pre_header
                  _
                $region68: #{s2_forward.8} parent=65 // loop_header
                  %s726 = sphi 0, %s728
                  %p727 = scmp.ge.s32.totalorder %s726, %s724
                  %s731 = sphi 0, %s768
                  %s732 = sphi %s627, %s771
                  %s733 = sphi %s638, %s772
                $region69: #{s2_forward.8} parent=65 // loop_header_branch
                  %730 = sbr.rel (%p727) target = $region73
                $region70: #{s2_forward.8} parent=65 // loop_body
                  %v734 = vld [vmem:[%s732] sm:$0xff]
                  %735 = vst [vmem:[%s733] sm:$0xff] %v734
                  %v736 = vld [vmem:[%s732 + $0x8] sm:$0xff]
                  %737 = vst [vmem:[%s733 + $0x8] sm:$0xff] %v736
                  %v738 = vld [vmem:[%s732 + $0x10] sm:$0xff]
                  %739 = vst [vmem:[%s733 + $0x10] sm:$0xff] %v738
                  %v740 = vld [vmem:[%s732 + $0x18] sm:$0xff]
                  %741 = vst [vmem:[%s733 + $0x18] sm:$0xff] %v740
                  %v742 = vld [vmem:[%s732 + $0x20] sm:$0xff]
                  %743 = vst [vmem:[%s733 + $0x20] sm:$0xff] %v742
                  %v744 = vld [vmem:[%s732 + $0x28] sm:$0xff]
                  %745 = vst [vmem:[%s733 + $0x28] sm:$0xff] %v744
                  %v746 = vld [vmem:[%s732 + $0x30] sm:$0xff]
                  %747 = vst [vmem:[%s733 + $0x30] sm:$0xff] %v746
                  %v748 = vld [vmem:[%s732 + $0x38] sm:$0xff]
                  %749 = vst [vmem:[%s733 + $0x38] sm:$0xff] %v748
                  %v750 = vld [vmem:[%s732 + $0x40] sm:$0xff]
                  %751 = vst [vmem:[%s733 + $0x40] sm:$0xff] %v750
                  %v752 = vld [vmem:[%s732 + $0x48] sm:$0xff]
                  %753 = vst [vmem:[%s733 + $0x48] sm:$0xff] %v752
                  %v754 = vld [vmem:[%s732 + $0x50] sm:$0xff]
                  %755 = vst [vmem:[%s733 + $0x50] sm:$0xff] %v754
                  %v756 = vld [vmem:[%s732 + $0x58] sm:$0xff]
                  %757 = vst [vmem:[%s733 + $0x58] sm:$0xff] %v756
                  %v758 = vld [vmem:[%s732 + $0x60] sm:$0xff]
                  %759 = vst [vmem:[%s733 + $0x60] sm:$0xff] %v758
                  %v760 = vld [vmem:[%s732 + $0x68] sm:$0xff]
                  %761 = vst [vmem:[%s733 + $0x68] sm:$0xff] %v760
                  %v762 = vld [vmem:[%s732 + $0x70] sm:$0xff]
                  %763 = vst [vmem:[%s733 + $0x70] sm:$0xff] %v762
                  %v764 = vld [vmem:[%s732 + $0x78] sm:$0xff]
                  %765 = vst [vmem:[%s733 + $0x78] sm:$0xff] %v764
                  %s766 = sadd.s32 1, %s731
                  %p767 = scmp.ge.s32.totalorder %s766, %s724
                  %s768 = scalar_select %p767, 0, %s766
                  %s769 = smul.u32 %s768, 128
                  %s770 = smul.u32 %s768, 128
                  %s771 = scalar_lea.vmem %s627, %s769 [#allocation2]
                  %s772 = scalar_lea.vmem %s638, %s770
                $region71: #{s2_forward.8} parent=65 // loop_footer
                  %s728 = sadd.s32 %s726, 1
                $region72: #{s2_forward.8} parent=65 // loop_footer_branch
                  %725 = sbr.rel target = $region68
                $region73: #{s2_forward.8} parent=65 // loop_exit
                  _
                %s773 = sshrl.u32 %s634, 4
                %s774 = sand.u32 %s634, 15
                %s775 = smul.u32 %s773, 16
                %s776 = smul.u32 8, %s775
                %s777 = scalar_lea.vmem %s627, %s776 [#allocation2]
                %s778 = smul.u32 8, %s775
                %s779 = scalar_lea.vmem %s638, %s778
                // While loop
                $region74: #{s2_forward.8} parent=65 // loop_pre_header
                  _
                $region75: #{s2_forward.8} parent=65 // loop_header
                  %s781 = sphi 0, %s783
                  %p782 = scmp.ge.s32.totalorder %s781, %s774
                  %s786 = sphi 0, %s793
                  %s787 = sphi %s777, %s796
                  %s788 = sphi %s779, %s797
                $region76: #{s2_forward.8} parent=65 // loop_header_branch
                  %785 = sbr.rel (%p782) target = $region80
                $region77: #{s2_forward.8} parent=65 // loop_body
                  %v789 = vld [vmem:[%s787] sm:$0xff]
                  %790 = vst [vmem:[%s788] sm:$0xff] %v789
                  %s791 = sadd.s32 1, %s786
                  %p792 = scmp.ge.s32.totalorder %s791, %s774
                  %s793 = scalar_select %p792, 0, %s791
                  %s794 = smul.u32 %s793, 8
                  %s795 = smul.u32 %s793, 8
                  %s796 = scalar_lea.vmem %s777, %s794 [#allocation2]
                  %s797 = scalar_lea.vmem %s779, %s795
                $region78: #{s2_forward.8} parent=65 // loop_footer
                  %s783 = sadd.s32 %s781, 1
                $region79: #{s2_forward.8} parent=65 // loop_footer_branch
                  %780 = sbr.rel target = $region75
                $region80: #{s2_forward.8} parent=65 // loop_exit
                  _
              $region66: #{s2_forward.8} parent=43 // pred_fallthru
                _
              // Predicated region
              $region81: #{s2_forward.8} parent=43 // pred_check
                _
              $region82: #{s2_forward.8} parent=43 // pred_check_branch
                %799 = sbr.rel target = $region84
              $region83: #{s2_forward.8} parent=43 // pred_region
                _
              $region84: #{s2_forward.8} parent=43 // pred_fallthru
                _
            $region44: #{s2_forward.8} parent=39 // pred_fallthru
              _
            // Predicated region
            $region45: #{s2_forward.8} parent=39 // pred_check
              _
            $region46: #{s2_forward.8} parent=39 // pred_check_branch
              %645 = sbr.rel target = $region48
            $region47: #{s2_forward.8} parent=39 // pred_region
              %s647 = ssub.s32 256, 1
              %s648 = sshrl.u32 %s634, 4
              // While loop
              $region49: #{s2_forward.8} parent=47 // loop_pre_header
                _
              $region50: #{s2_forward.8} parent=47 // loop_header
                %s650 = sphi 0, %s652
                %p651 = scmp.ge.s32.totalorder %s650, %s648
                %s655 = sphi 0, %s692
                %s656 = sphi %s627, %s695
                %s657 = sphi %s638, %s696
              $region51: #{s2_forward.8} parent=47 // loop_header_branch
                %654 = sbr.rel (%p651) target = $region55
              $region52: #{s2_forward.8} parent=47 // loop_body
                %v658 = vld [vmem:[%s656] sm:%s647]
                %659 = vst [vmem:[%s657] sm:%s647] %v658
                %v660 = vld [vmem:[%s656 + $0x8] sm:%s647]
                %661 = vst [vmem:[%s657 + $0x8] sm:%s647] %v660
                %v662 = vld [vmem:[%s656 + $0x10] sm:%s647]
                %663 = vst [vmem:[%s657 + $0x10] sm:%s647] %v662
                %v664 = vld [vmem:[%s656 + $0x18] sm:%s647]
                %665 = vst [vmem:[%s657 + $0x18] sm:%s647] %v664
                %v666 = vld [vmem:[%s656 + $0x20] sm:%s647]
                %667 = vst [vmem:[%s657 + $0x20] sm:%s647] %v666
                %v668 = vld [vmem:[%s656 + $0x28] sm:%s647]
                %669 = vst [vmem:[%s657 + $0x28] sm:%s647] %v668
                %v670 = vld [vmem:[%s656 + $0x30] sm:%s647]
                %671 = vst [vmem:[%s657 + $0x30] sm:%s647] %v670
                %v672 = vld [vmem:[%s656 + $0x38] sm:%s647]
                %673 = vst [vmem:[%s657 + $0x38] sm:%s647] %v672
                %v674 = vld [vmem:[%s656 + $0x40] sm:%s647]
                %675 = vst [vmem:[%s657 + $0x40] sm:%s647] %v674
                %v676 = vld [vmem:[%s656 + $0x48] sm:%s647]
                %677 = vst [vmem:[%s657 + $0x48] sm:%s647] %v676
                %v678 = vld [vmem:[%s656 + $0x50] sm:%s647]
                %679 = vst [vmem:[%s657 + $0x50] sm:%s647] %v678
                %v680 = vld [vmem:[%s656 + $0x58] sm:%s647]
                %681 = vst [vmem:[%s657 + $0x58] sm:%s647] %v680
                %v682 = vld [vmem:[%s656 + $0x60] sm:%s647]
                %683 = vst [vmem:[%s657 + $0x60] sm:%s647] %v682
                %v684 = vld [vmem:[%s656 + $0x68] sm:%s647]
                %685 = vst [vmem:[%s657 + $0x68] sm:%s647] %v684
                %v686 = vld [vmem:[%s656 + $0x70] sm:%s647]
                %687 = vst [vmem:[%s657 + $0x70] sm:%s647] %v686
                %v688 = vld [vmem:[%s656 + $0x78] sm:%s647]
                %689 = vst [vmem:[%s657 + $0x78] sm:%s647] %v688
                %s690 = sadd.s32 1, %s655
                %p691 = scmp.ge.s32.totalorder %s690, %s648
                %s692 = scalar_select %p691, 0, %s690
                %s693 = smul.u32 %s692, 128
                %s694 = smul.u32 %s692, 128
                %s695 = scalar_lea.vmem %s627, %s693 [#allocation2]
                %s696 = scalar_lea.vmem %s638, %s694
              $region53: #{s2_forward.8} parent=47 // loop_footer
                %s652 = sadd.s32 %s650, 1
              $region54: #{s2_forward.8} parent=47 // loop_footer_branch
                %649 = sbr.rel target = $region50
              $region55: #{s2_forward.8} parent=47 // loop_exit
                _
              %s697 = sshrl.u32 %s634, 4
              %s698 = sand.u32 %s634, 15
              %s699 = smul.u32 %s697, 16
              %s700 = smul.u32 8, %s699
              %s701 = scalar_lea.vmem %s627, %s700 [#allocation2]
              %s702 = smul.u32 8, %s699
              %s703 = scalar_lea.vmem %s638, %s702
              // While loop
              $region56: #{s2_forward.8} parent=47 // loop_pre_header
                _
              $region57: #{s2_forward.8} parent=47 // loop_header
                %s705 = sphi 0, %s707
                %p706 = scmp.ge.s32.totalorder %s705, %s698
                %s710 = sphi 0, %s717
                %s711 = sphi %s701, %s720
                %s712 = sphi %s703, %s721
              $region58: #{s2_forward.8} parent=47 // loop_header_branch
                %709 = sbr.rel (%p706) target = $region62
              $region59: #{s2_forward.8} parent=47 // loop_body
                %v713 = vld [vmem:[%s711] sm:%s647]
                %714 = vst [vmem:[%s712] sm:%s647] %v713
                %s715 = sadd.s32 1, %s710
                %p716 = scmp.ge.s32.totalorder %s715, %s698
                %s717 = scalar_select %p716, 0, %s715
                %s718 = smul.u32 %s717, 8
                %s719 = smul.u32 %s717, 8
                %s720 = scalar_lea.vmem %s701, %s718 [#allocation2]
                %s721 = scalar_lea.vmem %s703, %s719
              $region60: #{s2_forward.8} parent=47 // loop_footer
                %s707 = sadd.s32 %s705, 1
              $region61: #{s2_forward.8} parent=47 // loop_footer_branch
                %704 = sbr.rel target = $region57
              $region62: #{s2_forward.8} parent=47 // loop_exit
                _
            $region48: #{s2_forward.8} parent=39 // pred_fallthru
              _
          $region40: #{s2_forward.8} parent=35 // pred_fallthru
            _
          %800 = vnop
        $region36: #{s2_forward.8} parent=31 // pred_fallthru
          _
      $region32: #{s2_forward.8} parent=5 // pred_fallthru
        _
      %p801 = scmp.le.s32.totalorder 2, %s9
      // Predicated region
      $region85: #{s2_forward.8} parent=5 // pred_check
        %p802 = pneg %p801
      $region86: #{s2_forward.8} parent=5 // pred_check_branch
        %804 = sbr.rel (%p802) target = $region88
      $region87: #{s2_forward.8} parent=5 // pred_region
        %s805 = ssub.s32 %s9, 2
        // Predicated region
        $region89: #{s2_forward.8} parent=87 // pred_check
          %p806 = pneg %p106
        $region90: #{s2_forward.8} parent=87 // pred_check_branch
          %808 = sbr.rel (%p806) target = $region92
        $region91: #{s2_forward.8} parent=87 // pred_region
          %s809 = sand.u32 %s91, 1
          %s810 = sand.u32 %s91, 1
          %s811 = smul.addr %s810, 128
          %s812 = scalar_lea.vmem [#allocation2], %s811
        $region92: #{s2_forward.8} parent=87 // pred_fallthru
          _
      $region88: #{s2_forward.8} parent=5 // pred_fallthru
        _
    $region6: #{s2_forward.8} parent=1 // loop_footer
      %s13 = sadd.s32 1, %s9
    $region7: #{s2_forward.8} parent=1 // loop_footer_branch
      %8 = sbr.rel target = $region3
    $region8: #{s2_forward.8} parent=1 // loop_exit
      _

// kernel: s2_forward.10
$region0: #{s2_forward.10}
  #allocation0 [shape = 'u32[]', space=smem, size = 0x4, offset = 0x4, fixed_abs, tag = 'smem constant byte address 0x4 - core index']
  #allocation1 [shape = 'u32[72,128]{1,0:T(1,128)}', space=vmem, size = 0x9000, scoped, tag = 'internal scratch']
  %s0 = inlined_call_operand.vmem [shape: f32[10,17,96], index: 0, kind: input, shape index: {}]
  %s1 = inlined_call_operand.vmem [shape: f32[10,17,32], index: 1, kind: output, shape index: {}]
  %s2 = sld [smem:[#allocation0]]
  $region37: #{s2_forward.10} parent=0
    _
  %s4 = ssub.s32 1, %s2
  %s5 = scalar_select 0, %s4, %s2
  loop: start=0, step=1, limit=12
  $region2: #{s2_forward.10} parent=0 // loop_pre_header
    _
  $region3: #{s2_forward.10} parent=0 // loop_header
    %s7 = sphi 0, %s11
    %p8 = scmp.ge.s32.totalorder %s7, 12
    %s17 = sphi 0, %s19
    %s20 = sphi 0, %s17
    %s21 = sphi 0, %s20
    %s37 = sphi 0, %s21
    %s43 = sphi 0, %s45
    %s46 = sphi 0, %s43
    %s47 = sphi 0, %s46
    %s63 = sphi 0, %s47
  $region4: #{s2_forward.10} parent=0 // loop_header_branch
    %10 = sbr.rel (%p8) target = $region8
  $region5: #{s2_forward.10} parent=0 // loop_body
    %s12 = ssub.s32 %s7, 1
    %s13 = ssub.s32 %s7, 2
    %s14 = sadd.s32 %s7, 1
    %s15 = ssub.s32 %s7, %s14
    %p16 = scmp.eq.s32.totalorder %s15, 0
    %s18 = sadd.s32 %s17, 1
    %s19 = scalar_select %p16, %s17, %s18
    %p22 = pneg %p16
    %p23 = scmp.eq.s32.totalorder %s7, 9
    %p24 = por %p22, %p23
    %p25 = scmp.ne.s32.totalorder %s17, %s20
    %p26 = scmp.eq.s32.totalorder %s7, 0
    %p27 = por %p25, %p26
    %p28 = scmp.ne.s32.totalorder %s17, %s20
    %p29 = scmp.eq.s32.totalorder %s12, 9
    %p30 = por %p28, %p29
    %p31 = scmp.ne.s32.totalorder %s20, %s21
    %p32 = scmp.eq.s32.totalorder %s12, 0
    %p33 = por %p31, %p32
    %p34 = scmp.ne.s32.totalorder %s20, %s21
    %p35 = scmp.eq.s32.totalorder %s13, 9
    %p36 = por %p34, %p35
    %p38 = scmp.ne.s32.totalorder %s21, %s37
    %p39 = scmp.eq.s32.totalorder %s13, 0
    %p40 = por %p38, %p39
    %s41 = ssub.s32 %s7, %s14
    %p42 = scmp.eq.s32.totalorder %s41, 0
    %s44 = sadd.s32 %s43, 1
    %s45 = scalar_select %p42, %s43, %s44
    %p48 = pneg %p42
    %p49 = scmp.eq.s32.totalorder %s7, 9
    %p50 = por %p48, %p49
    %p51 = scmp.ne.s32.totalorder %s43, %s46
    %p52 = scmp.eq.s32.totalorder %s7, 0
    %p53 = por %p51, %p52
    %p54 = scmp.ne.s32.totalorder %s43, %s46
    %p55 = scmp.eq.s32.totalorder %s12, 9
    %p56 = por %p54, %p55
    %p57 = scmp.ne.s32.totalorder %s46, %s47
    %p58 = scmp.eq.s32.totalorder %s12, 0
    %p59 = por %p57, %p58
    %p60 = scmp.ne.s32.totalorder %s46, %s47
    %p61 = scmp.eq.s32.totalorder %s13, 9
    %p62 = por %p60, %p61
    %p64 = scmp.ne.s32.totalorder %s47, %s63
    %p65 = scmp.eq.s32.totalorder %s13, 0
    %p66 = por %p64, %p65
    %p67 = scmp.le.s32.totalorder 1, %s7
    %p68 = scmp.lt.s32.totalorder %s7, 11
    %p69 = pnand %p67, %p68
    %p70 = pneg %p69
    // Predicated region
    $region9: #{s2_forward.10} parent=5 // pred_check
      _
    $region10: #{s2_forward.10} parent=5 // pred_check_branch
      %72 = sbr.rel (%p69) target = $region12
    $region11: #{s2_forward.10} parent=5 // pred_region
      %s73 = ssub.s32 %s7, 1
    $region12: #{s2_forward.10} parent=5 // pred_fallthru
      _
    %p74 = scmp.lt.s32.totalorder %s7, 10
    // Predicated region
    $region13: #{s2_forward.10} parent=5 // pred_check
      %p75 = pneg %p74
    $region14: #{s2_forward.10} parent=5 // pred_check_branch
      %77 = sbr.rel (%p75) target = $region16
    $region15: #{s2_forward.10} parent=5 // pred_region
      // Predicated region
      $region17: #{s2_forward.10} parent=15 // pred_check
        %p78 = pneg %p27
      $region18: #{s2_forward.10} parent=15 // pred_check_branch
        %80 = sbr.rel (%p78) target = $region20
      $region19: #{s2_forward.10} parent=15 // pred_region
        %p81 = scmp.lt.s32.totalorder %s7, 9
        %s82 = scalar_select %p81, %s7, 9
        %s83 = smul.addr %s82, 3
        %s84 = smul.addr %s83, 8
        %s85 = scalar_lea.vmem %s0, %s84
      $region20: #{s2_forward.10} parent=15 // pred_fallthru
        _
    $region16: #{s2_forward.10} parent=5 // pred_fallthru
      _
    %p86 = scmp.le.s32.totalorder 1, %s7
    %p87 = scmp.lt.s32.totalorder %s7, 11
    %p88 = pnand %p86, %p87
    %p89 = pneg %p88
    // Predicated region
    $region21: #{s2_forward.10} parent=5 // pred_check
      _
    $region22: #{s2_forward.10} parent=5 // pred_check_branch
      %91 = sbr.rel (%p88) target = $region24
    $region23: #{s2_forward.10} parent=5 // pred_region
      %s92 = ssub.s32 %s7, 1
      %p93 = scmp.lt.s32.totalorder %s12, 9
      %s94 = scalar_select %p93, %s12, 9
      %s95 = smul.addr %s94, 3
      %s96 = smul.addr %s95, 8
      %s97 = scalar_lea.vmem %s0, %s96
      %p98 = pneg %p33
      %p99 = pneg %p30
      %p100 = pneg %p59
      %p101 = pneg %p56
      %p102 = scmp.lt.s32.totalorder %s12, 9
      %s103 = scalar_select %p102, %s12, 9
      %s104 = smul.addr %s103, 3
      %s105 = smul.addr %s104, 8
      %s106 = scalar_lea.vmem %s1, %s105
      %p107 = scmp.lt.s32.totalorder %s12, 9
      %s108 = scalar_select %p107, %s12, 9
      %s109 = smul.addr %s108, 3
      %s110 = smul.addr %s109, 8
      %s111 = scalar_lea.vmem %s0, %s110
      %p112 = scmp.lt.s32.totalorder %s12, 9
      %s113 = scalar_select %p112, %s12, 9
      %s114 = smul.addr %s113, 3
      %s115 = smul.addr %s114, 8
      %s116 = scalar_lea.vmem %s1, %s115
      %v117 = vld [vmem:[%s111] sm:$0xff]
      %v118 = vld [vmem:[%s111 + $0x8] sm:$0xff]
      %v119 = vld [vmem:[%s111 + $0x10] sm:$0x1]
      %123 = vrot.lane.b32.xlu0 %v117, 96
      %v124 = vpop.permute.xlu0 %123
      %125 = vrot.lane.b32.xlu0 %v118, 96
      %v126 = vpop.permute.xlu0 %125
      %127 = vrot.lane.b32.xlu0 %v119, 96
      %v128 = vpop.permute.xlu0 %127
      %vm129 = vcmask 64512
      %v130 = vsel %vm129, %v117, 0
      %v132 = vsel %vm129, %v118, 0
      %v134 = vsel %vm129, %v119, 0
      %v136 = vsel %vm129, %v124, 0
      %v138 = vsel %vm129, %v126, 0
      %v140 = vsel %vm129, %v128, 0
      %142 = vmatpush.xpose.msra.mxu0 0.0
      %143 = vmatpush.xpose.msra.mxu0 0.0
      %144 = vmatpush.xpose.msra.mxu0 0.0
      %145 = vmatpush.xpose.msra.mxu0 0.0
      %146 = vmatpush.xpose.msra.mxu0 0.0
      %147 = vmatpush.xpose.msra.mxu0 0.0
      %148 = vmatpush.xpose.msra.mxu0 0.0
      %149 = vmatpush.xpose.msra.mxu0 0.0
      %150 = vmatpush.xpose.msra.mxu0 0.0
      %151 = vmatpush.xpose.msra.mxu0 0.0
      %152 = vmatpush.xpose.msra.mxu0 0.0
      %153 = vmatpush.xpose.msra.mxu0 0.0
      %154 = vmatpush.xpose.msra.mxu0 0.0
      %155 = vmatpush.xpose.msra.mxu0 %v140
      %156 = vmatpush.xpose.msra.mxu0 %v138
      %157 = vmatpush.xpose.msra.mxu0 %v136
      %158 = vmatmul.f32.gmra.mxu0 %v130
      %v159 = vpop.f32.mrf.mxu0
      %v160 = vadd.f32 0.0, %v159
      %161 = vmatmul.f32.gmra.mxu0 %v132
      %v162 = vpop.f32.mrf.mxu0
      %v163 = vadd.f32 0.0, %v162
      %164 = vmatmul.f32.gmra.mxu0 %v134
      %v165 = vpop.f32.mrf.mxu0
      %v166 = vadd.f32 0.0, %v165
      %167 = vdwg.mxu0
      %v168 = vmul.f32 %v160, 0.35355338
      %v169 = vmul.f32 %v163, 0.35355338
      %v170 = vmul.f32 %v166, 0.35355338
      %vm171 = vcmask 138240
      %v172 = vsel %vm171, %v168, -inf
      %173 = vmax.xlane.f32.xlu0 %v172
      %v174 = vpop.xlane.xlu0 %173
      %v175 = vsel %vm171, %v169, -inf
      %176 = vmax.xlane.f32.xlu0 %v175
      %v177 = vpop.xlane.xlu0 %176
      %vm178 = vcmask 131072
      %v179 = vsel %vm178, %v170, -inf
      %180 = vmax.xlane.f32.xlu0 %v179
      %v181 = vpop.xlane.xlu0 %180
      %v182 = vsub.f32 %v168, %v174
      %v183 = vsub.f32 %v169, %v177
      %v184 = vsub.f32 %v170, %v181
      %v185 = vmul.f32 %v182, 1.442695
      %v186 = vpow.pop %v185
      %v187 = vmul.f32 %v183, 1.442695
      %v188 = vpow.pop %v187
      %v189 = vmul.f32 %v184, 1.442695
      %v190 = vpow.pop %v189
      %v191 = vsel %vm171, %v186, 0.0
      %192 = vadd.xlane.f32.xlu0 %v191
      %v193 = vpop.xlane.xlu0 %192
      %v194 = vsel %vm171, %v188, 0.0
      %195 = vadd.xlane.f32.xlu0 %v194
      %v196 = vpop.xlane.xlu0 %195
      %v197 = vsel %vm178, %v190, 0.0
      %198 = vadd.xlane.f32.xlu0 %v197
      %v199 = vpop.xlane.xlu0 %198
      %v200 = vrcp.pop %v193
      %v201 = vrcp.pop %v196
      %v202 = vrcp.pop %v199
      %v203 = vmul.f32 %v186, %v200
      %v204 = vmul.f32 %v188, %v201
      %v205 = vmul.f32 %v190, %v202
      %206 = vrot.lane.b32.xlu0 %v117, 64
      %v207 = vpop.permute.xlu0 %206
      %208 = vrot.lane.b32.xlu0 %v118, 64
      %v209 = vpop.permute.xlu0 %208
      %210 = vrot.lane.b32.xlu0 %v119, 64
      %v211 = vpop.permute.xlu0 %210
      %v215 = vsel %vm171, %v203, 0
      %v218 = vsel %vm171, %v204, 0
      %v221 = vsel %vm171, %v205, 0
      %vm223 = vcmask 1040384
      %v224 = vsel %vm223, %v211, 0
      %226 = vmatpush.msra.mxu0 0.0
      %227 = vmatpush.msra.mxu0 0.0
      %228 = vmatpush.msra.mxu0 0.0
      %229 = vmatpush.msra.mxu0 0.0
      %230 = vmatpush.msra.mxu0 0.0
      %231 = vmatpush.msra.mxu0 0.0
      %232 = vmatpush.msra.mxu0 0.0
      %233 = vmatpush.msra.mxu0 0.0
      %234 = vmatpush.msra.mxu0 0.0
      %235 = vmatpush.msra.mxu0 0.0
      %236 = vmatpush.msra.mxu0 0.0
      %237 = vmatpush.msra.mxu0 0.0
      %238 = vmatpush.msra.mxu0 0.0
      %239 = vmatpush.msra.mxu0 %v224
      %240 = vmatpush.msra.mxu0 %v209
      %241 = vmatpush.msra.mxu0 %v207
      %242 = vmatmul.f32.gmra.mxu0 %v215
      %v243 = vpop.f32.mrf.mxu0
      %v244 = vadd.f32 0.0, %v243
      %245 = vmatmul.f32.gmra.mxu0 %v218
      %v246 = vpop.f32.mrf.mxu0
      %v247 = vadd.f32 0.0, %v246
      %248 = vmatmul.f32.gmra.mxu0 %v221
      %v249 = vpop.f32.mrf.mxu0
      %v250 = vadd.f32 0.0, %v249
      %251 = vdwg.mxu0
      %252 = vrot.lane.b32.xlu0 %v117, 120
      %v253 = vpop.permute.xlu0 %252
      %254 = vrot.lane.b32.xlu0 %v118, 120
      %v255 = vpop.permute.xlu0 %254
      %256 = vrot.lane.b32.xlu0 %v119, 120
      %v257 = vpop.permute.xlu0 %256
      %258 = vrot.lane.b32.xlu0 %v117, 88
      %v259 = vpop.permute.xlu0 %258
      %260 = vrot.lane.b32.xlu0 %v118, 88
      %v261 = vpop.permute.xlu0 %260
      %262 = vrot.lane.b32.xlu0 %v119, 88
      %v263 = vpop.permute.xlu0 %262
      %v264 = vsel %vm129, %v253, 0
      %v266 = vsel %vm129, %v255, 0
      %v268 = vsel %vm129, %v257, 0
      %v270 = vsel %vm129, %v259, 0
      %v272 = vsel %vm129, %v261, 0
      %v274 = vsel %vm129, %v263, 0
      %276 = vmatpush.xpose.msra.mxu0 0.0
      %277 = vmatpush.xpose.msra.mxu0 0.0
      %278 = vmatpush.xpose.msra.mxu0 0.0
      %279 = vmatpush.xpose.msra.mxu0 0.0
      %280 = vmatpush.xpose.msra.mxu0 0.0
      %281 = vmatpush.xpose.msra.mxu0 0.0
      %282 = vmatpush.xpose.msra.mxu0 0.0
      %283 = vmatpush.xpose.msra.mxu0 0.0
      %284 = vmatpush.xpose.msra.mxu0 0.0
      %285 = vmatpush.xpose.msra.mxu0 0.0
      %286 = vmatpush.xpose.msra.mxu0 0.0
      %287 = vmatpush.xpose.msra.mxu0 0.0
      %288 = vmatpush.xpose.msra.mxu0 0.0
      %289 = vmatpush.xpose.msra.mxu0 %v274
      %290 = vmatpush.xpose.msra.mxu0 %v272
      %291 = vmatpush.xpose.msra.mxu0 %v270
      %292 = vmatmul.f32.gmra.mxu0 %v264
      %v293 = vpop.f32.mrf.mxu0
      %v294 = vadd.f32 0.0, %v293
      %295 = vmatmul.f32.gmra.mxu0 %v266
      %v296 = vpop.f32.mrf.mxu0
      %v297 = vadd.f32 0.0, %v296
      %298 = vmatmul.f32.gmra.mxu0 %v268
      %v299 = vpop.f32.mrf.mxu0
      %v300 = vadd.f32 0.0, %v299
      %301 = vdwg.mxu0
      %v302 = vmul.f32 %v294, 0.35355338
      %v303 = vmul.f32 %v297, 0.35355338
      %v304 = vmul.f32 %v300, 0.35355338
      %v305 = vsel %vm171, %v302, -inf
      %306 = vmax.xlane.f32.xlu0 %v305
      %v307 = vpop.xlane.xlu0 %306
      %v308 = vsel %vm171, %v303, -inf
      %309 = vmax.xlane.f32.xlu0 %v308
      %v310 = vpop.xlane.xlu0 %309
      %v311 = vsel %vm178, %v304, -inf
      %312 = vmax.xlane.f32.xlu0 %v311
      %v313 = vpop.xlane.xlu0 %312
      %v314 = vsub.f32 %v302, %v307
      %v315 = vsub.f32 %v303, %v310
      %v316 = vsub.f32 %v304, %v313
      %v317 = vmul.f32 %v314, 1.442695
      %v318 = vpow.pop %v317
      %v319 = vmul.f32 %v315, 1.442695
      %v320 = vpow.pop %v319
      %v321 = vmul.f32 %v316, 1.442695
      %v322 = vpow.pop %v321
      %v323 = vsel %vm171, %v318, 0.0
      %324 = vadd.xlane.f32.xlu0 %v323
      %v325 = vpop.xlane.xlu0 %324
      %v326 = vsel %vm171, %v320, 0.0
      %327 = vadd.xlane.f32.xlu0 %v326
      %v328 = vpop.xlane.xlu0 %327
      %v329 = vsel %vm178, %v322, 0.0
      %330 = vadd.xlane.f32.xlu0 %v329
      %v331 = vpop.xlane.xlu0 %330
      %v332 = vrcp.pop %v325
      %v333 = vrcp.pop %v328
      %v334 = vrcp.pop %v331
      %v335 = vmul.f32 %v318, %v332
      %v336 = vmul.f32 %v320, %v333
      %v337 = vmul.f32 %v322, %v334
      %338 = vrot.lane.b32.xlu0 %v117, 56
      %v339 = vpop.permute.xlu0 %338
      %340 = vrot.lane.b32.xlu0 %v118, 56
      %v341 = vpop.permute.xlu0 %340
      %342 = vrot.lane.b32.xlu0 %v119, 56
      %v343 = vpop.permute.xlu0 %342
      %v347 = vsel %vm171, %v335, 0
      %v350 = vsel %vm171, %v336, 0
      %v353 = vsel %vm171, %v337, 0
      %v355 = vsel %vm223, %v343, 0
      %357 = vmatpush.msra.mxu0 0.0
      %358 = vmatpush.msra.mxu0 0.0
      %359 = vmatpush.msra.mxu0 0.0
      %360 = vmatpush.msra.mxu0 0.0
      %361 = vmatpush.msra.mxu0 0.0
      %362 = vmatpush.msra.mxu0 0.0
      %363 = vmatpush.msra.mxu0 0.0
      %364 = vmatpush.msra.mxu0 0.0
      %365 = vmatpush.msra.mxu0 0.0
      %366 = vmatpush.msra.mxu0 0.0
      %367 = vmatpush.msra.mxu0 0.0
      %368 = vmatpush.msra.mxu0 0.0
      %369 = vmatpush.msra.mxu0 0.0
      %370 = vmatpush.msra.mxu0 %v355
      %371 = vmatpush.msra.mxu0 %v341
      %372 = vmatpush.msra.mxu0 %v339
      %373 = vmatmul.f32.gmra.mxu0 %v347
      %v374 = vpop.f32.mrf.mxu0
      %v375 = vadd.f32 0.0, %v374
      %376 = vmatmul.f32.gmra.mxu0 %v350
      %v377 = vpop.f32.mrf.mxu0
      %v378 = vadd.f32 0.0, %v377
      %379 = vmatmul.f32.gmra.mxu0 %v353
      %v380 = vpop.f32.mrf.mxu0
      %v381 = vadd.f32 0.0, %v380
      %382 = vdwg.mxu0
      %383 = vrot.lane.b32.xlu0 %v117, 112
      %v384 = vpop.permute.xlu0 %383
      %385 = vrot.lane.b32.xlu0 %v118, 112
      %v386 = vpop.permute.xlu0 %385
      %387 = vrot.lane.b32.xlu0 %v119, 112
      %v388 = vpop.permute.xlu0 %387
      %389 = vrot.lane.b32.xlu0 %v117, 80
      %v390 = vpop.permute.xlu0 %389
      %391 = vrot.lane.b32.xlu0 %v118, 80
      %v392 = vpop.permute.xlu0 %391
      %393 = vrot.lane.b32.xlu0 %v119, 80
      %v394 = vpop.permute.xlu0 %393
      %v395 = vsel %vm129, %v384, 0
      %v397 = vsel %vm129, %v386, 0
      %v399 = vsel %vm129, %v388, 0
      %v401 = vsel %vm129, %v390, 0
      %v403 = vsel %vm129, %v392, 0
      %v405 = vsel %vm129, %v394, 0
      %407 = vmatpush.xpose.msra.mxu0 0.0
      %408 = vmatpush.xpose.msra.mxu0 0.0
      %409 = vmatpush.xpose.msra.mxu0 0.0
      %410 = vmatpush.xpose.msra.mxu0 0.0
      %411 = vmatpush.xpose.msra.mxu0 0.0
      %412 = vmatpush.xpose.msra.mxu0 0.0
      %413 = vmatpush.xpose.msra.mxu0 0.0
      %414 = vmatpush.xpose.msra.mxu0 0.0
      %415 = vmatpush.xpose.msra.mxu0 0.0
      %416 = vmatpush.xpose.msra.mxu0 0.0
      %417 = vmatpush.xpose.msra.mxu0 0.0
      %418 = vmatpush.xpose.msra.mxu0 0.0
      %419 = vmatpush.xpose.msra.mxu0 0.0
      %420 = vmatpush.xpose.msra.mxu0 %v405
      %421 = vmatpush.xpose.msra.mxu0 %v403
      %422 = vmatpush.xpose.msra.mxu0 %v401
      %423 = vmatmul.f32.gmra.mxu0 %v395
      %v424 = vpop.f32.mrf.mxu0
      %v425 = vadd.f32 0.0, %v424
      %426 = vmatmul.f32.gmra.mxu0 %v397
      %v427 = vpop.f32.mrf.mxu0
      %v428 = vadd.f32 0.0, %v427
      %429 = vmatmul.f32.gmra.mxu0 %v399
      %v430 = vpop.f32.mrf.mxu0
      %v431 = vadd.f32 0.0, %v430
      %432 = vdwg.mxu0
      %v433 = vmul.f32 %v425, 0.35355338
      %v434 = vmul.f32 %v428, 0.35355338
      %v435 = vmul.f32 %v431, 0.35355338
      %v436 = vsel %vm171, %v433, -inf
      %437 = vmax.xlane.f32.xlu0 %v436
      %v438 = vpop.xlane.xlu0 %437
      %v439 = vsel %vm171, %v434, -inf
      %440 = vmax.xlane.f32.xlu0 %v439
      %v441 = vpop.xlane.xlu0 %440
      %v442 = vsel %vm178, %v435, -inf
      %443 = vmax.xlane.f32.xlu0 %v442
      %v444 = vpop.xlane.xlu0 %443
      %v445 = vsub.f32 %v433, %v438
      %v446 = vsub.f32 %v434, %v441
      %v447 = vsub.f32 %v435, %v444
      %v448 = vmul.f32 %v445, 1.442695
      %v449 = vpow.pop %v448
      %v450 = vmul.f32 %v446, 1.442695
      %v451 = vpow.pop %v450
      %v452 = vmul.f32 %v447, 1.442695
      %v453 = vpow.pop %v452
      %v454 = vsel %vm171, %v449, 0.0
      %455 = vadd.xlane.f32.xlu0 %v454
      %v456 = vpop.xlane.xlu0 %455
      %v457 = vsel %vm171, %v451, 0.0
      %458 = vadd.xlane.f32.xlu0 %v457
      %v459 = vpop.xlane.xlu0 %458
      %v460 = vsel %vm178, %v453, 0.0
      %461 = vadd.xlane.f32.xlu0 %v460
      %v462 = vpop.xlane.xlu0 %461
      %v463 = vrcp.pop %v456
      %v464 = vrcp.pop %v459
      %v465 = vrcp.pop %v462
      %v466 = vmul.f32 %v449, %v463
      %v467 = vmul.f32 %v451, %v464
      %v468 = vmul.f32 %v453, %v465
      %469 = vrot.lane.b32.xlu0 %v117, 48
      %v470 = vpop.permute.xlu0 %469
      %471 = vrot.lane.b32.xlu0 %v118, 48
      %v472 = vpop.permute.xlu0 %471
      %473 = vrot.lane.b32.xlu0 %v119, 48
      %v474 = vpop.permute.xlu0 %473
      %v478 = vsel %vm171, %v466, 0
      %v481 = vsel %vm171, %v467, 0
      %v484 = vsel %vm171, %v468, 0
      %v486 = vsel %vm223, %v474, 0
      %488 = vmatpush.msra.mxu0 0.0
      %489 = vmatpush.msra.mxu0 0.0
      %490 = vmatpush.msra.mxu0 0.0
      %491 = vmatpush.msra.mxu0 0.0
      %492 = vmatpush.msra.mxu0 0.0
      %493 = vmatpush.msra.mxu0 0.0
      %494 = vmatpush.msra.mxu0 0.0
      %495 = vmatpush.msra.mxu0 0.0
      %496 = vmatpush.msra.mxu0 0.0
      %497 = vmatpush.msra.mxu0 0.0
      %498 = vmatpush.msra.mxu0 0.0
      %499 = vmatpush.msra.mxu0 0.0
      %500 = vmatpush.msra.mxu0 0.0
      %501 = vmatpush.msra.mxu0 %v486
      %502 = vmatpush.msra.mxu0 %v472
      %503 = vmatpush.msra.mxu0 %v470
      %504 = vmatmul.f32.gmra.mxu0 %v478
      %v505 = vpop.f32.mrf.mxu0
      %v506 = vadd.f32 0.0, %v505
      %507 = vmatmul.f32.gmra.mxu0 %v481
      %v508 = vpop.f32.mrf.mxu0
      %v509 = vadd.f32 0.0, %v508
      %510 = vmatmul.f32.gmra.mxu0 %v484
      %v511 = vpop.f32.mrf.mxu0
      %v512 = vadd.f32 0.0, %v511
      %513 = vdwg.mxu0
      %514 = vrot.lane.b32.xlu0 %v117, 104
      %v515 = vpop.permute.xlu0 %514
      %516 = vrot.lane.b32.xlu0 %v118, 104
      %v517 = vpop.permute.xlu0 %516
      %518 = vrot.lane.b32.xlu0 %v119, 104
      %v519 = vpop.permute.xlu0 %518
      %520 = vrot.lane.b32.xlu0 %v117, 72
      %v521 = vpop.permute.xlu0 %520
      %522 = vrot.lane.b32.xlu0 %v118, 72
      %v523 = vpop.permute.xlu0 %522
      %524 = vrot.lane.b32.xlu0 %v119, 72
      %v525 = vpop.permute.xlu0 %524
      %v526 = vsel %vm129, %v515, 0
      %v528 = vsel %vm129, %v517, 0
      %v530 = vsel %vm129, %v519, 0
      %v532 = vsel %vm129, %v521, 0
      %v534 = vsel %vm129, %v523, 0
      %v536 = vsel %vm129, %v525, 0
      %538 = vmatpush.xpose.msra.mxu0 0.0
      %539 = vmatpush.xpose.msra.mxu0 0.0
      %540 = vmatpush.xpose.msra.mxu0 0.0
      %541 = vmatpush.xpose.msra.mxu0 0.0
      %542 = vmatpush.xpose.msra.mxu0 0.0
      %543 = vmatpush.xpose.msra.mxu0 0.0
      %544 = vmatpush.xpose.msra.mxu0 0.0
      %545 = vmatpush.xpose.msra.mxu0 0.0
      %546 = vmatpush.xpose.msra.mxu0 0.0
      %547 = vmatpush.xpose.msra.mxu0 0.0
      %548 = vmatpush.xpose.msra.mxu0 0.0
      %549 = vmatpush.xpose.msra.mxu0 0.0
      %550 = vmatpush.xpose.msra.mxu0 0.0
      %551 = vmatpush.xpose.msra.mxu0 %v536
      %552 = vmatpush.xpose.msra.mxu0 %v534
      %553 = vmatpush.xpose.msra.mxu0 %v532
      %554 = vmatmul.f32.gmra.mxu0 %v526
      %v555 = vpop.f32.mrf.mxu0
      %v556 = vadd.f32 0.0, %v555
      %557 = vmatmul.f32.gmra.mxu0 %v528
      %v558 = vpop.f32.mrf.mxu0
      %v559 = vadd.f32 0.0, %v558
      %560 = vmatmul.f32.gmra.mxu0 %v530
      %v561 = vpop.f32.mrf.mxu0
      %v562 = vadd.f32 0.0, %v561
      %563 = vdwg.mxu0
      %v564 = vmul.f32 %v556, 0.35355338
      %v565 = vmul.f32 %v559, 0.35355338
      %v566 = vmul.f32 %v562, 0.35355338
      %v567 = vsel %vm171, %v564, -inf
      %568 = vmax.xlane.f32.xlu0 %v567
      %v569 = vpop.xlane.xlu0 %568
      %v570 = vsel %vm171, %v565, -inf
      %571 = vmax.xlane.f32.xlu0 %v570
      %v572 = vpop.xlane.xlu0 %571
      %v573 = vsel %vm178, %v566, -inf
      %574 = vmax.xlane.f32.xlu0 %v573
      %v575 = vpop.xlane.xlu0 %574
      %v576 = vsub.f32 %v564, %v569
      %v577 = vsub.f32 %v565, %v572
      %v578 = vsub.f32 %v566, %v575
      %v579 = vmul.f32 %v576, 1.442695
      %v580 = vpow.pop %v579
      %v581 = vmul.f32 %v577, 1.442695
      %v582 = vpow.pop %v581
      %v583 = vmul.f32 %v578, 1.442695
      %v584 = vpow.pop %v583
      %v585 = vsel %vm171, %v580, 0.0
      %586 = vadd.xlane.f32.xlu0 %v585
      %v587 = vpop.xlane.xlu0 %586
      %v588 = vsel %vm171, %v582, 0.0
      %589 = vadd.xlane.f32.xlu0 %v588
      %v590 = vpop.xlane.xlu0 %589
      %v591 = vsel %vm178, %v584, 0.0
      %592 = vadd.xlane.f32.xlu0 %v591
      %v593 = vpop.xlane.xlu0 %592
      %v594 = vrcp.pop %v587
      %v595 = vrcp.pop %v590
      %v596 = vrcp.pop %v593
      %v597 = vmul.f32 %v580, %v594
      %v598 = vmul.f32 %v582, %v595
      %v599 = vmul.f32 %v584, %v596
      %600 = vrot.lane.b32.xlu0 %v117, 40
      %v601 = vpop.permute.xlu0 %600
      %602 = vrot.lane.b32.xlu0 %v118, 40
      %v603 = vpop.permute.xlu0 %602
      %604 = vrot.lane.b32.xlu0 %v119, 40
      %v605 = vpop.permute.xlu0 %604
      %v609 = vsel %vm171, %v597, 0
      %v612 = vsel %vm171, %v598, 0
      %v615 = vsel %vm171, %v599, 0
      %v617 = vsel %vm223, %v605, 0
      %619 = vmatpush.msra.mxu0 0.0
      %620 = vmatpush.msra.mxu0 0.0
      %621 = vmatpush.msra.mxu0 0.0
      %622 = vmatpush.msra.mxu0 0.0
      %623 = vmatpush.msra.mxu0 0.0
      %624 = vmatpush.msra.mxu0 0.0
      %625 = vmatpush.msra.mxu0 0.0
      %626 = vmatpush.msra.mxu0 0.0
      %627 = vmatpush.msra.mxu0 0.0
      %628 = vmatpush.msra.mxu0 0.0
      %629 = vmatpush.msra.mxu0 0.0
      %630 = vmatpush.msra.mxu0 0.0
      %631 = vmatpush.msra.mxu0 0.0
      %632 = vmatpush.msra.mxu0 %v617
      %633 = vmatpush.msra.mxu0 %v603
      %634 = vmatpush.msra.mxu0 %v601
      %635 = vmatmul.f32.gmra.mxu0 %v609
      %v636 = vpop.f32.mrf.mxu0
      %v637 = vadd.f32 0.0, %v636
      %638 = vmatmul.f32.gmra.mxu0 %v612
      %v639 = vpop.f32.mrf.mxu0
      %v640 = vadd.f32 0.0, %v639
      %641 = vmatmul.f32.gmra.mxu0 %v615
      %v642 = vpop.f32.mrf.mxu0
      %v643 = vadd.f32 0.0, %v642
      %644 = vdwg.mxu0
      %648 = vrot.lane.b32.xlu0 %v375, 8
      %v649 = vpop.permute.xlu0 %648
      %650 = vrot.lane.b32.xlu0 %v378, 8
      %v651 = vpop.permute.xlu0 %650
      %652 = vrot.lane.b32.xlu0 %v381, 8
      %v653 = vpop.permute.xlu0 %652
      %660 = vrot.lane.b32.xlu0 %v506, 16
      %v661 = vpop.permute.xlu0 %660
      %662 = vrot.lane.b32.xlu0 %v509, 16
      %v663 = vpop.permute.xlu0 %662
      %664 = vrot.lane.b32.xlu0 %v512, 16
      %v665 = vpop.permute.xlu0 %664
      %672 = vrot.lane.b32.xlu0 %v637, 24
      %v673 = vpop.permute.xlu0 %672
      %674 = vrot.lane.b32.xlu0 %v640, 24
      %v675 = vpop.permute.xlu0 %674
      %676 = vrot.lane.b32.xlu0 %v643, 24
      %v677 = vpop.permute.xlu0 %676
      %v681 = vsel %vm129, %v244, %v649
      %v682 = vsel %vm129, %v247, %v651
      %v683 = vsel %vm129, %v250, %v653
      %vm684 = vcmask 130048
      %v685 = vsel %vm684, %v681, %v661
      %v686 = vsel %vm684, %v682, %v663
      %v687 = vsel %vm684, %v683, %v665
      %vm688 = vcmask 195584
      %v689 = vsel %vm688, %v685, %v673
      %v690 = vsel %vm688, %v686, %v675
      %v691 = vsel %vm688, %v687, %v677
      %vm692 = vcmask 261120
      %693 = vst.msk [vmem:[%s116] sm:$0xff] %vm692, %v689
      %694 = vst.msk [vmem:[%s116 + $0x8] sm:$0xff] %vm692, %v690
      %vm695 = vcmask 253952
      %696 = vst.msk [vmem:[%s116 + $0x10] sm:$0x1] %vm695, %v691
      %p697 = scmp.lt.s32.totalorder %s12, 9
      %s698 = scalar_select %p697, %s12, 9
      %s699 = smul.addr %s698, 3
      %s700 = smul.addr %s699, 8
      %s701 = scalar_lea.vmem %s1, %s700
      // Predicated region
      $region25: #{s2_forward.10} parent=23 // pred_check
        %p702 = pneg %p56
      $region26: #{s2_forward.10} parent=23 // pred_check_branch
        %704 = sbr.rel (%p702) target = $region28
      $region27: #{s2_forward.10} parent=23 // pred_region
        _
      $region28: #{s2_forward.10} parent=23 // pred_fallthru
        _
    $region24: #{s2_forward.10} parent=5 // pred_fallthru
      _
    %p705 = scmp.le.s32.totalorder 2, %s7
    // Predicated region
    $region29: #{s2_forward.10} parent=5 // pred_check
      %p706 = pneg %p705
    $region30: #{s2_forward.10} parent=5 // pred_check_branch
      %708 = sbr.rel (%p706) target = $region32
    $region31: #{s2_forward.10} parent=5 // pred_region
      %s709 = ssub.s32 %s7, 2
      // Predicated region
      $region33: #{s2_forward.10} parent=31 // pred_check
        %p710 = pneg %p62
      $region34: #{s2_forward.10} parent=31 // pred_check_branch
        %712 = sbr.rel (%p710) target = $region36
      $region35: #{s2_forward.10} parent=31 // pred_region
        %p713 = scmp.lt.s32.totalorder %s13, 9
        %s714 = scalar_select %p713, %s13, 9
        %s715 = smul.addr %s714, 3
        %s716 = smul.addr %s715, 8
        %s717 = scalar_lea.vmem %s1, %s716
      $region36: #{s2_forward.10} parent=31 // pred_fallthru
        _
    $region32: #{s2_forward.10} parent=5 // pred_fallthru
      _
  $region6: #{s2_forward.10} parent=0 // loop_footer
    %s11 = sadd.s32 1, %s7
  $region7: #{s2_forward.10} parent=0 // loop_footer_branch
    %6 = sbr.rel target = $region3
  $region8: #{s2_forward.10} parent=0 // loop_exit
    _

// kernel: s2_forward.9
$region0: #{s2_forward.9}
  #allocation0 [shape = 'u32[]', space=smem, size = 0x4, offset = 0x4, fixed_abs, tag = 'smem constant byte address 0x4 - core index']
  #allocation1 [shape = 'u32[72,128]{1,0:T(1,128)}', space=vmem, size = 0x9000, scoped, tag = 'internal scratch']
  %s0 = inlined_call_operand.vmem [shape: f32[170,32], index: 0, kind: input, shape index: {}]
  %s1 = inlined_call_operand.vmem [shape: f32[1,32], index: 1, kind: input, shape index: {}]
  %s2 = inlined_call_operand.vmem [shape: f32[1,32], index: 2, kind: input, shape index: {}]
  %s3 = inlined_call_operand.vmem [shape: f32[32,96], index: 3, kind: input, shape index: {}]
  %s4 = inlined_call_operand.vmem [shape: f32[1,96], index: 4, kind: input, shape index: {}]
  %s5 = inlined_call_operand.vmem [shape: f32[170,96], index: 5, kind: output, shape index: {}]
  %s6 = sld [smem:[#allocation0]]
  $region101: #{s2_forward.9} parent=0
    _
  %s8 = ssub.s32 1, %s6
  %s9 = scalar_select 0, %s8, %s6
  $region1: #{s2_forward.9} parent=0
    #allocation2 [shape = 'u8[131072]{0}', space=vmem, size = 0x20000, scoped, tag = 'output window, operand 0']
    loop: start=0, step=1, limit=4
    $region2: #{s2_forward.9} parent=1 // loop_pre_header
      _
    $region3: #{s2_forward.9} parent=1 // loop_header
      %s11 = sphi 0, %s15
      %p12 = scmp.ge.s32.totalorder %s11, 4
      %s18 = sphi 0, %s30
      %s19 = sphi 0, %s26
      %s20 = sphi 0, %s18
      %s21 = sphi 0, %s19
      %s22 = sphi 0, %s20
      %s23 = sphi 0, %s21
      %s33 = sphi 0, %s35
      %s36 = sphi 0, %s33
      %s37 = sphi 0, %s36
      %s53 = sphi 0, %s37
      %s57 = sphi 0, %s57
      %s59 = sphi 0, %s57
      %s60 = sphi 0, %s59
      %s74 = sphi 0, %s60
      %s78 = sphi 0, %s78
      %s80 = sphi 0, %s78
      %s81 = sphi 0, %s80
      %s95 = sphi 0, %s81
      %s101 = sphi 0, %s103
      %s104 = sphi 0, %s101
      %s105 = sphi 0, %s104
      %s121 = sphi 0, %s105
      %s127 = sphi 0, %s129
      %s130 = sphi 0, %s127
      %s131 = sphi 0, %s130
      %s147 = sphi 0, %s131
      %s155 = sphi 0, %s157
      %s158 = sphi 0, %s155
      %s159 = sphi 0, %s158
      %s175 = sphi 0, %s159
    $region4: #{s2_forward.9} parent=1 // loop_header_branch
      %14 = sbr.rel (%p12) target = $region8
    $region5: #{s2_forward.9} parent=1 // loop_body
      %s16 = ssub.s32 %s11, 1
      %s17 = ssub.s32 %s11, 2
      %s24 = sadd.s32 1, %s19
      %p25 = scmp.ge.s32.totalorder %s24, 1
      %s26 = scalar_select %p25, 0, %s24
      %s27 = sadd.s32 1, %s18
      %s28 = scalar_select %p25, %s27, %s18
      %p29 = scmp.ge.s32.totalorder %s28, 2
      %s30 = scalar_select %p29, 0, %s28
      %s31 = ssub.s32 %s18, %s30
      %p32 = scmp.eq.s32.totalorder %s31, 0
      %s34 = sadd.s32 %s33, 1
      %s35 = scalar_select %p32, %s33, %s34
      %p38 = pneg %p32
      %p39 = scmp.eq.s32.totalorder %s11, 1
      %p40 = por %p38, %p39
      %p41 = scmp.ne.s32.totalorder %s33, %s36
      %p42 = scmp.eq.s32.totalorder %s11, 0
      %p43 = por %p41, %p42
      %p44 = scmp.ne.s32.totalorder %s33, %s36
      %p45 = scmp.eq.s32.totalorder %s16, 1
      %p46 = por %p44, %p45
      %p47 = scmp.ne.s32.totalorder %s36, %s37
      %p48 = scmp.eq.s32.totalorder %s16, 0
      %p49 = por %p47, %p48
      %p50 = scmp.ne.s32.totalorder %s36, %s37
      %p51 = scmp.eq.s32.totalorder %s17, 1
      %p52 = por %p50, %p51
      %p54 = scmp.ne.s32.totalorder %s37, %s53
      %p55 = scmp.eq.s32.totalorder %s17, 0
      %p56 = por %p54, %p55
      %s58 = sadd.s32 %s57, 1
      %p61 = scmp.eq.s32.totalorder %s11, 1
      %p62 = scmp.ne.s32.totalorder %s57, %s59
      %p63 = scmp.eq.s32.totalorder %s11, 0
      %p64 = por %p62, %p63
      %p65 = scmp.ne.s32.totalorder %s57, %s59
      %p66 = scmp.eq.s32.totalorder %s16, 1
      %p67 = por %p65, %p66
      %p68 = scmp.ne.s32.totalorder %s59, %s60
      %p69 = scmp.eq.s32.totalorder %s16, 0
      %p70 = por %p68, %p69
      %p71 = scmp.ne.s32.totalorder %s59, %s60
      %p72 = scmp.eq.s32.totalorder %s17, 1
      %p73 = por %p71, %p72
      %p75 = scmp.ne.s32.totalorder %s60, %s74
      %p76 = scmp.eq.s32.totalorder %s17, 0
      %p77 = por %p75, %p76
      %s79 = sadd.s32 %s78, 1
      %p82 = scmp.eq.s32.totalorder %s11, 1
      %p83 = scmp.ne.s32.totalorder %s78, %s80
      %p84 = scmp.eq.s32.totalorder %s11, 0
      %p85 = por %p83, %p84
      %p86 = scmp.ne.s32.totalorder %s78, %s80
      %p87 = scmp.eq.s32.totalorder %s16, 1
      %p88 = por %p86, %p87
      %p89 = scmp.ne.s32.totalorder %s80, %s81
      %p90 = scmp.eq.s32.totalorder %s16, 0
      %p91 = por %p89, %p90
      %p92 = scmp.ne.s32.totalorder %s80, %s81
      %p93 = scmp.eq.s32.totalorder %s17, 1
      %p94 = por %p92, %p93
      %p96 = scmp.ne.s32.totalorder %s81, %s95
      %p97 = scmp.eq.s32.totalorder %s17, 0
      %p98 = por %p96, %p97
      %s99 = ssub.s32 %s19, %s26
      %p100 = scmp.eq.s32.totalorder %s99, 0
      %s102 = sadd.s32 %s101, 1
      %s103 = scalar_select %p100, %s101, %s102
      %p106 = pneg %p100
      %p107 = scmp.eq.s32.totalorder %s11, 1
      %p108 = por %p106, %p107
      %p109 = scmp.ne.s32.totalorder %s101, %s104
      %p110 = scmp.eq.s32.totalorder %s11, 0
      %p111 = por %p109, %p110
      %p112 = scmp.ne.s32.totalorder %s101, %s104
      %p113 = scmp.eq.s32.totalorder %s16, 1
      %p114 = por %p112, %p113
      %p115 = scmp.ne.s32.totalorder %s104, %s105
      %p116 = scmp.eq.s32.totalorder %s16, 0
      %p117 = por %p115, %p116
      %p118 = scmp.ne.s32.totalorder %s104, %s105
      %p119 = scmp.eq.s32.totalorder %s17, 1
      %p120 = por %p118, %p119
      %p122 = scmp.ne.s32.totalorder %s105, %s121
      %p123 = scmp.eq.s32.totalorder %s17, 0
      %p124 = por %p122, %p123
      %s125 = ssub.s32 %s19, %s26
      %p126 = scmp.eq.s32.totalorder %s125, 0
      %s128 = sadd.s32 %s127, 1
      %s129 = scalar_select %p126, %s127, %s128
      %p132 = pneg %p126
      %p133 = scmp.eq.s32.totalorder %s11, 1
      %p134 = por %p132, %p133
      %p135 = scmp.ne.s32.totalorder %s127, %s130
      %p136 = scmp.eq.s32.totalorder %s11, 0
      %p137 = por %p135, %p136
      %p138 = scmp.ne.s32.totalorder %s127, %s130
      %p139 = scmp.eq.s32.totalorder %s16, 1
      %p140 = por %p138, %p139
      %p141 = scmp.ne.s32.totalorder %s130, %s131
      %p142 = scmp.eq.s32.totalorder %s16, 0
      %p143 = por %p141, %p142
      %p144 = scmp.ne.s32.totalorder %s130, %s131
      %p145 = scmp.eq.s32.totalorder %s17, 1
      %p146 = por %p144, %p145
      %p148 = scmp.ne.s32.totalorder %s131, %s147
      %p149 = scmp.eq.s32.totalorder %s17, 0
      %p150 = por %p148, %p149
      %s151 = ssub.s32 %s18, %s30
      %s152 = ssub.s32 %s19, %s26
      %s153 = sor.u32 %s151, %s152
      %p154 = scmp.eq.s32.totalorder %s153, 0
      %s156 = sadd.s32 %s155, 1
      %s157 = scalar_select %p154, %s155, %s156
      %p160 = pneg %p154
      %p161 = scmp.eq.s32.totalorder %s11, 1
      %p162 = por %p160, %p161
      %p163 = scmp.ne.s32.totalorder %s155, %s158
      %p164 = scmp.eq.s32.totalorder %s11, 0
      %p165 = por %p163, %p164
      %p166 = scmp.ne.s32.totalorder %s155, %s158
      %p167 = scmp.eq.s32.totalorder %s16, 1
      %p168 = por %p166, %p167
      %p169 = scmp.ne.s32.totalorder %s158, %s159
      %p170 = scmp.eq.s32.totalorder %s16, 0
      %p171 = por %p169, %p170
      %p172 = scmp.ne.s32.totalorder %s158, %s159
      %p173 = scmp.eq.s32.totalorder %s17, 1
      %p174 = por %p172, %p173
      %p176 = scmp.ne.s32.totalorder %s159, %s175
      %p177 = scmp.eq.s32.totalorder %s17, 0
      %p178 = por %p176, %p177
      %p179 = scmp.le.s32.totalorder 1, %s11
      %p180 = scmp.lt.s32.totalorder %s11, 3
      %p181 = pnand %p179, %p180
      %p182 = pneg %p181
      // Predicated region
      $region9: #{s2_forward.9} parent=5 // pred_check
        _
      $region10: #{s2_forward.9} parent=5 // pred_check_branch
        %184 = sbr.rel (%p181) target = $region12
      $region11: #{s2_forward.9} parent=5 // pred_region
        %s185 = ssub.s32 %s11, 1
        // Predicated region
        $region13: #{s2_forward.9} parent=11 // pred_check
          %p186 = pneg %p70
        $region14: #{s2_forward.9} parent=11 // pred_check_branch
          %188 = sbr.rel (%p186) target = $region16
        $region15: #{s2_forward.9} parent=11 // pred_region
          _
        $region16: #{s2_forward.9} parent=11 // pred_fallthru
          _
        // Predicated region
        $region17: #{s2_forward.9} parent=11 // pred_check
          %p189 = pneg %p91
        $region18: #{s2_forward.9} parent=11 // pred_check_branch
          %191 = sbr.rel (%p189) target = $region20
        $region19: #{s2_forward.9} parent=11 // pred_region
          _
        $region20: #{s2_forward.9} parent=11 // pred_fallthru
          _
        // Predicated region
        $region21: #{s2_forward.9} parent=11 // pred_check
          %p192 = pneg %p117
        $region22: #{s2_forward.9} parent=11 // pred_check_branch
          %194 = sbr.rel (%p192) target = $region24
        $region23: #{s2_forward.9} parent=11 // pred_region
          %p195 = scmp.lt.s32.totalorder %s21, 0
          %s196 = scalar_select %p195, %s21, 0
          %s197 = smul.addr %s196, 8
          %s198 = scalar_lea.vmem %s3, %s197
        $region24: #{s2_forward.9} parent=11 // pred_fallthru
          _
        // Predicated region
        $region25: #{s2_forward.9} parent=11 // pred_check
          %p199 = pneg %p143
        $region26: #{s2_forward.9} parent=11 // pred_check_branch
          %201 = sbr.rel (%p199) target = $region28
        $region27: #{s2_forward.9} parent=11 // pred_region
          %p202 = scmp.lt.s32.totalorder %s21, 0
          %s203 = scalar_select %p202, %s21, 0
          %s204 = scalar_lea.vmem %s4, %s203
        $region28: #{s2_forward.9} parent=11 // pred_fallthru
          _
      $region12: #{s2_forward.9} parent=5 // pred_fallthru
        _
      %p205 = scmp.lt.s32.totalorder %s11, 2
      // Predicated region
      $region29: #{s2_forward.9} parent=5 // pred_check
        %p206 = pneg %p205
      $region30: #{s2_forward.9} parent=5 // pred_check_branch
        %208 = sbr.rel (%p206) target = $region32
      $region31: #{s2_forward.9} parent=5 // pred_region
        // Predicated region
        $region33: #{s2_forward.9} parent=31 // pred_check
          %p209 = pneg %p43
        $region34: #{s2_forward.9} parent=31 // pred_check_branch
          %211 = sbr.rel (%p209) target = $region36
        $region35: #{s2_forward.9} parent=31 // pred_region
          %s212 = smul.u32 16, %s18
          %s213 = ssub.s32 22, %s212
          %p214 = scmp.lt.s32.totalorder %s213, 16
          %s215 = scalar_select %p214, %s213, 16
          %s216 = smul.u32 8, %s215
          %p217 = scmp.lt.s32.totalorder %s212, 21
          %s218 = scalar_select %p217, %s212, 21
          %s219 = smul.addr %s218, 8
          %s220 = scalar_lea.vmem %s0, %s219
          %s221 = smul.u32 16, %s18
          %s222 = ssub.s32 22, %s221
          %p223 = scmp.lt.s32.totalorder %s222, 16
          %s224 = scalar_select %p223, %s222, 16
          %s225 = smul.u32 8, %s224
        $region36: #{s2_forward.9} parent=31 // pred_fallthru
          _
      $region32: #{s2_forward.9} parent=5 // pred_fallthru
        _
      %p226 = scmp.le.s32.totalorder 1, %s11
      %p227 = scmp.lt.s32.totalorder %s11, 3
      %p228 = pnand %p226, %p227
      %p229 = pneg %p228
      // Predicated region
      $region37: #{s2_forward.9} parent=5 // pred_check
        _
      $region38: #{s2_forward.9} parent=5 // pred_check_branch
        %231 = sbr.rel (%p228) target = $region40
      $region39: #{s2_forward.9} parent=5 // pred_region
        %s232 = ssub.s32 %s11, 1
        %s233 = smul.u32 16, %s20
        %s234 = ssub.s32 22, %s233
        %p235 = scmp.lt.s32.totalorder %s234, 16
        %s236 = scalar_select %p235, %s234, 16
        %s237 = smul.u32 8, %s236
        %p238 = scmp.lt.s32.totalorder %s233, 21
        %s239 = scalar_select %p238, %s233, 21
        %s240 = smul.addr %s239, 8
        %s241 = scalar_lea.vmem %s0, %s240
        %p242 = pneg %p49
        %p243 = pneg %p46
        %p244 = pneg %p70
        %p245 = pneg %p67
        %p246 = pneg %p91
        %p247 = pneg %p88
        %p248 = scmp.lt.s32.totalorder %s21, 0
        %s249 = scalar_select %p248, %s21, 0
        %s250 = smul.addr %s249, 8
        %s251 = scalar_lea.vmem %s3, %s250
        %p252 = pneg %p117
        %p253 = pneg %p114
        %p254 = scmp.lt.s32.totalorder %s21, 0
        %s255 = scalar_select %p254, %s21, 0
        %s256 = scalar_lea.vmem %s4, %s255
        %p257 = pneg %p143
        %p258 = pneg %p140
        %p259 = pneg %p171
        %p260 = pneg %p168
        %s261 = sand.u32 %s158, 1
        %s262 = sand.u32 %s158, 1
        %s263 = smul.addr %s262, 128
        %s264 = scalar_lea.vmem [#allocation2], %s263
        %s265 = smul.u32 16, %s20
        %s266 = ssub.s32 22, %s265
        %p267 = scmp.lt.s32.totalorder %s266, 16
        %s268 = scalar_select %p267, %s266, 16
        %s269 = smul.u32 8, %s268
        %p270 = scmp.lt.s32.totalorder %s265, 21
        %s271 = scalar_select %p270, %s265, 21
        %s272 = smul.addr %s271, 8
        %s273 = scalar_lea.vmem %s0, %s272
        %s274 = smul.u32 16, %s20
        %s275 = ssub.s32 22, %s274
        %p276 = scmp.lt.s32.totalorder %s275, 16
        %s277 = scalar_select %p276, %s275, 16
        %s278 = smul.u32 8, %s277
        %p279 = scmp.lt.s32.totalorder %s21, 0
        %s280 = scalar_select %p279, %s21, 0
        %s281 = smul.addr %s280, 8
        %s282 = scalar_lea.vmem %s3, %s281
        %p283 = scmp.lt.s32.totalorder %s21, 0
        %s284 = scalar_select %p283, %s21, 0
        %s285 = scalar_lea.vmem %s4, %s284
        %s286 = smul.u32 16, %s20
        %s287 = ssub.s32 22, %s286
        %p288 = scmp.lt.s32.totalorder %s287, 16
        %s289 = scalar_select %p288, %s287, 16
        %s290 = smul.u32 8, %s289
        %v292 = vld [vmem:[%s273] sm:$0xff]
        %v293 = vld [vmem:[%s273 + $0x8] sm:$0xff]
        %v294 = vld [vmem:[%s273 + $0x10] sm:$0xff]
        %v295 = vld [vmem:[%s273 + $0x18] sm:$0xff]
        %v296 = vld [vmem:[%s273 + $0x20] sm:$0xff]
        %v297 = vld [vmem:[%s273 + $0x28] sm:$0xff]
        %v298 = vld [vmem:[%s273 + $0x30] sm:$0xff]
        %v299 = vld [vmem:[%s273 + $0x38] sm:$0xff]
        %v300 = vld [vmem:[%s273 + $0x40] sm:$0xff]
        %v301 = vld [vmem:[%s273 + $0x48] sm:$0xff]
        %v302 = vld [vmem:[%s273 + $0x50] sm:$0xff]
        %v303 = vld [vmem:[%s273 + $0x58] sm:$0xff]
        %v304 = vld [vmem:[%s273 + $0x60] sm:$0xff]
        %v305 = vld [vmem:[%s273 + $0x68] sm:$0xff]
        %v306 = vld [vmem:[%s273 + $0x70] sm:$0xff]
        %v307 = vld [vmem:[%s273 + $0x78] sm:$0xff]
        %vm308 = vcmask 261120
        %v309 = vsel %vm308, %v292, 0.0
        %310 = vadd.xlane.f32.xlu0 %v309
        %v311 = vpop.xlane.xlu0 %310
        %v312 = vsel %vm308, %v293, 0.0
        %313 = vadd.xlane.f32.xlu0 %v312
        %v314 = vpop.xlane.xlu0 %313
        %v315 = vsel %vm308, %v294, 0.0
        %316 = vadd.xlane.f32.xlu0 %v315
        %v317 = vpop.xlane.xlu0 %316
        %v318 = vsel %vm308, %v295, 0.0
        %319 = vadd.xlane.f32.xlu0 %v318
        %v320 = vpop.xlane.xlu0 %319
        %v321 = vsel %vm308, %v296, 0.0
        %322 = vadd.xlane.f32.xlu0 %v321
        %v323 = vpop.xlane.xlu0 %322
        %v324 = vsel %vm308, %v297, 0.0
        %325 = vadd.xlane.f32.xlu0 %v324
        %v326 = vpop.xlane.xlu0 %325
        %v327 = vsel %vm308, %v298, 0.0
        %328 = vadd.xlane.f32.xlu0 %v327
        %v329 = vpop.xlane.xlu0 %328
        %v330 = vsel %vm308, %v299, 0.0
        %331 = vadd.xlane.f32.xlu0 %v330
        %v332 = vpop.xlane.xlu0 %331
        %v333 = vsel %vm308, %v300, 0.0
        %334 = vadd.xlane.f32.xlu0 %v333
        %v335 = vpop.xlane.xlu0 %334
        %v336 = vsel %vm308, %v301, 0.0
        %337 = vadd.xlane.f32.xlu0 %v336
        %v338 = vpop.xlane.xlu0 %337
        %v339 = vsel %vm308, %v302, 0.0
        %340 = vadd.xlane.f32.xlu0 %v339
        %v341 = vpop.xlane.xlu0 %340
        %v342 = vsel %vm308, %v303, 0.0
        %343 = vadd.xlane.f32.xlu0 %v342
        %v344 = vpop.xlane.xlu0 %343
        %v345 = vsel %vm308, %v304, 0.0
        %346 = vadd.xlane.f32.xlu0 %v345
        %v347 = vpop.xlane.xlu0 %346
        %v348 = vsel %vm308, %v305, 0.0
        %349 = vadd.xlane.f32.xlu0 %v348
        %v350 = vpop.xlane.xlu0 %349
        %v351 = vsel %vm308, %v306, 0.0
        %352 = vadd.xlane.f32.xlu0 %v351
        %v353 = vpop.xlane.xlu0 %352
        %v354 = vsel %vm308, %v307, 0.0
        %355 = vadd.xlane.f32.xlu0 %v354
        %v356 = vpop.xlane.xlu0 %355
        %v357 = vrcp.pop 32.0
        %v358 = vmul.f32 32.0, %v357
        %v359 = vsub.f32 1.0, %v358
        %v360 = vmul.f32 %v357, %v359
        %v361 = vadd.f32 %v357, %v360
        %vm362 = vweird.f32 %v357
        %v363 = vsel %vm362, %v357, %v361
        %v364 = vmul.f32 %v311, %v363
        %v365 = vmul.f32 %v314, %v363
        %v366 = vmul.f32 %v317, %v363
        %v367 = vmul.f32 %v320, %v363
        %v368 = vmul.f32 %v323, %v363
        %v369 = vmul.f32 %v326, %v363
        %v370 = vmul.f32 %v329, %v363
        %v371 = vmul.f32 %v332, %v363
        %v372 = vmul.f32 %v335, %v363
        %v373 = vmul.f32 %v338, %v363
        %v374 = vmul.f32 %v341, %v363
        %v375 = vmul.f32 %v344, %v363
        %v376 = vmul.f32 %v347, %v363
        %v377 = vmul.f32 %v350, %v363
        %v378 = vmul.f32 %v353, %v363
        %v379 = vmul.f32 %v356, %v363
        %v380 = vsub.f32 %v292, %v364
        %v381 = vsub.f32 %v293, %v365
        %v382 = vsub.f32 %v294, %v366
        %v383 = vsub.f32 %v295, %v367
        %v384 = vsub.f32 %v296, %v368
        %v385 = vsub.f32 %v297, %v369
        %v386 = vsub.f32 %v298, %v370
        %v387 = vsub.f32 %v299, %v371
        %v388 = vsub.f32 %v300, %v372
        %v389 = vsub.f32 %v301, %v373
        %v390 = vsub.f32 %v302, %v374
        %v391 = vsub.f32 %v303, %v375
        %v392 = vsub.f32 %v304, %v376
        %v393 = vsub.f32 %v305, %v377
        %v394 = vsub.f32 %v306, %v378
        %v395 = vsub.f32 %v307, %v379
        %v396 = vmul.f32 %v380, %v380
        %v397 = vmul.f32 %v381, %v381
        %v398 = vmul.f32 %v382, %v382
        %v399 = vmul.f32 %v383, %v383
        %v400 = vmul.f32 %v384, %v384
        %v401 = vmul.f32 %v385, %v385
        %v402 = vmul.f32 %v386, %v386
        %v403 = vmul.f32 %v387, %v387
        %v404 = vmul.f32 %v388, %v388
        %v405 = vmul.f32 %v389, %v389
        %v406 = vmul.f32 %v390, %v390
        %v407 = vmul.f32 %v391, %v391
        %v408 = vmul.f32 %v392, %v392
        %v409 = vmul.f32 %v393, %v393
        %v410 = vmul.f32 %v394, %v394
        %v411 = vmul.f32 %v395, %v395
        %v412 = vsel %vm308, %v396, 0.0
        %413 = vadd.xlane.f32.xlu0 %v412
        %v414 = vpop.xlane.xlu0 %413
        %v415 = vsel %vm308, %v397, 0.0
        %416 = vadd.xlane.f32.xlu0 %v415
        %v417 = vpop.xlane.xlu0 %416
        %v418 = vsel %vm308, %v398, 0.0
        %419 = vadd.xlane.f32.xlu0 %v418
        %v420 = vpop.xlane.xlu0 %419
        %v421 = vsel %vm308, %v399, 0.0
        %422 = vadd.xlane.f32.xlu0 %v421
        %v423 = vpop.xlane.xlu0 %422
        %v424 = vsel %vm308, %v400, 0.0
        %425 = vadd.xlane.f32.xlu0 %v424
        %v426 = vpop.xlane.xlu0 %425
        %v427 = vsel %vm308, %v401, 0.0
        %428 = vadd.xlane.f32.xlu0 %v427
        %v429 = vpop.xlane.xlu0 %428
        %v430 = vsel %vm308, %v402, 0.0
        %431 = vadd.xlane.f32.xlu0 %v430
        %v432 = vpop.xlane.xlu0 %431
        %v433 = vsel %vm308, %v403, 0.0
        %434 = vadd.xlane.f32.xlu0 %v433
        %v435 = vpop.xlane.xlu0 %434
        %v436 = vsel %vm308, %v404, 0.0
        %437 = vadd.xlane.f32.xlu0 %v436
        %v438 = vpop.xlane.xlu0 %437
        %v439 = vsel %vm308, %v405, 0.0
        %440 = vadd.xlane.f32.xlu0 %v439
        %v441 = vpop.xlane.xlu0 %440
        %v442 = vsel %vm308, %v406, 0.0
        %443 = vadd.xlane.f32.xlu0 %v442
        %v444 = vpop.xlane.xlu0 %443
        %v445 = vsel %vm308, %v407, 0.0
        %446 = vadd.xlane.f32.xlu0 %v445
        %v447 = vpop.xlane.xlu0 %446
        %v448 = vsel %vm308, %v408, 0.0
        %449 = vadd.xlane.f32.xlu0 %v448
        %v450 = vpop.xlane.xlu0 %449
        %v451 = vsel %vm308, %v409, 0.0
        %452 = vadd.xlane.f32.xlu0 %v451
        %v453 = vpop.xlane.xlu0 %452
        %v454 = vsel %vm308, %v410, 0.0
        %455 = vadd.xlane.f32.xlu0 %v454
        %v456 = vpop.xlane.xlu0 %455
        %v457 = vsel %vm308, %v411, 0.0
        %458 = vadd.xlane.f32.xlu0 %v457
        %v459 = vpop.xlane.xlu0 %458
        %v460 = vmul.f32 %v414, %v363
        %v461 = vmul.f32 %v417, %v363
        %v462 = vmul.f32 %v420, %v363
        %v463 = vmul.f32 %v423, %v363
        %v464 = vmul.f32 %v426, %v363
        %v465 = vmul.f32 %v429, %v363
        %v466 = vmul.f32 %v432, %v363
        %v467 = vmul.f32 %v435, %v363
        %v468 = vmul.f32 %v438, %v363
        %v469 = vmul.f32 %v441, %v363
        %v470 = vmul.f32 %v444, %v363
        %v471 = vmul.f32 %v447, %v363
        %v472 = vmul.f32 %v450, %v363
        %v473 = vmul.f32 %v453, %v363
        %v474 = vmul.f32 %v456, %v363
        %v475 = vmul.f32 %v459, %v363
        %v476 = vadd.f32 %v460, 1e-05
        %v477 = vadd.f32 %v461, 1e-05
        %v478 = vadd.f32 %v462, 1e-05
        %v479 = vadd.f32 %v463, 1e-05
        %v480 = vadd.f32 %v464, 1e-05
        %v481 = vadd.f32 %v465, 1e-05
        %v482 = vadd.f32 %v466, 1e-05
        %v483 = vadd.f32 %v467, 1e-05
        %v484 = vadd.f32 %v468, 1e-05
        %v485 = vadd.f32 %v469, 1e-05
        %v486 = vadd.f32 %v470, 1e-05
        %v487 = vadd.f32 %v471, 1e-05
        %v488 = vadd.f32 %v472, 1e-05
        %v489 = vadd.f32 %v473, 1e-05
        %v490 = vadd.f32 %v474, 1e-05
        %v491 = vadd.f32 %v475, 1e-05
        %v492 = vrsqrt.pop %v476
        %v493 = vmul.f32 %v492, %v476
        %v494 = vmul.f32 %v493, %v492
        %v495 = vmul.f32 0.5, %v494
        %v496 = vsub.f32 1.5, %v495
        %v497 = vmul.f32 %v492, %v496
        %vm498 = vweird.f32 %v476
        %vm499 = vweird.f32 %v492
        %vm500 = vmor %vm498, %vm499
        %v501 = vsel %vm500, %v492, %v497
        %v502 = vrsqrt.pop %v477
        %v503 = vmul.f32 %v502, %v477
        %v504 = vmul.f32 %v503, %v502
        %v505 = vmul.f32 0.5, %v504
        %v506 = vsub.f32 1.5, %v505
        %v507 = vmul.f32 %v502, %v506
        %vm508 = vweird.f32 %v477
        %vm509 = vweird.f32 %v502
        %vm510 = vmor %vm508, %vm509
        %v511 = vsel %vm510, %v502, %v507
        %v512 = vrsqrt.pop %v478
        %v513 = vmul.f32 %v512, %v478
        %v514 = vmul.f32 %v513, %v512
        %v515 = vmul.f32 0.5, %v514
        %v516 = vsub.f32 1.5, %v515
        %v517 = vmul.f32 %v512, %v516
        %vm518 = vweird.f32 %v478
        %vm519 = vweird.f32 %v512
        %vm520 = vmor %vm518, %vm519
        %v521 = vsel %vm520, %v512, %v517
        %v522 = vrsqrt.pop %v479
        %v523 = vmul.f32 %v522, %v479
        %v524 = vmul.f32 %v523, %v522
        %v525 = vmul.f32 0.5, %v524
        %v526 = vsub.f32 1.5, %v525
        %v527 = vmul.f32 %v522, %v526
        %vm528 = vweird.f32 %v479
        %vm529 = vweird.f32 %v522
        %vm530 = vmor %vm528, %vm529
        %v531 = vsel %vm530, %v522, %v527
        %v532 = vrsqrt.pop %v480
        %v533 = vmul.f32 %v532, %v480
        %v534 = vmul.f32 %v533, %v532
        %v535 = vmul.f32 0.5, %v534
        %v536 = vsub.f32 1.5, %v535
        %v537 = vmul.f32 %v532, %v536
        %vm538 = vweird.f32 %v480
        %vm539 = vweird.f32 %v532
        %vm540 = vmor %vm538, %vm539
        %v541 = vsel %vm540, %v532, %v537
        %v542 = vrsqrt.pop %v481
        %v543 = vmul.f32 %v542, %v481
        %v544 = vmul.f32 %v543, %v542
        %v545 = vmul.f32 0.5, %v544
        %v546 = vsub.f32 1.5, %v545
        %v547 = vmul.f32 %v542, %v546
        %vm548 = vweird.f32 %v481
        %vm549 = vweird.f32 %v542
        %vm550 = vmor %vm548, %vm549
        %v551 = vsel %vm550, %v542, %v547
        %v552 = vrsqrt.pop %v482
        %v553 = vmul.f32 %v552, %v482
        %v554 = vmul.f32 %v553, %v552
        %v555 = vmul.f32 0.5, %v554
        %v556 = vsub.f32 1.5, %v555
        %v557 = vmul.f32 %v552, %v556
        %vm558 = vweird.f32 %v482
        %vm559 = vweird.f32 %v552
        %vm560 = vmor %vm558, %vm559
        %v561 = vsel %vm560, %v552, %v557
        %v562 = vrsqrt.pop %v483
        %v563 = vmul.f32 %v562, %v483
        %v564 = vmul.f32 %v563, %v562
        %v565 = vmul.f32 0.5, %v564
        %v566 = vsub.f32 1.5, %v565
        %v567 = vmul.f32 %v562, %v566
        %vm568 = vweird.f32 %v483
        %vm569 = vweird.f32 %v562
        %vm570 = vmor %vm568, %vm569
        %v571 = vsel %vm570, %v562, %v567
        %v572 = vrsqrt.pop %v484
        %v573 = vmul.f32 %v572, %v484
        %v574 = vmul.f32 %v573, %v572
        %v575 = vmul.f32 0.5, %v574
        %v576 = vsub.f32 1.5, %v575
        %v577 = vmul.f32 %v572, %v576
        %vm578 = vweird.f32 %v484
        %vm579 = vweird.f32 %v572
        %vm580 = vmor %vm578, %vm579
        %v581 = vsel %vm580, %v572, %v577
        %v582 = vrsqrt.pop %v485
        %v583 = vmul.f32 %v582, %v485
        %v584 = vmul.f32 %v583, %v582
        %v585 = vmul.f32 0.5, %v584
        %v586 = vsub.f32 1.5, %v585
        %v587 = vmul.f32 %v582, %v586
        %vm588 = vweird.f32 %v485
        %vm589 = vweird.f32 %v582
        %vm590 = vmor %vm588, %vm589
        %v591 = vsel %vm590, %v582, %v587
        %v592 = vrsqrt.pop %v486
        %v593 = vmul.f32 %v592, %v486
        %v594 = vmul.f32 %v593, %v592
        %v595 = vmul.f32 0.5, %v594
        %v596 = vsub.f32 1.5, %v595
        %v597 = vmul.f32 %v592, %v596
        %vm598 = vweird.f32 %v486
        %vm599 = vweird.f32 %v592
        %vm600 = vmor %vm598, %vm599
        %v601 = vsel %vm600, %v592, %v597
        %v602 = vrsqrt.pop %v487
        %v603 = vmul.f32 %v602, %v487
        %v604 = vmul.f32 %v603, %v602
        %v605 = vmul.f32 0.5, %v604
        %v606 = vsub.f32 1.5, %v605
        %v607 = vmul.f32 %v602, %v606
        %vm608 = vweird.f32 %v487
        %vm609 = vweird.f32 %v602
        %vm610 = vmor %vm608, %vm609
        %v611 = vsel %vm610, %v602, %v607
        %v612 = vrsqrt.pop %v488
        %v613 = vmul.f32 %v612, %v488
        %v614 = vmul.f32 %v613, %v612
        %v615 = vmul.f32 0.5, %v614
        %v616 = vsub.f32 1.5, %v615
        %v617 = vmul.f32 %v612, %v616
        %vm618 = vweird.f32 %v488
        %vm619 = vweird.f32 %v612
        %vm620 = vmor %vm618, %vm619
        %v621 = vsel %vm620, %v612, %v617
        %v622 = vrsqrt.pop %v489
        %v623 = vmul.f32 %v622, %v489
        %v624 = vmul.f32 %v623, %v622
        %v625 = vmul.f32 0.5, %v624
        %v626 = vsub.f32 1.5, %v625
        %v627 = vmul.f32 %v622, %v626
        %vm628 = vweird.f32 %v489
        %vm629 = vweird.f32 %v622
        %vm630 = vmor %vm628, %vm629
        %v631 = vsel %vm630, %v622, %v627
        %v632 = vrsqrt.pop %v490
        %v633 = vmul.f32 %v632, %v490
        %v634 = vmul.f32 %v633, %v632
        %v635 = vmul.f32 0.5, %v634
        %v636 = vsub.f32 1.5, %v635
        %v637 = vmul.f32 %v632, %v636
        %vm638 = vweird.f32 %v490
        %vm639 = vweird.f32 %v632
        %vm640 = vmor %vm638, %vm639
        %v641 = vsel %vm640, %v632, %v637
        %v642 = vrsqrt.pop %v491
        %v643 = vmul.f32 %v642, %v491
        %v644 = vmul.f32 %v643, %v642
        %v645 = vmul.f32 0.5, %v644
        %v646 = vsub.f32 1.5, %v645
        %v647 = vmul.f32 %v642, %v646
        %vm648 = vweird.f32 %v491
        %vm649 = vweird.f32 %v642
        %vm650 = vmor %vm648, %vm649
        %v651 = vsel %vm650, %v642, %v647
        %v652 = vmul.f32 %v380, %v501
        %v653 = vmul.f32 %v381, %v511
        %v654 = vmul.f32 %v382, %v521
        %v655 = vmul.f32 %v383, %v531
        %v656 = vmul.f32 %v384, %v541
        %v657 = vmul.f32 %v385, %v551
        %v658 = vmul.f32 %v386, %v561
        %v659 = vmul.f32 %v387, %v571
        %v660 = vmul.f32 %v388, %v581
        %v661 = vmul.f32 %v389, %v591
        %v662 = vmul.f32 %v390, %v601
        %v663 = vmul.f32 %v391, %v611
        %v664 = vmul.f32 %v392, %v621
        %v665 = vmul.f32 %v393, %v631
        %v666 = vmul.f32 %v394, %v641
        %v667 = vmul.f32 %v395, %v651
        %v668 = vld [vmem:[%s1] sm:$0x1]
        %v670 = vperm.slane %v668, 0
        %v672 = vmul.f32 %v652, %v670
        %v673 = vmul.f32 %v653, %v670
        %v674 = vmul.f32 %v654, %v670
        %v675 = vmul.f32 %v655, %v670
        %v676 = vmul.f32 %v656, %v670
        %v677 = vmul.f32 %v657, %v670
        %v678 = vmul.f32 %v658, %v670
        %v679 = vmul.f32 %v659, %v670
        %v680 = vmul.f32 %v660, %v670
        %v681 = vmul.f32 %v661, %v670
        %v682 = vmul.f32 %v662, %v670
        %v683 = vmul.f32 %v663, %v670
        %v684 = vmul.f32 %v664, %v670
        %v685 = vmul.f32 %v665, %v670
        %v686 = vmul.f32 %v666, %v670
        %v687 = vmul.f32 %v667, %v670
        %v688 = vld [vmem:[%s2] sm:$0x1]
        %v690 = vperm.slane %v688, 0
        %v692 = vadd.f32 %v672, %v690
        %v693 = vadd.f32 %v673, %v690
        %v694 = vadd.f32 %v674, %v690
        %v695 = vadd.f32 %v675, %v690
        %v696 = vadd.f32 %v676, %v690
        %v697 = vadd.f32 %v677, %v690
        %v698 = vadd.f32 %v678, %v690
        %v699 = vadd.f32 %v679, %v690
        %v700 = vadd.f32 %v680, %v690
        %v701 = vadd.f32 %v681, %v690
        %v702 = vadd.f32 %v682, %v690
        %v703 = vadd.f32 %v683, %v690
        %v704 = vadd.f32 %v684, %v690
        %v705 = vadd.f32 %v685, %v690
        %v706 = vadd.f32 %v686, %v690
        %v707 = vadd.f32 %v687, %v690
        %v708 = vpack.c.bf16 %v693, %v692
        %v709 = vpack.c.bf16 %v695, %v694
        %v710 = vpack.c.bf16 %v697, %v696
        %v711 = vpack.c.bf16 %v699, %v698
        %v712 = vpack.c.bf16 %v701, %v700
        %v713 = vpack.c.bf16 %v703, %v702
        %v714 = vpack.c.bf16 %v705, %v704
        %v715 = vpack.c.bf16 %v707, %v706
        %v716 = vld [vmem:[%s282] sm:$0xff]
        %v717 = vld [vmem:[%s282 + $0x8] sm:$0xff]
        %v718 = vld [vmem:[%s282 + $0x10] sm:$0xff]
        %v719 = vld [vmem:[%s282 + $0x18] sm:$0xff]
        %v720 = vpack.c.bf16 %v717, %v716
        %v721 = vpack.c.bf16 %v719, %v718
        %v722 = vld [vmem:[%s285] sm:$0x1]
        %v724 = vperm.slane %v722, 0
        %v727 = vsel %vm308, %v708, 0
        %v730 = vsel %vm308, %v709, 0
        %v733 = vsel %vm308, %v710, 0
        %v736 = vsel %vm308, %v711, 0
        %v739 = vsel %vm308, %v712, 0
        %v742 = vsel %vm308, %v713, 0
        %v745 = vsel %vm308, %v714, 0
        %v748 = vsel %vm308, %v715, 0
        %750 = vmatpush.bf16.msra.mxu0 0
        %751 = vmatpush.bf16.msra.mxu0 0
        %752 = vmatpush.bf16.msra.mxu0 0
        %753 = vmatpush.bf16.msra.mxu0 0
        %754 = vmatpush.bf16.msra.mxu0 0
        %755 = vmatpush.bf16.msra.mxu0 0
        %756 = vmatpush.bf16.msra.mxu0 %v721
        %757 = vmatpush.bf16.msra.mxu0 %v720
        %758 = vmatmul.bf16.gmra.mxu0 %v727
        %v759 = vpop.f32.mrf.mxu0
        %v760 = vadd.f32 %v724, %v759
        %v761 = vpop.f32.mrf.mxu0
        %v762 = vadd.f32 %v724, %v761
        %763 = vmatmul.bf16.gmra.mxu0 %v730
        %v764 = vpop.f32.mrf.mxu0
        %v765 = vadd.f32 %v724, %v764
        %v766 = vpop.f32.mrf.mxu0
        %v767 = vadd.f32 %v724, %v766
        %768 = vmatmul.bf16.gmra.mxu0 %v733
        %v769 = vpop.f32.mrf.mxu0
        %v770 = vadd.f32 %v724, %v769
        %v771 = vpop.f32.mrf.mxu0
        %v772 = vadd.f32 %v724, %v771
        %773 = vmatmul.bf16.gmra.mxu0 %v736
        %v774 = vpop.f32.mrf.mxu0
        %v775 = vadd.f32 %v724, %v774
        %v776 = vpop.f32.mrf.mxu0
        %v777 = vadd.f32 %v724, %v776
        %778 = vmatmul.bf16.gmra.mxu0 %v739
        %v779 = vpop.f32.mrf.mxu0
        %v780 = vadd.f32 %v724, %v779
        %v781 = vpop.f32.mrf.mxu0
        %v782 = vadd.f32 %v724, %v781
        %783 = vmatmul.bf16.gmra.mxu0 %v742
        %v784 = vpop.f32.mrf.mxu0
        %v785 = vadd.f32 %v724, %v784
        %v786 = vpop.f32.mrf.mxu0
        %v787 = vadd.f32 %v724, %v786
        %788 = vmatmul.bf16.gmra.mxu0 %v745
        %v789 = vpop.f32.mrf.mxu0
        %v790 = vadd.f32 %v724, %v789
        %v791 = vpop.f32.mrf.mxu0
        %v792 = vadd.f32 %v724, %v791
        %793 = vmatmul.bf16.gmra.mxu0 %v748
        %v794 = vpop.f32.mrf.mxu0
        %v795 = vadd.f32 %v724, %v794
        %v796 = vpop.f32.mrf.mxu0
        %v797 = vadd.f32 %v724, %v796
        %798 = vdwg.mxu0
        %vm799 = vcmask 785408
        %800 = vst.msk [vmem:[%s264] sm:$0xff] %vm799, %v760
        %801 = vst.msk [vmem:[%s264 + $0x8] sm:$0xff] %vm799, %v762
        %802 = vst.msk [vmem:[%s264 + $0x10] sm:$0xff] %vm799, %v765
        %803 = vst.msk [vmem:[%s264 + $0x18] sm:$0xff] %vm799, %v767
        %804 = vst.msk [vmem:[%s264 + $0x20] sm:$0xff] %vm799, %v770
        %805 = vst.msk [vmem:[%s264 + $0x28] sm:$0xff] %vm799, %v772
        %806 = vst.msk [vmem:[%s264 + $0x30] sm:$0xff] %vm799, %v775
        %807 = vst.msk [vmem:[%s264 + $0x38] sm:$0xff] %vm799, %v777
        %808 = vst.msk [vmem:[%s264 + $0x40] sm:$0xff] %vm799, %v780
        %809 = vst.msk [vmem:[%s264 + $0x48] sm:$0xff] %vm799, %v782
        %810 = vst.msk [vmem:[%s264 + $0x50] sm:$0xff] %vm799, %v785
        %811 = vst.msk [vmem:[%s264 + $0x58] sm:$0xff] %vm799, %v787
        %812 = vst.msk [vmem:[%s264 + $0x60] sm:$0xff] %vm799, %v790
        %813 = vst.msk [vmem:[%s264 + $0x68] sm:$0xff] %vm799, %v792
        %814 = vst.msk [vmem:[%s264 + $0x70] sm:$0xff] %vm799, %v795
        %815 = vst.msk [vmem:[%s264 + $0x78] sm:$0xff] %vm799, %v797
        %s816 = sand.u32 %s158, 1
        %s817 = sand.u32 %s158, 1
        %s818 = smul.addr %s817, 128
        %s819 = scalar_lea.vmem [#allocation2], %s818
        // Predicated region
        $region41: #{s2_forward.9} parent=39 // pred_check
          %p820 = pneg %p168
        $region42: #{s2_forward.9} parent=39 // pred_check_branch
          %822 = sbr.rel (%p820) target = $region44
        $region43: #{s2_forward.9} parent=39 // pred_region
          %s823 = smul.u32 16, %s20
          %s824 = ssub.s32 22, %s823
          %p825 = scmp.lt.s32.totalorder %s824, 16
          %s826 = scalar_select %p825, %s824, 16
          %s827 = smul.u32 8, %s826
          %p828 = scmp.ne.s32.totalorder 0, %s827
          %s829 = sadd.s32 %s21, %s823
          %s830 = smul.addr %s829, 8
          %s831 = scalar_lea.vmem %s5, %s830
          // Predicated region
          $region45: #{s2_forward.9} parent=43 // pred_check
            %p832 = pneg %p828
          $region46: #{s2_forward.9} parent=43 // pred_check_branch
            %834 = sbr.rel (%p832) target = $region48
          $region47: #{s2_forward.9} parent=43 // pred_region
            // Predicated region
            $region49: #{s2_forward.9} parent=47 // pred_check
              _
            $region50: #{s2_forward.9} parent=47 // pred_check_branch
              %836 = sbr.rel (0) target = $region52
            $region51: #{s2_forward.9} parent=47 // pred_region
              // Predicated region
              $region71: #{s2_forward.9} parent=51 // pred_check
                _
              $region72: #{s2_forward.9} parent=51 // pred_check_branch
                %916 = sbr.rel (0) target = $region74
              $region73: #{s2_forward.9} parent=51 // pred_region
                %s917 = sshrl.u32 %s826, 4
                // While loop
                $region75: #{s2_forward.9} parent=73 // loop_pre_header
                  _
                $region76: #{s2_forward.9} parent=73 // loop_header
                  %s919 = sphi 0, %s921
                  %p920 = scmp.ge.s32.totalorder %s919, %s917
                  %s924 = sphi 0, %s961
                  %s925 = sphi %s819, %s964
                  %s926 = sphi %s831, %s965
                $region77: #{s2_forward.9} parent=73 // loop_header_branch
                  %923 = sbr.rel (%p920) target = $region81
                $region78: #{s2_forward.9} parent=73 // loop_body
                  %v927 = vld [vmem:[%s925] sm:$0xff]
                  %928 = vst [vmem:[%s926] sm:$0xff] %v927
                  %v929 = vld [vmem:[%s925 + $0x8] sm:$0xff]
                  %930 = vst [vmem:[%s926 + $0x8] sm:$0xff] %v929
                  %v931 = vld [vmem:[%s925 + $0x10] sm:$0xff]
                  %932 = vst [vmem:[%s926 + $0x10] sm:$0xff] %v931
                  %v933 = vld [vmem:[%s925 + $0x18] sm:$0xff]
                  %934 = vst [vmem:[%s926 + $0x18] sm:$0xff] %v933
                  %v935 = vld [vmem:[%s925 + $0x20] sm:$0xff]
                  %936 = vst [vmem:[%s926 + $0x20] sm:$0xff] %v935
                  %v937 = vld [vmem:[%s925 + $0x28] sm:$0xff]
                  %938 = vst [vmem:[%s926 + $0x28] sm:$0xff] %v937
                  %v939 = vld [vmem:[%s925 + $0x30] sm:$0xff]
                  %940 = vst [vmem:[%s926 + $0x30] sm:$0xff] %v939
                  %v941 = vld [vmem:[%s925 + $0x38] sm:$0xff]
                  %942 = vst [vmem:[%s926 + $0x38] sm:$0xff] %v941
                  %v943 = vld [vmem:[%s925 + $0x40] sm:$0xff]
                  %944 = vst [vmem:[%s926 + $0x40] sm:$0xff] %v943
                  %v945 = vld [vmem:[%s925 + $0x48] sm:$0xff]
                  %946 = vst [vmem:[%s926 + $0x48] sm:$0xff] %v945
                  %v947 = vld [vmem:[%s925 + $0x50] sm:$0xff]
                  %948 = vst [vmem:[%s926 + $0x50] sm:$0xff] %v947
                  %v949 = vld [vmem:[%s925 + $0x58] sm:$0xff]
                  %950 = vst [vmem:[%s926 + $0x58] sm:$0xff] %v949
                  %v951 = vld [vmem:[%s925 + $0x60] sm:$0xff]
                  %952 = vst [vmem:[%s926 + $0x60] sm:$0xff] %v951
                  %v953 = vld [vmem:[%s925 + $0x68] sm:$0xff]
                  %954 = vst [vmem:[%s926 + $0x68] sm:$0xff] %v953
                  %v955 = vld [vmem:[%s925 + $0x70] sm:$0xff]
                  %956 = vst [vmem:[%s926 + $0x70] sm:$0xff] %v955
                  %v957 = vld [vmem:[%s925 + $0x78] sm:$0xff]
                  %958 = vst [vmem:[%s926 + $0x78] sm:$0xff] %v957
                  %s959 = sadd.s32 1, %s924
                  %p960 = scmp.ge.s32.totalorder %s959, %s917
                  %s961 = scalar_select %p960, 0, %s959
                  %s962 = smul.u32 %s961, 128
                  %s963 = smul.u32 %s961, 128
                  %s964 = scalar_lea.vmem %s819, %s962 [#allocation2]
                  %s965 = scalar_lea.vmem %s831, %s963
                $region79: #{s2_forward.9} parent=73 // loop_footer
                  %s921 = sadd.s32 %s919, 1
                $region80: #{s2_forward.9} parent=73 // loop_footer_branch
                  %918 = sbr.rel target = $region76
                $region81: #{s2_forward.9} parent=73 // loop_exit
                  _
                %s966 = sshrl.u32 %s826, 4
                %s967 = sand.u32 %s826, 15
                %s968 = smul.u32 %s966, 16
                %s969 = smul.u32 8, %s968
                %s970 = scalar_lea.vmem %s819, %s969 [#allocation2]
                %s971 = smul.u32 8, %s968
                %s972 = scalar_lea.vmem %s831, %s971
                // While loop
                $region82: #{s2_forward.9} parent=73 // loop_pre_header
                  _
                $region83: #{s2_forward.9} parent=73 // loop_header
                  %s974 = sphi 0, %s976
                  %p975 = scmp.ge.s32.totalorder %s974, %s967
                  %s979 = sphi 0, %s986
                  %s980 = sphi %s970, %s989
                  %s981 = sphi %s972, %s990
                $region84: #{s2_forward.9} parent=73 // loop_header_branch
                  %978 = sbr.rel (%p975) target = $region88
                $region85: #{s2_forward.9} parent=73 // loop_body
                  %v982 = vld [vmem:[%s980] sm:$0xff]
                  %983 = vst [vmem:[%s981] sm:$0xff] %v982
                  %s984 = sadd.s32 1, %s979
                  %p985 = scmp.ge.s32.totalorder %s984, %s967
                  %s986 = scalar_select %p985, 0, %s984
                  %s987 = smul.u32 %s986, 8
                  %s988 = smul.u32 %s986, 8
                  %s989 = scalar_lea.vmem %s970, %s987 [#allocation2]
                  %s990 = scalar_lea.vmem %s972, %s988
                $region86: #{s2_forward.9} parent=73 // loop_footer
                  %s976 = sadd.s32 %s974, 1
                $region87: #{s2_forward.9} parent=73 // loop_footer_branch
                  %973 = sbr.rel target = $region83
                $region88: #{s2_forward.9} parent=73 // loop_exit
                  _
              $region74: #{s2_forward.9} parent=51 // pred_fallthru
                _
              // Predicated region
              $region89: #{s2_forward.9} parent=51 // pred_check
                _
              $region90: #{s2_forward.9} parent=51 // pred_check_branch
                %992 = sbr.rel target = $region92
              $region91: #{s2_forward.9} parent=51 // pred_region
                _
              $region92: #{s2_forward.9} parent=51 // pred_fallthru
                _
            $region52: #{s2_forward.9} parent=47 // pred_fallthru
              _
            // Predicated region
            $region53: #{s2_forward.9} parent=47 // pred_check
              _
            $region54: #{s2_forward.9} parent=47 // pred_check_branch
              %838 = sbr.rel target = $region56
            $region55: #{s2_forward.9} parent=47 // pred_region
              %s840 = ssub.s32 256, 1
              %s841 = sshrl.u32 %s826, 4
              // While loop
              $region57: #{s2_forward.9} parent=55 // loop_pre_header
                _
              $region58: #{s2_forward.9} parent=55 // loop_header
                %s843 = sphi 0, %s845
                %p844 = scmp.ge.s32.totalorder %s843, %s841
                %s848 = sphi 0, %s885
                %s849 = sphi %s819, %s888
                %s850 = sphi %s831, %s889
              $region59: #{s2_forward.9} parent=55 // loop_header_branch
                %847 = sbr.rel (%p844) target = $region63
              $region60: #{s2_forward.9} parent=55 // loop_body
                %v851 = vld [vmem:[%s849] sm:%s840]
                %852 = vst [vmem:[%s850] sm:%s840] %v851
                %v853 = vld [vmem:[%s849 + $0x8] sm:%s840]
                %854 = vst [vmem:[%s850 + $0x8] sm:%s840] %v853
                %v855 = vld [vmem:[%s849 + $0x10] sm:%s840]
                %856 = vst [vmem:[%s850 + $0x10] sm:%s840] %v855
                %v857 = vld [vmem:[%s849 + $0x18] sm:%s840]
                %858 = vst [vmem:[%s850 + $0x18] sm:%s840] %v857
                %v859 = vld [vmem:[%s849 + $0x20] sm:%s840]
                %860 = vst [vmem:[%s850 + $0x20] sm:%s840] %v859
                %v861 = vld [vmem:[%s849 + $0x28] sm:%s840]
                %862 = vst [vmem:[%s850 + $0x28] sm:%s840] %v861
                %v863 = vld [vmem:[%s849 + $0x30] sm:%s840]
                %864 = vst [vmem:[%s850 + $0x30] sm:%s840] %v863
                %v865 = vld [vmem:[%s849 + $0x38] sm:%s840]
                %866 = vst [vmem:[%s850 + $0x38] sm:%s840] %v865
                %v867 = vld [vmem:[%s849 + $0x40] sm:%s840]
                %868 = vst [vmem:[%s850 + $0x40] sm:%s840] %v867
                %v869 = vld [vmem:[%s849 + $0x48] sm:%s840]
                %870 = vst [vmem:[%s850 + $0x48] sm:%s840] %v869
                %v871 = vld [vmem:[%s849 + $0x50] sm:%s840]
                %872 = vst [vmem:[%s850 + $0x50] sm:%s840] %v871
                %v873 = vld [vmem:[%s849 + $0x58] sm:%s840]
                %874 = vst [vmem:[%s850 + $0x58] sm:%s840] %v873
                %v875 = vld [vmem:[%s849 + $0x60] sm:%s840]
                %876 = vst [vmem:[%s850 + $0x60] sm:%s840] %v875
                %v877 = vld [vmem:[%s849 + $0x68] sm:%s840]
                %878 = vst [vmem:[%s850 + $0x68] sm:%s840] %v877
                %v879 = vld [vmem:[%s849 + $0x70] sm:%s840]
                %880 = vst [vmem:[%s850 + $0x70] sm:%s840] %v879
                %v881 = vld [vmem:[%s849 + $0x78] sm:%s840]
                %882 = vst [vmem:[%s850 + $0x78] sm:%s840] %v881
                %s883 = sadd.s32 1, %s848
                %p884 = scmp.ge.s32.totalorder %s883, %s841
                %s885 = scalar_select %p884, 0, %s883
                %s886 = smul.u32 %s885, 128
                %s887 = smul.u32 %s885, 128
                %s888 = scalar_lea.vmem %s819, %s886 [#allocation2]
                %s889 = scalar_lea.vmem %s831, %s887
              $region61: #{s2_forward.9} parent=55 // loop_footer
                %s845 = sadd.s32 %s843, 1
              $region62: #{s2_forward.9} parent=55 // loop_footer_branch
                %842 = sbr.rel target = $region58
              $region63: #{s2_forward.9} parent=55 // loop_exit
                _
              %s890 = sshrl.u32 %s826, 4
              %s891 = sand.u32 %s826, 15
              %s892 = smul.u32 %s890, 16
              %s893 = smul.u32 8, %s892
              %s894 = scalar_lea.vmem %s819, %s893 [#allocation2]
              %s895 = smul.u32 8, %s892
              %s896 = scalar_lea.vmem %s831, %s895
              // While loop
              $region64: #{s2_forward.9} parent=55 // loop_pre_header
                _
              $region65: #{s2_forward.9} parent=55 // loop_header
                %s898 = sphi 0, %s900
                %p899 = scmp.ge.s32.totalorder %s898, %s891
                %s903 = sphi 0, %s910
                %s904 = sphi %s894, %s913
                %s905 = sphi %s896, %s914
              $region66: #{s2_forward.9} parent=55 // loop_header_branch
                %902 = sbr.rel (%p899) target = $region70
              $region67: #{s2_forward.9} parent=55 // loop_body
                %v906 = vld [vmem:[%s904] sm:%s840]
                %907 = vst [vmem:[%s905] sm:%s840] %v906
                %s908 = sadd.s32 1, %s903
                %p909 = scmp.ge.s32.totalorder %s908, %s891
                %s910 = scalar_select %p909, 0, %s908
                %s911 = smul.u32 %s910, 8
                %s912 = smul.u32 %s910, 8
                %s913 = scalar_lea.vmem %s894, %s911 [#allocation2]
                %s914 = scalar_lea.vmem %s896, %s912
              $region68: #{s2_forward.9} parent=55 // loop_footer
                %s900 = sadd.s32 %s898, 1
              $region69: #{s2_forward.9} parent=55 // loop_footer_branch
                %897 = sbr.rel target = $region65
              $region70: #{s2_forward.9} parent=55 // loop_exit
                _
            $region56: #{s2_forward.9} parent=47 // pred_fallthru
              _
          $region48: #{s2_forward.9} parent=43 // pred_fallthru
            _
          %993 = vnop
        $region44: #{s2_forward.9} parent=39 // pred_fallthru
          _
      $region40: #{s2_forward.9} parent=5 // pred_fallthru
        _
      %p994 = scmp.le.s32.totalorder 2, %s11
      // Predicated region
      $region93: #{s2_forward.9} parent=5 // pred_check
        %p995 = pneg %p994
      $region94: #{s2_forward.9} parent=5 // pred_check_branch
        %997 = sbr.rel (%p995) target = $region96
      $region95: #{s2_forward.9} parent=5 // pred_region
        %s998 = ssub.s32 %s11, 2
        // Predicated region
        $region97: #{s2_forward.9} parent=95 // pred_check
          %p999 = pneg %p174
        $region98: #{s2_forward.9} parent=95 // pred_check_branch
          %1001 = sbr.rel (%p999) target = $region100
        $region99: #{s2_forward.9} parent=95 // pred_region
          %s1002 = sand.u32 %s159, 1
          %s1003 = sand.u32 %s159, 1
          %s1004 = smul.addr %s1003, 128
          %s1005 = scalar_lea.vmem [#allocation2], %s1004
        $region100: #{s2_forward.9} parent=95 // pred_fallthru
          _
      $region96: #{s2_forward.9} parent=5 // pred_fallthru
        _
    $region6: #{s2_forward.9} parent=1 // loop_footer
      %s15 = sadd.s32 1, %s11
    $region7: #{s2_forward.9} parent=1 // loop_footer_branch
      %10 = sbr.rel target = $region3
    $region8: #{s2_forward.9} parent=1 // loop_exit
      _

// kernel: s2_forward.11
$region0: #{s2_forward.11}
  #allocation0 [shape = 'u32[]', space=smem, size = 0x4, offset = 0x4, fixed_abs, tag = 'smem constant byte address 0x4 - core index']
  #allocation1 [shape = 'u32[72,128]{1,0:T(1,128)}', space=vmem, size = 0x9000, scoped, tag = 'internal scratch']
  %s0 = inlined_call_operand.vmem [shape: f32[170,32], index: 0, kind: input, shape index: {}]
  %s1 = inlined_call_operand.vmem [shape: f32[32,32], index: 1, kind: input, shape index: {}]
  %s2 = inlined_call_operand.vmem [shape: f32[1,32], index: 2, kind: input, shape index: {}]
  %s3 = inlined_call_operand.vmem [shape: f32[170,32], index: 3, kind: input, shape index: {}]
  %s4 = inlined_call_operand.vmem [shape: f32[170,32], index: 4, kind: output, shape index: {}]
  %s5 = sld [smem:[#allocation0]]
  $region97: #{s2_forward.11} parent=0
    _
  %s7 = ssub.s32 1, %s5
  %s8 = scalar_select 0, %s7, %s5
  $region1: #{s2_forward.11} parent=0
    #allocation2 [shape = 'u8[131072]{0}', space=vmem, size = 0x20000, scoped, tag = 'output window, operand 0']
    loop: start=0, step=1, limit=4
    $region2: #{s2_forward.11} parent=1 // loop_pre_header
      _
    $region3: #{s2_forward.11} parent=1 // loop_header
      %s10 = sphi 0, %s14
      %p11 = scmp.ge.s32.totalorder %s10, 4
      %s17 = sphi 0, %s29
      %s18 = sphi 0, %s25
      %s19 = sphi 0, %s17
      %s20 = sphi 0, %s18
      %s21 = sphi 0, %s19
      %s22 = sphi 0, %s20
      %s32 = sphi 0, %s34
      %s35 = sphi 0, %s32
      %s36 = sphi 0, %s35
      %s52 = sphi 0, %s36
      %s58 = sphi 0, %s60
      %s61 = sphi 0, %s58
      %s62 = sphi 0, %s61
      %s78 = sphi 0, %s62
      %s84 = sphi 0, %s86
      %s87 = sphi 0, %s84
      %s88 = sphi 0, %s87
      %s104 = sphi 0, %s88
      %s112 = sphi 0, %s114
      %s115 = sphi 0, %s112
      %s116 = sphi 0, %s115
      %s132 = sphi 0, %s116
      %s140 = sphi 0, %s142
      %s143 = sphi 0, %s140
      %s144 = sphi 0, %s143
      %s160 = sphi 0, %s144
    $region4: #{s2_forward.11} parent=1 // loop_header_branch
      %13 = sbr.rel (%p11) target = $region8
    $region5: #{s2_forward.11} parent=1 // loop_body
      %s15 = ssub.s32 %s10, 1
      %s16 = ssub.s32 %s10, 2
      %s23 = sadd.s32 1, %s18
      %p24 = scmp.ge.s32.totalorder %s23, 1
      %s25 = scalar_select %p24, 0, %s23
      %s26 = sadd.s32 1, %s17
      %s27 = scalar_select %p24, %s26, %s17
      %p28 = scmp.ge.s32.totalorder %s27, 2
      %s29 = scalar_select %p28, 0, %s27
      %s30 = ssub.s32 %s17, %s29
      %p31 = scmp.eq.s32.totalorder %s30, 0
      %s33 = sadd.s32 %s32, 1
      %s34 = scalar_select %p31, %s32, %s33
      %p37 = pneg %p31
      %p38 = scmp.eq.s32.totalorder %s10, 1
      %p39 = por %p37, %p38
      %p40 = scmp.ne.s32.totalorder %s32, %s35
      %p41 = scmp.eq.s32.totalorder %s10, 0
      %p42 = por %p40, %p41
      %p43 = scmp.ne.s32.totalorder %s32, %s35
      %p44 = scmp.eq.s32.totalorder %s15, 1
      %p45 = por %p43, %p44
      %p46 = scmp.ne.s32.totalorder %s35, %s36
      %p47 = scmp.eq.s32.totalorder %s15, 0
      %p48 = por %p46, %p47
      %p49 = scmp.ne.s32.totalorder %s35, %s36
      %p50 = scmp.eq.s32.totalorder %s16, 1
      %p51 = por %p49, %p50
      %p53 = scmp.ne.s32.totalorder %s36, %s52
      %p54 = scmp.eq.s32.totalorder %s16, 0
      %p55 = por %p53, %p54
      %s56 = ssub.s32 %s18, %s25
      %p57 = scmp.eq.s32.totalorder %s56, 0
      %s59 = sadd.s32 %s58, 1
      %s60 = scalar_select %p57, %s58, %s59
      %p63 = pneg %p57
      %p64 = scmp.eq.s32.totalorder %s10, 1
      %p65 = por %p63, %p64
      %p66 = scmp.ne.s32.totalorder %s58, %s61
      %p67 = scmp.eq.s32.totalorder %s10, 0
      %p68 = por %p66, %p67
      %p69 = scmp.ne.s32.totalorder %s58, %s61
      %p70 = scmp.eq.s32.totalorder %s15, 1
      %p71 = por %p69, %p70
      %p72 = scmp.ne.s32.totalorder %s61, %s62
      %p73 = scmp.eq.s32.totalorder %s15, 0
      %p74 = por %p72, %p73
      %p75 = scmp.ne.s32.totalorder %s61, %s62
      %p76 = scmp.eq.s32.totalorder %s16, 1
      %p77 = por %p75, %p76
      %p79 = scmp.ne.s32.totalorder %s62, %s78
      %p80 = scmp.eq.s32.totalorder %s16, 0
      %p81 = por %p79, %p80
      %s82 = ssub.s32 %s18, %s25
      %p83 = scmp.eq.s32.totalorder %s82, 0
      %s85 = sadd.s32 %s84, 1
      %s86 = scalar_select %p83, %s84, %s85
      %p89 = pneg %p83
      %p90 = scmp.eq.s32.totalorder %s10, 1
      %p91 = por %p89, %p90
      %p92 = scmp.ne.s32.totalorder %s84, %s87
      %p93 = scmp.eq.s32.totalorder %s10, 0
      %p94 = por %p92, %p93
      %p95 = scmp.ne.s32.totalorder %s84, %s87
      %p96 = scmp.eq.s32.totalorder %s15, 1
      %p97 = por %p95, %p96
      %p98 = scmp.ne.s32.totalorder %s87, %s88
      %p99 = scmp.eq.s32.totalorder %s15, 0
      %p100 = por %p98, %p99
      %p101 = scmp.ne.s32.totalorder %s87, %s88
      %p102 = scmp.eq.s32.totalorder %s16, 1
      %p103 = por %p101, %p102
      %p105 = scmp.ne.s32.totalorder %s88, %s104
      %p106 = scmp.eq.s32.totalorder %s16, 0
      %p107 = por %p105, %p106
      %s108 = ssub.s32 %s17, %s29
      %s109 = ssub.s32 %s18, %s25
      %s110 = sor.u32 %s108, %s109
      %p111 = scmp.eq.s32.totalorder %s110, 0
      %s113 = sadd.s32 %s112, 1
      %s114 = scalar_select %p111, %s112, %s113
      %p117 = pneg %p111
      %p118 = scmp.eq.s32.totalorder %s10, 1
      %p119 = por %p117, %p118
      %p120 = scmp.ne.s32.totalorder %s112, %s115
      %p121 = scmp.eq.s32.totalorder %s10, 0
      %p122 = por %p120, %p121
      %p123 = scmp.ne.s32.totalorder %s112, %s115
      %p124 = scmp.eq.s32.totalorder %s15, 1
      %p125 = por %p123, %p124
      %p126 = scmp.ne.s32.totalorder %s115, %s116
      %p127 = scmp.eq.s32.totalorder %s15, 0
      %p128 = por %p126, %p127
      %p129 = scmp.ne.s32.totalorder %s115, %s116
      %p130 = scmp.eq.s32.totalorder %s16, 1
      %p131 = por %p129, %p130
      %p133 = scmp.ne.s32.totalorder %s116, %s132
      %p134 = scmp.eq.s32.totalorder %s16, 0
      %p135 = por %p133, %p134
      %s136 = ssub.s32 %s17, %s29
      %s137 = ssub.s32 %s18, %s25
      %s138 = sor.u32 %s136, %s137
      %p139 = scmp.eq.s32.totalorder %s138, 0
      %s141 = sadd.s32 %s140, 1
      %s142 = scalar_select %p139, %s140, %s141
      %p145 = pneg %p139
      %p146 = scmp.eq.s32.totalorder %s10, 1
      %p147 = por %p145, %p146
      %p148 = scmp.ne.s32.totalorder %s140, %s143
      %p149 = scmp.eq.s32.totalorder %s10, 0
      %p150 = por %p148, %p149
      %p151 = scmp.ne.s32.totalorder %s140, %s143
      %p152 = scmp.eq.s32.totalorder %s15, 1
      %p153 = por %p151, %p152
      %p154 = scmp.ne.s32.totalorder %s143, %s144
      %p155 = scmp.eq.s32.totalorder %s15, 0
      %p156 = por %p154, %p155
      %p157 = scmp.ne.s32.totalorder %s143, %s144
      %p158 = scmp.eq.s32.totalorder %s16, 1
      %p159 = por %p157, %p158
      %p161 = scmp.ne.s32.totalorder %s144, %s160
      %p162 = scmp.eq.s32.totalorder %s16, 0
      %p163 = por %p161, %p162
      %p164 = scmp.le.s32.totalorder 1, %s10
      %p165 = scmp.lt.s32.totalorder %s10, 3
      %p166 = pnand %p164, %p165
      %p167 = pneg %p166
      // Predicated region
      $region9: #{s2_forward.11} parent=5 // pred_check
        _
      $region10: #{s2_forward.11} parent=5 // pred_check_branch
        %169 = sbr.rel (%p166) target = $region12
      $region11: #{s2_forward.11} parent=5 // pred_region
        %s170 = ssub.s32 %s10, 1
        // Predicated region
        $region13: #{s2_forward.11} parent=11 // pred_check
          %p171 = pneg %p74
        $region14: #{s2_forward.11} parent=11 // pred_check_branch
          %173 = sbr.rel (%p171) target = $region16
        $region15: #{s2_forward.11} parent=11 // pred_region
          %p174 = scmp.lt.s32.totalorder %s20, 0
          %s175 = scalar_select %p174, %s20, 0
          %s176 = smul.addr %s175, 8
          %s177 = scalar_lea.vmem %s1, %s176
        $region16: #{s2_forward.11} parent=11 // pred_fallthru
          _
        // Predicated region
        $region17: #{s2_forward.11} parent=11 // pred_check
          %p178 = pneg %p100
        $region18: #{s2_forward.11} parent=11 // pred_check_branch
          %180 = sbr.rel (%p178) target = $region20
        $region19: #{s2_forward.11} parent=11 // pred_region
          %p181 = scmp.lt.s32.totalorder %s20, 0
          %s182 = scalar_select %p181, %s20, 0
          %s183 = scalar_lea.vmem %s2, %s182
        $region20: #{s2_forward.11} parent=11 // pred_fallthru
          _
      $region12: #{s2_forward.11} parent=5 // pred_fallthru
        _
      %p184 = scmp.lt.s32.totalorder %s10, 2
      // Predicated region
      $region21: #{s2_forward.11} parent=5 // pred_check
        %p185 = pneg %p184
      $region22: #{s2_forward.11} parent=5 // pred_check_branch
        %187 = sbr.rel (%p185) target = $region24
      $region23: #{s2_forward.11} parent=5 // pred_region
        // Predicated region
        $region25: #{s2_forward.11} parent=23 // pred_check
          %p188 = pneg %p42
        $region26: #{s2_forward.11} parent=23 // pred_check_branch
          %190 = sbr.rel (%p188) target = $region28
        $region27: #{s2_forward.11} parent=23 // pred_region
          %s191 = smul.u32 16, %s17
          %s192 = ssub.s32 22, %s191
          %p193 = scmp.lt.s32.totalorder %s192, 16
          %s194 = scalar_select %p193, %s192, 16
          %s195 = smul.u32 8, %s194
          %p196 = scmp.lt.s32.totalorder %s191, 21
          %s197 = scalar_select %p196, %s191, 21
          %s198 = smul.addr %s197, 8
          %s199 = scalar_lea.vmem %s0, %s198
          %s200 = smul.u32 16, %s17
          %s201 = ssub.s32 22, %s200
          %p202 = scmp.lt.s32.totalorder %s201, 16
          %s203 = scalar_select %p202, %s201, 16
          %s204 = smul.u32 8, %s203
        $region28: #{s2_forward.11} parent=23 // pred_fallthru
          _
        // Predicated region
        $region29: #{s2_forward.11} parent=23 // pred_check
          %p205 = pneg %p122
        $region30: #{s2_forward.11} parent=23 // pred_check_branch
          %207 = sbr.rel (%p205) target = $region32
        $region31: #{s2_forward.11} parent=23 // pred_region
          %s208 = smul.u32 16, %s17
          %s209 = ssub.s32 22, %s208
          %p210 = scmp.lt.s32.totalorder %s209, 16
          %s211 = scalar_select %p210, %s209, 16
          %s212 = smul.u32 8, %s211
          %p213 = scmp.lt.s32.totalorder %s208, 21
          %s214 = scalar_select %p213, %s208, 21
          %p215 = scmp.lt.s32.totalorder %s18, 0
          %s216 = scalar_select %p215, %s18, 0
          %s217 = sadd.s32 %s216, %s214
          %s218 = smul.addr %s217, 8
          %s219 = scalar_lea.vmem %s3, %s218
          %s220 = smul.u32 16, %s17
          %s221 = ssub.s32 22, %s220
          %p222 = scmp.lt.s32.totalorder %s221, 16
          %s223 = scalar_select %p222, %s221, 16
          %s224 = smul.u32 8, %s223
        $region32: #{s2_forward.11} parent=23 // pred_fallthru
          _
      $region24: #{s2_forward.11} parent=5 // pred_fallthru
        _
      %p225 = scmp.le.s32.totalorder 1, %s10
      %p226 = scmp.lt.s32.totalorder %s10, 3
      %p227 = pnand %p225, %p226
      %p228 = pneg %p227
      // Predicated region
      $region33: #{s2_forward.11} parent=5 // pred_check
        _
      $region34: #{s2_forward.11} parent=5 // pred_check_branch
        %230 = sbr.rel (%p227) target = $region36
      $region35: #{s2_forward.11} parent=5 // pred_region
        %s231 = ssub.s32 %s10, 1
        %s232 = smul.u32 16, %s19
        %s233 = ssub.s32 22, %s232
        %p234 = scmp.lt.s32.totalorder %s233, 16
        %s235 = scalar_select %p234, %s233, 16
        %s236 = smul.u32 8, %s235
        %p237 = scmp.lt.s32.totalorder %s232, 21
        %s238 = scalar_select %p237, %s232, 21
        %s239 = smul.addr %s238, 8
        %s240 = scalar_lea.vmem %s0, %s239
        %p241 = pneg %p48
        %p242 = pneg %p45
        %p243 = scmp.lt.s32.totalorder %s20, 0
        %s244 = scalar_select %p243, %s20, 0
        %s245 = smul.addr %s244, 8
        %s246 = scalar_lea.vmem %s1, %s245
        %p247 = pneg %p74
        %p248 = pneg %p71
        %p249 = scmp.lt.s32.totalorder %s20, 0
        %s250 = scalar_select %p249, %s20, 0
        %s251 = scalar_lea.vmem %s2, %s250
        %p252 = pneg %p100
        %p253 = pneg %p97
        %s254 = smul.u32 16, %s19
        %s255 = ssub.s32 22, %s254
        %p256 = scmp.lt.s32.totalorder %s255, 16
        %s257 = scalar_select %p256, %s255, 16
        %s258 = smul.u32 8, %s257
        %p259 = scmp.lt.s32.totalorder %s254, 21
        %s260 = scalar_select %p259, %s254, 21
        %p261 = scmp.lt.s32.totalorder %s20, 0
        %s262 = scalar_select %p261, %s20, 0
        %s263 = sadd.s32 %s262, %s260
        %s264 = smul.addr %s263, 8
        %s265 = scalar_lea.vmem %s3, %s264
        %p266 = pneg %p128
        %p267 = pneg %p125
        %p268 = pneg %p156
        %p269 = pneg %p153
        %s270 = sand.u32 %s143, 1
        %s271 = sand.u32 %s143, 1
        %s272 = smul.addr %s271, 128
        %s273 = scalar_lea.vmem [#allocation2], %s272
        %s274 = smul.u32 16, %s19
        %s275 = ssub.s32 22, %s274
        %p276 = scmp.lt.s32.totalorder %s275, 16
        %s277 = scalar_select %p276, %s275, 16
        %s278 = smul.u32 8, %s277
        %p279 = scmp.lt.s32.totalorder %s274, 21
        %s280 = scalar_select %p279, %s274, 21
        %s281 = smul.addr %s280, 8
        %s282 = scalar_lea.vmem %s0, %s281
        %s283 = smul.u32 16, %s19
        %s284 = ssub.s32 22, %s283
        %p285 = scmp.lt.s32.totalorder %s284, 16
        %s286 = scalar_select %p285, %s284, 16
        %s287 = smul.u32 8, %s286
        %p288 = scmp.lt.s32.totalorder %s20, 0
        %s289 = scalar_select %p288, %s20, 0
        %s290 = smul.addr %s289, 8
        %s291 = scalar_lea.vmem %s1, %s290
        %p292 = scmp.lt.s32.totalorder %s20, 0
        %s293 = scalar_select %p292, %s20, 0
        %s294 = scalar_lea.vmem %s2, %s293
        %s295 = smul.u32 16, %s19
        %s296 = ssub.s32 22, %s295
        %p297 = scmp.lt.s32.totalorder %s296, 16
        %s298 = scalar_select %p297, %s296, 16
        %s299 = smul.u32 8, %s298
        %p300 = scmp.lt.s32.totalorder %s295, 21
        %s301 = scalar_select %p300, %s295, 21
        %p302 = scmp.lt.s32.totalorder %s20, 0
        %s303 = scalar_select %p302, %s20, 0
        %s304 = sadd.s32 %s303, %s301
        %s305 = smul.addr %s304, 8
        %s306 = scalar_lea.vmem %s3, %s305
        %s307 = smul.u32 16, %s19
        %s308 = ssub.s32 22, %s307
        %p309 = scmp.lt.s32.totalorder %s308, 16
        %s310 = scalar_select %p309, %s308, 16
        %s311 = smul.u32 8, %s310
        %s312 = smul.u32 16, %s19
        %s313 = ssub.s32 22, %s312
        %p314 = scmp.lt.s32.totalorder %s313, 16
        %s315 = scalar_select %p314, %s313, 16
        %s316 = smul.u32 8, %s315
        %v318 = vld [vmem:[%s282] sm:$0xff]
        %v319 = vld [vmem:[%s282 + $0x8] sm:$0xff]
        %v320 = vld [vmem:[%s282 + $0x10] sm:$0xff]
        %v321 = vld [vmem:[%s282 + $0x18] sm:$0xff]
        %v322 = vld [vmem:[%s282 + $0x20] sm:$0xff]
        %v323 = vld [vmem:[%s282 + $0x28] sm:$0xff]
        %v324 = vld [vmem:[%s282 + $0x30] sm:$0xff]
        %v325 = vld [vmem:[%s282 + $0x38] sm:$0xff]
        %v326 = vld [vmem:[%s282 + $0x40] sm:$0xff]
        %v327 = vld [vmem:[%s282 + $0x48] sm:$0xff]
        %v328 = vld [vmem:[%s282 + $0x50] sm:$0xff]
        %v329 = vld [vmem:[%s282 + $0x58] sm:$0xff]
        %v330 = vld [vmem:[%s282 + $0x60] sm:$0xff]
        %v331 = vld [vmem:[%s282 + $0x68] sm:$0xff]
        %v332 = vld [vmem:[%s282 + $0x70] sm:$0xff]
        %v333 = vld [vmem:[%s282 + $0x78] sm:$0xff]
        %v334 = vpack.c.bf16 %v319, %v318
        %v335 = vpack.c.bf16 %v321, %v320
        %v336 = vpack.c.bf16 %v323, %v322
        %v337 = vpack.c.bf16 %v325, %v324
        %v338 = vpack.c.bf16 %v327, %v326
        %v339 = vpack.c.bf16 %v329, %v328
        %v340 = vpack.c.bf16 %v331, %v330
        %v341 = vpack.c.bf16 %v333, %v332
        %v342 = vld [vmem:[%s291] sm:$0xff]
        %v343 = vld [vmem:[%s291 + $0x8] sm:$0xff]
        %v344 = vld [vmem:[%s291 + $0x10] sm:$0xff]
        %v345 = vld [vmem:[%s291 + $0x18] sm:$0xff]
        %v346 = vpack.c.bf16 %v343, %v342
        %v347 = vpack.c.bf16 %v345, %v344
        %v348 = vld [vmem:[%s294] sm:$0x1]
        %v350 = vperm.slane %v348, 0
        %vm352 = vcmask 261120
        %v354 = vsel %vm352, %v334, 0
        %v357 = vsel %vm352, %v335, 0
        %v360 = vsel %vm352, %v336, 0
        %v363 = vsel %vm352, %v337, 0
        %v366 = vsel %vm352, %v338, 0
        %v369 = vsel %vm352, %v339, 0
        %v372 = vsel %vm352, %v340, 0
        %v375 = vsel %vm352, %v341, 0
        %377 = vmatpush.bf16.msra.mxu0 0
        %378 = vmatpush.bf16.msra.mxu0 0
        %379 = vmatpush.bf16.msra.mxu0 0
        %380 = vmatpush.bf16.msra.mxu0 0
        %381 = vmatpush.bf16.msra.mxu0 0
        %382 = vmatpush.bf16.msra.mxu0 0
        %383 = vmatpush.bf16.msra.mxu0 %v347
        %384 = vmatpush.bf16.msra.mxu0 %v346
        %385 = vmatmul.bf16.gmra.mxu0 %v354
        %v386 = vpop.f32.mrf.mxu0
        %v387 = vadd.f32 %v350, %v386
        %v388 = vpop.f32.mrf.mxu0
        %v389 = vadd.f32 %v350, %v388
        %390 = vmatmul.bf16.gmra.mxu0 %v357
        %v391 = vpop.f32.mrf.mxu0
        %v392 = vadd.f32 %v350, %v391
        %v393 = vpop.f32.mrf.mxu0
        %v394 = vadd.f32 %v350, %v393
        %395 = vmatmul.bf16.gmra.mxu0 %v360
        %v396 = vpop.f32.mrf.mxu0
        %v397 = vadd.f32 %v350, %v396
        %v398 = vpop.f32.mrf.mxu0
        %v399 = vadd.f32 %v350, %v398
        %400 = vmatmul.bf16.gmra.mxu0 %v363
        %v401 = vpop.f32.mrf.mxu0
        %v402 = vadd.f32 %v350, %v401
        %v403 = vpop.f32.mrf.mxu0
        %v404 = vadd.f32 %v350, %v403
        %405 = vmatmul.bf16.gmra.mxu0 %v366
        %v406 = vpop.f32.mrf.mxu0
        %v407 = vadd.f32 %v350, %v406
        %v408 = vpop.f32.mrf.mxu0
        %v409 = vadd.f32 %v350, %v408
        %410 = vmatmul.bf16.gmra.mxu0 %v369
        %v411 = vpop.f32.mrf.mxu0
        %v412 = vadd.f32 %v350, %v411
        %v413 = vpop.f32.mrf.mxu0
        %v414 = vadd.f32 %v350, %v413
        %415 = vmatmul.bf16.gmra.mxu0 %v372
        %v416 = vpop.f32.mrf.mxu0
        %v417 = vadd.f32 %v350, %v416
        %v418 = vpop.f32.mrf.mxu0
        %v419 = vadd.f32 %v350, %v418
        %420 = vmatmul.bf16.gmra.mxu0 %v375
        %v421 = vpop.f32.mrf.mxu0
        %v422 = vadd.f32 %v350, %v421
        %v423 = vpop.f32.mrf.mxu0
        %v424 = vadd.f32 %v350, %v423
        %425 = vdwg.mxu0
        %v426 = vld [vmem:[%s306] sm:$0xff]
        %v427 = vld [vmem:[%s306 + $0x8] sm:$0xff]
        %v428 = vld [vmem:[%s306 + $0x10] sm:$0xff]
        %v429 = vld [vmem:[%s306 + $0x18] sm:$0xff]
        %v430 = vld [vmem:[%s306 + $0x20] sm:$0xff]
        %v431 = vld [vmem:[%s306 + $0x28] sm:$0xff]
        %v432 = vld [vmem:[%s306 + $0x30] sm:$0xff]
        %v433 = vld [vmem:[%s306 + $0x38] sm:$0xff]
        %v434 = vld [vmem:[%s306 + $0x40] sm:$0xff]
        %v435 = vld [vmem:[%s306 + $0x48] sm:$0xff]
        %v436 = vld [vmem:[%s306 + $0x50] sm:$0xff]
        %v437 = vld [vmem:[%s306 + $0x58] sm:$0xff]
        %v438 = vld [vmem:[%s306 + $0x60] sm:$0xff]
        %v439 = vld [vmem:[%s306 + $0x68] sm:$0xff]
        %v440 = vld [vmem:[%s306 + $0x70] sm:$0xff]
        %v441 = vld [vmem:[%s306 + $0x78] sm:$0xff]
        %v442 = vadd.f32 %v387, %v426
        %v443 = vadd.f32 %v389, %v427
        %v444 = vadd.f32 %v392, %v428
        %v445 = vadd.f32 %v394, %v429
        %v446 = vadd.f32 %v397, %v430
        %v447 = vadd.f32 %v399, %v431
        %v448 = vadd.f32 %v402, %v432
        %v449 = vadd.f32 %v404, %v433
        %v450 = vadd.f32 %v407, %v434
        %v451 = vadd.f32 %v409, %v435
        %v452 = vadd.f32 %v412, %v436
        %v453 = vadd.f32 %v414, %v437
        %v454 = vadd.f32 %v417, %v438
        %v455 = vadd.f32 %v419, %v439
        %v456 = vadd.f32 %v422, %v440
        %v457 = vadd.f32 %v424, %v441
        %458 = vst.msk [vmem:[%s273] sm:$0xff] %vm352, %v442
        %459 = vst.msk [vmem:[%s273 + $0x8] sm:$0xff] %vm352, %v443
        %460 = vst.msk [vmem:[%s273 + $0x10] sm:$0xff] %vm352, %v444
        %461 = vst.msk [vmem:[%s273 + $0x18] sm:$0xff] %vm352, %v445
        %462 = vst.msk [vmem:[%s273 + $0x20] sm:$0xff] %vm352, %v446
        %463 = vst.msk [vmem:[%s273 + $0x28] sm:$0xff] %vm352, %v447
        %464 = vst.msk [vmem:[%s273 + $0x30] sm:$0xff] %vm352, %v448
        %465 = vst.msk [vmem:[%s273 + $0x38] sm:$0xff] %vm352, %v449
        %466 = vst.msk [vmem:[%s273 + $0x40] sm:$0xff] %vm352, %v450
        %467 = vst.msk [vmem:[%s273 + $0x48] sm:$0xff] %vm352, %v451
        %468 = vst.msk [vmem:[%s273 + $0x50] sm:$0xff] %vm352, %v452
        %469 = vst.msk [vmem:[%s273 + $0x58] sm:$0xff] %vm352, %v453
        %470 = vst.msk [vmem:[%s273 + $0x60] sm:$0xff] %vm352, %v454
        %471 = vst.msk [vmem:[%s273 + $0x68] sm:$0xff] %vm352, %v455
        %472 = vst.msk [vmem:[%s273 + $0x70] sm:$0xff] %vm352, %v456
        %473 = vst.msk [vmem:[%s273 + $0x78] sm:$0xff] %vm352, %v457
        %s474 = sand.u32 %s143, 1
        %s475 = sand.u32 %s143, 1
        %s476 = smul.addr %s475, 128
        %s477 = scalar_lea.vmem [#allocation2], %s476
        // Predicated region
        $region37: #{s2_forward.11} parent=35 // pred_check
          %p478 = pneg %p153
        $region38: #{s2_forward.11} parent=35 // pred_check_branch
          %480 = sbr.rel (%p478) target = $region40
        $region39: #{s2_forward.11} parent=35 // pred_region
          %s481 = smul.u32 16, %s19
          %s482 = ssub.s32 22, %s481
          %p483 = scmp.lt.s32.totalorder %s482, 16
          %s484 = scalar_select %p483, %s482, 16
          %s485 = smul.u32 8, %s484
          %p486 = scmp.ne.s32.totalorder 0, %s485
          %s487 = sadd.s32 %s20, %s481
          %s488 = smul.addr %s487, 8
          %s489 = scalar_lea.vmem %s4, %s488
          // Predicated region
          $region41: #{s2_forward.11} parent=39 // pred_check
            %p490 = pneg %p486
          $region42: #{s2_forward.11} parent=39 // pred_check_branch
            %492 = sbr.rel (%p490) target = $region44
          $region43: #{s2_forward.11} parent=39 // pred_region
            // Predicated region
            $region45: #{s2_forward.11} parent=43 // pred_check
              _
            $region46: #{s2_forward.11} parent=43 // pred_check_branch
              %494 = sbr.rel (0) target = $region48
            $region47: #{s2_forward.11} parent=43 // pred_region
              // Predicated region
              $region67: #{s2_forward.11} parent=47 // pred_check
                _
              $region68: #{s2_forward.11} parent=47 // pred_check_branch
                %574 = sbr.rel (0) target = $region70
              $region69: #{s2_forward.11} parent=47 // pred_region
                %s575 = sshrl.u32 %s484, 4
                // While loop
                $region71: #{s2_forward.11} parent=69 // loop_pre_header
                  _
                $region72: #{s2_forward.11} parent=69 // loop_header
                  %s577 = sphi 0, %s579
                  %p578 = scmp.ge.s32.totalorder %s577, %s575
                  %s582 = sphi 0, %s619
                  %s583 = sphi %s477, %s622
                  %s584 = sphi %s489, %s623
                $region73: #{s2_forward.11} parent=69 // loop_header_branch
                  %581 = sbr.rel (%p578) target = $region77
                $region74: #{s2_forward.11} parent=69 // loop_body
                  %v585 = vld [vmem:[%s583] sm:$0xff]
                  %586 = vst [vmem:[%s584] sm:$0xff] %v585
                  %v587 = vld [vmem:[%s583 + $0x8] sm:$0xff]
                  %588 = vst [vmem:[%s584 + $0x8] sm:$0xff] %v587
                  %v589 = vld [vmem:[%s583 + $0x10] sm:$0xff]
                  %590 = vst [vmem:[%s584 + $0x10] sm:$0xff] %v589
                  %v591 = vld [vmem:[%s583 + $0x18] sm:$0xff]
                  %592 = vst [vmem:[%s584 + $0x18] sm:$0xff] %v591
                  %v593 = vld [vmem:[%s583 + $0x20] sm:$0xff]
                  %594 = vst [vmem:[%s584 + $0x20] sm:$0xff] %v593
                  %v595 = vld [vmem:[%s583 + $0x28] sm:$0xff]
                  %596 = vst [vmem:[%s584 + $0x28] sm:$0xff] %v595
                  %v597 = vld [vmem:[%s583 + $0x30] sm:$0xff]
                  %598 = vst [vmem:[%s584 + $0x30] sm:$0xff] %v597
                  %v599 = vld [vmem:[%s583 + $0x38] sm:$0xff]
                  %600 = vst [vmem:[%s584 + $0x38] sm:$0xff] %v599
                  %v601 = vld [vmem:[%s583 + $0x40] sm:$0xff]
                  %602 = vst [vmem:[%s584 + $0x40] sm:$0xff] %v601
                  %v603 = vld [vmem:[%s583 + $0x48] sm:$0xff]
                  %604 = vst [vmem:[%s584 + $0x48] sm:$0xff] %v603
                  %v605 = vld [vmem:[%s583 + $0x50] sm:$0xff]
                  %606 = vst [vmem:[%s584 + $0x50] sm:$0xff] %v605
                  %v607 = vld [vmem:[%s583 + $0x58] sm:$0xff]
                  %608 = vst [vmem:[%s584 + $0x58] sm:$0xff] %v607
                  %v609 = vld [vmem:[%s583 + $0x60] sm:$0xff]
                  %610 = vst [vmem:[%s584 + $0x60] sm:$0xff] %v609
                  %v611 = vld [vmem:[%s583 + $0x68] sm:$0xff]
                  %612 = vst [vmem:[%s584 + $0x68] sm:$0xff] %v611
                  %v613 = vld [vmem:[%s583 + $0x70] sm:$0xff]
                  %614 = vst [vmem:[%s584 + $0x70] sm:$0xff] %v613
                  %v615 = vld [vmem:[%s583 + $0x78] sm:$0xff]
                  %616 = vst [vmem:[%s584 + $0x78] sm:$0xff] %v615
                  %s617 = sadd.s32 1, %s582
                  %p618 = scmp.ge.s32.totalorder %s617, %s575
                  %s619 = scalar_select %p618, 0, %s617
                  %s620 = smul.u32 %s619, 128
                  %s621 = smul.u32 %s619, 128
                  %s622 = scalar_lea.vmem %s477, %s620 [#allocation2]
                  %s623 = scalar_lea.vmem %s489, %s621
                $region75: #{s2_forward.11} parent=69 // loop_footer
                  %s579 = sadd.s32 %s577, 1
                $region76: #{s2_forward.11} parent=69 // loop_footer_branch
                  %576 = sbr.rel target = $region72
                $region77: #{s2_forward.11} parent=69 // loop_exit
                  _
                %s624 = sshrl.u32 %s484, 4
                %s625 = sand.u32 %s484, 15
                %s626 = smul.u32 %s624, 16
                %s627 = smul.u32 8, %s626
                %s628 = scalar_lea.vmem %s477, %s627 [#allocation2]
                %s629 = smul.u32 8, %s626
                %s630 = scalar_lea.vmem %s489, %s629
                // While loop
                $region78: #{s2_forward.11} parent=69 // loop_pre_header
                  _
                $region79: #{s2_forward.11} parent=69 // loop_header
                  %s632 = sphi 0, %s634
                  %p633 = scmp.ge.s32.totalorder %s632, %s625
                  %s637 = sphi 0, %s644
                  %s638 = sphi %s628, %s647
                  %s639 = sphi %s630, %s648
                $region80: #{s2_forward.11} parent=69 // loop_header_branch
                  %636 = sbr.rel (%p633) target = $region84
                $region81: #{s2_forward.11} parent=69 // loop_body
                  %v640 = vld [vmem:[%s638] sm:$0xff]
                  %641 = vst [vmem:[%s639] sm:$0xff] %v640
                  %s642 = sadd.s32 1, %s637
                  %p643 = scmp.ge.s32.totalorder %s642, %s625
                  %s644 = scalar_select %p643, 0, %s642
                  %s645 = smul.u32 %s644, 8
                  %s646 = smul.u32 %s644, 8
                  %s647 = scalar_lea.vmem %s628, %s645 [#allocation2]
                  %s648 = scalar_lea.vmem %s630, %s646
                $region82: #{s2_forward.11} parent=69 // loop_footer
                  %s634 = sadd.s32 %s632, 1
                $region83: #{s2_forward.11} parent=69 // loop_footer_branch
                  %631 = sbr.rel target = $region79
                $region84: #{s2_forward.11} parent=69 // loop_exit
                  _
              $region70: #{s2_forward.11} parent=47 // pred_fallthru
                _
              // Predicated region
              $region85: #{s2_forward.11} parent=47 // pred_check
                _
              $region86: #{s2_forward.11} parent=47 // pred_check_branch
                %650 = sbr.rel target = $region88
              $region87: #{s2_forward.11} parent=47 // pred_region
                _
              $region88: #{s2_forward.11} parent=47 // pred_fallthru
                _
            $region48: #{s2_forward.11} parent=43 // pred_fallthru
              _
            // Predicated region
            $region49: #{s2_forward.11} parent=43 // pred_check
              _
            $region50: #{s2_forward.11} parent=43 // pred_check_branch
              %496 = sbr.rel target = $region52
            $region51: #{s2_forward.11} parent=43 // pred_region
              %s498 = ssub.s32 256, 1
              %s499 = sshrl.u32 %s484, 4
              // While loop
              $region53: #{s2_forward.11} parent=51 // loop_pre_header
                _
              $region54: #{s2_forward.11} parent=51 // loop_header
                %s501 = sphi 0, %s503
                %p502 = scmp.ge.s32.totalorder %s501, %s499
                %s506 = sphi 0, %s543
                %s507 = sphi %s477, %s546
                %s508 = sphi %s489, %s547
              $region55: #{s2_forward.11} parent=51 // loop_header_branch
                %505 = sbr.rel (%p502) target = $region59
              $region56: #{s2_forward.11} parent=51 // loop_body
                %v509 = vld [vmem:[%s507] sm:%s498]
                %510 = vst [vmem:[%s508] sm:%s498] %v509
                %v511 = vld [vmem:[%s507 + $0x8] sm:%s498]
                %512 = vst [vmem:[%s508 + $0x8] sm:%s498] %v511
                %v513 = vld [vmem:[%s507 + $0x10] sm:%s498]
                %514 = vst [vmem:[%s508 + $0x10] sm:%s498] %v513
                %v515 = vld [vmem:[%s507 + $0x18] sm:%s498]
                %516 = vst [vmem:[%s508 + $0x18] sm:%s498] %v515
                %v517 = vld [vmem:[%s507 + $0x20] sm:%s498]
                %518 = vst [vmem:[%s508 + $0x20] sm:%s498] %v517
                %v519 = vld [vmem:[%s507 + $0x28] sm:%s498]
                %520 = vst [vmem:[%s508 + $0x28] sm:%s498] %v519
                %v521 = vld [vmem:[%s507 + $0x30] sm:%s498]
                %522 = vst [vmem:[%s508 + $0x30] sm:%s498] %v521
                %v523 = vld [vmem:[%s507 + $0x38] sm:%s498]
                %524 = vst [vmem:[%s508 + $0x38] sm:%s498] %v523
                %v525 = vld [vmem:[%s507 + $0x40] sm:%s498]
                %526 = vst [vmem:[%s508 + $0x40] sm:%s498] %v525
                %v527 = vld [vmem:[%s507 + $0x48] sm:%s498]
                %528 = vst [vmem:[%s508 + $0x48] sm:%s498] %v527
                %v529 = vld [vmem:[%s507 + $0x50] sm:%s498]
                %530 = vst [vmem:[%s508 + $0x50] sm:%s498] %v529
                %v531 = vld [vmem:[%s507 + $0x58] sm:%s498]
                %532 = vst [vmem:[%s508 + $0x58] sm:%s498] %v531
                %v533 = vld [vmem:[%s507 + $0x60] sm:%s498]
                %534 = vst [vmem:[%s508 + $0x60] sm:%s498] %v533
                %v535 = vld [vmem:[%s507 + $0x68] sm:%s498]
                %536 = vst [vmem:[%s508 + $0x68] sm:%s498] %v535
                %v537 = vld [vmem:[%s507 + $0x70] sm:%s498]
                %538 = vst [vmem:[%s508 + $0x70] sm:%s498] %v537
                %v539 = vld [vmem:[%s507 + $0x78] sm:%s498]
                %540 = vst [vmem:[%s508 + $0x78] sm:%s498] %v539
                %s541 = sadd.s32 1, %s506
                %p542 = scmp.ge.s32.totalorder %s541, %s499
                %s543 = scalar_select %p542, 0, %s541
                %s544 = smul.u32 %s543, 128
                %s545 = smul.u32 %s543, 128
                %s546 = scalar_lea.vmem %s477, %s544 [#allocation2]
                %s547 = scalar_lea.vmem %s489, %s545
              $region57: #{s2_forward.11} parent=51 // loop_footer
                %s503 = sadd.s32 %s501, 1
              $region58: #{s2_forward.11} parent=51 // loop_footer_branch
                %500 = sbr.rel target = $region54
              $region59: #{s2_forward.11} parent=51 // loop_exit
                _
              %s548 = sshrl.u32 %s484, 4
              %s549 = sand.u32 %s484, 15
              %s550 = smul.u32 %s548, 16
              %s551 = smul.u32 8, %s550
              %s552 = scalar_lea.vmem %s477, %s551 [#allocation2]
              %s553 = smul.u32 8, %s550
              %s554 = scalar_lea.vmem %s489, %s553
              // While loop
              $region60: #{s2_forward.11} parent=51 // loop_pre_header
                _
              $region61: #{s2_forward.11} parent=51 // loop_header
                %s556 = sphi 0, %s558
                %p557 = scmp.ge.s32.totalorder %s556, %s549
                %s561 = sphi 0, %s568
                %s562 = sphi %s552, %s571
                %s563 = sphi %s554, %s572
              $region62: #{s2_forward.11} parent=51 // loop_header_branch
                %560 = sbr.rel (%p557) target = $region66
              $region63: #{s2_forward.11} parent=51 // loop_body
                %v564 = vld [vmem:[%s562] sm:%s498]
                %565 = vst [vmem:[%s563] sm:%s498] %v564
                %s566 = sadd.s32 1, %s561
                %p567 = scmp.ge.s32.totalorder %s566, %s549
                %s568 = scalar_select %p567, 0, %s566
                %s569 = smul.u32 %s568, 8
                %s570 = smul.u32 %s568, 8
                %s571 = scalar_lea.vmem %s552, %s569 [#allocation2]
                %s572 = scalar_lea.vmem %s554, %s570
              $region64: #{s2_forward.11} parent=51 // loop_footer
                %s558 = sadd.s32 %s556, 1
              $region65: #{s2_forward.11} parent=51 // loop_footer_branch
                %555 = sbr.rel target = $region61
              $region66: #{s2_forward.11} parent=51 // loop_exit
                _
            $region52: #{s2_forward.11} parent=43 // pred_fallthru
              _
          $region44: #{s2_forward.11} parent=39 // pred_fallthru
            _
          %651 = vnop
        $region40: #{s2_forward.11} parent=35 // pred_fallthru
          _
      $region36: #{s2_forward.11} parent=5 // pred_fallthru
        _
      %p652 = scmp.le.s32.totalorder 2, %s10
      // Predicated region
      $region89: #{s2_forward.11} parent=5 // pred_check
        %p653 = pneg %p652
      $region90: #{s2_forward.11} parent=5 // pred_check_branch
        %655 = sbr.rel (%p653) target = $region92
      $region91: #{s2_forward.11} parent=5 // pred_region
        %s656 = ssub.s32 %s10, 2
        // Predicated region
        $region93: #{s2_forward.11} parent=91 // pred_check
          %p657 = pneg %p159
        $region94: #{s2_forward.11} parent=91 // pred_check_branch
          %659 = sbr.rel (%p657) target = $region96
        $region95: #{s2_forward.11} parent=91 // pred_region
          %s660 = sand.u32 %s144, 1
          %s661 = sand.u32 %s144, 1
          %s662 = smul.addr %s661, 128
          %s663 = scalar_lea.vmem [#allocation2], %s662
        $region96: #{s2_forward.11} parent=91 // pred_fallthru
          _
      $region92: #{s2_forward.11} parent=5 // pred_fallthru
        _
    $region6: #{s2_forward.11} parent=1 // loop_footer
      %s14 = sadd.s32 1, %s10
    $region7: #{s2_forward.11} parent=1 // loop_footer_branch
      %9 = sbr.rel target = $region3
    $region8: #{s2_forward.11} parent=1 // loop_exit
      _

// kernel: s2_forward.12
$region0: #{s2_forward.12}
  #allocation0 [shape = 'u32[]', space=smem, size = 0x4, offset = 0x4, fixed_abs, tag = 'smem constant byte address 0x4 - core index']
  #allocation1 [shape = 'u32[72,128]{1,0:T(1,128)}', space=vmem, size = 0x9000, scoped, tag = 'internal scratch']
  %s0 = inlined_call_operand.vmem [shape: f32[170,32], index: 0, kind: input, shape index: {}]
  %s1 = inlined_call_operand.vmem [shape: f32[1,32], index: 1, kind: input, shape index: {}]
  %s2 = inlined_call_operand.vmem [shape: f32[1,32], index: 2, kind: input, shape index: {}]
  %s3 = inlined_call_operand.vmem [shape: f32[32,64], index: 3, kind: input, shape index: {}]
  %s4 = inlined_call_operand.vmem [shape: f32[1,64], index: 4, kind: input, shape index: {}]
  %s5 = inlined_call_operand.vmem [shape: f32[170,64], index: 5, kind: output, shape index: {}]
  %s6 = sld [smem:[#allocation0]]
  $region101: #{s2_forward.12} parent=0
    _
  %s8 = ssub.s32 1, %s6
  %s9 = scalar_select 0, %s8, %s6
  $region1: #{s2_forward.12} parent=0
    #allocation2 [shape = 'u8[131072]{0}', space=vmem, size = 0x20000, scoped, tag = 'output window, operand 0']
    loop: start=0, step=1, limit=4
    $region2: #{s2_forward.12} parent=1 // loop_pre_header
      _
    $region3: #{s2_forward.12} parent=1 // loop_header
      %s11 = sphi 0, %s15
      %p12 = scmp.ge.s32.totalorder %s11, 4
      %s18 = sphi 0, %s30
      %s19 = sphi 0, %s26
      %s20 = sphi 0, %s18
      %s21 = sphi 0, %s19
      %s22 = sphi 0, %s20
      %s23 = sphi 0, %s21
      %s33 = sphi 0, %s35
      %s36 = sphi 0, %s33
      %s37 = sphi 0, %s36
      %s53 = sphi 0, %s37
      %s57 = sphi 0, %s57
      %s59 = sphi 0, %s57
      %s60 = sphi 0, %s59
      %s74 = sphi 0, %s60
      %s78 = sphi 0, %s78
      %s80 = sphi 0, %s78
      %s81 = sphi 0, %s80
      %s95 = sphi 0, %s81
      %s101 = sphi 0, %s103
      %s104 = sphi 0, %s101
      %s105 = sphi 0, %s104
      %s121 = sphi 0, %s105
      %s127 = sphi 0, %s129
      %s130 = sphi 0, %s127
      %s131 = sphi 0, %s130
      %s147 = sphi 0, %s131
      %s155 = sphi 0, %s157
      %s158 = sphi 0, %s155
      %s159 = sphi 0, %s158
      %s175 = sphi 0, %s159
    $region4: #{s2_forward.12} parent=1 // loop_header_branch
      %14 = sbr.rel (%p12) target = $region8
    $region5: #{s2_forward.12} parent=1 // loop_body
      %s16 = ssub.s32 %s11, 1
      %s17 = ssub.s32 %s11, 2
      %s24 = sadd.s32 1, %s19
      %p25 = scmp.ge.s32.totalorder %s24, 1
      %s26 = scalar_select %p25, 0, %s24
      %s27 = sadd.s32 1, %s18
      %s28 = scalar_select %p25, %s27, %s18
      %p29 = scmp.ge.s32.totalorder %s28, 2
      %s30 = scalar_select %p29, 0, %s28
      %s31 = ssub.s32 %s18, %s30
      %p32 = scmp.eq.s32.totalorder %s31, 0
      %s34 = sadd.s32 %s33, 1
      %s35 = scalar_select %p32, %s33, %s34
      %p38 = pneg %p32
      %p39 = scmp.eq.s32.totalorder %s11, 1
      %p40 = por %p38, %p39
      %p41 = scmp.ne.s32.totalorder %s33, %s36
      %p42 = scmp.eq.s32.totalorder %s11, 0
      %p43 = por %p41, %p42
      %p44 = scmp.ne.s32.totalorder %s33, %s36
      %p45 = scmp.eq.s32.totalorder %s16, 1
      %p46 = por %p44, %p45
      %p47 = scmp.ne.s32.totalorder %s36, %s37
      %p48 = scmp.eq.s32.totalorder %s16, 0
      %p49 = por %p47, %p48
      %p50 = scmp.ne.s32.totalorder %s36, %s37
      %p51 = scmp.eq.s32.totalorder %s17, 1
      %p52 = por %p50, %p51
      %p54 = scmp.ne.s32.totalorder %s37, %s53
      %p55 = scmp.eq.s32.totalorder %s17, 0
      %p56 = por %p54, %p55
      %s58 = sadd.s32 %s57, 1
      %p61 = scmp.eq.s32.totalorder %s11, 1
      %p62 = scmp.ne.s32.totalorder %s57, %s59
      %p63 = scmp.eq.s32.totalorder %s11, 0
      %p64 = por %p62, %p63
      %p65 = scmp.ne.s32.totalorder %s57, %s59
      %p66 = scmp.eq.s32.totalorder %s16, 1
      %p67 = por %p65, %p66
      %p68 = scmp.ne.s32.totalorder %s59, %s60
      %p69 = scmp.eq.s32.totalorder %s16, 0
      %p70 = por %p68, %p69
      %p71 = scmp.ne.s32.totalorder %s59, %s60
      %p72 = scmp.eq.s32.totalorder %s17, 1
      %p73 = por %p71, %p72
      %p75 = scmp.ne.s32.totalorder %s60, %s74
      %p76 = scmp.eq.s32.totalorder %s17, 0
      %p77 = por %p75, %p76
      %s79 = sadd.s32 %s78, 1
      %p82 = scmp.eq.s32.totalorder %s11, 1
      %p83 = scmp.ne.s32.totalorder %s78, %s80
      %p84 = scmp.eq.s32.totalorder %s11, 0
      %p85 = por %p83, %p84
      %p86 = scmp.ne.s32.totalorder %s78, %s80
      %p87 = scmp.eq.s32.totalorder %s16, 1
      %p88 = por %p86, %p87
      %p89 = scmp.ne.s32.totalorder %s80, %s81
      %p90 = scmp.eq.s32.totalorder %s16, 0
      %p91 = por %p89, %p90
      %p92 = scmp.ne.s32.totalorder %s80, %s81
      %p93 = scmp.eq.s32.totalorder %s17, 1
      %p94 = por %p92, %p93
      %p96 = scmp.ne.s32.totalorder %s81, %s95
      %p97 = scmp.eq.s32.totalorder %s17, 0
      %p98 = por %p96, %p97
      %s99 = ssub.s32 %s19, %s26
      %p100 = scmp.eq.s32.totalorder %s99, 0
      %s102 = sadd.s32 %s101, 1
      %s103 = scalar_select %p100, %s101, %s102
      %p106 = pneg %p100
      %p107 = scmp.eq.s32.totalorder %s11, 1
      %p108 = por %p106, %p107
      %p109 = scmp.ne.s32.totalorder %s101, %s104
      %p110 = scmp.eq.s32.totalorder %s11, 0
      %p111 = por %p109, %p110
      %p112 = scmp.ne.s32.totalorder %s101, %s104
      %p113 = scmp.eq.s32.totalorder %s16, 1
      %p114 = por %p112, %p113
      %p115 = scmp.ne.s32.totalorder %s104, %s105
      %p116 = scmp.eq.s32.totalorder %s16, 0
      %p117 = por %p115, %p116
      %p118 = scmp.ne.s32.totalorder %s104, %s105
      %p119 = scmp.eq.s32.totalorder %s17, 1
      %p120 = por %p118, %p119
      %p122 = scmp.ne.s32.totalorder %s105, %s121
      %p123 = scmp.eq.s32.totalorder %s17, 0
      %p124 = por %p122, %p123
      %s125 = ssub.s32 %s19, %s26
      %p126 = scmp.eq.s32.totalorder %s125, 0
      %s128 = sadd.s32 %s127, 1
      %s129 = scalar_select %p126, %s127, %s128
      %p132 = pneg %p126
      %p133 = scmp.eq.s32.totalorder %s11, 1
      %p134 = por %p132, %p133
      %p135 = scmp.ne.s32.totalorder %s127, %s130
      %p136 = scmp.eq.s32.totalorder %s11, 0
      %p137 = por %p135, %p136
      %p138 = scmp.ne.s32.totalorder %s127, %s130
      %p139 = scmp.eq.s32.totalorder %s16, 1
      %p140 = por %p138, %p139
      %p141 = scmp.ne.s32.totalorder %s130, %s131
      %p142 = scmp.eq.s32.totalorder %s16, 0
      %p143 = por %p141, %p142
      %p144 = scmp.ne.s32.totalorder %s130, %s131
      %p145 = scmp.eq.s32.totalorder %s17, 1
      %p146 = por %p144, %p145
      %p148 = scmp.ne.s32.totalorder %s131, %s147
      %p149 = scmp.eq.s32.totalorder %s17, 0
      %p150 = por %p148, %p149
      %s151 = ssub.s32 %s18, %s30
      %s152 = ssub.s32 %s19, %s26
      %s153 = sor.u32 %s151, %s152
      %p154 = scmp.eq.s32.totalorder %s153, 0
      %s156 = sadd.s32 %s155, 1
      %s157 = scalar_select %p154, %s155, %s156
      %p160 = pneg %p154
      %p161 = scmp.eq.s32.totalorder %s11, 1
      %p162 = por %p160, %p161
      %p163 = scmp.ne.s32.totalorder %s155, %s158
      %p164 = scmp.eq.s32.totalorder %s11, 0
      %p165 = por %p163, %p164
      %p166 = scmp.ne.s32.totalorder %s155, %s158
      %p167 = scmp.eq.s32.totalorder %s16, 1
      %p168 = por %p166, %p167
      %p169 = scmp.ne.s32.totalorder %s158, %s159
      %p170 = scmp.eq.s32.totalorder %s16, 0
      %p171 = por %p169, %p170
      %p172 = scmp.ne.s32.totalorder %s158, %s159
      %p173 = scmp.eq.s32.totalorder %s17, 1
      %p174 = por %p172, %p173
      %p176 = scmp.ne.s32.totalorder %s159, %s175
      %p177 = scmp.eq.s32.totalorder %s17, 0
      %p178 = por %p176, %p177
      %p179 = scmp.le.s32.totalorder 1, %s11
      %p180 = scmp.lt.s32.totalorder %s11, 3
      %p181 = pnand %p179, %p180
      %p182 = pneg %p181
      // Predicated region
      $region9: #{s2_forward.12} parent=5 // pred_check
        _
      $region10: #{s2_forward.12} parent=5 // pred_check_branch
        %184 = sbr.rel (%p181) target = $region12
      $region11: #{s2_forward.12} parent=5 // pred_region
        %s185 = ssub.s32 %s11, 1
        // Predicated region
        $region13: #{s2_forward.12} parent=11 // pred_check
          %p186 = pneg %p70
        $region14: #{s2_forward.12} parent=11 // pred_check_branch
          %188 = sbr.rel (%p186) target = $region16
        $region15: #{s2_forward.12} parent=11 // pred_region
          _
        $region16: #{s2_forward.12} parent=11 // pred_fallthru
          _
        // Predicated region
        $region17: #{s2_forward.12} parent=11 // pred_check
          %p189 = pneg %p91
        $region18: #{s2_forward.12} parent=11 // pred_check_branch
          %191 = sbr.rel (%p189) target = $region20
        $region19: #{s2_forward.12} parent=11 // pred_region
          _
        $region20: #{s2_forward.12} parent=11 // pred_fallthru
          _
        // Predicated region
        $region21: #{s2_forward.12} parent=11 // pred_check
          %p192 = pneg %p117
        $region22: #{s2_forward.12} parent=11 // pred_check_branch
          %194 = sbr.rel (%p192) target = $region24
        $region23: #{s2_forward.12} parent=11 // pred_region
          %p195 = scmp.lt.s32.totalorder %s21, 0
          %s196 = scalar_select %p195, %s21, 0
          %s197 = smul.addr %s196, 8
          %s198 = scalar_lea.vmem %s3, %s197
        $region24: #{s2_forward.12} parent=11 // pred_fallthru
          _
        // Predicated region
        $region25: #{s2_forward.12} parent=11 // pred_check
          %p199 = pneg %p143
        $region26: #{s2_forward.12} parent=11 // pred_check_branch
          %201 = sbr.rel (%p199) target = $region28
        $region27: #{s2_forward.12} parent=11 // pred_region
          %p202 = scmp.lt.s32.totalorder %s21, 0
          %s203 = scalar_select %p202, %s21, 0
          %s204 = scalar_lea.vmem %s4, %s203
        $region28: #{s2_forward.12} parent=11 // pred_fallthru
          _
      $region12: #{s2_forward.12} parent=5 // pred_fallthru
        _
      %p205 = scmp.lt.s32.totalorder %s11, 2
      // Predicated region
      $region29: #{s2_forward.12} parent=5 // pred_check
        %p206 = pneg %p205
      $region30: #{s2_forward.12} parent=5 // pred_check_branch
        %208 = sbr.rel (%p206) target = $region32
      $region31: #{s2_forward.12} parent=5 // pred_region
        // Predicated region
        $region33: #{s2_forward.12} parent=31 // pred_check
          %p209 = pneg %p43
        $region34: #{s2_forward.12} parent=31 // pred_check_branch
          %211 = sbr.rel (%p209) target = $region36
        $region35: #{s2_forward.12} parent=31 // pred_region
          %s212 = smul.u32 16, %s18
          %s213 = ssub.s32 22, %s212
          %p214 = scmp.lt.s32.totalorder %s213, 16
          %s215 = scalar_select %p214, %s213, 16
          %s216 = smul.u32 8, %s215
          %p217 = scmp.lt.s32.totalorder %s212, 21
          %s218 = scalar_select %p217, %s212, 21
          %s219 = smul.addr %s218, 8
          %s220 = scalar_lea.vmem %s0, %s219
          %s221 = smul.u32 16, %s18
          %s222 = ssub.s32 22, %s221
          %p223 = scmp.lt.s32.totalorder %s222, 16
          %s224 = scalar_select %p223, %s222, 16
          %s225 = smul.u32 8, %s224
        $region36: #{s2_forward.12} parent=31 // pred_fallthru
          _
      $region32: #{s2_forward.12} parent=5 // pred_fallthru
        _
      %p226 = scmp.le.s32.totalorder 1, %s11
      %p227 = scmp.lt.s32.totalorder %s11, 3
      %p228 = pnand %p226, %p227
      %p229 = pneg %p228
      // Predicated region
      $region37: #{s2_forward.12} parent=5 // pred_check
        _
      $region38: #{s2_forward.12} parent=5 // pred_check_branch
        %231 = sbr.rel (%p228) target = $region40
      $region39: #{s2_forward.12} parent=5 // pred_region
        %s232 = ssub.s32 %s11, 1
        %s233 = smul.u32 16, %s20
        %s234 = ssub.s32 22, %s233
        %p235 = scmp.lt.s32.totalorder %s234, 16
        %s236 = scalar_select %p235, %s234, 16
        %s237 = smul.u32 8, %s236
        %p238 = scmp.lt.s32.totalorder %s233, 21
        %s239 = scalar_select %p238, %s233, 21
        %s240 = smul.addr %s239, 8
        %s241 = scalar_lea.vmem %s0, %s240
        %p242 = pneg %p49
        %p243 = pneg %p46
        %p244 = pneg %p70
        %p245 = pneg %p67
        %p246 = pneg %p91
        %p247 = pneg %p88
        %p248 = scmp.lt.s32.totalorder %s21, 0
        %s249 = scalar_select %p248, %s21, 0
        %s250 = smul.addr %s249, 8
        %s251 = scalar_lea.vmem %s3, %s250
        %p252 = pneg %p117
        %p253 = pneg %p114
        %p254 = scmp.lt.s32.totalorder %s21, 0
        %s255 = scalar_select %p254, %s21, 0
        %s256 = scalar_lea.vmem %s4, %s255
        %p257 = pneg %p143
        %p258 = pneg %p140
        %p259 = pneg %p171
        %p260 = pneg %p168
        %s261 = sand.u32 %s158, 1
        %s262 = sand.u32 %s158, 1
        %s263 = smul.addr %s262, 128
        %s264 = scalar_lea.vmem [#allocation2], %s263
        %s265 = smul.u32 16, %s20
        %s266 = ssub.s32 22, %s265
        %p267 = scmp.lt.s32.totalorder %s266, 16
        %s268 = scalar_select %p267, %s266, 16
        %s269 = smul.u32 8, %s268
        %p270 = scmp.lt.s32.totalorder %s265, 21
        %s271 = scalar_select %p270, %s265, 21
        %s272 = smul.addr %s271, 8
        %s273 = scalar_lea.vmem %s0, %s272
        %s274 = smul.u32 16, %s20
        %s275 = ssub.s32 22, %s274
        %p276 = scmp.lt.s32.totalorder %s275, 16
        %s277 = scalar_select %p276, %s275, 16
        %s278 = smul.u32 8, %s277
        %p279 = scmp.lt.s32.totalorder %s21, 0
        %s280 = scalar_select %p279, %s21, 0
        %s281 = smul.addr %s280, 8
        %s282 = scalar_lea.vmem %s3, %s281
        %p283 = scmp.lt.s32.totalorder %s21, 0
        %s284 = scalar_select %p283, %s21, 0
        %s285 = scalar_lea.vmem %s4, %s284
        %s286 = smul.u32 16, %s20
        %s287 = ssub.s32 22, %s286
        %p288 = scmp.lt.s32.totalorder %s287, 16
        %s289 = scalar_select %p288, %s287, 16
        %s290 = smul.u32 8, %s289
        %v292 = vld [vmem:[%s273] sm:$0xff]
        %v293 = vld [vmem:[%s273 + $0x8] sm:$0xff]
        %v294 = vld [vmem:[%s273 + $0x10] sm:$0xff]
        %v295 = vld [vmem:[%s273 + $0x18] sm:$0xff]
        %v296 = vld [vmem:[%s273 + $0x20] sm:$0xff]
        %v297 = vld [vmem:[%s273 + $0x28] sm:$0xff]
        %v298 = vld [vmem:[%s273 + $0x30] sm:$0xff]
        %v299 = vld [vmem:[%s273 + $0x38] sm:$0xff]
        %v300 = vld [vmem:[%s273 + $0x40] sm:$0xff]
        %v301 = vld [vmem:[%s273 + $0x48] sm:$0xff]
        %v302 = vld [vmem:[%s273 + $0x50] sm:$0xff]
        %v303 = vld [vmem:[%s273 + $0x58] sm:$0xff]
        %v304 = vld [vmem:[%s273 + $0x60] sm:$0xff]
        %v305 = vld [vmem:[%s273 + $0x68] sm:$0xff]
        %v306 = vld [vmem:[%s273 + $0x70] sm:$0xff]
        %v307 = vld [vmem:[%s273 + $0x78] sm:$0xff]
        %vm308 = vcmask 261120
        %v309 = vsel %vm308, %v292, 0.0
        %310 = vadd.xlane.f32.xlu0 %v309
        %v311 = vpop.xlane.xlu0 %310
        %v312 = vsel %vm308, %v293, 0.0
        %313 = vadd.xlane.f32.xlu0 %v312
        %v314 = vpop.xlane.xlu0 %313
        %v315 = vsel %vm308, %v294, 0.0
        %316 = vadd.xlane.f32.xlu0 %v315
        %v317 = vpop.xlane.xlu0 %316
        %v318 = vsel %vm308, %v295, 0.0
        %319 = vadd.xlane.f32.xlu0 %v318
        %v320 = vpop.xlane.xlu0 %319
        %v321 = vsel %vm308, %v296, 0.0
        %322 = vadd.xlane.f32.xlu0 %v321
        %v323 = vpop.xlane.xlu0 %322
        %v324 = vsel %vm308, %v297, 0.0
        %325 = vadd.xlane.f32.xlu0 %v324
        %v326 = vpop.xlane.xlu0 %325
        %v327 = vsel %vm308, %v298, 0.0
        %328 = vadd.xlane.f32.xlu0 %v327
        %v329 = vpop.xlane.xlu0 %328
        %v330 = vsel %vm308, %v299, 0.0
        %331 = vadd.xlane.f32.xlu0 %v330
        %v332 = vpop.xlane.xlu0 %331
        %v333 = vsel %vm308, %v300, 0.0
        %334 = vadd.xlane.f32.xlu0 %v333
        %v335 = vpop.xlane.xlu0 %334
        %v336 = vsel %vm308, %v301, 0.0
        %337 = vadd.xlane.f32.xlu0 %v336
        %v338 = vpop.xlane.xlu0 %337
        %v339 = vsel %vm308, %v302, 0.0
        %340 = vadd.xlane.f32.xlu0 %v339
        %v341 = vpop.xlane.xlu0 %340
        %v342 = vsel %vm308, %v303, 0.0
        %343 = vadd.xlane.f32.xlu0 %v342
        %v344 = vpop.xlane.xlu0 %343
        %v345 = vsel %vm308, %v304, 0.0
        %346 = vadd.xlane.f32.xlu0 %v345
        %v347 = vpop.xlane.xlu0 %346
        %v348 = vsel %vm308, %v305, 0.0
        %349 = vadd.xlane.f32.xlu0 %v348
        %v350 = vpop.xlane.xlu0 %349
        %v351 = vsel %vm308, %v306, 0.0
        %352 = vadd.xlane.f32.xlu0 %v351
        %v353 = vpop.xlane.xlu0 %352
        %v354 = vsel %vm308, %v307, 0.0
        %355 = vadd.xlane.f32.xlu0 %v354
        %v356 = vpop.xlane.xlu0 %355
        %v357 = vrcp.pop 32.0
        %v358 = vmul.f32 32.0, %v357
        %v359 = vsub.f32 1.0, %v358
        %v360 = vmul.f32 %v357, %v359
        %v361 = vadd.f32 %v357, %v360
        %vm362 = vweird.f32 %v357
        %v363 = vsel %vm362, %v357, %v361
        %v364 = vmul.f32 %v311, %v363
        %v365 = vmul.f32 %v314, %v363
        %v366 = vmul.f32 %v317, %v363
        %v367 = vmul.f32 %v320, %v363
        %v368 = vmul.f32 %v323, %v363
        %v369 = vmul.f32 %v326, %v363
        %v370 = vmul.f32 %v329, %v363
        %v371 = vmul.f32 %v332, %v363
        %v372 = vmul.f32 %v335, %v363
        %v373 = vmul.f32 %v338, %v363
        %v374 = vmul.f32 %v341, %v363
        %v375 = vmul.f32 %v344, %v363
        %v376 = vmul.f32 %v347, %v363
        %v377 = vmul.f32 %v350, %v363
        %v378 = vmul.f32 %v353, %v363
        %v379 = vmul.f32 %v356, %v363
        %v380 = vsub.f32 %v292, %v364
        %v381 = vsub.f32 %v293, %v365
        %v382 = vsub.f32 %v294, %v366
        %v383 = vsub.f32 %v295, %v367
        %v384 = vsub.f32 %v296, %v368
        %v385 = vsub.f32 %v297, %v369
        %v386 = vsub.f32 %v298, %v370
        %v387 = vsub.f32 %v299, %v371
        %v388 = vsub.f32 %v300, %v372
        %v389 = vsub.f32 %v301, %v373
        %v390 = vsub.f32 %v302, %v374
        %v391 = vsub.f32 %v303, %v375
        %v392 = vsub.f32 %v304, %v376
        %v393 = vsub.f32 %v305, %v377
        %v394 = vsub.f32 %v306, %v378
        %v395 = vsub.f32 %v307, %v379
        %v396 = vmul.f32 %v380, %v380
        %v397 = vmul.f32 %v381, %v381
        %v398 = vmul.f32 %v382, %v382
        %v399 = vmul.f32 %v383, %v383
        %v400 = vmul.f32 %v384, %v384
        %v401 = vmul.f32 %v385, %v385
        %v402 = vmul.f32 %v386, %v386
        %v403 = vmul.f32 %v387, %v387
        %v404 = vmul.f32 %v388, %v388
        %v405 = vmul.f32 %v389, %v389
        %v406 = vmul.f32 %v390, %v390
        %v407 = vmul.f32 %v391, %v391
        %v408 = vmul.f32 %v392, %v392
        %v409 = vmul.f32 %v393, %v393
        %v410 = vmul.f32 %v394, %v394
        %v411 = vmul.f32 %v395, %v395
        %v412 = vsel %vm308, %v396, 0.0
        %413 = vadd.xlane.f32.xlu0 %v412
        %v414 = vpop.xlane.xlu0 %413
        %v415 = vsel %vm308, %v397, 0.0
        %416 = vadd.xlane.f32.xlu0 %v415
        %v417 = vpop.xlane.xlu0 %416
        %v418 = vsel %vm308, %v398, 0.0
        %419 = vadd.xlane.f32.xlu0 %v418
        %v420 = vpop.xlane.xlu0 %419
        %v421 = vsel %vm308, %v399, 0.0
        %422 = vadd.xlane.f32.xlu0 %v421
        %v423 = vpop.xlane.xlu0 %422
        %v424 = vsel %vm308, %v400, 0.0
        %425 = vadd.xlane.f32.xlu0 %v424
        %v426 = vpop.xlane.xlu0 %425
        %v427 = vsel %vm308, %v401, 0.0
        %428 = vadd.xlane.f32.xlu0 %v427
        %v429 = vpop.xlane.xlu0 %428
        %v430 = vsel %vm308, %v402, 0.0
        %431 = vadd.xlane.f32.xlu0 %v430
        %v432 = vpop.xlane.xlu0 %431
        %v433 = vsel %vm308, %v403, 0.0
        %434 = vadd.xlane.f32.xlu0 %v433
        %v435 = vpop.xlane.xlu0 %434
        %v436 = vsel %vm308, %v404, 0.0
        %437 = vadd.xlane.f32.xlu0 %v436
        %v438 = vpop.xlane.xlu0 %437
        %v439 = vsel %vm308, %v405, 0.0
        %440 = vadd.xlane.f32.xlu0 %v439
        %v441 = vpop.xlane.xlu0 %440
        %v442 = vsel %vm308, %v406, 0.0
        %443 = vadd.xlane.f32.xlu0 %v442
        %v444 = vpop.xlane.xlu0 %443
        %v445 = vsel %vm308, %v407, 0.0
        %446 = vadd.xlane.f32.xlu0 %v445
        %v447 = vpop.xlane.xlu0 %446
        %v448 = vsel %vm308, %v408, 0.0
        %449 = vadd.xlane.f32.xlu0 %v448
        %v450 = vpop.xlane.xlu0 %449
        %v451 = vsel %vm308, %v409, 0.0
        %452 = vadd.xlane.f32.xlu0 %v451
        %v453 = vpop.xlane.xlu0 %452
        %v454 = vsel %vm308, %v410, 0.0
        %455 = vadd.xlane.f32.xlu0 %v454
        %v456 = vpop.xlane.xlu0 %455
        %v457 = vsel %vm308, %v411, 0.0
        %458 = vadd.xlane.f32.xlu0 %v457
        %v459 = vpop.xlane.xlu0 %458
        %v460 = vmul.f32 %v414, %v363
        %v461 = vmul.f32 %v417, %v363
        %v462 = vmul.f32 %v420, %v363
        %v463 = vmul.f32 %v423, %v363
        %v464 = vmul.f32 %v426, %v363
        %v465 = vmul.f32 %v429, %v363
        %v466 = vmul.f32 %v432, %v363
        %v467 = vmul.f32 %v435, %v363
        %v468 = vmul.f32 %v438, %v363
        %v469 = vmul.f32 %v441, %v363
        %v470 = vmul.f32 %v444, %v363
        %v471 = vmul.f32 %v447, %v363
        %v472 = vmul.f32 %v450, %v363
        %v473 = vmul.f32 %v453, %v363
        %v474 = vmul.f32 %v456, %v363
        %v475 = vmul.f32 %v459, %v363
        %v476 = vadd.f32 %v460, 1e-05
        %v477 = vadd.f32 %v461, 1e-05
        %v478 = vadd.f32 %v462, 1e-05
        %v479 = vadd.f32 %v463, 1e-05
        %v480 = vadd.f32 %v464, 1e-05
        %v481 = vadd.f32 %v465, 1e-05
        %v482 = vadd.f32 %v466, 1e-05
        %v483 = vadd.f32 %v467, 1e-05
        %v484 = vadd.f32 %v468, 1e-05
        %v485 = vadd.f32 %v469, 1e-05
        %v486 = vadd.f32 %v470, 1e-05
        %v487 = vadd.f32 %v471, 1e-05
        %v488 = vadd.f32 %v472, 1e-05
        %v489 = vadd.f32 %v473, 1e-05
        %v490 = vadd.f32 %v474, 1e-05
        %v491 = vadd.f32 %v475, 1e-05
        %v492 = vrsqrt.pop %v476
        %v493 = vmul.f32 %v492, %v476
        %v494 = vmul.f32 %v493, %v492
        %v495 = vmul.f32 0.5, %v494
        %v496 = vsub.f32 1.5, %v495
        %v497 = vmul.f32 %v492, %v496
        %vm498 = vweird.f32 %v476
        %vm499 = vweird.f32 %v492
        %vm500 = vmor %vm498, %vm499
        %v501 = vsel %vm500, %v492, %v497
        %v502 = vrsqrt.pop %v477
        %v503 = vmul.f32 %v502, %v477
        %v504 = vmul.f32 %v503, %v502
        %v505 = vmul.f32 0.5, %v504
        %v506 = vsub.f32 1.5, %v505
        %v507 = vmul.f32 %v502, %v506
        %vm508 = vweird.f32 %v477
        %vm509 = vweird.f32 %v502
        %vm510 = vmor %vm508, %vm509
        %v511 = vsel %vm510, %v502, %v507
        %v512 = vrsqrt.pop %v478
        %v513 = vmul.f32 %v512, %v478
        %v514 = vmul.f32 %v513, %v512
        %v515 = vmul.f32 0.5, %v514
        %v516 = vsub.f32 1.5, %v515
        %v517 = vmul.f32 %v512, %v516
        %vm518 = vweird.f32 %v478
        %vm519 = vweird.f32 %v512
        %vm520 = vmor %vm518, %vm519
        %v521 = vsel %vm520, %v512, %v517
        %v522 = vrsqrt.pop %v479
        %v523 = vmul.f32 %v522, %v479
        %v524 = vmul.f32 %v523, %v522
        %v525 = vmul.f32 0.5, %v524
        %v526 = vsub.f32 1.5, %v525
        %v527 = vmul.f32 %v522, %v526
        %vm528 = vweird.f32 %v479
        %vm529 = vweird.f32 %v522
        %vm530 = vmor %vm528, %vm529
        %v531 = vsel %vm530, %v522, %v527
        %v532 = vrsqrt.pop %v480
        %v533 = vmul.f32 %v532, %v480
        %v534 = vmul.f32 %v533, %v532
        %v535 = vmul.f32 0.5, %v534
        %v536 = vsub.f32 1.5, %v535
        %v537 = vmul.f32 %v532, %v536
        %vm538 = vweird.f32 %v480
        %vm539 = vweird.f32 %v532
        %vm540 = vmor %vm538, %vm539
        %v541 = vsel %vm540, %v532, %v537
        %v542 = vrsqrt.pop %v481
        %v543 = vmul.f32 %v542, %v481
        %v544 = vmul.f32 %v543, %v542
        %v545 = vmul.f32 0.5, %v544
        %v546 = vsub.f32 1.5, %v545
        %v547 = vmul.f32 %v542, %v546
        %vm548 = vweird.f32 %v481
        %vm549 = vweird.f32 %v542
        %vm550 = vmor %vm548, %vm549
        %v551 = vsel %vm550, %v542, %v547
        %v552 = vrsqrt.pop %v482
        %v553 = vmul.f32 %v552, %v482
        %v554 = vmul.f32 %v553, %v552
        %v555 = vmul.f32 0.5, %v554
        %v556 = vsub.f32 1.5, %v555
        %v557 = vmul.f32 %v552, %v556
        %vm558 = vweird.f32 %v482
        %vm559 = vweird.f32 %v552
        %vm560 = vmor %vm558, %vm559
        %v561 = vsel %vm560, %v552, %v557
        %v562 = vrsqrt.pop %v483
        %v563 = vmul.f32 %v562, %v483
        %v564 = vmul.f32 %v563, %v562
        %v565 = vmul.f32 0.5, %v564
        %v566 = vsub.f32 1.5, %v565
        %v567 = vmul.f32 %v562, %v566
        %vm568 = vweird.f32 %v483
        %vm569 = vweird.f32 %v562
        %vm570 = vmor %vm568, %vm569
        %v571 = vsel %vm570, %v562, %v567
        %v572 = vrsqrt.pop %v484
        %v573 = vmul.f32 %v572, %v484
        %v574 = vmul.f32 %v573, %v572
        %v575 = vmul.f32 0.5, %v574
        %v576 = vsub.f32 1.5, %v575
        %v577 = vmul.f32 %v572, %v576
        %vm578 = vweird.f32 %v484
        %vm579 = vweird.f32 %v572
        %vm580 = vmor %vm578, %vm579
        %v581 = vsel %vm580, %v572, %v577
        %v582 = vrsqrt.pop %v485
        %v583 = vmul.f32 %v582, %v485
        %v584 = vmul.f32 %v583, %v582
        %v585 = vmul.f32 0.5, %v584
        %v586 = vsub.f32 1.5, %v585
        %v587 = vmul.f32 %v582, %v586
        %vm588 = vweird.f32 %v485
        %vm589 = vweird.f32 %v582
        %vm590 = vmor %vm588, %vm589
        %v591 = vsel %vm590, %v582, %v587
        %v592 = vrsqrt.pop %v486
        %v593 = vmul.f32 %v592, %v486
        %v594 = vmul.f32 %v593, %v592
        %v595 = vmul.f32 0.5, %v594
        %v596 = vsub.f32 1.5, %v595
        %v597 = vmul.f32 %v592, %v596
        %vm598 = vweird.f32 %v486
        %vm599 = vweird.f32 %v592
        %vm600 = vmor %vm598, %vm599
        %v601 = vsel %vm600, %v592, %v597
        %v602 = vrsqrt.pop %v487
        %v603 = vmul.f32 %v602, %v487
        %v604 = vmul.f32 %v603, %v602
        %v605 = vmul.f32 0.5, %v604
        %v606 = vsub.f32 1.5, %v605
        %v607 = vmul.f32 %v602, %v606
        %vm608 = vweird.f32 %v487
        %vm609 = vweird.f32 %v602
        %vm610 = vmor %vm608, %vm609
        %v611 = vsel %vm610, %v602, %v607
        %v612 = vrsqrt.pop %v488
        %v613 = vmul.f32 %v612, %v488
        %v614 = vmul.f32 %v613, %v612
        %v615 = vmul.f32 0.5, %v614
        %v616 = vsub.f32 1.5, %v615
        %v617 = vmul.f32 %v612, %v616
        %vm618 = vweird.f32 %v488
        %vm619 = vweird.f32 %v612
        %vm620 = vmor %vm618, %vm619
        %v621 = vsel %vm620, %v612, %v617
        %v622 = vrsqrt.pop %v489
        %v623 = vmul.f32 %v622, %v489
        %v624 = vmul.f32 %v623, %v622
        %v625 = vmul.f32 0.5, %v624
        %v626 = vsub.f32 1.5, %v625
        %v627 = vmul.f32 %v622, %v626
        %vm628 = vweird.f32 %v489
        %vm629 = vweird.f32 %v622
        %vm630 = vmor %vm628, %vm629
        %v631 = vsel %vm630, %v622, %v627
        %v632 = vrsqrt.pop %v490
        %v633 = vmul.f32 %v632, %v490
        %v634 = vmul.f32 %v633, %v632
        %v635 = vmul.f32 0.5, %v634
        %v636 = vsub.f32 1.5, %v635
        %v637 = vmul.f32 %v632, %v636
        %vm638 = vweird.f32 %v490
        %vm639 = vweird.f32 %v632
        %vm640 = vmor %vm638, %vm639
        %v641 = vsel %vm640, %v632, %v637
        %v642 = vrsqrt.pop %v491
        %v643 = vmul.f32 %v642, %v491
        %v644 = vmul.f32 %v643, %v642
        %v645 = vmul.f32 0.5, %v644
        %v646 = vsub.f32 1.5, %v645
        %v647 = vmul.f32 %v642, %v646
        %vm648 = vweird.f32 %v491
        %vm649 = vweird.f32 %v642
        %vm650 = vmor %vm648, %vm649
        %v651 = vsel %vm650, %v642, %v647
        %v652 = vmul.f32 %v380, %v501
        %v653 = vmul.f32 %v381, %v511
        %v654 = vmul.f32 %v382, %v521
        %v655 = vmul.f32 %v383, %v531
        %v656 = vmul.f32 %v384, %v541
        %v657 = vmul.f32 %v385, %v551
        %v658 = vmul.f32 %v386, %v561
        %v659 = vmul.f32 %v387, %v571
        %v660 = vmul.f32 %v388, %v581
        %v661 = vmul.f32 %v389, %v591
        %v662 = vmul.f32 %v390, %v601
        %v663 = vmul.f32 %v391, %v611
        %v664 = vmul.f32 %v392, %v621
        %v665 = vmul.f32 %v393, %v631
        %v666 = vmul.f32 %v394, %v641
        %v667 = vmul.f32 %v395, %v651
        %v668 = vld [vmem:[%s1] sm:$0x1]
        %v670 = vperm.slane %v668, 0
        %v672 = vmul.f32 %v652, %v670
        %v673 = vmul.f32 %v653, %v670
        %v674 = vmul.f32 %v654, %v670
        %v675 = vmul.f32 %v655, %v670
        %v676 = vmul.f32 %v656, %v670
        %v677 = vmul.f32 %v657, %v670
        %v678 = vmul.f32 %v658, %v670
        %v679 = vmul.f32 %v659, %v670
        %v680 = vmul.f32 %v660, %v670
        %v681 = vmul.f32 %v661, %v670
        %v682 = vmul.f32 %v662, %v670
        %v683 = vmul.f32 %v663, %v670
        %v684 = vmul.f32 %v664, %v670
        %v685 = vmul.f32 %v665, %v670
        %v686 = vmul.f32 %v666, %v670
        %v687 = vmul.f32 %v667, %v670
        %v688 = vld [vmem:[%s2] sm:$0x1]
        %v690 = vperm.slane %v688, 0
        %v692 = vadd.f32 %v672, %v690
        %v693 = vadd.f32 %v673, %v690
        %v694 = vadd.f32 %v674, %v690
        %v695 = vadd.f32 %v675, %v690
        %v696 = vadd.f32 %v676, %v690
        %v697 = vadd.f32 %v677, %v690
        %v698 = vadd.f32 %v678, %v690
        %v699 = vadd.f32 %v679, %v690
        %v700 = vadd.f32 %v680, %v690
        %v701 = vadd.f32 %v681, %v690
        %v702 = vadd.f32 %v682, %v690
        %v703 = vadd.f32 %v683, %v690
        %v704 = vadd.f32 %v684, %v690
        %v705 = vadd.f32 %v685, %v690
        %v706 = vadd.f32 %v686, %v690
        %v707 = vadd.f32 %v687, %v690
        %v708 = vpack.c.bf16 %v693, %v692
        %v709 = vpack.c.bf16 %v695, %v694
        %v710 = vpack.c.bf16 %v697, %v696
        %v711 = vpack.c.bf16 %v699, %v698
        %v712 = vpack.c.bf16 %v701, %v700
        %v713 = vpack.c.bf16 %v703, %v702
        %v714 = vpack.c.bf16 %v705, %v704
        %v715 = vpack.c.bf16 %v707, %v706
        %v716 = vld [vmem:[%s282] sm:$0xff]
        %v717 = vld [vmem:[%s282 + $0x8] sm:$0xff]
        %v718 = vld [vmem:[%s282 + $0x10] sm:$0xff]
        %v719 = vld [vmem:[%s282 + $0x18] sm:$0xff]
        %v720 = vpack.c.bf16 %v717, %v716
        %v721 = vpack.c.bf16 %v719, %v718
        %v722 = vld [vmem:[%s285] sm:$0x1]
        %v724 = vperm.slane %v722, 0
        %v727 = vsel %vm308, %v708, 0
        %v730 = vsel %vm308, %v709, 0
        %v733 = vsel %vm308, %v710, 0
        %v736 = vsel %vm308, %v711, 0
        %v739 = vsel %vm308, %v712, 0
        %v742 = vsel %vm308, %v713, 0
        %v745 = vsel %vm308, %v714, 0
        %v748 = vsel %vm308, %v715, 0
        %750 = vmatpush.bf16.msra.mxu0 0
        %751 = vmatpush.bf16.msra.mxu0 0
        %752 = vmatpush.bf16.msra.mxu0 0
        %753 = vmatpush.bf16.msra.mxu0 0
        %754 = vmatpush.bf16.msra.mxu0 0
        %755 = vmatpush.bf16.msra.mxu0 0
        %756 = vmatpush.bf16.msra.mxu0 %v721
        %757 = vmatpush.bf16.msra.mxu0 %v720
        %758 = vmatmul.bf16.gmra.mxu0 %v727
        %v759 = vpop.f32.mrf.mxu0
        %v760 = vadd.f32 %v724, %v759
        %v761 = vpop.f32.mrf.mxu0
        %v762 = vadd.f32 %v724, %v761
        %763 = vmatmul.bf16.gmra.mxu0 %v730
        %v764 = vpop.f32.mrf.mxu0
        %v765 = vadd.f32 %v724, %v764
        %v766 = vpop.f32.mrf.mxu0
        %v767 = vadd.f32 %v724, %v766
        %768 = vmatmul.bf16.gmra.mxu0 %v733
        %v769 = vpop.f32.mrf.mxu0
        %v770 = vadd.f32 %v724, %v769
        %v771 = vpop.f32.mrf.mxu0
        %v772 = vadd.f32 %v724, %v771
        %773 = vmatmul.bf16.gmra.mxu0 %v736
        %v774 = vpop.f32.mrf.mxu0
        %v775 = vadd.f32 %v724, %v774
        %v776 = vpop.f32.mrf.mxu0
        %v777 = vadd.f32 %v724, %v776
        %778 = vmatmul.bf16.gmra.mxu0 %v739
        %v779 = vpop.f32.mrf.mxu0
        %v780 = vadd.f32 %v724, %v779
        %v781 = vpop.f32.mrf.mxu0
        %v782 = vadd.f32 %v724, %v781
        %783 = vmatmul.bf16.gmra.mxu0 %v742
        %v784 = vpop.f32.mrf.mxu0
        %v785 = vadd.f32 %v724, %v784
        %v786 = vpop.f32.mrf.mxu0
        %v787 = vadd.f32 %v724, %v786
        %788 = vmatmul.bf16.gmra.mxu0 %v745
        %v789 = vpop.f32.mrf.mxu0
        %v790 = vadd.f32 %v724, %v789
        %v791 = vpop.f32.mrf.mxu0
        %v792 = vadd.f32 %v724, %v791
        %793 = vmatmul.bf16.gmra.mxu0 %v748
        %v794 = vpop.f32.mrf.mxu0
        %v795 = vadd.f32 %v724, %v794
        %v796 = vpop.f32.mrf.mxu0
        %v797 = vadd.f32 %v724, %v796
        %798 = vdwg.mxu0
        %v799 = vmul.f32 %v760, 1.702
        %v800 = vmul.f32 %v762, 1.702
        %v801 = vmul.f32 %v765, 1.702
        %v802 = vmul.f32 %v767, 1.702
        %v803 = vmul.f32 %v770, 1.702
        %v804 = vmul.f32 %v772, 1.702
        %v805 = vmul.f32 %v775, 1.702
        %v806 = vmul.f32 %v777, 1.702
        %v807 = vmul.f32 %v780, 1.702
        %v808 = vmul.f32 %v782, 1.702
        %v809 = vmul.f32 %v785, 1.702
        %v810 = vmul.f32 %v787, 1.702
        %v811 = vmul.f32 %v790, 1.702
        %v812 = vmul.f32 %v792, 1.702
        %v813 = vmul.f32 %v795, 1.702
        %v814 = vmul.f32 %v797, 1.702
        %v815 = vxor.u32 %v799, 2147483648
        %v816 = vxor.u32 %v800, 2147483648
        %v817 = vxor.u32 %v801, 2147483648
        %v818 = vxor.u32 %v802, 2147483648
        %v819 = vxor.u32 %v803, 2147483648
        %v820 = vxor.u32 %v804, 2147483648
        %v821 = vxor.u32 %v805, 2147483648
        %v822 = vxor.u32 %v806, 2147483648
        %v823 = vxor.u32 %v807, 2147483648
        %v824 = vxor.u32 %v808, 2147483648
        %v825 = vxor.u32 %v809, 2147483648
        %v826 = vxor.u32 %v810, 2147483648
        %v827 = vxor.u32 %v811, 2147483648
        %v828 = vxor.u32 %v812, 2147483648
        %v829 = vxor.u32 %v813, 2147483648
        %v830 = vxor.u32 %v814, 2147483648
        %v831 = vmul.f32 %v815, 1.442695
        %v832 = vpow.pop %v831
        %v833 = vmul.f32 %v816, 1.442695
        %v834 = vpow.pop %v833
        %v835 = vmul.f32 %v817, 1.442695
        %v836 = vpow.pop %v835
        %v837 = vmul.f32 %v818, 1.442695
        %v838 = vpow.pop %v837
        %v839 = vmul.f32 %v819, 1.442695
        %v840 = vpow.pop %v839
        %v841 = vmul.f32 %v820, 1.442695
        %v842 = vpow.pop %v841
        %v843 = vmul.f32 %v821, 1.442695
        %v844 = vpow.pop %v843
        %v845 = vmul.f32 %v822, 1.442695
        %v846 = vpow.pop %v845
        %v847 = vmul.f32 %v823, 1.442695
        %v848 = vpow.pop %v847
        %v849 = vmul.f32 %v824, 1.442695
        %v850 = vpow.pop %v849
        %v851 = vmul.f32 %v825, 1.442695
        %v852 = vpow.pop %v851
        %v853 = vmul.f32 %v826, 1.442695
        %v854 = vpow.pop %v853
        %v855 = vmul.f32 %v827, 1.442695
        %v856 = vpow.pop %v855
        %v857 = vmul.f32 %v828, 1.442695
        %v858 = vpow.pop %v857
        %v859 = vmul.f32 %v829, 1.442695
        %v860 = vpow.pop %v859
        %v861 = vmul.f32 %v830, 1.442695
        %v862 = vpow.pop %v861
        %v863 = vadd.f32 %v832, 1.0
        %v864 = vadd.f32 %v834, 1.0
        %v865 = vadd.f32 %v836, 1.0
        %v866 = vadd.f32 %v838, 1.0
        %v867 = vadd.f32 %v840, 1.0
        %v868 = vadd.f32 %v842, 1.0
        %v869 = vadd.f32 %v844, 1.0
        %v870 = vadd.f32 %v846, 1.0
        %v871 = vadd.f32 %v848, 1.0
        %v872 = vadd.f32 %v850, 1.0
        %v873 = vadd.f32 %v852, 1.0
        %v874 = vadd.f32 %v854, 1.0
        %v875 = vadd.f32 %v856, 1.0
        %v876 = vadd.f32 %v858, 1.0
        %v877 = vadd.f32 %v860, 1.0
        %v878 = vadd.f32 %v862, 1.0
        %v879 = vrcp.pop %v863
        %v880 = vmul.f32 %v863, %v879
        %v881 = vsub.f32 1.0, %v880
        %v882 = vmul.f32 %v879, %v881
        %v883 = vadd.f32 %v879, %v882
        %vm884 = vweird.f32 %v863
        %vm885 = vweird.f32 %v879
        %vm886 = vmor %vm884, %vm885
        %v887 = vsel %vm886, %v879, %v883
        %v888 = vand.u32 2147483647, %v863
        %vm889 = vcmp.eq.f32.partialorder %v888, 8.507059e+37
        %v890 = vand.u32 %v863, 2147483648
        %v891 = vor.u32 1.1754944e-38, %v890
        %v892 = vsel %vm889, %v891, %v887
        %v893 = vmul.f32 1.0, %v892
        %v894 = vrcp.pop %v864
        %v895 = vmul.f32 %v864, %v894
        %v896 = vsub.f32 1.0, %v895
        %v897 = vmul.f32 %v894, %v896
        %v898 = vadd.f32 %v894, %v897
        %vm899 = vweird.f32 %v864
        %vm900 = vweird.f32 %v894
        %vm901 = vmor %vm899, %vm900
        %v902 = vsel %vm901, %v894, %v898
        %v903 = vand.u32 2147483647, %v864
        %vm904 = vcmp.eq.f32.partialorder %v903, 8.507059e+37
        %v905 = vand.u32 %v864, 2147483648
        %v906 = vor.u32 1.1754944e-38, %v905
        %v907 = vsel %vm904, %v906, %v902
        %v908 = vmul.f32 1.0, %v907
        %v909 = vrcp.pop %v865
        %v910 = vmul.f32 %v865, %v909
        %v911 = vsub.f32 1.0, %v910
        %v912 = vmul.f32 %v909, %v911
        %v913 = vadd.f32 %v909, %v912
        %vm914 = vweird.f32 %v865
        %vm915 = vweird.f32 %v909
        %vm916 = vmor %vm914, %vm915
        %v917 = vsel %vm916, %v909, %v913
        %v918 = vand.u32 2147483647, %v865
        %vm919 = vcmp.eq.f32.partialorder %v918, 8.507059e+37
        %v920 = vand.u32 %v865, 2147483648
        %v921 = vor.u32 1.1754944e-38, %v920
        %v922 = vsel %vm919, %v921, %v917
        %v923 = vmul.f32 1.0, %v922
        %v924 = vrcp.pop %v866
        %v925 = vmul.f32 %v866, %v924
        %v926 = vsub.f32 1.0, %v925
        %v927 = vmul.f32 %v924, %v926
        %v928 = vadd.f32 %v924, %v927
        %vm929 = vweird.f32 %v866
        %vm930 = vweird.f32 %v924
        %vm931 = vmor %vm929, %vm930
        %v932 = vsel %vm931, %v924, %v928
        %v933 = vand.u32 2147483647, %v866
        %vm934 = vcmp.eq.f32.partialorder %v933, 8.507059e+37
        %v935 = vand.u32 %v866, 2147483648
        %v936 = vor.u32 1.1754944e-38, %v935
        %v937 = vsel %vm934, %v936, %v932
        %v938 = vmul.f32 1.0, %v937
        %v939 = vrcp.pop %v867
        %v940 = vmul.f32 %v867, %v939
        %v941 = vsub.f32 1.0, %v940
        %v942 = vmul.f32 %v939, %v941
        %v943 = vadd.f32 %v939, %v942
        %vm944 = vweird.f32 %v867
        %vm945 = vweird.f32 %v939
        %vm946 = vmor %vm944, %vm945
        %v947 = vsel %vm946, %v939, %v943
        %v948 = vand.u32 2147483647, %v867
        %vm949 = vcmp.eq.f32.partialorder %v948, 8.507059e+37
        %v950 = vand.u32 %v867, 2147483648
        %v951 = vor.u32 1.1754944e-38, %v950
        %v952 = vsel %vm949, %v951, %v947
        %v953 = vmul.f32 1.0, %v952
        %v954 = vrcp.pop %v868
        %v955 = vmul.f32 %v868, %v954
        %v956 = vsub.f32 1.0, %v955
        %v957 = vmul.f32 %v954, %v956
        %v958 = vadd.f32 %v954, %v957
        %vm959 = vweird.f32 %v868
        %vm960 = vweird.f32 %v954
        %vm961 = vmor %vm959, %vm960
        %v962 = vsel %vm961, %v954, %v958
        %v963 = vand.u32 2147483647, %v868
        %vm964 = vcmp.eq.f32.partialorder %v963, 8.507059e+37
        %v965 = vand.u32 %v868, 2147483648
        %v966 = vor.u32 1.1754944e-38, %v965
        %v967 = vsel %vm964, %v966, %v962
        %v968 = vmul.f32 1.0, %v967
        %v969 = vrcp.pop %v869
        %v970 = vmul.f32 %v869, %v969
        %v971 = vsub.f32 1.0, %v970
        %v972 = vmul.f32 %v969, %v971
        %v973 = vadd.f32 %v969, %v972
        %vm974 = vweird.f32 %v869
        %vm975 = vweird.f32 %v969
        %vm976 = vmor %vm974, %vm975
        %v977 = vsel %vm976, %v969, %v973
        %v978 = vand.u32 2147483647, %v869
        %vm979 = vcmp.eq.f32.partialorder %v978, 8.507059e+37
        %v980 = vand.u32 %v869, 2147483648
        %v981 = vor.u32 1.1754944e-38, %v980
        %v982 = vsel %vm979, %v981, %v977
        %v983 = vmul.f32 1.0, %v982
        %v984 = vrcp.pop %v870
        %v985 = vmul.f32 %v870, %v984
        %v986 = vsub.f32 1.0, %v985
        %v987 = vmul.f32 %v984, %v986
        %v988 = vadd.f32 %v984, %v987
        %vm989 = vweird.f32 %v870
        %vm990 = vweird.f32 %v984
        %vm991 = vmor %vm989, %vm990
        %v992 = vsel %vm991, %v984, %v988
        %v993 = vand.u32 2147483647, %v870
        %vm994 = vcmp.eq.f32.partialorder %v993, 8.507059e+37
        %v995 = vand.u32 %v870, 2147483648
        %v996 = vor.u32 1.1754944e-38, %v995
        %v997 = vsel %vm994, %v996, %v992
        %v998 = vmul.f32 1.0, %v997
        %v999 = vrcp.pop %v871
        %v1000 = vmul.f32 %v871, %v999
        %v1001 = vsub.f32 1.0, %v1000
        %v1002 = vmul.f32 %v999, %v1001
        %v1003 = vadd.f32 %v999, %v1002
        %vm1004 = vweird.f32 %v871
        %vm1005 = vweird.f32 %v999
        %vm1006 = vmor %vm1004, %vm1005
        %v1007 = vsel %vm1006, %v999, %v1003
        %v1008 = vand.u32 2147483647, %v871
        %vm1009 = vcmp.eq.f32.partialorder %v1008, 8.507059e+37
        %v1010 = vand.u32 %v871, 2147483648
        %v1011 = vor.u32 1.1754944e-38, %v1010
        %v1012 = vsel %vm1009, %v1011, %v1007
        %v1013 = vmul.f32 1.0, %v1012
        %v1014 = vrcp.pop %v872
        %v1015 = vmul.f32 %v872, %v1014
        %v1016 = vsub.f32 1.0, %v1015
        %v1017 = vmul.f32 %v1014, %v1016
        %v1018 = vadd.f32 %v1014, %v1017
        %vm1019 = vweird.f32 %v872
        %vm1020 = vweird.f32 %v1014
        %vm1021 = vmor %vm1019, %vm1020
        %v1022 = vsel %vm1021, %v1014, %v1018
        %v1023 = vand.u32 2147483647, %v872
        %vm1024 = vcmp.eq.f32.partialorder %v1023, 8.507059e+37
        %v1025 = vand.u32 %v872, 2147483648
        %v1026 = vor.u32 1.1754944e-38, %v1025
        %v1027 = vsel %vm1024, %v1026, %v1022
        %v1028 = vmul.f32 1.0, %v1027
        %v1029 = vrcp.pop %v873
        %v1030 = vmul.f32 %v873, %v1029
        %v1031 = vsub.f32 1.0, %v1030
        %v1032 = vmul.f32 %v1029, %v1031
        %v1033 = vadd.f32 %v1029, %v1032
        %vm1034 = vweird.f32 %v873
        %vm1035 = vweird.f32 %v1029
        %vm1036 = vmor %vm1034, %vm1035
        %v1037 = vsel %vm1036, %v1029, %v1033
        %v1038 = vand.u32 2147483647, %v873
        %vm1039 = vcmp.eq.f32.partialorder %v1038, 8.507059e+37
        %v1040 = vand.u32 %v873, 2147483648
        %v1041 = vor.u32 1.1754944e-38, %v1040
        %v1042 = vsel %vm1039, %v1041, %v1037
        %v1043 = vmul.f32 1.0, %v1042
        %v1044 = vrcp.pop %v874
        %v1045 = vmul.f32 %v874, %v1044
        %v1046 = vsub.f32 1.0, %v1045
        %v1047 = vmul.f32 %v1044, %v1046
        %v1048 = vadd.f32 %v1044, %v1047
        %vm1049 = vweird.f32 %v874
        %vm1050 = vweird.f32 %v1044
        %vm1051 = vmor %vm1049, %vm1050
        %v1052 = vsel %vm1051, %v1044, %v1048
        %v1053 = vand.u32 2147483647, %v874
        %vm1054 = vcmp.eq.f32.partialorder %v1053, 8.507059e+37
        %v1055 = vand.u32 %v874, 2147483648
        %v1056 = vor.u32 1.1754944e-38, %v1055
        %v1057 = vsel %vm1054, %v1056, %v1052
        %v1058 = vmul.f32 1.0, %v1057
        %v1059 = vrcp.pop %v875
        %v1060 = vmul.f32 %v875, %v1059
        %v1061 = vsub.f32 1.0, %v1060
        %v1062 = vmul.f32 %v1059, %v1061
        %v1063 = vadd.f32 %v1059, %v1062
        %vm1064 = vweird.f32 %v875
        %vm1065 = vweird.f32 %v1059
        %vm1066 = vmor %vm1064, %vm1065
        %v1067 = vsel %vm1066, %v1059, %v1063
        %v1068 = vand.u32 2147483647, %v875
        %vm1069 = vcmp.eq.f32.partialorder %v1068, 8.507059e+37
        %v1070 = vand.u32 %v875, 2147483648
        %v1071 = vor.u32 1.1754944e-38, %v1070
        %v1072 = vsel %vm1069, %v1071, %v1067
        %v1073 = vmul.f32 1.0, %v1072
        %v1074 = vrcp.pop %v876
        %v1075 = vmul.f32 %v876, %v1074
        %v1076 = vsub.f32 1.0, %v1075
        %v1077 = vmul.f32 %v1074, %v1076
        %v1078 = vadd.f32 %v1074, %v1077
        %vm1079 = vweird.f32 %v876
        %vm1080 = vweird.f32 %v1074
        %vm1081 = vmor %vm1079, %vm1080
        %v1082 = vsel %vm1081, %v1074, %v1078
        %v1083 = vand.u32 2147483647, %v876
        %vm1084 = vcmp.eq.f32.partialorder %v1083, 8.507059e+37
        %v1085 = vand.u32 %v876, 2147483648
        %v1086 = vor.u32 1.1754944e-38, %v1085
        %v1087 = vsel %vm1084, %v1086, %v1082
        %v1088 = vmul.f32 1.0, %v1087
        %v1089 = vrcp.pop %v877
        %v1090 = vmul.f32 %v877, %v1089
        %v1091 = vsub.f32 1.0, %v1090
        %v1092 = vmul.f32 %v1089, %v1091
        %v1093 = vadd.f32 %v1089, %v1092
        %vm1094 = vweird.f32 %v877
        %vm1095 = vweird.f32 %v1089
        %vm1096 = vmor %vm1094, %vm1095
        %v1097 = vsel %vm1096, %v1089, %v1093
        %v1098 = vand.u32 2147483647, %v877
        %vm1099 = vcmp.eq.f32.partialorder %v1098, 8.507059e+37
        %v1100 = vand.u32 %v877, 2147483648
        %v1101 = vor.u32 1.1754944e-38, %v1100
        %v1102 = vsel %vm1099, %v1101, %v1097
        %v1103 = vmul.f32 1.0, %v1102
        %v1104 = vrcp.pop %v878
        %v1105 = vmul.f32 %v878, %v1104
        %v1106 = vsub.f32 1.0, %v1105
        %v1107 = vmul.f32 %v1104, %v1106
        %v1108 = vadd.f32 %v1104, %v1107
        %vm1109 = vweird.f32 %v878
        %vm1110 = vweird.f32 %v1104
        %vm1111 = vmor %vm1109, %vm1110
        %v1112 = vsel %vm1111, %v1104, %v1108
        %v1113 = vand.u32 2147483647, %v878
        %vm1114 = vcmp.eq.f32.partialorder %v1113, 8.507059e+37
        %v1115 = vand.u32 %v878, 2147483648
        %v1116 = vor.u32 1.1754944e-38, %v1115
        %v1117 = vsel %vm1114, %v1116, %v1112
        %v1118 = vmul.f32 1.0, %v1117
        %v1119 = vmul.f32 %v760, %v893
        %v1120 = vmul.f32 %v762, %v908
        %v1121 = vmul.f32 %v765, %v923
        %v1122 = vmul.f32 %v767, %v938
        %v1123 = vmul.f32 %v770, %v953
        %v1124 = vmul.f32 %v772, %v968
        %v1125 = vmul.f32 %v775, %v983
        %v1126 = vmul.f32 %v777, %v998
        %v1127 = vmul.f32 %v780, %v1013
        %v1128 = vmul.f32 %v782, %v1028
        %v1129 = vmul.f32 %v785, %v1043
        %v1130 = vmul.f32 %v787, %v1058
        %v1131 = vmul.f32 %v790, %v1073
        %v1132 = vmul.f32 %v792, %v1088
        %v1133 = vmul.f32 %v795, %v1103
        %v1134 = vmul.f32 %v797, %v1118
        %vm1135 = vcmask 523264
        %1136 = vst.msk [vmem:[%s264] sm:$0xff] %vm1135, %v1119
        %1137 = vst.msk [vmem:[%s264 + $0x8] sm:$0xff] %vm1135, %v1120
        %1138 = vst.msk [vmem:[%s264 + $0x10] sm:$0xff] %vm1135, %v1121
        %1139 = vst.msk [vmem:[%s264 + $0x18] sm:$0xff] %vm1135, %v1122
        %1140 = vst.msk [vmem:[%s264 + $0x20] sm:$0xff] %vm1135, %v1123
        %1141 = vst.msk [vmem:[%s264 + $0x28] sm:$0xff] %vm1135, %v1124
        %1142 = vst.msk [vmem:[%s264 + $0x30] sm:$0xff] %vm1135, %v1125
        %1143 = vst.msk [vmem:[%s264 + $0x38] sm:$0xff] %vm1135, %v1126
        %1144 = vst.msk [vmem:[%s264 + $0x40] sm:$0xff] %vm1135, %v1127
        %1145 = vst.msk [vmem:[%s264 + $0x48] sm:$0xff] %vm1135, %v1128
        %1146 = vst.msk [vmem:[%s264 + $0x50] sm:$0xff] %vm1135, %v1129
        %1147 = vst.msk [vmem:[%s264 + $0x58] sm:$0xff] %vm1135, %v1130
        %1148 = vst.msk [vmem:[%s264 + $0x60] sm:$0xff] %vm1135, %v1131
        %1149 = vst.msk [vmem:[%s264 + $0x68] sm:$0xff] %vm1135, %v1132
        %1150 = vst.msk [vmem:[%s264 + $0x70] sm:$0xff] %vm1135, %v1133
        %1151 = vst.msk [vmem:[%s264 + $0x78] sm:$0xff] %vm1135, %v1134
        %s1152 = sand.u32 %s158, 1
        %s1153 = sand.u32 %s158, 1
        %s1154 = smul.addr %s1153, 128
        %s1155 = scalar_lea.vmem [#allocation2], %s1154
        // Predicated region
        $region41: #{s2_forward.12} parent=39 // pred_check
          %p1156 = pneg %p168
        $region42: #{s2_forward.12} parent=39 // pred_check_branch
          %1158 = sbr.rel (%p1156) target = $region44
        $region43: #{s2_forward.12} parent=39 // pred_region
          %s1159 = smul.u32 16, %s20
          %s1160 = ssub.s32 22, %s1159
          %p1161 = scmp.lt.s32.totalorder %s1160, 16
          %s1162 = scalar_select %p1161, %s1160, 16
          %s1163 = smul.u32 8, %s1162
          %p1164 = scmp.ne.s32.totalorder 0, %s1163
          %s1165 = sadd.s32 %s21, %s1159
          %s1166 = smul.addr %s1165, 8
          %s1167 = scalar_lea.vmem %s5, %s1166
          // Predicated region
          $region45: #{s2_forward.12} parent=43 // pred_check
            %p1168 = pneg %p1164
          $region46: #{s2_forward.12} parent=43 // pred_check_branch
            %1170 = sbr.rel (%p1168) target = $region48
          $region47: #{s2_forward.12} parent=43 // pred_region
            // Predicated region
            $region49: #{s2_forward.12} parent=47 // pred_check
              _
            $region50: #{s2_forward.12} parent=47 // pred_check_branch
              %1172 = sbr.rel (0) target = $region52
            $region51: #{s2_forward.12} parent=47 // pred_region
              // Predicated region
              $region71: #{s2_forward.12} parent=51 // pred_check
                _
              $region72: #{s2_forward.12} parent=51 // pred_check_branch
                %1252 = sbr.rel (0) target = $region74
              $region73: #{s2_forward.12} parent=51 // pred_region
                %s1253 = sshrl.u32 %s1162, 4
                // While loop
                $region75: #{s2_forward.12} parent=73 // loop_pre_header
                  _
                $region76: #{s2_forward.12} parent=73 // loop_header
                  %s1255 = sphi 0, %s1257
                  %p1256 = scmp.ge.s32.totalorder %s1255, %s1253
                  %s1260 = sphi 0, %s1297
                  %s1261 = sphi %s1155, %s1300
                  %s1262 = sphi %s1167, %s1301
                $region77: #{s2_forward.12} parent=73 // loop_header_branch
                  %1259 = sbr.rel (%p1256) target = $region81
                $region78: #{s2_forward.12} parent=73 // loop_body
                  %v1263 = vld [vmem:[%s1261] sm:$0xff]
                  %1264 = vst [vmem:[%s1262] sm:$0xff] %v1263
                  %v1265 = vld [vmem:[%s1261 + $0x8] sm:$0xff]
                  %1266 = vst [vmem:[%s1262 + $0x8] sm:$0xff] %v1265
                  %v1267 = vld [vmem:[%s1261 + $0x10] sm:$0xff]
                  %1268 = vst [vmem:[%s1262 + $0x10] sm:$0xff] %v1267
                  %v1269 = vld [vmem:[%s1261 + $0x18] sm:$0xff]
                  %1270 = vst [vmem:[%s1262 + $0x18] sm:$0xff] %v1269
                  %v1271 = vld [vmem:[%s1261 + $0x20] sm:$0xff]
                  %1272 = vst [vmem:[%s1262 + $0x20] sm:$0xff] %v1271
                  %v1273 = vld [vmem:[%s1261 + $0x28] sm:$0xff]
                  %1274 = vst [vmem:[%s1262 + $0x28] sm:$0xff] %v1273
                  %v1275 = vld [vmem:[%s1261 + $0x30] sm:$0xff]
                  %1276 = vst [vmem:[%s1262 + $0x30] sm:$0xff] %v1275
                  %v1277 = vld [vmem:[%s1261 + $0x38] sm:$0xff]
                  %1278 = vst [vmem:[%s1262 + $0x38] sm:$0xff] %v1277
                  %v1279 = vld [vmem:[%s1261 + $0x40] sm:$0xff]
                  %1280 = vst [vmem:[%s1262 + $0x40] sm:$0xff] %v1279
                  %v1281 = vld [vmem:[%s1261 + $0x48] sm:$0xff]
                  %1282 = vst [vmem:[%s1262 + $0x48] sm:$0xff] %v1281
                  %v1283 = vld [vmem:[%s1261 + $0x50] sm:$0xff]
                  %1284 = vst [vmem:[%s1262 + $0x50] sm:$0xff] %v1283
                  %v1285 = vld [vmem:[%s1261 + $0x58] sm:$0xff]
                  %1286 = vst [vmem:[%s1262 + $0x58] sm:$0xff] %v1285
                  %v1287 = vld [vmem:[%s1261 + $0x60] sm:$0xff]
                  %1288 = vst [vmem:[%s1262 + $0x60] sm:$0xff] %v1287
                  %v1289 = vld [vmem:[%s1261 + $0x68] sm:$0xff]
                  %1290 = vst [vmem:[%s1262 + $0x68] sm:$0xff] %v1289
                  %v1291 = vld [vmem:[%s1261 + $0x70] sm:$0xff]
                  %1292 = vst [vmem:[%s1262 + $0x70] sm:$0xff] %v1291
                  %v1293 = vld [vmem:[%s1261 + $0x78] sm:$0xff]
                  %1294 = vst [vmem:[%s1262 + $0x78] sm:$0xff] %v1293
                  %s1295 = sadd.s32 1, %s1260
                  %p1296 = scmp.ge.s32.totalorder %s1295, %s1253
                  %s1297 = scalar_select %p1296, 0, %s1295
                  %s1298 = smul.u32 %s1297, 128
                  %s1299 = smul.u32 %s1297, 128
                  %s1300 = scalar_lea.vmem %s1155, %s1298 [#allocation2]
                  %s1301 = scalar_lea.vmem %s1167, %s1299
                $region79: #{s2_forward.12} parent=73 // loop_footer
                  %s1257 = sadd.s32 %s1255, 1
                $region80: #{s2_forward.12} parent=73 // loop_footer_branch
                  %1254 = sbr.rel target = $region76
                $region81: #{s2_forward.12} parent=73 // loop_exit
                  _
                %s1302 = sshrl.u32 %s1162, 4
                %s1303 = sand.u32 %s1162, 15
                %s1304 = smul.u32 %s1302, 16
                %s1305 = smul.u32 8, %s1304
                %s1306 = scalar_lea.vmem %s1155, %s1305 [#allocation2]
                %s1307 = smul.u32 8, %s1304
                %s1308 = scalar_lea.vmem %s1167, %s1307
                // While loop
                $region82: #{s2_forward.12} parent=73 // loop_pre_header
                  _
                $region83: #{s2_forward.12} parent=73 // loop_header
                  %s1310 = sphi 0, %s1312
                  %p1311 = scmp.ge.s32.totalorder %s1310, %s1303
                  %s1315 = sphi 0, %s1322
                  %s1316 = sphi %s1306, %s1325
                  %s1317 = sphi %s1308, %s1326
                $region84: #{s2_forward.12} parent=73 // loop_header_branch
                  %1314 = sbr.rel (%p1311) target = $region88
                $region85: #{s2_forward.12} parent=73 // loop_body
                  %v1318 = vld [vmem:[%s1316] sm:$0xff]
                  %1319 = vst [vmem:[%s1317] sm:$0xff] %v1318
                  %s1320 = sadd.s32 1, %s1315
                  %p1321 = scmp.ge.s32.totalorder %s1320, %s1303
                  %s1322 = scalar_select %p1321, 0, %s1320
                  %s1323 = smul.u32 %s1322, 8
                  %s1324 = smul.u32 %s1322, 8
                  %s1325 = scalar_lea.vmem %s1306, %s1323 [#allocation2]
                  %s1326 = scalar_lea.vmem %s1308, %s1324
                $region86: #{s2_forward.12} parent=73 // loop_footer
                  %s1312 = sadd.s32 %s1310, 1
                $region87: #{s2_forward.12} parent=73 // loop_footer_branch
                  %1309 = sbr.rel target = $region83
                $region88: #{s2_forward.12} parent=73 // loop_exit
                  _
              $region74: #{s2_forward.12} parent=51 // pred_fallthru
                _
              // Predicated region
              $region89: #{s2_forward.12} parent=51 // pred_check
                _
              $region90: #{s2_forward.12} parent=51 // pred_check_branch
                %1328 = sbr.rel target = $region92
              $region91: #{s2_forward.12} parent=51 // pred_region
                _
              $region92: #{s2_forward.12} parent=51 // pred_fallthru
                _
            $region52: #{s2_forward.12} parent=47 // pred_fallthru
              _
            // Predicated region
            $region53: #{s2_forward.12} parent=47 // pred_check
              _
            $region54: #{s2_forward.12} parent=47 // pred_check_branch
              %1174 = sbr.rel target = $region56
            $region55: #{s2_forward.12} parent=47 // pred_region
              %s1176 = ssub.s32 256, 1
              %s1177 = sshrl.u32 %s1162, 4
              // While loop
              $region57: #{s2_forward.12} parent=55 // loop_pre_header
                _
              $region58: #{s2_forward.12} parent=55 // loop_header
                %s1179 = sphi 0, %s1181
                %p1180 = scmp.ge.s32.totalorder %s1179, %s1177
                %s1184 = sphi 0, %s1221
                %s1185 = sphi %s1155, %s1224
                %s1186 = sphi %s1167, %s1225
              $region59: #{s2_forward.12} parent=55 // loop_header_branch
                %1183 = sbr.rel (%p1180) target = $region63
              $region60: #{s2_forward.12} parent=55 // loop_body
                %v1187 = vld [vmem:[%s1185] sm:%s1176]
                %1188 = vst [vmem:[%s1186] sm:%s1176] %v1187
                %v1189 = vld [vmem:[%s1185 + $0x8] sm:%s1176]
                %1190 = vst [vmem:[%s1186 + $0x8] sm:%s1176] %v1189
                %v1191 = vld [vmem:[%s1185 + $0x10] sm:%s1176]
                %1192 = vst [vmem:[%s1186 + $0x10] sm:%s1176] %v1191
                %v1193 = vld [vmem:[%s1185 + $0x18] sm:%s1176]
                %1194 = vst [vmem:[%s1186 + $0x18] sm:%s1176] %v1193
                %v1195 = vld [vmem:[%s1185 + $0x20] sm:%s1176]
                %1196 = vst [vmem:[%s1186 + $0x20] sm:%s1176] %v1195
                %v1197 = vld [vmem:[%s1185 + $0x28] sm:%s1176]
                %1198 = vst [vmem:[%s1186 + $0x28] sm:%s1176] %v1197
                %v1199 = vld [vmem:[%s1185 + $0x30] sm:%s1176]
                %1200 = vst [vmem:[%s1186 + $0x30] sm:%s1176] %v1199
                %v1201 = vld [vmem:[%s1185 + $0x38] sm:%s1176]
                %1202 = vst [vmem:[%s1186 + $0x38] sm:%s1176] %v1201
                %v1203 = vld [vmem:[%s1185 + $0x40] sm:%s1176]
                %1204 = vst [vmem:[%s1186 + $0x40] sm:%s1176] %v1203
                %v1205 = vld [vmem:[%s1185 + $0x48] sm:%s1176]
                %1206 = vst [vmem:[%s1186 + $0x48] sm:%s1176] %v1205
                %v1207 = vld [vmem:[%s1185 + $0x50] sm:%s1176]
                %1208 = vst [vmem:[%s1186 + $0x50] sm:%s1176] %v1207
                %v1209 = vld [vmem:[%s1185 + $0x58] sm:%s1176]
                %1210 = vst [vmem:[%s1186 + $0x58] sm:%s1176] %v1209
                %v1211 = vld [vmem:[%s1185 + $0x60] sm:%s1176]
                %1212 = vst [vmem:[%s1186 + $0x60] sm:%s1176] %v1211
                %v1213 = vld [vmem:[%s1185 + $0x68] sm:%s1176]
                %1214 = vst [vmem:[%s1186 + $0x68] sm:%s1176] %v1213
                %v1215 = vld [vmem:[%s1185 + $0x70] sm:%s1176]
                %1216 = vst [vmem:[%s1186 + $0x70] sm:%s1176] %v1215
                %v1217 = vld [vmem:[%s1185 + $0x78] sm:%s1176]
                %1218 = vst [vmem:[%s1186 + $0x78] sm:%s1176] %v1217
                %s1219 = sadd.s32 1, %s1184
                %p1220 = scmp.ge.s32.totalorder %s1219, %s1177
                %s1221 = scalar_select %p1220, 0, %s1219
                %s1222 = smul.u32 %s1221, 128
                %s1223 = smul.u32 %s1221, 128
                %s1224 = scalar_lea.vmem %s1155, %s1222 [#allocation2]
                %s1225 = scalar_lea.vmem %s1167, %s1223
              $region61: #{s2_forward.12} parent=55 // loop_footer
                %s1181 = sadd.s32 %s1179, 1
              $region62: #{s2_forward.12} parent=55 // loop_footer_branch
                %1178 = sbr.rel target = $region58
              $region63: #{s2_forward.12} parent=55 // loop_exit
                _
              %s1226 = sshrl.u32 %s1162, 4
              %s1227 = sand.u32 %s1162, 15
              %s1228 = smul.u32 %s1226, 16
              %s1229 = smul.u32 8, %s1228
              %s1230 = scalar_lea.vmem %s1155, %s1229 [#allocation2]
              %s1231 = smul.u32 8, %s1228
              %s1232 = scalar_lea.vmem %s1167, %s1231
              // While loop
              $region64: #{s2_forward.12} parent=55 // loop_pre_header
                _
              $region65: #{s2_forward.12} parent=55 // loop_header
                %s1234 = sphi 0, %s1236
                %p1235 = scmp.ge.s32.totalorder %s1234, %s1227
                %s1239 = sphi 0, %s1246
                %s1240 = sphi %s1230, %s1249
                %s1241 = sphi %s1232, %s1250
              $region66: #{s2_forward.12} parent=55 // loop_header_branch
                %1238 = sbr.rel (%p1235) target = $region70
              $region67: #{s2_forward.12} parent=55 // loop_body
                %v1242 = vld [vmem:[%s1240] sm:%s1176]
                %1243 = vst [vmem:[%s1241] sm:%s1176] %v1242
                %s1244 = sadd.s32 1, %s1239
                %p1245 = scmp.ge.s32.totalorder %s1244, %s1227
                %s1246 = scalar_select %p1245, 0, %s1244
                %s1247 = smul.u32 %s1246, 8
                %s1248 = smul.u32 %s1246, 8
                %s1249 = scalar_lea.vmem %s1230, %s1247 [#allocation2]
                %s1250 = scalar_lea.vmem %s1232, %s1248
              $region68: #{s2_forward.12} parent=55 // loop_footer
                %s1236 = sadd.s32 %s1234, 1
              $region69: #{s2_forward.12} parent=55 // loop_footer_branch
                %1233 = sbr.rel target = $region65
              $region70: #{s2_forward.12} parent=55 // loop_exit
                _
            $region56: #{s2_forward.12} parent=47 // pred_fallthru
              _
          $region48: #{s2_forward.12} parent=43 // pred_fallthru
            _
          %1329 = vnop
        $region44: #{s2_forward.12} parent=39 // pred_fallthru
          _
      $region40: #{s2_forward.12} parent=5 // pred_fallthru
        _
      %p1330 = scmp.le.s32.totalorder 2, %s11
      // Predicated region
      $region93: #{s2_forward.12} parent=5 // pred_check
        %p1331 = pneg %p1330
      $region94: #{s2_forward.12} parent=5 // pred_check_branch
        %1333 = sbr.rel (%p1331) target = $region96
      $region95: #{s2_forward.12} parent=5 // pred_region
        %s1334 = ssub.s32 %s11, 2
        // Predicated region
        $region97: #{s2_forward.12} parent=95 // pred_check
          %p1335 = pneg %p174
        $region98: #{s2_forward.12} parent=95 // pred_check_branch
          %1337 = sbr.rel (%p1335) target = $region100
        $region99: #{s2_forward.12} parent=95 // pred_region
          %s1338 = sand.u32 %s159, 1
          %s1339 = sand.u32 %s159, 1
          %s1340 = smul.addr %s1339, 128
          %s1341 = scalar_lea.vmem [#allocation2], %s1340
        $region100: #{s2_forward.12} parent=95 // pred_fallthru
          _
      $region96: #{s2_forward.12} parent=5 // pred_fallthru
        _
    $region6: #{s2_forward.12} parent=1 // loop_footer
      %s15 = sadd.s32 1, %s11
    $region7: #{s2_forward.12} parent=1 // loop_footer_branch
      %10 = sbr.rel target = $region3
    $region8: #{s2_forward.12} parent=1 // loop_exit
      _

// kernel: s2_forward.13
$region0: #{s2_forward.13}
  #allocation0 [shape = 'u32[]', space=smem, size = 0x4, offset = 0x4, fixed_abs, tag = 'smem constant byte address 0x4 - core index']
  #allocation1 [shape = 'u32[72,128]{1,0:T(1,128)}', space=vmem, size = 0x9000, scoped, tag = 'internal scratch']
  %s0 = inlined_call_operand.vmem [shape: f32[170,64], index: 0, kind: input, shape index: {}]
  %s1 = inlined_call_operand.vmem [shape: f32[64,32], index: 1, kind: input, shape index: {}]
  %s2 = inlined_call_operand.vmem [shape: f32[1,32], index: 2, kind: input, shape index: {}]
  %s3 = inlined_call_operand.vmem [shape: f32[170,32], index: 3, kind: input, shape index: {}]
  %s4 = inlined_call_operand.vmem [shape: f32[170,32], index: 4, kind: output, shape index: {}]
  %s5 = sld [smem:[#allocation0]]
  $region97: #{s2_forward.13} parent=0
    _
  %s7 = ssub.s32 1, %s5
  %s8 = scalar_select 0, %s7, %s5
  $region1: #{s2_forward.13} parent=0
    #allocation2 [shape = 'u8[131072]{0}', space=vmem, size = 0x20000, scoped, tag = 'output window, operand 0']
    loop: start=0, step=1, limit=4
    $region2: #{s2_forward.13} parent=1 // loop_pre_header
      _
    $region3: #{s2_forward.13} parent=1 // loop_header
      %s10 = sphi 0, %s14
      %p11 = scmp.ge.s32.totalorder %s10, 4
      %s17 = sphi 0, %s29
      %s18 = sphi 0, %s25
      %s19 = sphi 0, %s17
      %s20 = sphi 0, %s18
      %s21 = sphi 0, %s19
      %s22 = sphi 0, %s20
      %s32 = sphi 0, %s34
      %s35 = sphi 0, %s32
      %s36 = sphi 0, %s35
      %s52 = sphi 0, %s36
      %s58 = sphi 0, %s60
      %s61 = sphi 0, %s58
      %s62 = sphi 0, %s61
      %s78 = sphi 0, %s62
      %s84 = sphi 0, %s86
      %s87 = sphi 0, %s84
      %s88 = sphi 0, %s87
      %s104 = sphi 0, %s88
      %s112 = sphi 0, %s114
      %s115 = sphi 0, %s112
      %s116 = sphi 0, %s115
      %s132 = sphi 0, %s116
      %s140 = sphi 0, %s142
      %s143 = sphi 0, %s140
      %s144 = sphi 0, %s143
      %s160 = sphi 0, %s144
    $region4: #{s2_forward.13} parent=1 // loop_header_branch
      %13 = sbr.rel (%p11) target = $region8
    $region5: #{s2_forward.13} parent=1 // loop_body
      %s15 = ssub.s32 %s10, 1
      %s16 = ssub.s32 %s10, 2
      %s23 = sadd.s32 1, %s18
      %p24 = scmp.ge.s32.totalorder %s23, 1
      %s25 = scalar_select %p24, 0, %s23
      %s26 = sadd.s32 1, %s17
      %s27 = scalar_select %p24, %s26, %s17
      %p28 = scmp.ge.s32.totalorder %s27, 2
      %s29 = scalar_select %p28, 0, %s27
      %s30 = ssub.s32 %s17, %s29
      %p31 = scmp.eq.s32.totalorder %s30, 0
      %s33 = sadd.s32 %s32, 1
      %s34 = scalar_select %p31, %s32, %s33
      %p37 = pneg %p31
      %p38 = scmp.eq.s32.totalorder %s10, 1
      %p39 = por %p37, %p38
      %p40 = scmp.ne.s32.totalorder %s32, %s35
      %p41 = scmp.eq.s32.totalorder %s10, 0
      %p42 = por %p40, %p41
      %p43 = scmp.ne.s32.totalorder %s32, %s35
      %p44 = scmp.eq.s32.totalorder %s15, 1
      %p45 = por %p43, %p44
      %p46 = scmp.ne.s32.totalorder %s35, %s36
      %p47 = scmp.eq.s32.totalorder %s15, 0
      %p48 = por %p46, %p47
      %p49 = scmp.ne.s32.totalorder %s35, %s36
      %p50 = scmp.eq.s32.totalorder %s16, 1
      %p51 = por %p49, %p50
      %p53 = scmp.ne.s32.totalorder %s36, %s52
      %p54 = scmp.eq.s32.totalorder %s16, 0
      %p55 = por %p53, %p54
      %s56 = ssub.s32 %s18, %s25
      %p57 = scmp.eq.s32.totalorder %s56, 0
      %s59 = sadd.s32 %s58, 1
      %s60 = scalar_select %p57, %s58, %s59
      %p63 = pneg %p57
      %p64 = scmp.eq.s32.totalorder %s10, 1
      %p65 = por %p63, %p64
      %p66 = scmp.ne.s32.totalorder %s58, %s61
      %p67 = scmp.eq.s32.totalorder %s10, 0
      %p68 = por %p66, %p67
      %p69 = scmp.ne.s32.totalorder %s58, %s61
      %p70 = scmp.eq.s32.totalorder %s15, 1
      %p71 = por %p69, %p70
      %p72 = scmp.ne.s32.totalorder %s61, %s62
      %p73 = scmp.eq.s32.totalorder %s15, 0
      %p74 = por %p72, %p73
      %p75 = scmp.ne.s32.totalorder %s61, %s62
      %p76 = scmp.eq.s32.totalorder %s16, 1
      %p77 = por %p75, %p76
      %p79 = scmp.ne.s32.totalorder %s62, %s78
      %p80 = scmp.eq.s32.totalorder %s16, 0
      %p81 = por %p79, %p80
      %s82 = ssub.s32 %s18, %s25
      %p83 = scmp.eq.s32.totalorder %s82, 0
      %s85 = sadd.s32 %s84, 1
      %s86 = scalar_select %p83, %s84, %s85
      %p89 = pneg %p83
      %p90 = scmp.eq.s32.totalorder %s10, 1
      %p91 = por %p89, %p90
      %p92 = scmp.ne.s32.totalorder %s84, %s87
      %p93 = scmp.eq.s32.totalorder %s10, 0
      %p94 = por %p92, %p93
      %p95 = scmp.ne.s32.totalorder %s84, %s87
      %p96 = scmp.eq.s32.totalorder %s15, 1
      %p97 = por %p95, %p96
      %p98 = scmp.ne.s32.totalorder %s87, %s88
      %p99 = scmp.eq.s32.totalorder %s15, 0
      %p100 = por %p98, %p99
      %p101 = scmp.ne.s32.totalorder %s87, %s88
      %p102 = scmp.eq.s32.totalorder %s16, 1
      %p103 = por %p101, %p102
      %p105 = scmp.ne.s32.totalorder %s88, %s104
      %p106 = scmp.eq.s32.totalorder %s16, 0
      %p107 = por %p105, %p106
      %s108 = ssub.s32 %s17, %s29
      %s109 = ssub.s32 %s18, %s25
      %s110 = sor.u32 %s108, %s109
      %p111 = scmp.eq.s32.totalorder %s110, 0
      %s113 = sadd.s32 %s112, 1
      %s114 = scalar_select %p111, %s112, %s113
      %p117 = pneg %p111
      %p118 = scmp.eq.s32.totalorder %s10, 1
      %p119 = por %p117, %p118
      %p120 = scmp.ne.s32.totalorder %s112, %s115
      %p121 = scmp.eq.s32.totalorder %s10, 0
      %p122 = por %p120, %p121
      %p123 = scmp.ne.s32.totalorder %s112, %s115
      %p124 = scmp.eq.s32.totalorder %s15, 1
      %p125 = por %p123, %p124
      %p126 = scmp.ne.s32.totalorder %s115, %s116
      %p127 = scmp.eq.s32.totalorder %s15, 0
      %p128 = por %p126, %p127
      %p129 = scmp.ne.s32.totalorder %s115, %s116
      %p130 = scmp.eq.s32.totalorder %s16, 1
      %p131 = por %p129, %p130
      %p133 = scmp.ne.s32.totalorder %s116, %s132
      %p134 = scmp.eq.s32.totalorder %s16, 0
      %p135 = por %p133, %p134
      %s136 = ssub.s32 %s17, %s29
      %s137 = ssub.s32 %s18, %s25
      %s138 = sor.u32 %s136, %s137
      %p139 = scmp.eq.s32.totalorder %s138, 0
      %s141 = sadd.s32 %s140, 1
      %s142 = scalar_select %p139, %s140, %s141
      %p145 = pneg %p139
      %p146 = scmp.eq.s32.totalorder %s10, 1
      %p147 = por %p145, %p146
      %p148 = scmp.ne.s32.totalorder %s140, %s143
      %p149 = scmp.eq.s32.totalorder %s10, 0
      %p150 = por %p148, %p149
      %p151 = scmp.ne.s32.totalorder %s140, %s143
      %p152 = scmp.eq.s32.totalorder %s15, 1
      %p153 = por %p151, %p152
      %p154 = scmp.ne.s32.totalorder %s143, %s144
      %p155 = scmp.eq.s32.totalorder %s15, 0
      %p156 = por %p154, %p155
      %p157 = scmp.ne.s32.totalorder %s143, %s144
      %p158 = scmp.eq.s32.totalorder %s16, 1
      %p159 = por %p157, %p158
      %p161 = scmp.ne.s32.totalorder %s144, %s160
      %p162 = scmp.eq.s32.totalorder %s16, 0
      %p163 = por %p161, %p162
      %p164 = scmp.le.s32.totalorder 1, %s10
      %p165 = scmp.lt.s32.totalorder %s10, 3
      %p166 = pnand %p164, %p165
      %p167 = pneg %p166
      // Predicated region
      $region9: #{s2_forward.13} parent=5 // pred_check
        _
      $region10: #{s2_forward.13} parent=5 // pred_check_branch
        %169 = sbr.rel (%p166) target = $region12
      $region11: #{s2_forward.13} parent=5 // pred_region
        %s170 = ssub.s32 %s10, 1
        // Predicated region
        $region13: #{s2_forward.13} parent=11 // pred_check
          %p171 = pneg %p74
        $region14: #{s2_forward.13} parent=11 // pred_check_branch
          %173 = sbr.rel (%p171) target = $region16
        $region15: #{s2_forward.13} parent=11 // pred_region
          %p174 = scmp.lt.s32.totalorder %s20, 0
          %s175 = scalar_select %p174, %s20, 0
          %s176 = smul.addr %s175, 8
          %s177 = scalar_lea.vmem %s1, %s176
        $region16: #{s2_forward.13} parent=11 // pred_fallthru
          _
        // Predicated region
        $region17: #{s2_forward.13} parent=11 // pred_check
          %p178 = pneg %p100
        $region18: #{s2_forward.13} parent=11 // pred_check_branch
          %180 = sbr.rel (%p178) target = $region20
        $region19: #{s2_forward.13} parent=11 // pred_region
          %p181 = scmp.lt.s32.totalorder %s20, 0
          %s182 = scalar_select %p181, %s20, 0
          %s183 = scalar_lea.vmem %s2, %s182
        $region20: #{s2_forward.13} parent=11 // pred_fallthru
          _
      $region12: #{s2_forward.13} parent=5 // pred_fallthru
        _
      %p184 = scmp.lt.s32.totalorder %s10, 2
      // Predicated region
      $region21: #{s2_forward.13} parent=5 // pred_check
        %p185 = pneg %p184
      $region22: #{s2_forward.13} parent=5 // pred_check_branch
        %187 = sbr.rel (%p185) target = $region24
      $region23: #{s2_forward.13} parent=5 // pred_region
        // Predicated region
        $region25: #{s2_forward.13} parent=23 // pred_check
          %p188 = pneg %p42
        $region26: #{s2_forward.13} parent=23 // pred_check_branch
          %190 = sbr.rel (%p188) target = $region28
        $region27: #{s2_forward.13} parent=23 // pred_region
          %s191 = smul.u32 16, %s17
          %s192 = ssub.s32 22, %s191
          %p193 = scmp.lt.s32.totalorder %s192, 16
          %s194 = scalar_select %p193, %s192, 16
          %s195 = smul.u32 8, %s194
          %p196 = scmp.lt.s32.totalorder %s191, 21
          %s197 = scalar_select %p196, %s191, 21
          %s198 = smul.addr %s197, 8
          %s199 = scalar_lea.vmem %s0, %s198
          %s200 = smul.u32 16, %s17
          %s201 = ssub.s32 22, %s200
          %p202 = scmp.lt.s32.totalorder %s201, 16
          %s203 = scalar_select %p202, %s201, 16
          %s204 = smul.u32 8, %s203
        $region28: #{s2_forward.13} parent=23 // pred_fallthru
          _
        // Predicated region
        $region29: #{s2_forward.13} parent=23 // pred_check
          %p205 = pneg %p122
        $region30: #{s2_forward.13} parent=23 // pred_check_branch
          %207 = sbr.rel (%p205) target = $region32
        $region31: #{s2_forward.13} parent=23 // pred_region
          %s208 = smul.u32 16, %s17
          %s209 = ssub.s32 22, %s208
          %p210 = scmp.lt.s32.totalorder %s209, 16
          %s211 = scalar_select %p210, %s209, 16
          %s212 = smul.u32 8, %s211
          %p213 = scmp.lt.s32.totalorder %s208, 21
          %s214 = scalar_select %p213, %s208, 21
          %p215 = scmp.lt.s32.totalorder %s18, 0
          %s216 = scalar_select %p215, %s18, 0
          %s217 = sadd.s32 %s216, %s214
          %s218 = smul.addr %s217, 8
          %s219 = scalar_lea.vmem %s3, %s218
          %s220 = smul.u32 16, %s17
          %s221 = ssub.s32 22, %s220
          %p222 = scmp.lt.s32.totalorder %s221, 16
          %s223 = scalar_select %p222, %s221, 16
          %s224 = smul.u32 8, %s223
        $region32: #{s2_forward.13} parent=23 // pred_fallthru
          _
      $region24: #{s2_forward.13} parent=5 // pred_fallthru
        _
      %p225 = scmp.le.s32.totalorder 1, %s10
      %p226 = scmp.lt.s32.totalorder %s10, 3
      %p227 = pnand %p225, %p226
      %p228 = pneg %p227
      // Predicated region
      $region33: #{s2_forward.13} parent=5 // pred_check
        _
      $region34: #{s2_forward.13} parent=5 // pred_check_branch
        %230 = sbr.rel (%p227) target = $region36
      $region35: #{s2_forward.13} parent=5 // pred_region
        %s231 = ssub.s32 %s10, 1
        %s232 = smul.u32 16, %s19
        %s233 = ssub.s32 22, %s232
        %p234 = scmp.lt.s32.totalorder %s233, 16
        %s235 = scalar_select %p234, %s233, 16
        %s236 = smul.u32 8, %s235
        %p237 = scmp.lt.s32.totalorder %s232, 21
        %s238 = scalar_select %p237, %s232, 21
        %s239 = smul.addr %s238, 8
        %s240 = scalar_lea.vmem %s0, %s239
        %p241 = pneg %p48
        %p242 = pneg %p45
        %p243 = scmp.lt.s32.totalorder %s20, 0
        %s244 = scalar_select %p243, %s20, 0
        %s245 = smul.addr %s244, 8
        %s246 = scalar_lea.vmem %s1, %s245
        %p247 = pneg %p74
        %p248 = pneg %p71
        %p249 = scmp.lt.s32.totalorder %s20, 0
        %s250 = scalar_select %p249, %s20, 0
        %s251 = scalar_lea.vmem %s2, %s250
        %p252 = pneg %p100
        %p253 = pneg %p97
        %s254 = smul.u32 16, %s19
        %s255 = ssub.s32 22, %s254
        %p256 = scmp.lt.s32.totalorder %s255, 16
        %s257 = scalar_select %p256, %s255, 16
        %s258 = smul.u32 8, %s257
        %p259 = scmp.lt.s32.totalorder %s254, 21
        %s260 = scalar_select %p259, %s254, 21
        %p261 = scmp.lt.s32.totalorder %s20, 0
        %s262 = scalar_select %p261, %s20, 0
        %s263 = sadd.s32 %s262, %s260
        %s264 = smul.addr %s263, 8
        %s265 = scalar_lea.vmem %s3, %s264
        %p266 = pneg %p128
        %p267 = pneg %p125
        %p268 = pneg %p156
        %p269 = pneg %p153
        %s270 = sand.u32 %s143, 1
        %s271 = sand.u32 %s143, 1
        %s272 = smul.addr %s271, 128
        %s273 = scalar_lea.vmem [#allocation2], %s272
        %s274 = smul.u32 16, %s19
        %s275 = ssub.s32 22, %s274
        %p276 = scmp.lt.s32.totalorder %s275, 16
        %s277 = scalar_select %p276, %s275, 16
        %s278 = smul.u32 8, %s277
        %p279 = scmp.lt.s32.totalorder %s274, 21
        %s280 = scalar_select %p279, %s274, 21
        %s281 = smul.addr %s280, 8
        %s282 = scalar_lea.vmem %s0, %s281
        %s283 = smul.u32 16, %s19
        %s284 = ssub.s32 22, %s283
        %p285 = scmp.lt.s32.totalorder %s284, 16
        %s286 = scalar_select %p285, %s284, 16
        %s287 = smul.u32 8, %s286
        %p288 = scmp.lt.s32.totalorder %s20, 0
        %s289 = scalar_select %p288, %s20, 0
        %s290 = smul.addr %s289, 8
        %s291 = scalar_lea.vmem %s1, %s290
        %p292 = scmp.lt.s32.totalorder %s20, 0
        %s293 = scalar_select %p292, %s20, 0
        %s294 = scalar_lea.vmem %s2, %s293
        %s295 = smul.u32 16, %s19
        %s296 = ssub.s32 22, %s295
        %p297 = scmp.lt.s32.totalorder %s296, 16
        %s298 = scalar_select %p297, %s296, 16
        %s299 = smul.u32 8, %s298
        %p300 = scmp.lt.s32.totalorder %s295, 21
        %s301 = scalar_select %p300, %s295, 21
        %p302 = scmp.lt.s32.totalorder %s20, 0
        %s303 = scalar_select %p302, %s20, 0
        %s304 = sadd.s32 %s303, %s301
        %s305 = smul.addr %s304, 8
        %s306 = scalar_lea.vmem %s3, %s305
        %s307 = smul.u32 16, %s19
        %s308 = ssub.s32 22, %s307
        %p309 = scmp.lt.s32.totalorder %s308, 16
        %s310 = scalar_select %p309, %s308, 16
        %s311 = smul.u32 8, %s310
        %s312 = smul.u32 16, %s19
        %s313 = ssub.s32 22, %s312
        %p314 = scmp.lt.s32.totalorder %s313, 16
        %s315 = scalar_select %p314, %s313, 16
        %s316 = smul.u32 8, %s315
        %v318 = vld [vmem:[%s282] sm:$0xff]
        %v319 = vld [vmem:[%s282 + $0x8] sm:$0xff]
        %v320 = vld [vmem:[%s282 + $0x10] sm:$0xff]
        %v321 = vld [vmem:[%s282 + $0x18] sm:$0xff]
        %v322 = vld [vmem:[%s282 + $0x20] sm:$0xff]
        %v323 = vld [vmem:[%s282 + $0x28] sm:$0xff]
        %v324 = vld [vmem:[%s282 + $0x30] sm:$0xff]
        %v325 = vld [vmem:[%s282 + $0x38] sm:$0xff]
        %v326 = vld [vmem:[%s282 + $0x40] sm:$0xff]
        %v327 = vld [vmem:[%s282 + $0x48] sm:$0xff]
        %v328 = vld [vmem:[%s282 + $0x50] sm:$0xff]
        %v329 = vld [vmem:[%s282 + $0x58] sm:$0xff]
        %v330 = vld [vmem:[%s282 + $0x60] sm:$0xff]
        %v331 = vld [vmem:[%s282 + $0x68] sm:$0xff]
        %v332 = vld [vmem:[%s282 + $0x70] sm:$0xff]
        %v333 = vld [vmem:[%s282 + $0x78] sm:$0xff]
        %v334 = vpack.c.bf16 %v319, %v318
        %v335 = vpack.c.bf16 %v321, %v320
        %v336 = vpack.c.bf16 %v323, %v322
        %v337 = vpack.c.bf16 %v325, %v324
        %v338 = vpack.c.bf16 %v327, %v326
        %v339 = vpack.c.bf16 %v329, %v328
        %v340 = vpack.c.bf16 %v331, %v330
        %v341 = vpack.c.bf16 %v333, %v332
        %v342 = vld [vmem:[%s291] sm:$0xff]
        %v343 = vld [vmem:[%s291 + $0x8] sm:$0xff]
        %v344 = vld [vmem:[%s291 + $0x10] sm:$0xff]
        %v345 = vld [vmem:[%s291 + $0x18] sm:$0xff]
        %v346 = vld [vmem:[%s291 + $0x20] sm:$0xff]
        %v347 = vld [vmem:[%s291 + $0x28] sm:$0xff]
        %v348 = vld [vmem:[%s291 + $0x30] sm:$0xff]
        %v349 = vld [vmem:[%s291 + $0x38] sm:$0xff]
        %v350 = vpack.c.bf16 %v343, %v342
        %v351 = vpack.c.bf16 %v345, %v344
        %v352 = vpack.c.bf16 %v347, %v346
        %v353 = vpack.c.bf16 %v349, %v348
        %v354 = vld [vmem:[%s294] sm:$0x1]
        %v356 = vperm.slane %v354, 0
        %vm358 = vcmask 523264
        %v360 = vsel %vm358, %v334, 0
        %v363 = vsel %vm358, %v335, 0
        %v366 = vsel %vm358, %v336, 0
        %v369 = vsel %vm358, %v337, 0
        %v372 = vsel %vm358, %v338, 0
        %v375 = vsel %vm358, %v339, 0
        %v378 = vsel %vm358, %v340, 0
        %v381 = vsel %vm358, %v341, 0
        %383 = vmatpush.bf16.msra.mxu0 0
        %384 = vmatpush.bf16.msra.mxu0 0
        %385 = vmatpush.bf16.msra.mxu0 0
        %386 = vmatpush.bf16.msra.mxu0 0
        %387 = vmatpush.bf16.msra.mxu0 %v353
        %388 = vmatpush.bf16.msra.mxu0 %v352
        %389 = vmatpush.bf16.msra.mxu0 %v351
        %390 = vmatpush.bf16.msra.mxu0 %v350
        %391 = vmatmul.bf16.gmra.mxu0 %v360
        %v392 = vpop.f32.mrf.mxu0
        %v393 = vadd.f32 %v356, %v392
        %v394 = vpop.f32.mrf.mxu0
        %v395 = vadd.f32 %v356, %v394
        %396 = vmatmul.bf16.gmra.mxu0 %v363
        %v397 = vpop.f32.mrf.mxu0
        %v398 = vadd.f32 %v356, %v397
        %v399 = vpop.f32.mrf.mxu0
        %v400 = vadd.f32 %v356, %v399
        %401 = vmatmul.bf16.gmra.mxu0 %v366
        %v402 = vpop.f32.mrf.mxu0
        %v403 = vadd.f32 %v356, %v402
        %v404 = vpop.f32.mrf.mxu0
        %v405 = vadd.f32 %v356, %v404
        %406 = vmatmul.bf16.gmra.mxu0 %v369
        %v407 = vpop.f32.mrf.mxu0
        %v408 = vadd.f32 %v356, %v407
        %v409 = vpop.f32.mrf.mxu0
        %v410 = vadd.f32 %v356, %v409
        %411 = vmatmul.bf16.gmra.mxu0 %v372
        %v412 = vpop.f32.mrf.mxu0
        %v413 = vadd.f32 %v356, %v412
        %v414 = vpop.f32.mrf.mxu0
        %v415 = vadd.f32 %v356, %v414
        %416 = vmatmul.bf16.gmra.mxu0 %v375
        %v417 = vpop.f32.mrf.mxu0
        %v418 = vadd.f32 %v356, %v417
        %v419 = vpop.f32.mrf.mxu0
        %v420 = vadd.f32 %v356, %v419
        %421 = vmatmul.bf16.gmra.mxu0 %v378
        %v422 = vpop.f32.mrf.mxu0
        %v423 = vadd.f32 %v356, %v422
        %v424 = vpop.f32.mrf.mxu0
        %v425 = vadd.f32 %v356, %v424
        %426 = vmatmul.bf16.gmra.mxu0 %v381
        %v427 = vpop.f32.mrf.mxu0
        %v428 = vadd.f32 %v356, %v427
        %v429 = vpop.f32.mrf.mxu0
        %v430 = vadd.f32 %v356, %v429
        %431 = vdwg.mxu0
        %v432 = vld [vmem:[%s306] sm:$0xff]
        %v433 = vld [vmem:[%s306 + $0x8] sm:$0xff]
        %v434 = vld [vmem:[%s306 + $0x10] sm:$0xff]
        %v435 = vld [vmem:[%s306 + $0x18] sm:$0xff]
        %v436 = vld [vmem:[%s306 + $0x20] sm:$0xff]
        %v437 = vld [vmem:[%s306 + $0x28] sm:$0xff]
        %v438 = vld [vmem:[%s306 + $0x30] sm:$0xff]
        %v439 = vld [vmem:[%s306 + $0x38] sm:$0xff]
        %v440 = vld [vmem:[%s306 + $0x40] sm:$0xff]
        %v441 = vld [vmem:[%s306 + $0x48] sm:$0xff]
        %v442 = vld [vmem:[%s306 + $0x50] sm:$0xff]
        %v443 = vld [vmem:[%s306 + $0x58] sm:$0xff]
        %v444 = vld [vmem:[%s306 + $0x60] sm:$0xff]
        %v445 = vld [vmem:[%s306 + $0x68] sm:$0xff]
        %v446 = vld [vmem:[%s306 + $0x70] sm:$0xff]
        %v447 = vld [vmem:[%s306 + $0x78] sm:$0xff]
        %v448 = vadd.f32 %v393, %v432
        %v449 = vadd.f32 %v395, %v433
        %v450 = vadd.f32 %v398, %v434
        %v451 = vadd.f32 %v400, %v435
        %v452 = vadd.f32 %v403, %v436
        %v453 = vadd.f32 %v405, %v437
        %v454 = vadd.f32 %v408, %v438
        %v455 = vadd.f32 %v410, %v439
        %v456 = vadd.f32 %v413, %v440
        %v457 = vadd.f32 %v415, %v441
        %v458 = vadd.f32 %v418, %v442
        %v459 = vadd.f32 %v420, %v443
        %v460 = vadd.f32 %v423, %v444
        %v461 = vadd.f32 %v425, %v445
        %v462 = vadd.f32 %v428, %v446
        %v463 = vadd.f32 %v430, %v447
        %vm464 = vcmask 261120
        %465 = vst.msk [vmem:[%s273] sm:$0xff] %vm464, %v448
        %466 = vst.msk [vmem:[%s273 + $0x8] sm:$0xff] %vm464, %v449
        %467 = vst.msk [vmem:[%s273 + $0x10] sm:$0xff] %vm464, %v450
        %468 = vst.msk [vmem:[%s273 + $0x18] sm:$0xff] %vm464, %v451
        %469 = vst.msk [vmem:[%s273 + $0x20] sm:$0xff] %vm464, %v452
        %470 = vst.msk [vmem:[%s273 + $0x28] sm:$0xff] %vm464, %v453
        %471 = vst.msk [vmem:[%s273 + $0x30] sm:$0xff] %vm464, %v454
        %472 = vst.msk [vmem:[%s273 + $0x38] sm:$0xff] %vm464, %v455
        %473 = vst.msk [vmem:[%s273 + $0x40] sm:$0xff] %vm464, %v456
        %474 = vst.msk [vmem:[%s273 + $0x48] sm:$0xff] %vm464, %v457
        %475 = vst.msk [vmem:[%s273 + $0x50] sm:$0xff] %vm464, %v458
        %476 = vst.msk [vmem:[%s273 + $0x58] sm:$0xff] %vm464, %v459
        %477 = vst.msk [vmem:[%s273 + $0x60] sm:$0xff] %vm464, %v460
        %478 = vst.msk [vmem:[%s273 + $0x68] sm:$0xff] %vm464, %v461
        %479 = vst.msk [vmem:[%s273 + $0x70] sm:$0xff] %vm464, %v462
        %480 = vst.msk [vmem:[%s273 + $0x78] sm:$0xff] %vm464, %v463
        %s481 = sand.u32 %s143, 1
        %s482 = sand.u32 %s143, 1
        %s483 = smul.addr %s482, 128
        %s484 = scalar_lea.vmem [#allocation2], %s483
        // Predicated region
        $region37: #{s2_forward.13} parent=35 // pred_check
          %p485 = pneg %p153
        $region38: #{s2_forward.13} parent=35 // pred_check_branch
          %487 = sbr.rel (%p485) target = $region40
        $region39: #{s2_forward.13} parent=35 // pred_region
          %s488 = smul.u32 16, %s19
          %s489 = ssub.s32 22, %s488
          %p490 = scmp.lt.s32.totalorder %s489, 16
          %s491 = scalar_select %p490, %s489, 16
          %s492 = smul.u32 8, %s491
          %p493 = scmp.ne.s32.totalorder 0, %s492
          %s494 = sadd.s32 %s20, %s488
          %s495 = smul.addr %s494, 8
          %s496 = scalar_lea.vmem %s4, %s495
          // Predicated region
          $region41: #{s2_forward.13} parent=39 // pred_check
            %p497 = pneg %p493
          $region42: #{s2_forward.13} parent=39 // pred_check_branch
            %499 = sbr.rel (%p497) target = $region44
          $region43: #{s2_forward.13} parent=39 // pred_region
            // Predicated region
            $region45: #{s2_forward.13} parent=43 // pred_check
              _
            $region46: #{s2_forward.13} parent=43 // pred_check_branch
              %501 = sbr.rel (0) target = $region48
            $region47: #{s2_forward.13} parent=43 // pred_region
              // Predicated region
              $region67: #{s2_forward.13} parent=47 // pred_check
                _
              $region68: #{s2_forward.13} parent=47 // pred_check_branch
                %581 = sbr.rel (0) target = $region70
              $region69: #{s2_forward.13} parent=47 // pred_region
                %s582 = sshrl.u32 %s491, 4
                // While loop
                $region71: #{s2_forward.13} parent=69 // loop_pre_header
                  _
                $region72: #{s2_forward.13} parent=69 // loop_header
                  %s584 = sphi 0, %s586
                  %p585 = scmp.ge.s32.totalorder %s584, %s582
                  %s589 = sphi 0, %s626
                  %s590 = sphi %s484, %s629
                  %s591 = sphi %s496, %s630
                $region73: #{s2_forward.13} parent=69 // loop_header_branch
                  %588 = sbr.rel (%p585) target = $region77
                $region74: #{s2_forward.13} parent=69 // loop_body
                  %v592 = vld [vmem:[%s590] sm:$0xff]
                  %593 = vst [vmem:[%s591] sm:$0xff] %v592
                  %v594 = vld [vmem:[%s590 + $0x8] sm:$0xff]
                  %595 = vst [vmem:[%s591 + $0x8] sm:$0xff] %v594
                  %v596 = vld [vmem:[%s590 + $0x10] sm:$0xff]
                  %597 = vst [vmem:[%s591 + $0x10] sm:$0xff] %v596
                  %v598 = vld [vmem:[%s590 + $0x18] sm:$0xff]
                  %599 = vst [vmem:[%s591 + $0x18] sm:$0xff] %v598
                  %v600 = vld [vmem:[%s590 + $0x20] sm:$0xff]
                  %601 = vst [vmem:[%s591 + $0x20] sm:$0xff] %v600
                  %v602 = vld [vmem:[%s590 + $0x28] sm:$0xff]
                  %603 = vst [vmem:[%s591 + $0x28] sm:$0xff] %v602
                  %v604 = vld [vmem:[%s590 + $0x30] sm:$0xff]
                  %605 = vst [vmem:[%s591 + $0x30] sm:$0xff] %v604
                  %v606 = vld [vmem:[%s590 + $0x38] sm:$0xff]
                  %607 = vst [vmem:[%s591 + $0x38] sm:$0xff] %v606
                  %v608 = vld [vmem:[%s590 + $0x40] sm:$0xff]
                  %609 = vst [vmem:[%s591 + $0x40] sm:$0xff] %v608
                  %v610 = vld [vmem:[%s590 + $0x48] sm:$0xff]
                  %611 = vst [vmem:[%s591 + $0x48] sm:$0xff] %v610
                  %v612 = vld [vmem:[%s590 + $0x50] sm:$0xff]
                  %613 = vst [vmem:[%s591 + $0x50] sm:$0xff] %v612
                  %v614 = vld [vmem:[%s590 + $0x58] sm:$0xff]
                  %615 = vst [vmem:[%s591 + $0x58] sm:$0xff] %v614
                  %v616 = vld [vmem:[%s590 + $0x60] sm:$0xff]
                  %617 = vst [vmem:[%s591 + $0x60] sm:$0xff] %v616
                  %v618 = vld [vmem:[%s590 + $0x68] sm:$0xff]
                  %619 = vst [vmem:[%s591 + $0x68] sm:$0xff] %v618
                  %v620 = vld [vmem:[%s590 + $0x70] sm:$0xff]
                  %621 = vst [vmem:[%s591 + $0x70] sm:$0xff] %v620
                  %v622 = vld [vmem:[%s590 + $0x78] sm:$0xff]
                  %623 = vst [vmem:[%s591 + $0x78] sm:$0xff] %v622
                  %s624 = sadd.s32 1, %s589
                  %p625 = scmp.ge.s32.totalorder %s624, %s582
                  %s626 = scalar_select %p625, 0, %s624
                  %s627 = smul.u32 %s626, 128
                  %s628 = smul.u32 %s626, 128
                  %s629 = scalar_lea.vmem %s484, %s627 [#allocation2]
                  %s630 = scalar_lea.vmem %s496, %s628
                $region75: #{s2_forward.13} parent=69 // loop_footer
                  %s586 = sadd.s32 %s584, 1
                $region76: #{s2_forward.13} parent=69 // loop_footer_branch
                  %583 = sbr.rel target = $region72
                $region77: #{s2_forward.13} parent=69 // loop_exit
                  _
                %s631 = sshrl.u32 %s491, 4
                %s632 = sand.u32 %s491, 15
                %s633 = smul.u32 %s631, 16
                %s634 = smul.u32 8, %s633
                %s635 = scalar_lea.vmem %s484, %s634 [#allocation2]
                %s636 = smul.u32 8, %s633
                %s637 = scalar_lea.vmem %s496, %s636
                // While loop
                $region78: #{s2_forward.13} parent=69 // loop_pre_header
                  _
                $region79: #{s2_forward.13} parent=69 // loop_header
                  %s639 = sphi 0, %s641
                  %p640 = scmp.ge.s32.totalorder %s639, %s632
                  %s644 = sphi 0, %s651
                  %s645 = sphi %s635, %s654
                  %s646 = sphi %s637, %s655
                $region80: #{s2_forward.13} parent=69 // loop_header_branch
                  %643 = sbr.rel (%p640) target = $region84
                $region81: #{s2_forward.13} parent=69 // loop_body
                  %v647 = vld [vmem:[%s645] sm:$0xff]
                  %648 = vst [vmem:[%s646] sm:$0xff] %v647
                  %s649 = sadd.s32 1, %s644
                  %p650 = scmp.ge.s32.totalorder %s649, %s632
                  %s651 = scalar_select %p650, 0, %s649
                  %s652 = smul.u32 %s651, 8
                  %s653 = smul.u32 %s651, 8
                  %s654 = scalar_lea.vmem %s635, %s652 [#allocation2]
                  %s655 = scalar_lea.vmem %s637, %s653
                $region82: #{s2_forward.13} parent=69 // loop_footer
                  %s641 = sadd.s32 %s639, 1
                $region83: #{s2_forward.13} parent=69 // loop_footer_branch
                  %638 = sbr.rel target = $region79
                $region84: #{s2_forward.13} parent=69 // loop_exit
                  _
              $region70: #{s2_forward.13} parent=47 // pred_fallthru
                _
              // Predicated region
              $region85: #{s2_forward.13} parent=47 // pred_check
                _
              $region86: #{s2_forward.13} parent=47 // pred_check_branch
                %657 = sbr.rel target = $region88
              $region87: #{s2_forward.13} parent=47 // pred_region
                _
              $region88: #{s2_forward.13} parent=47 // pred_fallthru
                _
            $region48: #{s2_forward.13} parent=43 // pred_fallthru
              _
            // Predicated region
            $region49: #{s2_forward.13} parent=43 // pred_check
              _
            $region50: #{s2_forward.13} parent=43 // pred_check_branch
              %503 = sbr.rel target = $region52
            $region51: #{s2_forward.13} parent=43 // pred_region
              %s505 = ssub.s32 256, 1
              %s506 = sshrl.u32 %s491, 4
              // While loop
              $region53: #{s2_forward.13} parent=51 // loop_pre_header
                _
              $region54: #{s2_forward.13} parent=51 // loop_header
                %s508 = sphi 0, %s510
                %p509 = scmp.ge.s32.totalorder %s508, %s506
                %s513 = sphi 0, %s550
                %s514 = sphi %s484, %s553
                %s515 = sphi %s496, %s554
              $region55: #{s2_forward.13} parent=51 // loop_header_branch
                %512 = sbr.rel (%p509) target = $region59
              $region56: #{s2_forward.13} parent=51 // loop_body
                %v516 = vld [vmem:[%s514] sm:%s505]
                %517 = vst [vmem:[%s515] sm:%s505] %v516
                %v518 = vld [vmem:[%s514 + $0x8] sm:%s505]
                %519 = vst [vmem:[%s515 + $0x8] sm:%s505] %v518
                %v520 = vld [vmem:[%s514 + $0x10] sm:%s505]
                %521 = vst [vmem:[%s515 + $0x10] sm:%s505] %v520
                %v522 = vld [vmem:[%s514 + $0x18] sm:%s505]
                %523 = vst [vmem:[%s515 + $0x18] sm:%s505] %v522
                %v524 = vld [vmem:[%s514 + $0x20] sm:%s505]
                %525 = vst [vmem:[%s515 + $0x20] sm:%s505] %v524
                %v526 = vld [vmem:[%s514 + $0x28] sm:%s505]
                %527 = vst [vmem:[%s515 + $0x28] sm:%s505] %v526
                %v528 = vld [vmem:[%s514 + $0x30] sm:%s505]
                %529 = vst [vmem:[%s515 + $0x30] sm:%s505] %v528
                %v530 = vld [vmem:[%s514 + $0x38] sm:%s505]
                %531 = vst [vmem:[%s515 + $0x38] sm:%s505] %v530
                %v532 = vld [vmem:[%s514 + $0x40] sm:%s505]
                %533 = vst [vmem:[%s515 + $0x40] sm:%s505] %v532
                %v534 = vld [vmem:[%s514 + $0x48] sm:%s505]
                %535 = vst [vmem:[%s515 + $0x48] sm:%s505] %v534
                %v536 = vld [vmem:[%s514 + $0x50] sm:%s505]
                %537 = vst [vmem:[%s515 + $0x50] sm:%s505] %v536
                %v538 = vld [vmem:[%s514 + $0x58] sm:%s505]
                %539 = vst [vmem:[%s515 + $0x58] sm:%s505] %v538
                %v540 = vld [vmem:[%s514 + $0x60] sm:%s505]
                %541 = vst [vmem:[%s515 + $0x60] sm:%s505] %v540
                %v542 = vld [vmem:[%s514 + $0x68] sm:%s505]
                %543 = vst [vmem:[%s515 + $0x68] sm:%s505] %v542
                %v544 = vld [vmem:[%s514 + $0x70] sm:%s505]
                %545 = vst [vmem:[%s515 + $0x70] sm:%s505] %v544
                %v546 = vld [vmem:[%s514 + $0x78] sm:%s505]
                %547 = vst [vmem:[%s515 + $0x78] sm:%s505] %v546
                %s548 = sadd.s32 1, %s513
                %p549 = scmp.ge.s32.totalorder %s548, %s506
                %s550 = scalar_select %p549, 0, %s548
                %s551 = smul.u32 %s550, 128
                %s552 = smul.u32 %s550, 128
                %s553 = scalar_lea.vmem %s484, %s551 [#allocation2]
                %s554 = scalar_lea.vmem %s496, %s552
              $region57: #{s2_forward.13} parent=51 // loop_footer
                %s510 = sadd.s32 %s508, 1
              $region58: #{s2_forward.13} parent=51 // loop_footer_branch
                %507 = sbr.rel target = $region54
              $region59: #{s2_forward.13} parent=51 // loop_exit
                _
              %s555 = sshrl.u32 %s491, 4
              %s556 = sand.u32 %s491, 15
              %s557 = smul.u32 %s555, 16
              %s558 = smul.u32 8, %s557
              %s559 = scalar_lea.vmem %s484, %s558 [#allocation2]
              %s560 = smul.u32 8, %s557
              %s561 = scalar_lea.vmem %s496, %s560
              // While loop
              $region60: #{s2_forward.13} parent=51 // loop_pre_header
                _
              $region61: #{s2_forward.13} parent=51 // loop_header
                %s563 = sphi 0, %s565
                %p564 = scmp.ge.s32.totalorder %s563, %s556
                %s568 = sphi 0, %s575
                %s569 = sphi %s559, %s578
                %s570 = sphi %s561, %s579
              $region62: #{s2_forward.13} parent=51 // loop_header_branch
                %567 = sbr.rel (%p564) target = $region66
              $region63: #{s2_forward.13} parent=51 // loop_body
                %v571 = vld [vmem:[%s569] sm:%s505]
                %572 = vst [vmem:[%s570] sm:%s505] %v571
                %s573 = sadd.s32 1, %s568
                %p574 = scmp.ge.s32.totalorder %s573, %s556
                %s575 = scalar_select %p574, 0, %s573
                %s576 = smul.u32 %s575, 8
                %s577 = smul.u32 %s575, 8
                %s578 = scalar_lea.vmem %s559, %s576 [#allocation2]
                %s579 = scalar_lea.vmem %s561, %s577
              $region64: #{s2_forward.13} parent=51 // loop_footer
                %s565 = sadd.s32 %s563, 1
              $region65: #{s2_forward.13} parent=51 // loop_footer_branch
                %562 = sbr.rel target = $region61
              $region66: #{s2_forward.13} parent=51 // loop_exit
                _
            $region52: #{s2_forward.13} parent=43 // pred_fallthru
              _
          $region44: #{s2_forward.13} parent=39 // pred_fallthru
            _
          %658 = vnop
        $region40: #{s2_forward.13} parent=35 // pred_fallthru
          _
      $region36: #{s2_forward.13} parent=5 // pred_fallthru
        _
      %p659 = scmp.le.s32.totalorder 2, %s10
      // Predicated region
      $region89: #{s2_forward.13} parent=5 // pred_check
        %p660 = pneg %p659
      $region90: #{s2_forward.13} parent=5 // pred_check_branch
        %662 = sbr.rel (%p660) target = $region92
      $region91: #{s2_forward.13} parent=5 // pred_region
        %s663 = ssub.s32 %s10, 2
        // Predicated region
        $region93: #{s2_forward.13} parent=91 // pred_check
          %p664 = pneg %p159
        $region94: #{s2_forward.13} parent=91 // pred_check_branch
          %666 = sbr.rel (%p664) target = $region96
        $region95: #{s2_forward.13} parent=91 // pred_region
          %s667 = sand.u32 %s144, 1
          %s668 = sand.u32 %s144, 1
          %s669 = smul.addr %s668, 128
          %s670 = scalar_lea.vmem [#allocation2], %s669
        $region96: #{s2_forward.13} parent=91 // pred_fallthru
          _
      $region92: #{s2_forward.13} parent=5 // pred_fallthru
        _
    $region6: #{s2_forward.13} parent=1 // loop_footer
      %s14 = sadd.s32 1, %s10
    $region7: #{s2_forward.13} parent=1 // loop_footer_branch
      %9 = sbr.rel target = $region3
    $region8: #{s2_forward.13} parent=1 // loop_exit
      _

</llo_original>
